<compile_context>
chip_gen: v6e
topology: v6e:2x2x1
jax: 0.10.0
libtpu: 0.0.40
codegen_flags: <defaults>
</compile_context>

<pallas_src>
import jax
import jax.numpy as jnp
import numpy as np
from jax import lax
from jax.experimental import pallas as pl
from jax.experimental.pallas import tpu as pltpu


def primalnet_kernel(f_ref, h_ref,
                     w1_ref, b1_ref, a1_ref,
                     w2_ref, b2_ref, a2_ref,
                     w3_ref, b3_ref,
                     out_ref,
                     xin_ref, hid_ref):
    # f_ref:   (B, H, W, P)        residual / primal input
    # h_ref:   (B, H, W, 1)        OpAdj_h
    # xin_ref: (B, H+2, W+2, C0p)  padded concat-input scratch (C0p >= P+1)
    # hid_ref: (B, H+2, W+2, HID)  shared padded hidden-activation scratch
    B, H, W, P = f_ref.shape
    HID = hid_ref.shape[-1]
    M = B * H * W

    def im2col(pad_ref):
        """(B,H+2,W+2,C) padded scratch -> (B*H*W, 9*C) bf16 patch matrix."""
        cin = pad_ref.shape[-1]
        parts = [pad_ref[:, dy:dy + H, dx:dx + W, :].reshape(M, cin)
                 for dy in range(3) for dx in range(3)]
        return jnp.concatenate(parts, axis=1).astype(jnp.bfloat16)

    # ---- stage the (zero-padded) concatenated input in VMEM -----------------
    # small C0p-channel buffer: bulk zero (covers border + padded channels),
    # then write f and OpAdj_h into the interior.
    xin_ref[...] = jnp.zeros_like(xin_ref)
    xin_ref[:, 1:H + 1, 1:W + 1, 0:P] = f_ref[...]
    xin_ref[:, 1:H + 1, 1:W + 1, P:P + 1] = h_ref[...]

    # 32-channel hidden scratch: interior is fully overwritten below, so only
    # the 1-pixel border needs zeroing (done every step -> safe under
    # megacore "parallel" sharding of the batch axis).
    zrow = jnp.zeros((B, 1, W + 2, HID), jnp.float32)
    zcol = jnp.zeros((B, H + 2, 1, HID), jnp.float32)
    hid_ref[:, 0:1, :, :] = zrow
    hid_ref[:, H + 1:H + 2, :, :] = zrow
    hid_ref[:, :, 0:1, :] = zcol
    hid_ref[:, :, W + 1:W + 2, :] = zcol

    # ---- conv1 (single im2col MXU matmul) + bias + PReLU --------------------
    p1 = im2col(xin_ref)                                     # (M, 9*C0p) bf16
    y1 = jnp.dot(p1, w1_ref[...], preferred_element_type=jnp.float32)
    y1 = y1 + b1_ref[...]                                    # (1, HID) bcast
    a1 = a1_ref[0, 0]
    y1 = jnp.where(y1 > 0, y1, a1 * y1)                      # f32 PReLU
    hid_ref[:, 1:H + 1, 1:W + 1, :] = y1.reshape(B, H, W, HID)

    # ---- conv2 + bias + PReLU (reuses the same padded scratch) --------------
    p2 = im2col(hid_ref)                                     # (M, 9*HID) bf16
    y2 = jnp.dot(p2, w2_ref[...], preferred_element_type=jnp.float32)
    y2 = y2 + b2_ref[...]
    a2 = a2_ref[0, 0]
    y2 = jnp.where(y2 > 0, y2, a2 * y2)
    hid_ref[:, 1:H + 1, 1:W + 1, :] = y2.reshape(B, H, W, HID)

    # ---- conv3 + bias + residual --------------------------------------------
    p3 = im2col(hid_ref)                                     # (M, 9*HID) bf16
    y3 = jnp.dot(p3, w3_ref[...], preferred_element_type=jnp.float32)
    y3 = y3 + b3_ref[...]
    out_ref[...] = f_ref[...] + y3.reshape(B, H, W, P)


def primalnet_forward(f_nchw, opadj_nchw, params, *, batch_block=1):
    """f_nchw: (N, P, H, W), opadj_nchw: (N, 1, H, W). Returns (N, P, H, W)."""
    w1, b1, a1, w2, b2, a2, w3, b3 = params
    N, P, H, W = f_nchw.shape
    C0 = P + 1
    HID = w1.shape[-1]
    C0p = ((C0 + 7) // 8) * 8          # pad conv1 input channels (5 -> 8)
    assert N % batch_block == 0
    B = batch_block

    # ---- layout glue only (NCHW -> NHWC); no concat / spatial pad in HBM ----
    f = jnp.transpose(f_nchw, (0, 2, 3, 1)).astype(jnp.float32)      # (N,H,W,P)
    h = jnp.transpose(opadj_nchw, (0, 2, 3, 1)).astype(jnp.float32)  # (N,H,W,1)

    # im2col weights: (3,3,Cin,Cout) -> (9*Cin, Cout); bf16 MXU operands.
    w1p = jnp.pad(w1, ((0, 0), (0, 0), (0, C0p - C0), (0, 0)))
    w1c = w1p.reshape(9 * C0p, HID).astype(jnp.bfloat16)
    w2c = w2.reshape(9 * HID, HID).astype(jnp.bfloat16)
    w3c = w3.reshape(9 * HID, P).astype(jnp.bfloat16)

    b1r = b1.reshape(1, HID).astype(jnp.float32)
    b2r = b2.reshape(1, HID).astype(jnp.float32)
    b3r = b3.reshape(1, P).astype(jnp.float32)
    a1r = a1.reshape(1, 1).astype(jnp.float32)
    a2r = a2.reshape(1, 1).astype(jnp.float32)

    batched = lambda n: (n, 0, 0, 0)
    full2 = lambda n: (0, 0)

    out_nhwc = pl.pallas_call(
        primalnet_kernel,
        out_shape=jax.ShapeDtypeStruct((N, H, W, P), jnp.float32),
        grid_spec=pltpu.PrefetchScalarGridSpec(
            num_scalar_prefetch=0,
            grid=(N // B,),
            in_specs=[
                pl.BlockSpec((B, H, W, P), batched),
                pl.BlockSpec((B, H, W, 1), batched),
                pl.BlockSpec((9 * C0p, HID), full2),
                pl.BlockSpec((1, HID), full2),
                pl.BlockSpec((1, 1), full2),
                pl.BlockSpec((9 * HID, HID), full2),
                pl.BlockSpec((1, HID), full2),
                pl.BlockSpec((1, 1), full2),
                pl.BlockSpec((9 * HID, P), full2),
                pl.BlockSpec((1, P), full2),
            ],
            out_specs=pl.BlockSpec((B, H, W, P), batched),
            scratch_shapes=[
                pltpu.VMEM((B, H + 2, W + 2, C0p), jnp.float32),
                pltpu.VMEM((B, H + 2, W + 2, HID), jnp.float32),
            ],
        ),
        compiler_params=pltpu.CompilerParams(
            dimension_semantics=("parallel",)),   # batch elems are independent
    )(f, h, w1c, b1r, a1r, w2c, b2r, a2r, w3c, b3r)

    return jnp.transpose(out_nhwc, (0, 3, 1, 2))  # back to NCHW


def _reference_forward(f_nchw, opadj_nchw, params):
    """Pure-JAX reference with the same bf16-operand / f32-accumulate convs."""
    w1, b1, a1, w2, b2, a2, w3, b3 = params
    f = jnp.transpose(f_nchw, (0, 2, 3, 1)).astype(jnp.float32)
    h = jnp.transpose(opadj_nchw, (0, 2, 3, 1)).astype(jnp.float32)
    x = jnp.concatenate([f, h], axis=-1)
    dn = ("NHWC", "HWIO", "NHWC")

    def conv(x, w, b):
        return lax.conv_general_dilated(
            x.astype(jnp.bfloat16), w.astype(jnp.bfloat16), (1, 1), "SAME",
            dimension_numbers=dn, preferred_element_type=jnp.float32) + b

    def prelu(x, a):
        return jnp.where(x > 0, x, a * x)

    y = prelu(conv(x, w1, b1), a1[0])
    y = prelu(conv(y, w2, b2), a2[0])
    y = conv(y, w3, b3)
    return jnp.transpose(f + y, (0, 3, 1, 2))


def init_params(key, n_primal, hidden=32):
    c0 = n_primal + 1
    k1, k2, k3 = jax.random.split(key, 3)
    w1 = jax.random.normal(k1, (3, 3, c0, hidden), jnp.float32) * 0.1
    b1 = jnp.zeros((hidden,), jnp.float32)
    a1 = jnp.full((1,), 0.25, jnp.float32)          # PReLU default init
    w2 = jax.random.normal(k2, (3, 3, hidden, hidden), jnp.float32) * 0.1
    b2 = jnp.zeros((hidden,), jnp.float32)
    a2 = jnp.full((1,), 0.25, jnp.float32)
    w3 = jax.random.normal(k3, (3, 3, hidden, n_primal), jnp.float32) * 0.1
    b3 = jnp.zeros((n_primal,), jnp.float32)
    return (w1, b1, a1, w2, b2, a2, w3, b3)


if __name__ == "__main__":
    n_primal = 4
    N, H, W = 2, 16, 16

    key = jax.random.PRNGKey(0)
    kf, kh, kp = jax.random.split(key, 3)
    f = jax.random.normal(kf, (N, n_primal, H, W), jnp.float32)       # NCHW
    opadj_h = jax.random.normal(kh, (N, 1, H, W), jnp.float32)        # NCHW
    params = init_params(kp, n_primal)

    # fold the whole (tiny) batch into one grid step to amortize per-step
    # pipeline overhead at 16x16 (use batch_block=1 for megacore sharding
    # of larger batches on v7x).
    out = primalnet_forward(f, opadj_h, params, batch_block=2)
    out = jax.block_until_ready(out)

    ref = _reference_forward(f, opadj_h, params)
    np.testing.assert_allclose(np.asarray(out), np.asarray(ref),
                               rtol=1e-2, atol=1e-2)
    assert out.shape == (N, n_primal, H, W)
    print("KERNEL_OK")
</pallas_src>

<mosaic_0001>
module attributes {stable_mosaic.version = 11 : i64} {
  func.func @primalnet_kernel(%arg0: i32, %arg1: memref<2x16x16x4xf32, #tpu.memory_space<vmem>>, %arg2: memref<2x16x16x1xf32, #tpu.memory_space<vmem>>, %arg3: memref<72x32xbf16, #tpu.memory_space<vmem>>, %arg4: memref<1x32xf32, #tpu.memory_space<vmem>>, %arg5: memref<1x1xf32, #tpu.memory_space<vmem>>, %arg6: memref<288x32xbf16, #tpu.memory_space<vmem>>, %arg7: memref<1x32xf32, #tpu.memory_space<vmem>>, %arg8: memref<1x1xf32, #tpu.memory_space<vmem>>, %arg9: memref<288x4xbf16, #tpu.memory_space<vmem>>, %arg10: memref<1x4xf32, #tpu.memory_space<vmem>>, %arg11: memref<2x16x16x4xf32, #tpu.memory_space<vmem>>, %arg12: memref<2x18x18x8xf32, #tpu.memory_space<vmem>>, %arg13: memref<2x18x18x32xf32, #tpu.memory_space<vmem>>) attributes {dimension_semantics = [#tpu.dimension_semantics<parallel>], iteration_bounds = array<i64: 1>, scalar_prefetch = 0 : i64, scratch_operands = 2 : i64, tpu.core_type = #tpu.core_type<tc>, window_params = [{transform_indices = @transform_0, window_bounds = array<i64: 2, 16, 16, 4>}, {transform_indices = @transform_1, window_bounds = array<i64: 2, 16, 16, 1>}, {pipeline_mode = #tpu.pipeline_mode<synchronous>, transform_indices = @transform_2, window_bounds = array<i64: 72, 32>}, {pipeline_mode = #tpu.pipeline_mode<synchronous>, transform_indices = @transform_3, window_bounds = array<i64: 1, 32>}, {pipeline_mode = #tpu.pipeline_mode<synchronous>, transform_indices = @transform_4, window_bounds = array<i64: 1, 1>}, {pipeline_mode = #tpu.pipeline_mode<synchronous>, transform_indices = @transform_5, window_bounds = array<i64: 288, 32>}, {pipeline_mode = #tpu.pipeline_mode<synchronous>, transform_indices = @transform_6, window_bounds = array<i64: 1, 32>}, {pipeline_mode = #tpu.pipeline_mode<synchronous>, transform_indices = @transform_7, window_bounds = array<i64: 1, 1>}, {pipeline_mode = #tpu.pipeline_mode<synchronous>, transform_indices = @transform_8, window_bounds = array<i64: 288, 4>}, {pipeline_mode = #tpu.pipeline_mode<synchronous>, transform_indices = @transform_9, window_bounds = array<i64: 1, 4>}, {transform_indices = @transform_10, window_bounds = array<i64: 2, 16, 16, 4>}]} {
    %cst = arith.constant 0.000000e+00 : f32
    %0 = vector.broadcast %cst : f32 to vector<2x18x18x8xf32>
    %c0 = arith.constant 0 : index
    %c0_0 = arith.constant 0 : index
    %c0_1 = arith.constant 0 : index
    %c0_2 = arith.constant 0 : index
    %1 = vector.load %arg12[%c0, %c0_0, %c0_1, %c0_2] : memref<2x18x18x8xf32, #tpu.memory_space<vmem>>, vector<2x18x18x8xf32>
    tpu.vector_store %arg12[%c0, %c0_0, %c0_1, %c0_2], %0 {strides = array<i32>} : memref<2x18x18x8xf32, #tpu.memory_space<vmem>>, vector<2x18x18x8xf32>,
    %c0_3 = arith.constant 0 : index
    %c0_4 = arith.constant 0 : index
    %c0_5 = arith.constant 0 : index
    %c0_6 = arith.constant 0 : index
    %2 = vector.load %arg1[%c0_3, %c0_4, %c0_5, %c0_6] : memref<2x16x16x4xf32, #tpu.memory_space<vmem>>, vector<2x16x16x4xf32>
    %c0_7 = arith.constant 0 : index
    %c1 = arith.constant 1 : index
    %c1_8 = arith.constant 1 : index
    %c0_9 = arith.constant 0 : index
    %3 = vector.load %arg12[%c0_7, %c1, %c1_8, %c0_9] : memref<2x18x18x8xf32, #tpu.memory_space<vmem>>, vector<2x16x16x4xf32>
    tpu.vector_store %arg12[%c0_7, %c1, %c1_8, %c0_9], %2 {strides = array<i32>} : memref<2x18x18x8xf32, #tpu.memory_space<vmem>>, vector<2x16x16x4xf32>,
    %c0_10 = arith.constant 0 : index
    %c0_11 = arith.constant 0 : index
    %c0_12 = arith.constant 0 : index
    %c0_13 = arith.constant 0 : index
    %4 = vector.load %arg2[%c0_10, %c0_11, %c0_12, %c0_13] : memref<2x16x16x1xf32, #tpu.memory_space<vmem>>, vector<2x16x16x1xf32>
    %c0_14 = arith.constant 0 : index
    %c1_15 = arith.constant 1 : index
    %c1_16 = arith.constant 1 : index
    %c4 = arith.constant 4 : index
    %5 = vector.load %arg12[%c0_14, %c1_15, %c1_16, %c4] : memref<2x18x18x8xf32, #tpu.memory_space<vmem>>, vector<2x16x16x1xf32>
    tpu.vector_store %arg12[%c0_14, %c1_15, %c1_16, %c4], %4 {strides = array<i32>} : memref<2x18x18x8xf32, #tpu.memory_space<vmem>>, vector<2x16x16x1xf32>,
    %cst_17 = arith.constant 0.000000e+00 : f32
    %6 = vector.broadcast %cst_17 : f32 to vector<2x1x18x32xf32>
    %cst_18 = arith.constant 0.000000e+00 : f32
    %7 = vector.broadcast %cst_18 : f32 to vector<2x18x1x32xf32>
    %c0_19 = arith.constant 0 : index
    %c0_20 = arith.constant 0 : index
    %c0_21 = arith.constant 0 : index
    %c0_22 = arith.constant 0 : index
    %8 = vector.load %arg13[%c0_19, %c0_20, %c0_21, %c0_22] : memref<2x18x18x32xf32, #tpu.memory_space<vmem>>, vector<2x1x18x32xf32>
    tpu.vector_store %arg13[%c0_19, %c0_20, %c0_21, %c0_22], %6 {strides = array<i32>} : memref<2x18x18x32xf32, #tpu.memory_space<vmem>>, vector<2x1x18x32xf32>,
    %c0_23 = arith.constant 0 : index
    %c17 = arith.constant 17 : index
    %c0_24 = arith.constant 0 : index
    %c0_25 = arith.constant 0 : index
    %9 = vector.load %arg13[%c0_23, %c17, %c0_24, %c0_25] : memref<2x18x18x32xf32, #tpu.memory_space<vmem>>, vector<2x1x18x32xf32>
    tpu.vector_store %arg13[%c0_23, %c17, %c0_24, %c0_25], %6 {strides = array<i32>} : memref<2x18x18x32xf32, #tpu.memory_space<vmem>>, vector<2x1x18x32xf32>,
    %c0_26 = arith.constant 0 : index
    %c0_27 = arith.constant 0 : index
    %c0_28 = arith.constant 0 : index
    %c0_29 = arith.constant 0 : index
    %10 = vector.load %arg13[%c0_26, %c0_27, %c0_28, %c0_29] : memref<2x18x18x32xf32, #tpu.memory_space<vmem>>, vector<2x18x1x32xf32>
    tpu.vector_store %arg13[%c0_26, %c0_27, %c0_28, %c0_29], %7 {strides = array<i32>} : memref<2x18x18x32xf32, #tpu.memory_space<vmem>>, vector<2x18x1x32xf32>,
    %c0_30 = arith.constant 0 : index
    %c0_31 = arith.constant 0 : index
    %c17_32 = arith.constant 17 : index
    %c0_33 = arith.constant 0 : index
    %11 = vector.load %arg13[%c0_30, %c0_31, %c17_32, %c0_33] : memref<2x18x18x32xf32, #tpu.memory_space<vmem>>, vector<2x18x1x32xf32>
    tpu.vector_store %arg13[%c0_30, %c0_31, %c17_32, %c0_33], %7 {strides = array<i32>} : memref<2x18x18x32xf32, #tpu.memory_space<vmem>>, vector<2x18x1x32xf32>,
    %c0_34 = arith.constant 0 : index
    %c0_35 = arith.constant 0 : index
    %c0_36 = arith.constant 0 : index
    %c0_37 = arith.constant 0 : index
    %12 = vector.load %arg12[%c0_34, %c0_35, %c0_36, %c0_37] : memref<2x18x18x8xf32, #tpu.memory_space<vmem>>, vector<2x16x16x8xf32>
    %13 = vector.shape_cast %12 : vector<2x16x16x8xf32> to vector<512x8xf32>
    %c0_38 = arith.constant 0 : index
    %c0_39 = arith.constant 0 : index
    %c1_40 = arith.constant 1 : index
    %c0_41 = arith.constant 0 : index
    %14 = vector.load %arg12[%c0_38, %c0_39, %c1_40, %c0_41] : memref<2x18x18x8xf32, #tpu.memory_space<vmem>>, vector<2x16x16x8xf32>
    %15 = vector.shape_cast %14 : vector<2x16x16x8xf32> to vector<512x8xf32>
    %c0_42 = arith.constant 0 : index
    %c0_43 = arith.constant 0 : index
    %c2 = arith.constant 2 : index
    %c0_44 = arith.constant 0 : index
    %16 = vector.load %arg12[%c0_42, %c0_43, %c2, %c0_44] : memref<2x18x18x8xf32, #tpu.memory_space<vmem>>, vector<2x16x16x8xf32>
    %17 = vector.shape_cast %16 : vector<2x16x16x8xf32> to vector<512x8xf32>
    %c0_45 = arith.constant 0 : index
    %c1_46 = arith.constant 1 : index
    %c0_47 = arith.constant 0 : index
    %c0_48 = arith.constant 0 : index
    %18 = vector.load %arg12[%c0_45, %c1_46, %c0_47, %c0_48] : memref<2x18x18x8xf32, #tpu.memory_space<vmem>>, vector<2x16x16x8xf32>
    %19 = vector.shape_cast %18 : vector<2x16x16x8xf32> to vector<512x8xf32>
    %c0_49 = arith.constant 0 : index
    %c1_50 = arith.constant 1 : index
    %c1_51 = arith.constant 1 : index
    %c0_52 = arith.constant 0 : index
    %20 = vector.load %arg12[%c0_49, %c1_50, %c1_51, %c0_52] : memref<2x18x18x8xf32, #tpu.memory_space<vmem>>, vector<2x16x16x8xf32>
    %21 = vector.shape_cast %20 : vector<2x16x16x8xf32> to vector<512x8xf32>
    %c0_53 = arith.constant 0 : index
    %c1_54 = arith.constant 1 : index
    %c2_55 = arith.constant 2 : index
    %c0_56 = arith.constant 0 : index
    %22 = vector.load %arg12[%c0_53, %c1_54, %c2_55, %c0_56] : memref<2x18x18x8xf32, #tpu.memory_space<vmem>>, vector<2x16x16x8xf32>
    %23 = vector.shape_cast %22 : vector<2x16x16x8xf32> to vector<512x8xf32>
    %c0_57 = arith.constant 0 : index
    %c2_58 = arith.constant 2 : index
    %c0_59 = arith.constant 0 : index
    %c0_60 = arith.constant 0 : index
    %24 = vector.load %arg12[%c0_57, %c2_58, %c0_59, %c0_60] : memref<2x18x18x8xf32, #tpu.memory_space<vmem>>, vector<2x16x16x8xf32>
    %25 = vector.shape_cast %24 : vector<2x16x16x8xf32> to vector<512x8xf32>
    %c0_61 = arith.constant 0 : index
    %c2_62 = arith.constant 2 : index
    %c1_63 = arith.constant 1 : index
    %c0_64 = arith.constant 0 : index
    %26 = vector.load %arg12[%c0_61, %c2_62, %c1_63, %c0_64] : memref<2x18x18x8xf32, #tpu.memory_space<vmem>>, vector<2x16x16x8xf32>
    %27 = vector.shape_cast %26 : vector<2x16x16x8xf32> to vector<512x8xf32>
    %c0_65 = arith.constant 0 : index
    %c2_66 = arith.constant 2 : index
    %c2_67 = arith.constant 2 : index
    %c0_68 = arith.constant 0 : index
    %28 = vector.load %arg12[%c0_65, %c2_66, %c2_67, %c0_68] : memref<2x18x18x8xf32, #tpu.memory_space<vmem>>, vector<2x16x16x8xf32>
    %29 = vector.shape_cast %28 : vector<2x16x16x8xf32> to vector<512x8xf32>
    %30 = tpu.concatenate %13, %15, %17, %19, %21, %23, %25, %27, %29 in 1 : vector<512x8xf32>, vector<512x8xf32>, vector<512x8xf32>, vector<512x8xf32>, vector<512x8xf32>, vector<512x8xf32>, vector<512x8xf32>, vector<512x8xf32>, vector<512x8xf32> -> vector<512x72xf32>
    %31 = arith.truncf %30 : vector<512x72xf32> to vector<512x72xbf16>
    %c0_69 = arith.constant 0 : index
    %c0_70 = arith.constant 0 : index
    %32 = vector.load %arg3[%c0_69, %c0_70] : memref<72x32xbf16, #tpu.memory_space<vmem>>, vector<72x32xbf16>
    %cst_71 = arith.constant dense<0.000000e+00> : vector<512x32xf32>
    %33 = tpu.matmul %31, %32, %cst_71 {dimension_numbers = #tpu.dot_dimension_numbers<[1], [0], [0], [1], [0, 0, 1, 1], [], []>} : vector<512x72xbf16>, vector<72x32xbf16>, vector<512x32xf32> -> vector<512x32xf32>
    %c0_72 = arith.constant 0 : index
    %c0_73 = arith.constant 0 : index
    %34 = vector.load %arg4[%c0_72, %c0_73] : memref<1x32xf32, #tpu.memory_space<vmem>>, vector<1x32xf32>
    %35 = vector.broadcast %34 : vector<1x32xf32> to vector<512x32xf32>
    %36 = arith.addf %33, %35 : vector<512x32xf32>
    %c0_74 = arith.constant 0 : index
    %c0_75 = arith.constant 0 : index
    %37 = vector.load %arg5[%c0_74, %c0_75] : memref<1x1xf32, #tpu.memory_space<vmem>>, vector<1x1xf32>
    %38 = vector.extract %37[0, 0] : f32 from vector<1x1xf32>
    %cst_76 = arith.constant 0.000000e+00 : f32
    %39 = vector.broadcast %cst_76 : f32 to vector<512x32xf32>
    %40 = arith.cmpf ogt, %36, %39 : vector<512x32xf32>
    %41 = vector.broadcast %38 : f32 to vector<512x32xf32>
    %42 = arith.mulf %41, %36 : vector<512x32xf32>
    %43 = arith.select %40, %36, %42 : vector<512x32xi1>, vector<512x32xf32>
    %44 = vector.shape_cast %43 : vector<512x32xf32> to vector<2x16x16x32xf32>
    %c0_77 = arith.constant 0 : index
    %c1_78 = arith.constant 1 : index
    %c1_79 = arith.constant 1 : index
    %c0_80 = arith.constant 0 : index
    %45 = vector.load %arg13[%c0_77, %c1_78, %c1_79, %c0_80] : memref<2x18x18x32xf32, #tpu.memory_space<vmem>>, vector<2x16x16x32xf32>
    tpu.vector_store %arg13[%c0_77, %c1_78, %c1_79, %c0_80], %44 {strides = array<i32>} : memref<2x18x18x32xf32, #tpu.memory_space<vmem>>, vector<2x16x16x32xf32>,
    %c0_81 = arith.constant 0 : index
    %c0_82 = arith.constant 0 : index
    %c0_83 = arith.constant 0 : index
    %c0_84 = arith.constant 0 : index
    %46 = vector.load %arg13[%c0_81, %c0_82, %c0_83, %c0_84] : memref<2x18x18x32xf32, #tpu.memory_space<vmem>>, vector<2x16x16x32xf32>
    %47 = vector.shape_cast %46 : vector<2x16x16x32xf32> to vector<512x32xf32>
    %c0_85 = arith.constant 0 : index
    %c0_86 = arith.constant 0 : index
    %c1_87 = arith.constant 1 : index
    %c0_88 = arith.constant 0 : index
    %48 = vector.load %arg13[%c0_85, %c0_86, %c1_87, %c0_88] : memref<2x18x18x32xf32, #tpu.memory_space<vmem>>, vector<2x16x16x32xf32>
    %49 = vector.shape_cast %48 : vector<2x16x16x32xf32> to vector<512x32xf32>
    %c0_89 = arith.constant 0 : index
    %c0_90 = arith.constant 0 : index
    %c2_91 = arith.constant 2 : index
    %c0_92 = arith.constant 0 : index
    %50 = vector.load %arg13[%c0_89, %c0_90, %c2_91, %c0_92] : memref<2x18x18x32xf32, #tpu.memory_space<vmem>>, vector<2x16x16x32xf32>
    %51 = vector.shape_cast %50 : vector<2x16x16x32xf32> to vector<512x32xf32>
    %c0_93 = arith.constant 0 : index
    %c1_94 = arith.constant 1 : index
    %c0_95 = arith.constant 0 : index
    %c0_96 = arith.constant 0 : index
    %52 = vector.load %arg13[%c0_93, %c1_94, %c0_95, %c0_96] : memref<2x18x18x32xf32, #tpu.memory_space<vmem>>, vector<2x16x16x32xf32>
    %53 = vector.shape_cast %52 : vector<2x16x16x32xf32> to vector<512x32xf32>
    %c0_97 = arith.constant 0 : index
    %c1_98 = arith.constant 1 : index
    %c1_99 = arith.constant 1 : index
    %c0_100 = arith.constant 0 : index
    %54 = vector.load %arg13[%c0_97, %c1_98, %c1_99, %c0_100] : memref<2x18x18x32xf32, #tpu.memory_space<vmem>>, vector<2x16x16x32xf32>
    %55 = vector.shape_cast %54 : vector<2x16x16x32xf32> to vector<512x32xf32>
    %c0_101 = arith.constant 0 : index
    %c1_102 = arith.constant 1 : index
    %c2_103 = arith.constant 2 : index
    %c0_104 = arith.constant 0 : index
    %56 = vector.load %arg13[%c0_101, %c1_102, %c2_103, %c0_104] : memref<2x18x18x32xf32, #tpu.memory_space<vmem>>, vector<2x16x16x32xf32>
    %57 = vector.shape_cast %56 : vector<2x16x16x32xf32> to vector<512x32xf32>
    %c0_105 = arith.constant 0 : index
    %c2_106 = arith.constant 2 : index
    %c0_107 = arith.constant 0 : index
    %c0_108 = arith.constant 0 : index
    %58 = vector.load %arg13[%c0_105, %c2_106, %c0_107, %c0_108] : memref<2x18x18x32xf32, #tpu.memory_space<vmem>>, vector<2x16x16x32xf32>
    %59 = vector.shape_cast %58 : vector<2x16x16x32xf32> to vector<512x32xf32>
    %c0_109 = arith.constant 0 : index
    %c2_110 = arith.constant 2 : index
    %c1_111 = arith.constant 1 : index
    %c0_112 = arith.constant 0 : index
    %60 = vector.load %arg13[%c0_109, %c2_110, %c1_111, %c0_112] : memref<2x18x18x32xf32, #tpu.memory_space<vmem>>, vector<2x16x16x32xf32>
    %61 = vector.shape_cast %60 : vector<2x16x16x32xf32> to vector<512x32xf32>
    %c0_113 = arith.constant 0 : index
    %c2_114 = arith.constant 2 : index
    %c2_115 = arith.constant 2 : index
    %c0_116 = arith.constant 0 : index
    %62 = vector.load %arg13[%c0_113, %c2_114, %c2_115, %c0_116] : memref<2x18x18x32xf32, #tpu.memory_space<vmem>>, vector<2x16x16x32xf32>
    %63 = vector.shape_cast %62 : vector<2x16x16x32xf32> to vector<512x32xf32>
    %64 = tpu.concatenate %47, %49, %51, %53, %55, %57, %59, %61, %63 in 1 : vector<512x32xf32>, vector<512x32xf32>, vector<512x32xf32>, vector<512x32xf32>, vector<512x32xf32>, vector<512x32xf32>, vector<512x32xf32>, vector<512x32xf32>, vector<512x32xf32> -> vector<512x288xf32>
    %65 = arith.truncf %64 : vector<512x288xf32> to vector<512x288xbf16>
    %c0_117 = arith.constant 0 : index
    %c0_118 = arith.constant 0 : index
    %66 = vector.load %arg6[%c0_117, %c0_118] : memref<288x32xbf16, #tpu.memory_space<vmem>>, vector<288x32xbf16>
    %cst_119 = arith.constant dense<0.000000e+00> : vector<512x32xf32>
    %67 = tpu.matmul %65, %66, %cst_119 {dimension_numbers = #tpu.dot_dimension_numbers<[1], [0], [0], [1], [0, 0, 1, 1], [], []>} : vector<512x288xbf16>, vector<288x32xbf16>, vector<512x32xf32> -> vector<512x32xf32>
    %c0_120 = arith.constant 0 : index
    %c0_121 = arith.constant 0 : index
    %68 = vector.load %arg7[%c0_120, %c0_121] : memref<1x32xf32, #tpu.memory_space<vmem>>, vector<1x32xf32>
    %69 = vector.broadcast %68 : vector<1x32xf32> to vector<512x32xf32>
    %70 = arith.addf %67, %69 : vector<512x32xf32>
    %c0_122 = arith.constant 0 : index
    %c0_123 = arith.constant 0 : index
    %71 = vector.load %arg8[%c0_122, %c0_123] : memref<1x1xf32, #tpu.memory_space<vmem>>, vector<1x1xf32>
    %72 = vector.extract %71[0, 0] : f32 from vector<1x1xf32>
    %cst_124 = arith.constant 0.000000e+00 : f32
    %73 = vector.broadcast %cst_124 : f32 to vector<512x32xf32>
    %74 = arith.cmpf ogt, %70, %73 : vector<512x32xf32>
    %75 = vector.broadcast %72 : f32 to vector<512x32xf32>
    %76 = arith.mulf %75, %70 : vector<512x32xf32>
    %77 = arith.select %74, %70, %76 : vector<512x32xi1>, vector<512x32xf32>
    %78 = vector.shape_cast %77 : vector<512x32xf32> to vector<2x16x16x32xf32>
    %c0_125 = arith.constant 0 : index
    %c1_126 = arith.constant 1 : index
    %c1_127 = arith.constant 1 : index
    %c0_128 = arith.constant 0 : index
    %79 = vector.load %arg13[%c0_125, %c1_126, %c1_127, %c0_128] : memref<2x18x18x32xf32, #tpu.memory_space<vmem>>, vector<2x16x16x32xf32>
    tpu.vector_store %arg13[%c0_125, %c1_126, %c1_127, %c0_128], %78 {strides = array<i32>} : memref<2x18x18x32xf32, #tpu.memory_space<vmem>>, vector<2x16x16x32xf32>,
    %c0_129 = arith.constant 0 : index
    %c0_130 = arith.constant 0 : index
    %c0_131 = arith.constant 0 : index
    %c0_132 = arith.constant 0 : index
    %80 = vector.load %arg13[%c0_129, %c0_130, %c0_131, %c0_132] : memref<2x18x18x32xf32, #tpu.memory_space<vmem>>, vector<2x16x16x32xf32>
    %81 = vector.shape_cast %80 : vector<2x16x16x32xf32> to vector<512x32xf32>
    %c0_133 = arith.constant 0 : index
    %c0_134 = arith.constant 0 : index
    %c1_135 = arith.constant 1 : index
    %c0_136 = arith.constant 0 : index
    %82 = vector.load %arg13[%c0_133, %c0_134, %c1_135, %c0_136] : memref<2x18x18x32xf32, #tpu.memory_space<vmem>>, vector<2x16x16x32xf32>
    %83 = vector.shape_cast %82 : vector<2x16x16x32xf32> to vector<512x32xf32>
    %c0_137 = arith.constant 0 : index
    %c0_138 = arith.constant 0 : index
    %c2_139 = arith.constant 2 : index
    %c0_140 = arith.constant 0 : index
    %84 = vector.load %arg13[%c0_137, %c0_138, %c2_139, %c0_140] : memref<2x18x18x32xf32, #tpu.memory_space<vmem>>, vector<2x16x16x32xf32>
    %85 = vector.shape_cast %84 : vector<2x16x16x32xf32> to vector<512x32xf32>
    %c0_141 = arith.constant 0 : index
    %c1_142 = arith.constant 1 : index
    %c0_143 = arith.constant 0 : index
    %c0_144 = arith.constant 0 : index
    %86 = vector.load %arg13[%c0_141, %c1_142, %c0_143, %c0_144] : memref<2x18x18x32xf32, #tpu.memory_space<vmem>>, vector<2x16x16x32xf32>
    %87 = vector.shape_cast %86 : vector<2x16x16x32xf32> to vector<512x32xf32>
    %c0_145 = arith.constant 0 : index
    %c1_146 = arith.constant 1 : index
    %c1_147 = arith.constant 1 : index
    %c0_148 = arith.constant 0 : index
    %88 = vector.load %arg13[%c0_145, %c1_146, %c1_147, %c0_148] : memref<2x18x18x32xf32, #tpu.memory_space<vmem>>, vector<2x16x16x32xf32>
    %89 = vector.shape_cast %88 : vector<2x16x16x32xf32> to vector<512x32xf32>
    %c0_149 = arith.constant 0 : index
    %c1_150 = arith.constant 1 : index
    %c2_151 = arith.constant 2 : index
    %c0_152 = arith.constant 0 : index
    %90 = vector.load %arg13[%c0_149, %c1_150, %c2_151, %c0_152] : memref<2x18x18x32xf32, #tpu.memory_space<vmem>>, vector<2x16x16x32xf32>
    %91 = vector.shape_cast %90 : vector<2x16x16x32xf32> to vector<512x32xf32>
    %c0_153 = arith.constant 0 : index
    %c2_154 = arith.constant 2 : index
    %c0_155 = arith.constant 0 : index
    %c0_156 = arith.constant 0 : index
    %92 = vector.load %arg13[%c0_153, %c2_154, %c0_155, %c0_156] : memref<2x18x18x32xf32, #tpu.memory_space<vmem>>, vector<2x16x16x32xf32>
    %93 = vector.shape_cast %92 : vector<2x16x16x32xf32> to vector<512x32xf32>
    %c0_157 = arith.constant 0 : index
    %c2_158 = arith.constant 2 : index
    %c1_159 = arith.constant 1 : index
    %c0_160 = arith.constant 0 : index
    %94 = vector.load %arg13[%c0_157, %c2_158, %c1_159, %c0_160] : memref<2x18x18x32xf32, #tpu.memory_space<vmem>>, vector<2x16x16x32xf32>
    %95 = vector.shape_cast %94 : vector<2x16x16x32xf32> to vector<512x32xf32>
    %c0_161 = arith.constant 0 : index
    %c2_162 = arith.constant 2 : index
    %c2_163 = arith.constant 2 : index
    %c0_164 = arith.constant 0 : index
    %96 = vector.load %arg13[%c0_161, %c2_162, %c2_163, %c0_164] : memref<2x18x18x32xf32, #tpu.memory_space<vmem>>, vector<2x16x16x32xf32>
    %97 = vector.shape_cast %96 : vector<2x16x16x32xf32> to vector<512x32xf32>
    %98 = tpu.concatenate %81, %83, %85, %87, %89, %91, %93, %95, %97 in 1 : vector<512x32xf32>, vector<512x32xf32>, vector<512x32xf32>, vector<512x32xf32>, vector<512x32xf32>, vector<512x32xf32>, vector<512x32xf32>, vector<512x32xf32>, vector<512x32xf32> -> vector<512x288xf32>
    %99 = arith.truncf %98 : vector<512x288xf32> to vector<512x288xbf16>
    %c0_165 = arith.constant 0 : index
    %c0_166 = arith.constant 0 : index
    %100 = vector.load %arg9[%c0_165, %c0_166] : memref<288x4xbf16, #tpu.memory_space<vmem>>, vector<288x4xbf16>
    %cst_167 = arith.constant dense<0.000000e+00> : vector<512x4xf32>
    %101 = tpu.matmul %99, %100, %cst_167 {dimension_numbers = #tpu.dot_dimension_numbers<[1], [0], [0], [1], [0, 0, 1, 1], [], []>} : vector<512x288xbf16>, vector<288x4xbf16>, vector<512x4xf32> -> vector<512x4xf32>
    %c0_168 = arith.constant 0 : index
    %c0_169 = arith.constant 0 : index
    %102 = vector.load %arg10[%c0_168, %c0_169] : memref<1x4xf32, #tpu.memory_space<vmem>>, vector<1x4xf32>
    %103 = vector.broadcast %102 : vector<1x4xf32> to vector<512x4xf32>
    %104 = arith.addf %101, %103 : vector<512x4xf32>
    %c0_170 = arith.constant 0 : index
    %c0_171 = arith.constant 0 : index
    %c0_172 = arith.constant 0 : index
    %c0_173 = arith.constant 0 : index
    %105 = vector.load %arg1[%c0_170, %c0_171, %c0_172, %c0_173] : memref<2x16x16x4xf32, #tpu.memory_space<vmem>>, vector<2x16x16x4xf32>
    %106 = vector.shape_cast %104 : vector<512x4xf32> to vector<2x16x16x4xf32>
    %107 = arith.addf %105, %106 : vector<2x16x16x4xf32>
    %c0_174 = arith.constant 0 : index
    %c0_175 = arith.constant 0 : index
    %c0_176 = arith.constant 0 : index
    %c0_177 = arith.constant 0 : index
    %108 = vector.load %arg11[%c0_174, %c0_175, %c0_176, %c0_177] : memref<2x16x16x4xf32, #tpu.memory_space<vmem>>, vector<2x16x16x4xf32>
    tpu.vector_store %arg11[%c0_174, %c0_175, %c0_176, %c0_177], %107 {strides = array<i32>} : memref<2x16x16x4xf32, #tpu.memory_space<vmem>>, vector<2x16x16x4xf32>,
    return
  }
  func.func @transform_0(%arg0: i32) -> (i32, i32, i32, i32) {
    %c0_i32 = arith.constant 0 : i32
    %c0_i32_0 = arith.constant 0 : i32
    %c0_i32_1 = arith.constant 0 : i32
    %c0_i32_2 = arith.constant 0 : i32
    return %arg0, %c0_i32, %c0_i32_0, %c0_i32_1 : i32, i32, i32, i32
  }
  func.func @transform_1(%arg0: i32) -> (i32, i32, i32, i32) {
    %c0_i32 = arith.constant 0 : i32
    %c0_i32_0 = arith.constant 0 : i32
    %c0_i32_1 = arith.constant 0 : i32
    %c0_i32_2 = arith.constant 0 : i32
    return %arg0, %c0_i32, %c0_i32_0, %c0_i32_1 : i32, i32, i32, i32
  }
  func.func @transform_2(%arg0: i32) -> (i32, i32) {
    %c0_i32 = arith.constant 0 : i32
    %c0_i32_0 = arith.constant 0 : i32
    %c0_i32_1 = arith.constant 0 : i32
    return %c0_i32, %c0_i32_0 : i32, i32
  }
  func.func @transform_3(%arg0: i32) -> (i32, i32) {
    %c0_i32 = arith.constant 0 : i32
    %c0_i32_0 = arith.constant 0 : i32
    %c0_i32_1 = arith.constant 0 : i32
    return %c0_i32, %c0_i32_0 : i32, i32
  }
  func.func @transform_4(%arg0: i32) -> (i32, i32) {
    %c0_i32 = arith.constant 0 : i32
    %c0_i32_0 = arith.constant 0 : i32
    %c0_i32_1 = arith.constant 0 : i32
    return %c0_i32, %c0_i32_0 : i32, i32
  }
  func.func @transform_5(%arg0: i32) -> (i32, i32) {
    %c0_i32 = arith.constant 0 : i32
    %c0_i32_0 = arith.constant 0 : i32
    %c0_i32_1 = arith.constant 0 : i32
    return %c0_i32, %c0_i32_0 : i32, i32
  }
  func.func @transform_6(%arg0: i32) -> (i32, i32) {
    %c0_i32 = arith.constant 0 : i32
    %c0_i32_0 = arith.constant 0 : i32
    %c0_i32_1 = arith.constant 0 : i32
    return %c0_i32, %c0_i32_0 : i32, i32
  }
  func.func @transform_7(%arg0: i32) -> (i32, i32) {
    %c0_i32 = arith.constant 0 : i32
    %c0_i32_0 = arith.constant 0 : i32
    %c0_i32_1 = arith.constant 0 : i32
    return %c0_i32, %c0_i32_0 : i32, i32
  }
  func.func @transform_8(%arg0: i32) -> (i32, i32) {
    %c0_i32 = arith.constant 0 : i32
    %c0_i32_0 = arith.constant 0 : i32
    %c0_i32_1 = arith.constant 0 : i32
    return %c0_i32, %c0_i32_0 : i32, i32
  }
  func.func @transform_9(%arg0: i32) -> (i32, i32) {
    %c0_i32 = arith.constant 0 : i32
    %c0_i32_0 = arith.constant 0 : i32
    %c0_i32_1 = arith.constant 0 : i32
    return %c0_i32, %c0_i32_0 : i32, i32
  }
  func.func @transform_10(%arg0: i32) -> (i32, i32, i32, i32) {
    %c0_i32 = arith.constant 0 : i32
    %c0_i32_0 = arith.constant 0 : i32
    %c0_i32_1 = arith.constant 0 : i32
    %c0_i32_2 = arith.constant 0 : i32
    return %arg0, %c0_i32, %c0_i32_0, %c0_i32_1 : i32, i32, i32, i32
  }
}

</mosaic_0001>

<llo_original>
// kernel: tpu_custom_call.1
$region0: #{tpu_custom_call.1}
  #allocation0 [shape = 'u32[]', space=smem, size = 0x4, offset = 0x4, fixed_abs, tag = 'smem constant byte address 0x4 - core index']
  #allocation1 [shape = 'u32[144,128]{1,0:T(1,128)}', space=vmem, size = 0x12000, scoped, tag = 'internal scratch']
  #allocation2 [shape = 'f32[2,18,18,8]{3,2,1,0:T(8,128)}', space=vmem, size = 0x6c000, scoped, tag = 'scratch operand']
  #allocation3 [shape = 'f32[2,18,18,32]{3,2,1,0:T(8,128)}', space=vmem, size = 0x6c000, scoped, tag = 'scratch operand']
  #allocation4 [shape = 'f32[1,1]{1,0:T(1,128)S(1)}', space=vmem, size = 0x200, scoped, tag = 'scoped memory for tpu_custom_call.1']
  #allocation5 [shape = 'f32[1,1]{1,0:T(1,128)S(1)}', space=vmem, size = 0x200, scoped, tag = 'scoped memory for tpu_custom_call.1']
  %s0 = inlined_call_operand.vmem [shape: f32[2,16,16,4], index: 0, kind: input, shape index: {}]
  %s1 = inlined_call_operand.vmem [shape: f32[2,16,16,1], index: 1, kind: input, shape index: {}]
  %s2 = inlined_call_operand.vmem [shape: bf16[72,32], index: 2, kind: input, shape index: {}]
  %s3 = inlined_call_operand.vmem [shape: f32[1,32], index: 3, kind: input, shape index: {}]
  %s4 = inlined_call_operand.<no memory space> [shape: f32[1,1], index: 4, kind: input, shape index: {}]
  %s5 = inlined_call_operand.vmem [shape: bf16[288,32], index: 5, kind: input, shape index: {}]
  %s6 = inlined_call_operand.vmem [shape: f32[1,32], index: 6, kind: input, shape index: {}]
  %s7 = inlined_call_operand.<no memory space> [shape: f32[1,1], index: 7, kind: input, shape index: {}]
  %s8 = inlined_call_operand.vmem [shape: bf16[288,4], index: 8, kind: input, shape index: {}]
  %s9 = inlined_call_operand.vmem [shape: f32[1,4], index: 9, kind: input, shape index: {}]
  %s10 = inlined_call_operand.vmem [shape: f32[2,16,16,4], index: 10, kind: output, shape index: {}]
  %s11 = sld [smem:[#allocation0]]
  $region50: #{tpu_custom_call.1} parent=0
    _
  %s13 = ssub.s32 1, %s11
  %s14 = scalar_select 0, %s13, %s11
  %v15 = vstv %s4
  %16 = vst [vmem:[#allocation4] sm:$0x1] %v15
  %v17 = vstv %s7
  %18 = vst [vmem:[#allocation5] sm:$0x1] %v17
  // Predicated region
  $region2: #{tpu_custom_call.1} parent=0 // pred_check
    _
  $region3: #{tpu_custom_call.1} parent=0 // pred_check_branch
    %20 = sbr.rel (0) target = $region5
  $region4: #{tpu_custom_call.1} parent=0 // pred_region
    _
  $region5: #{tpu_custom_call.1} parent=0 // pred_fallthru
    _
  // Predicated region
  $region6: #{tpu_custom_call.1} parent=0 // pred_check
    _
  $region7: #{tpu_custom_call.1} parent=0 // pred_check_branch
    %22 = sbr.rel (0) target = $region9
  $region8: #{tpu_custom_call.1} parent=0 // pred_region
    _
  $region9: #{tpu_custom_call.1} parent=0 // pred_fallthru
    _
  // Predicated region
  $region10: #{tpu_custom_call.1} parent=0 // pred_check
    _
  $region11: #{tpu_custom_call.1} parent=0 // pred_check_branch
    %24 = sbr.rel (0) target = $region13
  $region12: #{tpu_custom_call.1} parent=0 // pred_region
    _
  $region13: #{tpu_custom_call.1} parent=0 // pred_fallthru
    _
  // Predicated region
  $region14: #{tpu_custom_call.1} parent=0 // pred_check
    _
  $region15: #{tpu_custom_call.1} parent=0 // pred_check_branch
    %26 = sbr.rel (0) target = $region17
  $region16: #{tpu_custom_call.1} parent=0 // pred_region
    _
  $region17: #{tpu_custom_call.1} parent=0 // pred_fallthru
    _
  // Predicated region
  $region18: #{tpu_custom_call.1} parent=0 // pred_check
    _
  $region19: #{tpu_custom_call.1} parent=0 // pred_check_branch
    %28 = sbr.rel (0) target = $region21
  $region20: #{tpu_custom_call.1} parent=0 // pred_region
    _
  $region21: #{tpu_custom_call.1} parent=0 // pred_fallthru
    _
  // Predicated region
  $region22: #{tpu_custom_call.1} parent=0 // pred_check
    _
  $region23: #{tpu_custom_call.1} parent=0 // pred_check_branch
    %30 = sbr.rel (0) target = $region25
  $region24: #{tpu_custom_call.1} parent=0 // pred_region
    _
  $region25: #{tpu_custom_call.1} parent=0 // pred_fallthru
    _
  // Predicated region
  $region26: #{tpu_custom_call.1} parent=0 // pred_check
    _
  $region27: #{tpu_custom_call.1} parent=0 // pred_check_branch
    %32 = sbr.rel (0) target = $region29
  $region28: #{tpu_custom_call.1} parent=0 // pred_region
    _
  $region29: #{tpu_custom_call.1} parent=0 // pred_fallthru
    _
  // Predicated region
  $region30: #{tpu_custom_call.1} parent=0 // pred_check
    _
  $region31: #{tpu_custom_call.1} parent=0 // pred_check_branch
    %34 = sbr.rel (0) target = $region33
  $region32: #{tpu_custom_call.1} parent=0 // pred_region
    _
  $region33: #{tpu_custom_call.1} parent=0 // pred_fallthru
    _
  // Predicated region
  $region34: #{tpu_custom_call.1} parent=0 // pred_check
    _
  $region35: #{tpu_custom_call.1} parent=0 // pred_check_branch
    %36 = sbr.rel (0) target = $region37
  $region36: #{tpu_custom_call.1} parent=0 // pred_region
    _
  $region37: #{tpu_custom_call.1} parent=0 // pred_fallthru
    _
  // Predicated region
  $region38: #{tpu_custom_call.1} parent=0 // pred_check
    _
  $region39: #{tpu_custom_call.1} parent=0 // pred_check_branch
    %38 = sbr.rel (0) target = $region41
  $region40: #{tpu_custom_call.1} parent=0 // pred_region
    _
  $region41: #{tpu_custom_call.1} parent=0 // pred_fallthru
    _
  %vm40 = vcmask 64512
  %41 = vst.msk [vmem:[#allocation2] sm:$0xff] %vm40, 0.0
  %42 = vst.msk [vmem:[#allocation2 + $0x8] sm:$0xff] %vm40, 0.0
  %vm43 = vcmask 58368
  %44 = vst.msk [vmem:[#allocation2 + $0x10] sm:$0x3] %vm43, 0.0
  %45 = vst.msk [vmem:[#allocation2 + $0x18] sm:$0xff] %vm40, 0.0
  %46 = vst.msk [vmem:[#allocation2 + $0x20] sm:$0xff] %vm40, 0.0
  %47 = vst.msk [vmem:[#allocation2 + $0x28] sm:$0x3] %vm43, 0.0
  %48 = vst.msk [vmem:[#allocation2 + $0x30] sm:$0xff] %vm40, 0.0
  %49 = vst.msk [vmem:[#allocation2 + $0x38] sm:$0xff] %vm40, 0.0
  %50 = vst.msk [vmem:[#allocation2 + $0x40] sm:$0x3] %vm43, 0.0
  %51 = vst.msk [vmem:[#allocation2 + $0x48] sm:$0xff] %vm40, 0.0
  %52 = vst.msk [vmem:[#allocation2 + $0x50] sm:$0xff] %vm40, 0.0
  %53 = vst.msk [vmem:[#allocation2 + $0x58] sm:$0x3] %vm43, 0.0
  %54 = vst.msk [vmem:[#allocation2 + $0x60] sm:$0xff] %vm40, 0.0
  %55 = vst.msk [vmem:[#allocation2 + $0x68] sm:$0xff] %vm40, 0.0
  %56 = vst.msk [vmem:[#allocation2 + $0x70] sm:$0x3] %vm43, 0.0
  %57 = vst.msk [vmem:[#allocation2 + $0x78] sm:$0xff] %vm40, 0.0
  %58 = vst.msk [vmem:[#allocation2 + $0x80] sm:$0xff] %vm40, 0.0
  %59 = vst.msk [vmem:[#allocation2 + $0x88] sm:$0x3] %vm43, 0.0
  %60 = vst.msk [vmem:[#allocation2 + $0x90] sm:$0xff] %vm40, 0.0
  %61 = vst.msk [vmem:[#allocation2 + $0x98] sm:$0xff] %vm40, 0.0
  %62 = vst.msk [vmem:[#allocation2 + $0xa0] sm:$0x3] %vm43, 0.0
  %63 = vst.msk [vmem:[#allocation2 + $0xa8] sm:$0xff] %vm40, 0.0
  %64 = vst.msk [vmem:[#allocation2 + $0xb0] sm:$0xff] %vm40, 0.0
  %65 = vst.msk [vmem:[#allocation2 + $0xb8] sm:$0x3] %vm43, 0.0
  %66 = vst.msk [vmem:[#allocation2 + $0xc0] sm:$0xff] %vm40, 0.0
  %67 = vst.msk [vmem:[#allocation2 + $0xc8] sm:$0xff] %vm40, 0.0
  %68 = vst.msk [vmem:[#allocation2 + $0xd0] sm:$0x3] %vm43, 0.0
  %69 = vst.msk [vmem:[#allocation2 + $0xd8] sm:$0xff] %vm40, 0.0
  %70 = vst.msk [vmem:[#allocation2 + $0xe0] sm:$0xff] %vm40, 0.0
  %71 = vst.msk [vmem:[#allocation2 + $0xe8] sm:$0x3] %vm43, 0.0
  %72 = vst.msk [vmem:[#allocation2 + $0xf0] sm:$0xff] %vm40, 0.0
  %73 = vst.msk [vmem:[#allocation2 + $0xf8] sm:$0xff] %vm40, 0.0
  %74 = vst.msk [vmem:[#allocation2 + $0x100] sm:$0x3] %vm43, 0.0
  %75 = vst.msk [vmem:[#allocation2 + $0x108] sm:$0xff] %vm40, 0.0
  %76 = vst.msk [vmem:[#allocation2 + $0x110] sm:$0xff] %vm40, 0.0
  %77 = vst.msk [vmem:[#allocation2 + $0x118] sm:$0x3] %vm43, 0.0
  %78 = vst.msk [vmem:[#allocation2 + $0x120] sm:$0xff] %vm40, 0.0
  %79 = vst.msk [vmem:[#allocation2 + $0x128] sm:$0xff] %vm40, 0.0
  %80 = vst.msk [vmem:[#allocation2 + $0x130] sm:$0x3] %vm43, 0.0
  %81 = vst.msk [vmem:[#allocation2 + $0x138] sm:$0xff] %vm40, 0.0
  %82 = vst.msk [vmem:[#allocation2 + $0x140] sm:$0xff] %vm40, 0.0
  %83 = vst.msk [vmem:[#allocation2 + $0x148] sm:$0x3] %vm43, 0.0
  %84 = vst.msk [vmem:[#allocation2 + $0x150] sm:$0xff] %vm40, 0.0
  %85 = vst.msk [vmem:[#allocation2 + $0x158] sm:$0xff] %vm40, 0.0
  %86 = vst.msk [vmem:[#allocation2 + $0x160] sm:$0x3] %vm43, 0.0
  %87 = vst.msk [vmem:[#allocation2 + $0x168] sm:$0xff] %vm40, 0.0
  %88 = vst.msk [vmem:[#allocation2 + $0x170] sm:$0xff] %vm40, 0.0
  %89 = vst.msk [vmem:[#allocation2 + $0x178] sm:$0x3] %vm43, 0.0
  %90 = vst.msk [vmem:[#allocation2 + $0x180] sm:$0xff] %vm40, 0.0
  %91 = vst.msk [vmem:[#allocation2 + $0x188] sm:$0xff] %vm40, 0.0
  %92 = vst.msk [vmem:[#allocation2 + $0x190] sm:$0x3] %vm43, 0.0
  %93 = vst.msk [vmem:[#allocation2 + $0x198] sm:$0xff] %vm40, 0.0
  %94 = vst.msk [vmem:[#allocation2 + $0x1a0] sm:$0xff] %vm40, 0.0
  %95 = vst.msk [vmem:[#allocation2 + $0x1a8] sm:$0x3] %vm43, 0.0
  %96 = vst.msk [vmem:[#allocation2 + $0x1b0] sm:$0xff] %vm40, 0.0
  %97 = vst.msk [vmem:[#allocation2 + $0x1b8] sm:$0xff] %vm40, 0.0
  %98 = vst.msk [vmem:[#allocation2 + $0x1c0] sm:$0x3] %vm43, 0.0
  %99 = vst.msk [vmem:[#allocation2 + $0x1c8] sm:$0xff] %vm40, 0.0
  %100 = vst.msk [vmem:[#allocation2 + $0x1d0] sm:$0xff] %vm40, 0.0
  %101 = vst.msk [vmem:[#allocation2 + $0x1d8] sm:$0x3] %vm43, 0.0
  %102 = vst.msk [vmem:[#allocation2 + $0x1e0] sm:$0xff] %vm40, 0.0
  %103 = vst.msk [vmem:[#allocation2 + $0x1e8] sm:$0xff] %vm40, 0.0
  %104 = vst.msk [vmem:[#allocation2 + $0x1f0] sm:$0x3] %vm43, 0.0
  %105 = vst.msk [vmem:[#allocation2 + $0x1f8] sm:$0xff] %vm40, 0.0
  %106 = vst.msk [vmem:[#allocation2 + $0x200] sm:$0xff] %vm40, 0.0
  %107 = vst.msk [vmem:[#allocation2 + $0x208] sm:$0x3] %vm43, 0.0
  %108 = vst.msk [vmem:[#allocation2 + $0x210] sm:$0xff] %vm40, 0.0
  %109 = vst.msk [vmem:[#allocation2 + $0x218] sm:$0xff] %vm40, 0.0
  %110 = vst.msk [vmem:[#allocation2 + $0x220] sm:$0x3] %vm43, 0.0
  %111 = vst.msk [vmem:[#allocation2 + $0x228] sm:$0xff] %vm40, 0.0
  %112 = vst.msk [vmem:[#allocation2 + $0x230] sm:$0xff] %vm40, 0.0
  %113 = vst.msk [vmem:[#allocation2 + $0x238] sm:$0x3] %vm43, 0.0
  %114 = vst.msk [vmem:[#allocation2 + $0x240] sm:$0xff] %vm40, 0.0
  %115 = vst.msk [vmem:[#allocation2 + $0x248] sm:$0xff] %vm40, 0.0
  %116 = vst.msk [vmem:[#allocation2 + $0x250] sm:$0x3] %vm43, 0.0
  %117 = vst.msk [vmem:[#allocation2 + $0x258] sm:$0xff] %vm40, 0.0
  %118 = vst.msk [vmem:[#allocation2 + $0x260] sm:$0xff] %vm40, 0.0
  %119 = vst.msk [vmem:[#allocation2 + $0x268] sm:$0x3] %vm43, 0.0
  %120 = vst.msk [vmem:[#allocation2 + $0x270] sm:$0xff] %vm40, 0.0
  %121 = vst.msk [vmem:[#allocation2 + $0x278] sm:$0xff] %vm40, 0.0
  %122 = vst.msk [vmem:[#allocation2 + $0x280] sm:$0x3] %vm43, 0.0
  %123 = vst.msk [vmem:[#allocation2 + $0x288] sm:$0xff] %vm40, 0.0
  %124 = vst.msk [vmem:[#allocation2 + $0x290] sm:$0xff] %vm40, 0.0
  %125 = vst.msk [vmem:[#allocation2 + $0x298] sm:$0x3] %vm43, 0.0
  %126 = vst.msk [vmem:[#allocation2 + $0x2a0] sm:$0xff] %vm40, 0.0
  %127 = vst.msk [vmem:[#allocation2 + $0x2a8] sm:$0xff] %vm40, 0.0
  %128 = vst.msk [vmem:[#allocation2 + $0x2b0] sm:$0x3] %vm43, 0.0
  %129 = vst.msk [vmem:[#allocation2 + $0x2b8] sm:$0xff] %vm40, 0.0
  %130 = vst.msk [vmem:[#allocation2 + $0x2c0] sm:$0xff] %vm40, 0.0
  %131 = vst.msk [vmem:[#allocation2 + $0x2c8] sm:$0x3] %vm43, 0.0
  %132 = vst.msk [vmem:[#allocation2 + $0x2d0] sm:$0xff] %vm40, 0.0
  %133 = vst.msk [vmem:[#allocation2 + $0x2d8] sm:$0xff] %vm40, 0.0
  %134 = vst.msk [vmem:[#allocation2 + $0x2e0] sm:$0x3] %vm43, 0.0
  %135 = vst.msk [vmem:[#allocation2 + $0x2e8] sm:$0xff] %vm40, 0.0
  %136 = vst.msk [vmem:[#allocation2 + $0x2f0] sm:$0xff] %vm40, 0.0
  %137 = vst.msk [vmem:[#allocation2 + $0x2f8] sm:$0x3] %vm43, 0.0
  %138 = vst.msk [vmem:[#allocation2 + $0x300] sm:$0xff] %vm40, 0.0
  %139 = vst.msk [vmem:[#allocation2 + $0x308] sm:$0xff] %vm40, 0.0
  %140 = vst.msk [vmem:[#allocation2 + $0x310] sm:$0x3] %vm43, 0.0
  %141 = vst.msk [vmem:[#allocation2 + $0x318] sm:$0xff] %vm40, 0.0
  %142 = vst.msk [vmem:[#allocation2 + $0x320] sm:$0xff] %vm40, 0.0
  %143 = vst.msk [vmem:[#allocation2 + $0x328] sm:$0x3] %vm43, 0.0
  %144 = vst.msk [vmem:[#allocation2 + $0x330] sm:$0xff] %vm40, 0.0
  %145 = vst.msk [vmem:[#allocation2 + $0x338] sm:$0xff] %vm40, 0.0
  %146 = vst.msk [vmem:[#allocation2 + $0x340] sm:$0x3] %vm43, 0.0
  %147 = vst.msk [vmem:[#allocation2 + $0x348] sm:$0xff] %vm40, 0.0
  %148 = vst.msk [vmem:[#allocation2 + $0x350] sm:$0xff] %vm40, 0.0
  %149 = vst.msk [vmem:[#allocation2 + $0x358] sm:$0x3] %vm43, 0.0
  %v150 = vld [vmem:[%s0] sm:$0xff]
  %v151 = vld [vmem:[%s0 + $0x8] sm:$0xff]
  %v152 = vld [vmem:[%s0 + $0x10] sm:$0xff]
  %v153 = vld [vmem:[%s0 + $0x18] sm:$0xff]
  %v154 = vld [vmem:[%s0 + $0x20] sm:$0xff]
  %v155 = vld [vmem:[%s0 + $0x28] sm:$0xff]
  %v156 = vld [vmem:[%s0 + $0x30] sm:$0xff]
  %v157 = vld [vmem:[%s0 + $0x38] sm:$0xff]
  %v158 = vld [vmem:[%s0 + $0x40] sm:$0xff]
  %v159 = vld [vmem:[%s0 + $0x48] sm:$0xff]
  %v160 = vld [vmem:[%s0 + $0x50] sm:$0xff]
  %v161 = vld [vmem:[%s0 + $0x58] sm:$0xff]
  %v162 = vld [vmem:[%s0 + $0x60] sm:$0xff]
  %v163 = vld [vmem:[%s0 + $0x68] sm:$0xff]
  %v164 = vld [vmem:[%s0 + $0x70] sm:$0xff]
  %v165 = vld [vmem:[%s0 + $0x78] sm:$0xff]
  %v166 = vld [vmem:[%s0 + $0x80] sm:$0xff]
  %v167 = vld [vmem:[%s0 + $0x88] sm:$0xff]
  %v168 = vld [vmem:[%s0 + $0x90] sm:$0xff]
  %v169 = vld [vmem:[%s0 + $0x98] sm:$0xff]
  %v170 = vld [vmem:[%s0 + $0xa0] sm:$0xff]
  %v171 = vld [vmem:[%s0 + $0xa8] sm:$0xff]
  %v172 = vld [vmem:[%s0 + $0xb0] sm:$0xff]
  %v173 = vld [vmem:[%s0 + $0xb8] sm:$0xff]
  %v174 = vld [vmem:[%s0 + $0xc0] sm:$0xff]
  %v175 = vld [vmem:[%s0 + $0xc8] sm:$0xff]
  %v176 = vld [vmem:[%s0 + $0xd0] sm:$0xff]
  %v177 = vld [vmem:[%s0 + $0xd8] sm:$0xff]
  %v178 = vld [vmem:[%s0 + $0xe0] sm:$0xff]
  %v179 = vld [vmem:[%s0 + $0xe8] sm:$0xff]
  %v180 = vld [vmem:[%s0 + $0xf0] sm:$0xff]
  %v181 = vld [vmem:[%s0 + $0xf8] sm:$0xff]
  %v182 = vld [vmem:[%s0 + $0x100] sm:$0xff]
  %v183 = vld [vmem:[%s0 + $0x108] sm:$0xff]
  %v184 = vld [vmem:[%s0 + $0x110] sm:$0xff]
  %v185 = vld [vmem:[%s0 + $0x118] sm:$0xff]
  %v186 = vld [vmem:[%s0 + $0x120] sm:$0xff]
  %v187 = vld [vmem:[%s0 + $0x128] sm:$0xff]
  %v188 = vld [vmem:[%s0 + $0x130] sm:$0xff]
  %v189 = vld [vmem:[%s0 + $0x138] sm:$0xff]
  %v190 = vld [vmem:[%s0 + $0x140] sm:$0xff]
  %v191 = vld [vmem:[%s0 + $0x148] sm:$0xff]
  %v192 = vld [vmem:[%s0 + $0x150] sm:$0xff]
  %v193 = vld [vmem:[%s0 + $0x158] sm:$0xff]
  %v194 = vld [vmem:[%s0 + $0x160] sm:$0xff]
  %v195 = vld [vmem:[%s0 + $0x168] sm:$0xff]
  %v196 = vld [vmem:[%s0 + $0x170] sm:$0xff]
  %v197 = vld [vmem:[%s0 + $0x178] sm:$0xff]
  %v198 = vld [vmem:[%s0 + $0x180] sm:$0xff]
  %v199 = vld [vmem:[%s0 + $0x188] sm:$0xff]
  %v200 = vld [vmem:[%s0 + $0x190] sm:$0xff]
  %v201 = vld [vmem:[%s0 + $0x198] sm:$0xff]
  %v202 = vld [vmem:[%s0 + $0x1a0] sm:$0xff]
  %v203 = vld [vmem:[%s0 + $0x1a8] sm:$0xff]
  %v204 = vld [vmem:[%s0 + $0x1b0] sm:$0xff]
  %v205 = vld [vmem:[%s0 + $0x1b8] sm:$0xff]
  %v206 = vld [vmem:[%s0 + $0x1c0] sm:$0xff]
  %v207 = vld [vmem:[%s0 + $0x1c8] sm:$0xff]
  %v208 = vld [vmem:[%s0 + $0x1d0] sm:$0xff]
  %v209 = vld [vmem:[%s0 + $0x1d8] sm:$0xff]
  %v210 = vld [vmem:[%s0 + $0x1e0] sm:$0xff]
  %v211 = vld [vmem:[%s0 + $0x1e8] sm:$0xff]
  %v212 = vld [vmem:[%s0 + $0x1f0] sm:$0xff]
  %v213 = vld [vmem:[%s0 + $0x1f8] sm:$0xff]
  %s214 = scalar_lea.vmem [#allocation2], 24
  %vm215 = vcmask 31744
  %216 = vst.msk [vmem:[%s214 + $0x1] sm:$0xff] %vm215, %v150
  %217 = vst.msk [vmem:[%s214 + $0x9] sm:$0xff] %vm215, %v151
  %218 = vst.msk [vmem:[%s214 + $0x19] sm:$0xff] %vm215, %v152
  %219 = vst.msk [vmem:[%s214 + $0x21] sm:$0xff] %vm215, %v153
  %220 = vst.msk [vmem:[%s214 + $0x31] sm:$0xff] %vm215, %v154
  %221 = vst.msk [vmem:[%s214 + $0x39] sm:$0xff] %vm215, %v155
  %222 = vst.msk [vmem:[%s214 + $0x49] sm:$0xff] %vm215, %v156
  %223 = vst.msk [vmem:[%s214 + $0x51] sm:$0xff] %vm215, %v157
  %224 = vst.msk [vmem:[%s214 + $0x61] sm:$0xff] %vm215, %v158
  %225 = vst.msk [vmem:[%s214 + $0x69] sm:$0xff] %vm215, %v159
  %226 = vst.msk [vmem:[%s214 + $0x79] sm:$0xff] %vm215, %v160
  %227 = vst.msk [vmem:[%s214 + $0x81] sm:$0xff] %vm215, %v161
  %228 = vst.msk [vmem:[%s214 + $0x91] sm:$0xff] %vm215, %v162
  %229 = vst.msk [vmem:[%s214 + $0x99] sm:$0xff] %vm215, %v163
  %230 = vst.msk [vmem:[%s214 + $0xa9] sm:$0xff] %vm215, %v164
  %231 = vst.msk [vmem:[%s214 + $0xb1] sm:$0xff] %vm215, %v165
  %232 = vst.msk [vmem:[%s214 + $0xc1] sm:$0xff] %vm215, %v166
  %233 = vst.msk [vmem:[%s214 + $0xc9] sm:$0xff] %vm215, %v167
  %234 = vst.msk [vmem:[%s214 + $0xd9] sm:$0xff] %vm215, %v168
  %235 = vst.msk [vmem:[%s214 + $0xe1] sm:$0xff] %vm215, %v169
  %236 = vst.msk [vmem:[%s214 + $0xf1] sm:$0xff] %vm215, %v170
  %237 = vst.msk [vmem:[%s214 + $0xf9] sm:$0xff] %vm215, %v171
  %238 = vst.msk [vmem:[%s214 + $0x109] sm:$0xff] %vm215, %v172
  %239 = vst.msk [vmem:[%s214 + $0x111] sm:$0xff] %vm215, %v173
  %240 = vst.msk [vmem:[%s214 + $0x121] sm:$0xff] %vm215, %v174
  %241 = vst.msk [vmem:[%s214 + $0x129] sm:$0xff] %vm215, %v175
  %242 = vst.msk [vmem:[%s214 + $0x139] sm:$0xff] %vm215, %v176
  %243 = vst.msk [vmem:[%s214 + $0x141] sm:$0xff] %vm215, %v177
  %244 = vst.msk [vmem:[%s214 + $0x151] sm:$0xff] %vm215, %v178
  %245 = vst.msk [vmem:[%s214 + $0x159] sm:$0xff] %vm215, %v179
  %246 = vst.msk [vmem:[%s214 + $0x169] sm:$0xff] %vm215, %v180
  %247 = vst.msk [vmem:[%s214 + $0x171] sm:$0xff] %vm215, %v181
  %248 = vst.msk [vmem:[%s214 + $0x1b1] sm:$0xff] %vm215, %v182
  %249 = vst.msk [vmem:[%s214 + $0x1b9] sm:$0xff] %vm215, %v183
  %250 = vst.msk [vmem:[%s214 + $0x1c9] sm:$0xff] %vm215, %v184
  %251 = vst.msk [vmem:[%s214 + $0x1d1] sm:$0xff] %vm215, %v185
  %252 = vst.msk [vmem:[%s214 + $0x1e1] sm:$0xff] %vm215, %v186
  %253 = vst.msk [vmem:[%s214 + $0x1e9] sm:$0xff] %vm215, %v187
  %254 = vst.msk [vmem:[%s214 + $0x1f9] sm:$0xff] %vm215, %v188
  %255 = vst.msk [vmem:[%s214 + $0x201] sm:$0xff] %vm215, %v189
  %256 = vst.msk [vmem:[%s214 + $0x211] sm:$0xff] %vm215, %v190
  %257 = vst.msk [vmem:[%s214 + $0x219] sm:$0xff] %vm215, %v191
  %258 = vst.msk [vmem:[%s214 + $0x229] sm:$0xff] %vm215, %v192
  %259 = vst.msk [vmem:[%s214 + $0x231] sm:$0xff] %vm215, %v193
  %260 = vst.msk [vmem:[%s214 + $0x241] sm:$0xff] %vm215, %v194
  %261 = vst.msk [vmem:[%s214 + $0x249] sm:$0xff] %vm215, %v195
  %262 = vst.msk [vmem:[%s214 + $0x259] sm:$0xff] %vm215, %v196
  %263 = vst.msk [vmem:[%s214 + $0x261] sm:$0xff] %vm215, %v197
  %264 = vst.msk [vmem:[%s214 + $0x271] sm:$0xff] %vm215, %v198
  %265 = vst.msk [vmem:[%s214 + $0x279] sm:$0xff] %vm215, %v199
  %266 = vst.msk [vmem:[%s214 + $0x289] sm:$0xff] %vm215, %v200
  %267 = vst.msk [vmem:[%s214 + $0x291] sm:$0xff] %vm215, %v201
  %268 = vst.msk [vmem:[%s214 + $0x2a1] sm:$0xff] %vm215, %v202
  %269 = vst.msk [vmem:[%s214 + $0x2a9] sm:$0xff] %vm215, %v203
  %270 = vst.msk [vmem:[%s214 + $0x2b9] sm:$0xff] %vm215, %v204
  %271 = vst.msk [vmem:[%s214 + $0x2c1] sm:$0xff] %vm215, %v205
  %272 = vst.msk [vmem:[%s214 + $0x2d1] sm:$0xff] %vm215, %v206
  %273 = vst.msk [vmem:[%s214 + $0x2d9] sm:$0xff] %vm215, %v207
  %274 = vst.msk [vmem:[%s214 + $0x2e9] sm:$0xff] %vm215, %v208
  %275 = vst.msk [vmem:[%s214 + $0x2f1] sm:$0xff] %vm215, %v209
  %276 = vst.msk [vmem:[%s214 + $0x301] sm:$0xff] %vm215, %v210
  %277 = vst.msk [vmem:[%s214 + $0x309] sm:$0xff] %vm215, %v211
  %278 = vst.msk [vmem:[%s214 + $0x319] sm:$0xff] %vm215, %v212
  %279 = vst.msk [vmem:[%s214 + $0x321] sm:$0xff] %vm215, %v213
  %v280 = vld [vmem:[%s1] sm:$0xff]
  %v281 = vld [vmem:[%s1 + $0x8] sm:$0xff]
  %v282 = vld [vmem:[%s1 + $0x10] sm:$0xff]
  %v283 = vld [vmem:[%s1 + $0x18] sm:$0xff]
  %v284 = vld [vmem:[%s1 + $0x20] sm:$0xff]
  %v285 = vld [vmem:[%s1 + $0x28] sm:$0xff]
  %v286 = vld [vmem:[%s1 + $0x30] sm:$0xff]
  %v287 = vld [vmem:[%s1 + $0x38] sm:$0xff]
  %v288 = vld [vmem:[%s1 + $0x40] sm:$0xff]
  %v289 = vld [vmem:[%s1 + $0x48] sm:$0xff]
  %v290 = vld [vmem:[%s1 + $0x50] sm:$0xff]
  %v291 = vld [vmem:[%s1 + $0x58] sm:$0xff]
  %v292 = vld [vmem:[%s1 + $0x60] sm:$0xff]
  %v293 = vld [vmem:[%s1 + $0x68] sm:$0xff]
  %v294 = vld [vmem:[%s1 + $0x70] sm:$0xff]
  %v295 = vld [vmem:[%s1 + $0x78] sm:$0xff]
  %v296 = vld [vmem:[%s1 + $0x80] sm:$0xff]
  %v297 = vld [vmem:[%s1 + $0x88] sm:$0xff]
  %v298 = vld [vmem:[%s1 + $0x90] sm:$0xff]
  %v299 = vld [vmem:[%s1 + $0x98] sm:$0xff]
  %v300 = vld [vmem:[%s1 + $0xa0] sm:$0xff]
  %v301 = vld [vmem:[%s1 + $0xa8] sm:$0xff]
  %v302 = vld [vmem:[%s1 + $0xb0] sm:$0xff]
  %v303 = vld [vmem:[%s1 + $0xb8] sm:$0xff]
  %v304 = vld [vmem:[%s1 + $0xc0] sm:$0xff]
  %v305 = vld [vmem:[%s1 + $0xc8] sm:$0xff]
  %v306 = vld [vmem:[%s1 + $0xd0] sm:$0xff]
  %v307 = vld [vmem:[%s1 + $0xd8] sm:$0xff]
  %v308 = vld [vmem:[%s1 + $0xe0] sm:$0xff]
  %v309 = vld [vmem:[%s1 + $0xe8] sm:$0xff]
  %v310 = vld [vmem:[%s1 + $0xf0] sm:$0xff]
  %v311 = vld [vmem:[%s1 + $0xf8] sm:$0xff]
  %v312 = vld [vmem:[%s1 + $0x100] sm:$0xff]
  %v313 = vld [vmem:[%s1 + $0x108] sm:$0xff]
  %v314 = vld [vmem:[%s1 + $0x110] sm:$0xff]
  %v315 = vld [vmem:[%s1 + $0x118] sm:$0xff]
  %v316 = vld [vmem:[%s1 + $0x120] sm:$0xff]
  %v317 = vld [vmem:[%s1 + $0x128] sm:$0xff]
  %v318 = vld [vmem:[%s1 + $0x130] sm:$0xff]
  %v319 = vld [vmem:[%s1 + $0x138] sm:$0xff]
  %v320 = vld [vmem:[%s1 + $0x140] sm:$0xff]
  %v321 = vld [vmem:[%s1 + $0x148] sm:$0xff]
  %v322 = vld [vmem:[%s1 + $0x150] sm:$0xff]
  %v323 = vld [vmem:[%s1 + $0x158] sm:$0xff]
  %v324 = vld [vmem:[%s1 + $0x160] sm:$0xff]
  %v325 = vld [vmem:[%s1 + $0x168] sm:$0xff]
  %v326 = vld [vmem:[%s1 + $0x170] sm:$0xff]
  %v327 = vld [vmem:[%s1 + $0x178] sm:$0xff]
  %v328 = vld [vmem:[%s1 + $0x180] sm:$0xff]
  %v329 = vld [vmem:[%s1 + $0x188] sm:$0xff]
  %v330 = vld [vmem:[%s1 + $0x190] sm:$0xff]
  %v331 = vld [vmem:[%s1 + $0x198] sm:$0xff]
  %v332 = vld [vmem:[%s1 + $0x1a0] sm:$0xff]
  %v333 = vld [vmem:[%s1 + $0x1a8] sm:$0xff]
  %v334 = vld [vmem:[%s1 + $0x1b0] sm:$0xff]
  %v335 = vld [vmem:[%s1 + $0x1b8] sm:$0xff]
  %v336 = vld [vmem:[%s1 + $0x1c0] sm:$0xff]
  %v337 = vld [vmem:[%s1 + $0x1c8] sm:$0xff]
  %v338 = vld [vmem:[%s1 + $0x1d0] sm:$0xff]
  %v339 = vld [vmem:[%s1 + $0x1d8] sm:$0xff]
  %v340 = vld [vmem:[%s1 + $0x1e0] sm:$0xff]
  %v341 = vld [vmem:[%s1 + $0x1e8] sm:$0xff]
  %v342 = vld [vmem:[%s1 + $0x1f0] sm:$0xff]
  %v343 = vld [vmem:[%s1 + $0x1f8] sm:$0xff]
  %408 = vrot.lane.b32.xlu0 %v280, 4
  %v409 = vpop.permute.xlu0 %408
  %410 = vrot.lane.b32.xlu0 %v281, 4
  %v411 = vpop.permute.xlu0 %410
  %412 = vrot.lane.b32.xlu0 %v282, 4
  %v413 = vpop.permute.xlu0 %412
  %414 = vrot.lane.b32.xlu0 %v283, 4
  %v415 = vpop.permute.xlu0 %414
  %416 = vrot.lane.b32.xlu0 %v284, 4
  %v417 = vpop.permute.xlu0 %416
  %418 = vrot.lane.b32.xlu0 %v285, 4
  %v419 = vpop.permute.xlu0 %418
  %420 = vrot.lane.b32.xlu0 %v286, 4
  %v421 = vpop.permute.xlu0 %420
  %422 = vrot.lane.b32.xlu0 %v287, 4
  %v423 = vpop.permute.xlu0 %422
  %424 = vrot.lane.b32.xlu0 %v288, 4
  %v425 = vpop.permute.xlu0 %424
  %426 = vrot.lane.b32.xlu0 %v289, 4
  %v427 = vpop.permute.xlu0 %426
  %428 = vrot.lane.b32.xlu0 %v290, 4
  %v429 = vpop.permute.xlu0 %428
  %430 = vrot.lane.b32.xlu0 %v291, 4
  %v431 = vpop.permute.xlu0 %430
  %432 = vrot.lane.b32.xlu0 %v292, 4
  %v433 = vpop.permute.xlu0 %432
  %434 = vrot.lane.b32.xlu0 %v293, 4
  %v435 = vpop.permute.xlu0 %434
  %436 = vrot.lane.b32.xlu0 %v294, 4
  %v437 = vpop.permute.xlu0 %436
  %438 = vrot.lane.b32.xlu0 %v295, 4
  %v439 = vpop.permute.xlu0 %438
  %440 = vrot.lane.b32.xlu0 %v296, 4
  %v441 = vpop.permute.xlu0 %440
  %442 = vrot.lane.b32.xlu0 %v297, 4
  %v443 = vpop.permute.xlu0 %442
  %444 = vrot.lane.b32.xlu0 %v298, 4
  %v445 = vpop.permute.xlu0 %444
  %446 = vrot.lane.b32.xlu0 %v299, 4
  %v447 = vpop.permute.xlu0 %446
  %448 = vrot.lane.b32.xlu0 %v300, 4
  %v449 = vpop.permute.xlu0 %448
  %450 = vrot.lane.b32.xlu0 %v301, 4
  %v451 = vpop.permute.xlu0 %450
  %452 = vrot.lane.b32.xlu0 %v302, 4
  %v453 = vpop.permute.xlu0 %452
  %454 = vrot.lane.b32.xlu0 %v303, 4
  %v455 = vpop.permute.xlu0 %454
  %456 = vrot.lane.b32.xlu0 %v304, 4
  %v457 = vpop.permute.xlu0 %456
  %458 = vrot.lane.b32.xlu0 %v305, 4
  %v459 = vpop.permute.xlu0 %458
  %460 = vrot.lane.b32.xlu0 %v306, 4
  %v461 = vpop.permute.xlu0 %460
  %462 = vrot.lane.b32.xlu0 %v307, 4
  %v463 = vpop.permute.xlu0 %462
  %464 = vrot.lane.b32.xlu0 %v308, 4
  %v465 = vpop.permute.xlu0 %464
  %466 = vrot.lane.b32.xlu0 %v309, 4
  %v467 = vpop.permute.xlu0 %466
  %468 = vrot.lane.b32.xlu0 %v310, 4
  %v469 = vpop.permute.xlu0 %468
  %470 = vrot.lane.b32.xlu0 %v311, 4
  %v471 = vpop.permute.xlu0 %470
  %472 = vrot.lane.b32.xlu0 %v312, 4
  %v473 = vpop.permute.xlu0 %472
  %474 = vrot.lane.b32.xlu0 %v313, 4
  %v475 = vpop.permute.xlu0 %474
  %476 = vrot.lane.b32.xlu0 %v314, 4
  %v477 = vpop.permute.xlu0 %476
  %478 = vrot.lane.b32.xlu0 %v315, 4
  %v479 = vpop.permute.xlu0 %478
  %480 = vrot.lane.b32.xlu0 %v316, 4
  %v481 = vpop.permute.xlu0 %480
  %482 = vrot.lane.b32.xlu0 %v317, 4
  %v483 = vpop.permute.xlu0 %482
  %484 = vrot.lane.b32.xlu0 %v318, 4
  %v485 = vpop.permute.xlu0 %484
  %486 = vrot.lane.b32.xlu0 %v319, 4
  %v487 = vpop.permute.xlu0 %486
  %488 = vrot.lane.b32.xlu0 %v320, 4
  %v489 = vpop.permute.xlu0 %488
  %490 = vrot.lane.b32.xlu0 %v321, 4
  %v491 = vpop.permute.xlu0 %490
  %492 = vrot.lane.b32.xlu0 %v322, 4
  %v493 = vpop.permute.xlu0 %492
  %494 = vrot.lane.b32.xlu0 %v323, 4
  %v495 = vpop.permute.xlu0 %494
  %496 = vrot.lane.b32.xlu0 %v324, 4
  %v497 = vpop.permute.xlu0 %496
  %498 = vrot.lane.b32.xlu0 %v325, 4
  %v499 = vpop.permute.xlu0 %498
  %500 = vrot.lane.b32.xlu0 %v326, 4
  %v501 = vpop.permute.xlu0 %500
  %502 = vrot.lane.b32.xlu0 %v327, 4
  %v503 = vpop.permute.xlu0 %502
  %504 = vrot.lane.b32.xlu0 %v328, 4
  %v505 = vpop.permute.xlu0 %504
  %506 = vrot.lane.b32.xlu0 %v329, 4
  %v507 = vpop.permute.xlu0 %506
  %508 = vrot.lane.b32.xlu0 %v330, 4
  %v509 = vpop.permute.xlu0 %508
  %510 = vrot.lane.b32.xlu0 %v331, 4
  %v511 = vpop.permute.xlu0 %510
  %512 = vrot.lane.b32.xlu0 %v332, 4
  %v513 = vpop.permute.xlu0 %512
  %514 = vrot.lane.b32.xlu0 %v333, 4
  %v515 = vpop.permute.xlu0 %514
  %516 = vrot.lane.b32.xlu0 %v334, 4
  %v517 = vpop.permute.xlu0 %516
  %518 = vrot.lane.b32.xlu0 %v335, 4
  %v519 = vpop.permute.xlu0 %518
  %520 = vrot.lane.b32.xlu0 %v336, 4
  %v521 = vpop.permute.xlu0 %520
  %522 = vrot.lane.b32.xlu0 %v337, 4
  %v523 = vpop.permute.xlu0 %522
  %524 = vrot.lane.b32.xlu0 %v338, 4
  %v525 = vpop.permute.xlu0 %524
  %526 = vrot.lane.b32.xlu0 %v339, 4
  %v527 = vpop.permute.xlu0 %526
  %528 = vrot.lane.b32.xlu0 %v340, 4
  %v529 = vpop.permute.xlu0 %528
  %530 = vrot.lane.b32.xlu0 %v341, 4
  %v531 = vpop.permute.xlu0 %530
  %532 = vrot.lane.b32.xlu0 %v342, 4
  %v533 = vpop.permute.xlu0 %532
  %534 = vrot.lane.b32.xlu0 %v343, 4
  %v535 = vpop.permute.xlu0 %534
  %vm600 = vcmask 39968
  %601 = vst.msk [vmem:[%s214 + $0x1] sm:$0xff] %vm600, %v409
  %602 = vst.msk [vmem:[%s214 + $0x9] sm:$0xff] %vm600, %v411
  %603 = vst.msk [vmem:[%s214 + $0x19] sm:$0xff] %vm600, %v413
  %604 = vst.msk [vmem:[%s214 + $0x21] sm:$0xff] %vm600, %v415
  %605 = vst.msk [vmem:[%s214 + $0x31] sm:$0xff] %vm600, %v417
  %606 = vst.msk [vmem:[%s214 + $0x39] sm:$0xff] %vm600, %v419
  %607 = vst.msk [vmem:[%s214 + $0x49] sm:$0xff] %vm600, %v421
  %608 = vst.msk [vmem:[%s214 + $0x51] sm:$0xff] %vm600, %v423
  %609 = vst.msk [vmem:[%s214 + $0x61] sm:$0xff] %vm600, %v425
  %610 = vst.msk [vmem:[%s214 + $0x69] sm:$0xff] %vm600, %v427
  %611 = vst.msk [vmem:[%s214 + $0x79] sm:$0xff] %vm600, %v429
  %612 = vst.msk [vmem:[%s214 + $0x81] sm:$0xff] %vm600, %v431
  %613 = vst.msk [vmem:[%s214 + $0x91] sm:$0xff] %vm600, %v433
  %614 = vst.msk [vmem:[%s214 + $0x99] sm:$0xff] %vm600, %v435
  %615 = vst.msk [vmem:[%s214 + $0xa9] sm:$0xff] %vm600, %v437
  %616 = vst.msk [vmem:[%s214 + $0xb1] sm:$0xff] %vm600, %v439
  %617 = vst.msk [vmem:[%s214 + $0xc1] sm:$0xff] %vm600, %v441
  %618 = vst.msk [vmem:[%s214 + $0xc9] sm:$0xff] %vm600, %v443
  %619 = vst.msk [vmem:[%s214 + $0xd9] sm:$0xff] %vm600, %v445
  %620 = vst.msk [vmem:[%s214 + $0xe1] sm:$0xff] %vm600, %v447
  %621 = vst.msk [vmem:[%s214 + $0xf1] sm:$0xff] %vm600, %v449
  %622 = vst.msk [vmem:[%s214 + $0xf9] sm:$0xff] %vm600, %v451
  %623 = vst.msk [vmem:[%s214 + $0x109] sm:$0xff] %vm600, %v453
  %624 = vst.msk [vmem:[%s214 + $0x111] sm:$0xff] %vm600, %v455
  %625 = vst.msk [vmem:[%s214 + $0x121] sm:$0xff] %vm600, %v457
  %626 = vst.msk [vmem:[%s214 + $0x129] sm:$0xff] %vm600, %v459
  %627 = vst.msk [vmem:[%s214 + $0x139] sm:$0xff] %vm600, %v461
  %628 = vst.msk [vmem:[%s214 + $0x141] sm:$0xff] %vm600, %v463
  %629 = vst.msk [vmem:[%s214 + $0x151] sm:$0xff] %vm600, %v465
  %630 = vst.msk [vmem:[%s214 + $0x159] sm:$0xff] %vm600, %v467
  %631 = vst.msk [vmem:[%s214 + $0x169] sm:$0xff] %vm600, %v469
  %632 = vst.msk [vmem:[%s214 + $0x171] sm:$0xff] %vm600, %v471
  %633 = vst.msk [vmem:[%s214 + $0x1b1] sm:$0xff] %vm600, %v473
  %634 = vst.msk [vmem:[%s214 + $0x1b9] sm:$0xff] %vm600, %v475
  %635 = vst.msk [vmem:[%s214 + $0x1c9] sm:$0xff] %vm600, %v477
  %636 = vst.msk [vmem:[%s214 + $0x1d1] sm:$0xff] %vm600, %v479
  %637 = vst.msk [vmem:[%s214 + $0x1e1] sm:$0xff] %vm600, %v481
  %638 = vst.msk [vmem:[%s214 + $0x1e9] sm:$0xff] %vm600, %v483
  %639 = vst.msk [vmem:[%s214 + $0x1f9] sm:$0xff] %vm600, %v485
  %640 = vst.msk [vmem:[%s214 + $0x201] sm:$0xff] %vm600, %v487
  %641 = vst.msk [vmem:[%s214 + $0x211] sm:$0xff] %vm600, %v489
  %642 = vst.msk [vmem:[%s214 + $0x219] sm:$0xff] %vm600, %v491
  %643 = vst.msk [vmem:[%s214 + $0x229] sm:$0xff] %vm600, %v493
  %644 = vst.msk [vmem:[%s214 + $0x231] sm:$0xff] %vm600, %v495
  %645 = vst.msk [vmem:[%s214 + $0x241] sm:$0xff] %vm600, %v497
  %646 = vst.msk [vmem:[%s214 + $0x249] sm:$0xff] %vm600, %v499
  %647 = vst.msk [vmem:[%s214 + $0x259] sm:$0xff] %vm600, %v501
  %648 = vst.msk [vmem:[%s214 + $0x261] sm:$0xff] %vm600, %v503
  %649 = vst.msk [vmem:[%s214 + $0x271] sm:$0xff] %vm600, %v505
  %650 = vst.msk [vmem:[%s214 + $0x279] sm:$0xff] %vm600, %v507
  %651 = vst.msk [vmem:[%s214 + $0x289] sm:$0xff] %vm600, %v509
  %652 = vst.msk [vmem:[%s214 + $0x291] sm:$0xff] %vm600, %v511
  %653 = vst.msk [vmem:[%s214 + $0x2a1] sm:$0xff] %vm600, %v513
  %654 = vst.msk [vmem:[%s214 + $0x2a9] sm:$0xff] %vm600, %v515
  %655 = vst.msk [vmem:[%s214 + $0x2b9] sm:$0xff] %vm600, %v517
  %656 = vst.msk [vmem:[%s214 + $0x2c1] sm:$0xff] %vm600, %v519
  %657 = vst.msk [vmem:[%s214 + $0x2d1] sm:$0xff] %vm600, %v521
  %658 = vst.msk [vmem:[%s214 + $0x2d9] sm:$0xff] %vm600, %v523
  %659 = vst.msk [vmem:[%s214 + $0x2e9] sm:$0xff] %vm600, %v525
  %660 = vst.msk [vmem:[%s214 + $0x2f1] sm:$0xff] %vm600, %v527
  %661 = vst.msk [vmem:[%s214 + $0x301] sm:$0xff] %vm600, %v529
  %662 = vst.msk [vmem:[%s214 + $0x309] sm:$0xff] %vm600, %v531
  %663 = vst.msk [vmem:[%s214 + $0x319] sm:$0xff] %vm600, %v533
  %664 = vst.msk [vmem:[%s214 + $0x321] sm:$0xff] %vm600, %v535
  %vm665 = vcmask 261120
  %666 = vst.msk [vmem:[#allocation3] sm:$0xff] %vm665, 0.0
  %667 = vst.msk [vmem:[#allocation3 + $0x8] sm:$0xff] %vm665, 0.0
  %vm668 = vcmask 254976
  %669 = vst.msk [vmem:[#allocation3 + $0x10] sm:$0x3] %vm668, 0.0
  %670 = vst.msk [vmem:[#allocation3 + $0x1b0] sm:$0xff] %vm665, 0.0
  %671 = vst.msk [vmem:[#allocation3 + $0x1b8] sm:$0xff] %vm665, 0.0
  %672 = vst.msk [vmem:[#allocation3 + $0x1c0] sm:$0x3] %vm668, 0.0
  %s673 = scalar_lea.vmem [#allocation3], 408
  %674 = vst.msk [vmem:[%s673] sm:$0xff] %vm665, 0.0
  %675 = vst.msk [vmem:[%s673 + $0x8] sm:$0xff] %vm665, 0.0
  %676 = vst.msk [vmem:[%s673 + $0x10] sm:$0x3] %vm668, 0.0
  %677 = vst.msk [vmem:[%s673 + $0x1b0] sm:$0xff] %vm665, 0.0
  %678 = vst.msk [vmem:[%s673 + $0x1b8] sm:$0xff] %vm665, 0.0
  %679 = vst.msk [vmem:[%s673 + $0x1c0] sm:$0x3] %vm668, 0.0
  %vm680 = vcmask 253952
  %681 = vst.msk [vmem:[#allocation3] sm:$0x1] %vm680, 0.0
  %682 = vst.msk [vmem:[#allocation3 + $0x18] sm:$0x1] %vm680, 0.0
  %683 = vst.msk [vmem:[#allocation3 + $0x30] sm:$0x1] %vm680, 0.0
  %684 = vst.msk [vmem:[#allocation3 + $0x48] sm:$0x1] %vm680, 0.0
  %685 = vst.msk [vmem:[#allocation3 + $0x60] sm:$0x1] %vm680, 0.0
  %686 = vst.msk [vmem:[#allocation3 + $0x78] sm:$0x1] %vm680, 0.0
  %687 = vst.msk [vmem:[#allocation3 + $0x90] sm:$0x1] %vm680, 0.0
  %688 = vst.msk [vmem:[#allocation3 + $0xa8] sm:$0x1] %vm680, 0.0
  %689 = vst.msk [vmem:[#allocation3 + $0xc0] sm:$0x1] %vm680, 0.0
  %690 = vst.msk [vmem:[#allocation3 + $0xd8] sm:$0x1] %vm680, 0.0
  %691 = vst.msk [vmem:[#allocation3 + $0xf0] sm:$0x1] %vm680, 0.0
  %692 = vst.msk [vmem:[#allocation3 + $0x108] sm:$0x1] %vm680, 0.0
  %693 = vst.msk [vmem:[#allocation3 + $0x120] sm:$0x1] %vm680, 0.0
  %694 = vst.msk [vmem:[#allocation3 + $0x138] sm:$0x1] %vm680, 0.0
  %695 = vst.msk [vmem:[#allocation3 + $0x150] sm:$0x1] %vm680, 0.0
  %696 = vst.msk [vmem:[#allocation3 + $0x168] sm:$0x1] %vm680, 0.0
  %697 = vst.msk [vmem:[#allocation3 + $0x180] sm:$0x1] %vm680, 0.0
  %698 = vst.msk [vmem:[#allocation3 + $0x198] sm:$0x1] %vm680, 0.0
  %699 = vst.msk [vmem:[#allocation3 + $0x1b0] sm:$0x1] %vm680, 0.0
  %700 = vst.msk [vmem:[#allocation3 + $0x1c8] sm:$0x1] %vm680, 0.0
  %701 = vst.msk [vmem:[#allocation3 + $0x1e0] sm:$0x1] %vm680, 0.0
  %702 = vst.msk [vmem:[#allocation3 + $0x1f8] sm:$0x1] %vm680, 0.0
  %703 = vst.msk [vmem:[#allocation3 + $0x210] sm:$0x1] %vm680, 0.0
  %704 = vst.msk [vmem:[#allocation3 + $0x228] sm:$0x1] %vm680, 0.0
  %705 = vst.msk [vmem:[#allocation3 + $0x240] sm:$0x1] %vm680, 0.0
  %706 = vst.msk [vmem:[#allocation3 + $0x258] sm:$0x1] %vm680, 0.0
  %707 = vst.msk [vmem:[#allocation3 + $0x270] sm:$0x1] %vm680, 0.0
  %708 = vst.msk [vmem:[#allocation3 + $0x288] sm:$0x1] %vm680, 0.0
  %709 = vst.msk [vmem:[#allocation3 + $0x2a0] sm:$0x1] %vm680, 0.0
  %710 = vst.msk [vmem:[#allocation3 + $0x2b8] sm:$0x1] %vm680, 0.0
  %711 = vst.msk [vmem:[#allocation3 + $0x2d0] sm:$0x1] %vm680, 0.0
  %712 = vst.msk [vmem:[#allocation3 + $0x2e8] sm:$0x1] %vm680, 0.0
  %713 = vst.msk [vmem:[#allocation3 + $0x300] sm:$0x1] %vm680, 0.0
  %714 = vst.msk [vmem:[#allocation3 + $0x318] sm:$0x1] %vm680, 0.0
  %715 = vst.msk [vmem:[#allocation3 + $0x330] sm:$0x1] %vm680, 0.0
  %716 = vst.msk [vmem:[#allocation3 + $0x348] sm:$0x1] %vm680, 0.0
  %717 = vst.msk [vmem:[#allocation3 + $0x11] sm:$0x1] %vm680, 0.0
  %718 = vst.msk [vmem:[#allocation3 + $0x29] sm:$0x1] %vm680, 0.0
  %719 = vst.msk [vmem:[#allocation3 + $0x41] sm:$0x1] %vm680, 0.0
  %720 = vst.msk [vmem:[#allocation3 + $0x59] sm:$0x1] %vm680, 0.0
  %721 = vst.msk [vmem:[#allocation3 + $0x71] sm:$0x1] %vm680, 0.0
  %722 = vst.msk [vmem:[#allocation3 + $0x89] sm:$0x1] %vm680, 0.0
  %723 = vst.msk [vmem:[#allocation3 + $0xa1] sm:$0x1] %vm680, 0.0
  %724 = vst.msk [vmem:[#allocation3 + $0xb9] sm:$0x1] %vm680, 0.0
  %725 = vst.msk [vmem:[#allocation3 + $0xd1] sm:$0x1] %vm680, 0.0
  %726 = vst.msk [vmem:[#allocation3 + $0xe9] sm:$0x1] %vm680, 0.0
  %727 = vst.msk [vmem:[#allocation3 + $0x101] sm:$0x1] %vm680, 0.0
  %728 = vst.msk [vmem:[#allocation3 + $0x119] sm:$0x1] %vm680, 0.0
  %729 = vst.msk [vmem:[#allocation3 + $0x131] sm:$0x1] %vm680, 0.0
  %730 = vst.msk [vmem:[#allocation3 + $0x149] sm:$0x1] %vm680, 0.0
  %731 = vst.msk [vmem:[#allocation3 + $0x161] sm:$0x1] %vm680, 0.0
  %732 = vst.msk [vmem:[#allocation3 + $0x179] sm:$0x1] %vm680, 0.0
  %733 = vst.msk [vmem:[#allocation3 + $0x191] sm:$0x1] %vm680, 0.0
  %734 = vst.msk [vmem:[#allocation3 + $0x1a9] sm:$0x1] %vm680, 0.0
  %735 = vst.msk [vmem:[#allocation3 + $0x1c1] sm:$0x1] %vm680, 0.0
  %736 = vst.msk [vmem:[#allocation3 + $0x1d9] sm:$0x1] %vm680, 0.0
  %737 = vst.msk [vmem:[#allocation3 + $0x1f1] sm:$0x1] %vm680, 0.0
  %738 = vst.msk [vmem:[#allocation3 + $0x209] sm:$0x1] %vm680, 0.0
  %739 = vst.msk [vmem:[#allocation3 + $0x221] sm:$0x1] %vm680, 0.0
  %740 = vst.msk [vmem:[#allocation3 + $0x239] sm:$0x1] %vm680, 0.0
  %741 = vst.msk [vmem:[#allocation3 + $0x251] sm:$0x1] %vm680, 0.0
  %742 = vst.msk [vmem:[#allocation3 + $0x269] sm:$0x1] %vm680, 0.0
  %743 = vst.msk [vmem:[#allocation3 + $0x281] sm:$0x1] %vm680, 0.0
  %744 = vst.msk [vmem:[#allocation3 + $0x299] sm:$0x1] %vm680, 0.0
  %745 = vst.msk [vmem:[#allocation3 + $0x2b1] sm:$0x1] %vm680, 0.0
  %746 = vst.msk [vmem:[#allocation3 + $0x2c9] sm:$0x1] %vm680, 0.0
  %747 = vst.msk [vmem:[#allocation3 + $0x2e1] sm:$0x1] %vm680, 0.0
  %748 = vst.msk [vmem:[#allocation3 + $0x2f9] sm:$0x1] %vm680, 0.0
  %749 = vst.msk [vmem:[#allocation3 + $0x311] sm:$0x1] %vm680, 0.0
  %750 = vst.msk [vmem:[#allocation3 + $0x329] sm:$0x1] %vm680, 0.0
  %751 = vst.msk [vmem:[#allocation3 + $0x341] sm:$0x1] %vm680, 0.0
  %752 = vst.msk [vmem:[#allocation3 + $0x359] sm:$0x1] %vm680, 0.0
  %v753 = vld [vmem:[#allocation2] sm:$0xff]
  %v754 = vld [vmem:[#allocation2 + $0x8] sm:$0xff]
  %v755 = vld [vmem:[#allocation2 + $0x18] sm:$0xff]
  %v756 = vld [vmem:[#allocation2 + $0x20] sm:$0xff]
  %v757 = vld [vmem:[#allocation2 + $0x30] sm:$0xff]
  %v758 = vld [vmem:[#allocation2 + $0x38] sm:$0xff]
  %v759 = vld [vmem:[#allocation2 + $0x48] sm:$0xff]
  %v760 = vld [vmem:[#allocation2 + $0x50] sm:$0xff]
  %v761 = vld [vmem:[#allocation2 + $0x60] sm:$0xff]
  %v762 = vld [vmem:[#allocation2 + $0x68] sm:$0xff]
  %v763 = vld [vmem:[#allocation2 + $0x78] sm:$0xff]
  %v764 = vld [vmem:[#allocation2 + $0x80] sm:$0xff]
  %v765 = vld [vmem:[#allocation2 + $0x90] sm:$0xff]
  %v766 = vld [vmem:[#allocation2 + $0x98] sm:$0xff]
  %v767 = vld [vmem:[#allocation2 + $0xa8] sm:$0xff]
  %v768 = vld [vmem:[#allocation2 + $0xb0] sm:$0xff]
  %v769 = vld [vmem:[#allocation2 + $0xc0] sm:$0xff]
  %v770 = vld [vmem:[#allocation2 + $0xc8] sm:$0xff]
  %v771 = vld [vmem:[#allocation2 + $0xd8] sm:$0xff]
  %v772 = vld [vmem:[#allocation2 + $0xe0] sm:$0xff]
  %v773 = vld [vmem:[#allocation2 + $0xf0] sm:$0xff]
  %v774 = vld [vmem:[#allocation2 + $0xf8] sm:$0xff]
  %v775 = vld [vmem:[#allocation2 + $0x108] sm:$0xff]
  %v776 = vld [vmem:[#allocation2 + $0x110] sm:$0xff]
  %v777 = vld [vmem:[#allocation2 + $0x120] sm:$0xff]
  %v778 = vld [vmem:[#allocation2 + $0x128] sm:$0xff]
  %v779 = vld [vmem:[#allocation2 + $0x138] sm:$0xff]
  %v780 = vld [vmem:[#allocation2 + $0x140] sm:$0xff]
  %v781 = vld [vmem:[#allocation2 + $0x150] sm:$0xff]
  %v782 = vld [vmem:[#allocation2 + $0x158] sm:$0xff]
  %v783 = vld [vmem:[#allocation2 + $0x168] sm:$0xff]
  %v784 = vld [vmem:[#allocation2 + $0x170] sm:$0xff]
  %v785 = vld [vmem:[#allocation2 + $0x1b0] sm:$0xff]
  %v786 = vld [vmem:[#allocation2 + $0x1b8] sm:$0xff]
  %v787 = vld [vmem:[#allocation2 + $0x1c8] sm:$0xff]
  %v788 = vld [vmem:[#allocation2 + $0x1d0] sm:$0xff]
  %v789 = vld [vmem:[#allocation2 + $0x1e0] sm:$0xff]
  %v790 = vld [vmem:[#allocation2 + $0x1e8] sm:$0xff]
  %v791 = vld [vmem:[#allocation2 + $0x1f8] sm:$0xff]
  %v792 = vld [vmem:[#allocation2 + $0x200] sm:$0xff]
  %v793 = vld [vmem:[#allocation2 + $0x210] sm:$0xff]
  %v794 = vld [vmem:[#allocation2 + $0x218] sm:$0xff]
  %v795 = vld [vmem:[#allocation2 + $0x228] sm:$0xff]
  %v796 = vld [vmem:[#allocation2 + $0x230] sm:$0xff]
  %v797 = vld [vmem:[#allocation2 + $0x240] sm:$0xff]
  %v798 = vld [vmem:[#allocation2 + $0x248] sm:$0xff]
  %v799 = vld [vmem:[#allocation2 + $0x258] sm:$0xff]
  %v800 = vld [vmem:[#allocation2 + $0x260] sm:$0xff]
  %v801 = vld [vmem:[#allocation2 + $0x270] sm:$0xff]
  %v802 = vld [vmem:[#allocation2 + $0x278] sm:$0xff]
  %v803 = vld [vmem:[#allocation2 + $0x288] sm:$0xff]
  %v804 = vld [vmem:[#allocation2 + $0x290] sm:$0xff]
  %v805 = vld [vmem:[#allocation2 + $0x2a0] sm:$0xff]
  %v806 = vld [vmem:[#allocation2 + $0x2a8] sm:$0xff]
  %v807 = vld [vmem:[#allocation2 + $0x2b8] sm:$0xff]
  %v808 = vld [vmem:[#allocation2 + $0x2c0] sm:$0xff]
  %v809 = vld [vmem:[#allocation2 + $0x2d0] sm:$0xff]
  %v810 = vld [vmem:[#allocation2 + $0x2d8] sm:$0xff]
  %v811 = vld [vmem:[#allocation2 + $0x2e8] sm:$0xff]
  %v812 = vld [vmem:[#allocation2 + $0x2f0] sm:$0xff]
  %v813 = vld [vmem:[#allocation2 + $0x300] sm:$0xff]
  %v814 = vld [vmem:[#allocation2 + $0x308] sm:$0xff]
  %v815 = vld [vmem:[#allocation2 + $0x318] sm:$0xff]
  %v816 = vld [vmem:[#allocation2 + $0x320] sm:$0xff]
  %v817 = vld [vmem:[#allocation2 + $0x1] sm:$0xff]
  %v818 = vld [vmem:[#allocation2 + $0x9] sm:$0xff]
  %v819 = vld [vmem:[#allocation2 + $0x19] sm:$0xff]
  %v820 = vld [vmem:[#allocation2 + $0x21] sm:$0xff]
  %v821 = vld [vmem:[#allocation2 + $0x31] sm:$0xff]
  %v822 = vld [vmem:[#allocation2 + $0x39] sm:$0xff]
  %v823 = vld [vmem:[#allocation2 + $0x49] sm:$0xff]
  %v824 = vld [vmem:[#allocation2 + $0x51] sm:$0xff]
  %v825 = vld [vmem:[#allocation2 + $0x61] sm:$0xff]
  %v826 = vld [vmem:[#allocation2 + $0x69] sm:$0xff]
  %v827 = vld [vmem:[#allocation2 + $0x79] sm:$0xff]
  %v828 = vld [vmem:[#allocation2 + $0x81] sm:$0xff]
  %v829 = vld [vmem:[#allocation2 + $0x91] sm:$0xff]
  %v830 = vld [vmem:[#allocation2 + $0x99] sm:$0xff]
  %v831 = vld [vmem:[#allocation2 + $0xa9] sm:$0xff]
  %v832 = vld [vmem:[#allocation2 + $0xb1] sm:$0xff]
  %v833 = vld [vmem:[#allocation2 + $0xc1] sm:$0xff]
  %v834 = vld [vmem:[#allocation2 + $0xc9] sm:$0xff]
  %v835 = vld [vmem:[#allocation2 + $0xd9] sm:$0xff]
  %v836 = vld [vmem:[#allocation2 + $0xe1] sm:$0xff]
  %v837 = vld [vmem:[#allocation2 + $0xf1] sm:$0xff]
  %v838 = vld [vmem:[#allocation2 + $0xf9] sm:$0xff]
  %v839 = vld [vmem:[#allocation2 + $0x109] sm:$0xff]
  %v840 = vld [vmem:[#allocation2 + $0x111] sm:$0xff]
  %v841 = vld [vmem:[#allocation2 + $0x121] sm:$0xff]
  %v842 = vld [vmem:[#allocation2 + $0x129] sm:$0xff]
  %v843 = vld [vmem:[#allocation2 + $0x139] sm:$0xff]
  %v844 = vld [vmem:[#allocation2 + $0x141] sm:$0xff]
  %v845 = vld [vmem:[#allocation2 + $0x151] sm:$0xff]
  %v846 = vld [vmem:[#allocation2 + $0x159] sm:$0xff]
  %v847 = vld [vmem:[#allocation2 + $0x169] sm:$0xff]
  %v848 = vld [vmem:[#allocation2 + $0x171] sm:$0xff]
  %v849 = vld [vmem:[#allocation2 + $0x1b1] sm:$0xff]
  %v850 = vld [vmem:[#allocation2 + $0x1b9] sm:$0xff]
  %v851 = vld [vmem:[#allocation2 + $0x1c9] sm:$0xff]
  %v852 = vld [vmem:[#allocation2 + $0x1d1] sm:$0xff]
  %v853 = vld [vmem:[#allocation2 + $0x1e1] sm:$0xff]
  %v854 = vld [vmem:[#allocation2 + $0x1e9] sm:$0xff]
  %v855 = vld [vmem:[#allocation2 + $0x1f9] sm:$0xff]
  %v856 = vld [vmem:[#allocation2 + $0x201] sm:$0xff]
  %v857 = vld [vmem:[#allocation2 + $0x211] sm:$0xff]
  %v858 = vld [vmem:[#allocation2 + $0x219] sm:$0xff]
  %v859 = vld [vmem:[#allocation2 + $0x229] sm:$0xff]
  %v860 = vld [vmem:[#allocation2 + $0x231] sm:$0xff]
  %v861 = vld [vmem:[#allocation2 + $0x241] sm:$0xff]
  %v862 = vld [vmem:[#allocation2 + $0x249] sm:$0xff]
  %v863 = vld [vmem:[#allocation2 + $0x259] sm:$0xff]
  %v864 = vld [vmem:[#allocation2 + $0x261] sm:$0xff]
  %v865 = vld [vmem:[#allocation2 + $0x271] sm:$0xff]
  %v866 = vld [vmem:[#allocation2 + $0x279] sm:$0xff]
  %v867 = vld [vmem:[#allocation2 + $0x289] sm:$0xff]
  %v868 = vld [vmem:[#allocation2 + $0x291] sm:$0xff]
  %v869 = vld [vmem:[#allocation2 + $0x2a1] sm:$0xff]
  %v870 = vld [vmem:[#allocation2 + $0x2a9] sm:$0xff]
  %v871 = vld [vmem:[#allocation2 + $0x2b9] sm:$0xff]
  %v872 = vld [vmem:[#allocation2 + $0x2c1] sm:$0xff]
  %v873 = vld [vmem:[#allocation2 + $0x2d1] sm:$0xff]
  %v874 = vld [vmem:[#allocation2 + $0x2d9] sm:$0xff]
  %v875 = vld [vmem:[#allocation2 + $0x2e9] sm:$0xff]
  %v876 = vld [vmem:[#allocation2 + $0x2f1] sm:$0xff]
  %v877 = vld [vmem:[#allocation2 + $0x301] sm:$0xff]
  %v878 = vld [vmem:[#allocation2 + $0x309] sm:$0xff]
  %v879 = vld [vmem:[#allocation2 + $0x319] sm:$0xff]
  %v880 = vld [vmem:[#allocation2 + $0x321] sm:$0xff]
  %v881 = vld [vmem:[#allocation2 + $0x2] sm:$0xff]
  %v882 = vld [vmem:[#allocation2 + $0xa] sm:$0xff]
  %v883 = vld [vmem:[#allocation2 + $0x1a] sm:$0xff]
  %v884 = vld [vmem:[#allocation2 + $0x22] sm:$0xff]
  %v885 = vld [vmem:[#allocation2 + $0x32] sm:$0xff]
  %v886 = vld [vmem:[#allocation2 + $0x3a] sm:$0xff]
  %v887 = vld [vmem:[#allocation2 + $0x4a] sm:$0xff]
  %v888 = vld [vmem:[#allocation2 + $0x52] sm:$0xff]
  %v889 = vld [vmem:[#allocation2 + $0x62] sm:$0xff]
  %v890 = vld [vmem:[#allocation2 + $0x6a] sm:$0xff]
  %v891 = vld [vmem:[#allocation2 + $0x7a] sm:$0xff]
  %v892 = vld [vmem:[#allocation2 + $0x82] sm:$0xff]
  %v893 = vld [vmem:[#allocation2 + $0x92] sm:$0xff]
  %v894 = vld [vmem:[#allocation2 + $0x9a] sm:$0xff]
  %v895 = vld [vmem:[#allocation2 + $0xaa] sm:$0xff]
  %v896 = vld [vmem:[#allocation2 + $0xb2] sm:$0xff]
  %v897 = vld [vmem:[#allocation2 + $0xc2] sm:$0xff]
  %v898 = vld [vmem:[#allocation2 + $0xca] sm:$0xff]
  %v899 = vld [vmem:[#allocation2 + $0xda] sm:$0xff]
  %v900 = vld [vmem:[#allocation2 + $0xe2] sm:$0xff]
  %v901 = vld [vmem:[#allocation2 + $0xf2] sm:$0xff]
  %v902 = vld [vmem:[#allocation2 + $0xfa] sm:$0xff]
  %v903 = vld [vmem:[#allocation2 + $0x10a] sm:$0xff]
  %v904 = vld [vmem:[#allocation2 + $0x112] sm:$0xff]
  %v905 = vld [vmem:[#allocation2 + $0x122] sm:$0xff]
  %v906 = vld [vmem:[#allocation2 + $0x12a] sm:$0xff]
  %v907 = vld [vmem:[#allocation2 + $0x13a] sm:$0xff]
  %v908 = vld [vmem:[#allocation2 + $0x142] sm:$0xff]
  %v909 = vld [vmem:[#allocation2 + $0x152] sm:$0xff]
  %v910 = vld [vmem:[#allocation2 + $0x15a] sm:$0xff]
  %v911 = vld [vmem:[#allocation2 + $0x16a] sm:$0xff]
  %v912 = vld [vmem:[#allocation2 + $0x172] sm:$0xff]
  %v913 = vld [vmem:[#allocation2 + $0x1b2] sm:$0xff]
  %v914 = vld [vmem:[#allocation2 + $0x1ba] sm:$0xff]
  %v915 = vld [vmem:[#allocation2 + $0x1ca] sm:$0xff]
  %v916 = vld [vmem:[#allocation2 + $0x1d2] sm:$0xff]
  %v917 = vld [vmem:[#allocation2 + $0x1e2] sm:$0xff]
  %v918 = vld [vmem:[#allocation2 + $0x1ea] sm:$0xff]
  %v919 = vld [vmem:[#allocation2 + $0x1fa] sm:$0xff]
  %v920 = vld [vmem:[#allocation2 + $0x202] sm:$0xff]
  %v921 = vld [vmem:[#allocation2 + $0x212] sm:$0xff]
  %v922 = vld [vmem:[#allocation2 + $0x21a] sm:$0xff]
  %v923 = vld [vmem:[#allocation2 + $0x22a] sm:$0xff]
  %v924 = vld [vmem:[#allocation2 + $0x232] sm:$0xff]
  %v925 = vld [vmem:[#allocation2 + $0x242] sm:$0xff]
  %v926 = vld [vmem:[#allocation2 + $0x24a] sm:$0xff]
  %v927 = vld [vmem:[#allocation2 + $0x25a] sm:$0xff]
  %v928 = vld [vmem:[#allocation2 + $0x262] sm:$0xff]
  %v929 = vld [vmem:[#allocation2 + $0x272] sm:$0xff]
  %v930 = vld [vmem:[#allocation2 + $0x27a] sm:$0xff]
  %v931 = vld [vmem:[#allocation2 + $0x28a] sm:$0xff]
  %v932 = vld [vmem:[#allocation2 + $0x292] sm:$0xff]
  %v933 = vld [vmem:[#allocation2 + $0x2a2] sm:$0xff]
  %v934 = vld [vmem:[#allocation2 + $0x2aa] sm:$0xff]
  %v935 = vld [vmem:[#allocation2 + $0x2ba] sm:$0xff]
  %v936 = vld [vmem:[#allocation2 + $0x2c2] sm:$0xff]
  %v937 = vld [vmem:[#allocation2 + $0x2d2] sm:$0xff]
  %v938 = vld [vmem:[#allocation2 + $0x2da] sm:$0xff]
  %v939 = vld [vmem:[#allocation2 + $0x2ea] sm:$0xff]
  %v940 = vld [vmem:[#allocation2 + $0x2f2] sm:$0xff]
  %v941 = vld [vmem:[#allocation2 + $0x302] sm:$0xff]
  %v942 = vld [vmem:[#allocation2 + $0x30a] sm:$0xff]
  %v943 = vld [vmem:[#allocation2 + $0x31a] sm:$0xff]
  %v944 = vld [vmem:[#allocation2 + $0x322] sm:$0xff]
  %v945 = vld [vmem:[%s214] sm:$0xff]
  %v946 = vld [vmem:[%s214 + $0x8] sm:$0xff]
  %v947 = vld [vmem:[%s214 + $0x18] sm:$0xff]
  %v948 = vld [vmem:[%s214 + $0x20] sm:$0xff]
  %v949 = vld [vmem:[%s214 + $0x30] sm:$0xff]
  %v950 = vld [vmem:[%s214 + $0x38] sm:$0xff]
  %v951 = vld [vmem:[%s214 + $0x48] sm:$0xff]
  %v952 = vld [vmem:[%s214 + $0x50] sm:$0xff]
  %v953 = vld [vmem:[%s214 + $0x60] sm:$0xff]
  %v954 = vld [vmem:[%s214 + $0x68] sm:$0xff]
  %v955 = vld [vmem:[%s214 + $0x78] sm:$0xff]
  %v956 = vld [vmem:[%s214 + $0x80] sm:$0xff]
  %v957 = vld [vmem:[%s214 + $0x90] sm:$0xff]
  %v958 = vld [vmem:[%s214 + $0x98] sm:$0xff]
  %v959 = vld [vmem:[%s214 + $0xa8] sm:$0xff]
  %v960 = vld [vmem:[%s214 + $0xb0] sm:$0xff]
  %v961 = vld [vmem:[%s214 + $0xc0] sm:$0xff]
  %v962 = vld [vmem:[%s214 + $0xc8] sm:$0xff]
  %v963 = vld [vmem:[%s214 + $0xd8] sm:$0xff]
  %v964 = vld [vmem:[%s214 + $0xe0] sm:$0xff]
  %v965 = vld [vmem:[%s214 + $0xf0] sm:$0xff]
  %v966 = vld [vmem:[%s214 + $0xf8] sm:$0xff]
  %v967 = vld [vmem:[%s214 + $0x108] sm:$0xff]
  %v968 = vld [vmem:[%s214 + $0x110] sm:$0xff]
  %v969 = vld [vmem:[%s214 + $0x120] sm:$0xff]
  %v970 = vld [vmem:[%s214 + $0x128] sm:$0xff]
  %v971 = vld [vmem:[%s214 + $0x138] sm:$0xff]
  %v972 = vld [vmem:[%s214 + $0x140] sm:$0xff]
  %v973 = vld [vmem:[%s214 + $0x150] sm:$0xff]
  %v974 = vld [vmem:[%s214 + $0x158] sm:$0xff]
  %v975 = vld [vmem:[%s214 + $0x168] sm:$0xff]
  %v976 = vld [vmem:[%s214 + $0x170] sm:$0xff]
  %v977 = vld [vmem:[%s214 + $0x1b0] sm:$0xff]
  %v978 = vld [vmem:[%s214 + $0x1b8] sm:$0xff]
  %v979 = vld [vmem:[%s214 + $0x1c8] sm:$0xff]
  %v980 = vld [vmem:[%s214 + $0x1d0] sm:$0xff]
  %v981 = vld [vmem:[%s214 + $0x1e0] sm:$0xff]
  %v982 = vld [vmem:[%s214 + $0x1e8] sm:$0xff]
  %v983 = vld [vmem:[%s214 + $0x1f8] sm:$0xff]
  %v984 = vld [vmem:[%s214 + $0x200] sm:$0xff]
  %v985 = vld [vmem:[%s214 + $0x210] sm:$0xff]
  %v986 = vld [vmem:[%s214 + $0x218] sm:$0xff]
  %v987 = vld [vmem:[%s214 + $0x228] sm:$0xff]
  %v988 = vld [vmem:[%s214 + $0x230] sm:$0xff]
  %v989 = vld [vmem:[%s214 + $0x240] sm:$0xff]
  %v990 = vld [vmem:[%s214 + $0x248] sm:$0xff]
  %v991 = vld [vmem:[%s214 + $0x258] sm:$0xff]
  %v992 = vld [vmem:[%s214 + $0x260] sm:$0xff]
  %v993 = vld [vmem:[%s214 + $0x270] sm:$0xff]
  %v994 = vld [vmem:[%s214 + $0x278] sm:$0xff]
  %v995 = vld [vmem:[%s214 + $0x288] sm:$0xff]
  %v996 = vld [vmem:[%s214 + $0x290] sm:$0xff]
  %v997 = vld [vmem:[%s214 + $0x2a0] sm:$0xff]
  %v998 = vld [vmem:[%s214 + $0x2a8] sm:$0xff]
  %v999 = vld [vmem:[%s214 + $0x2b8] sm:$0xff]
  %v1000 = vld [vmem:[%s214 + $0x2c0] sm:$0xff]
  %v1001 = vld [vmem:[%s214 + $0x2d0] sm:$0xff]
  %v1002 = vld [vmem:[%s214 + $0x2d8] sm:$0xff]
  %v1003 = vld [vmem:[%s214 + $0x2e8] sm:$0xff]
  %v1004 = vld [vmem:[%s214 + $0x2f0] sm:$0xff]
  %v1005 = vld [vmem:[%s214 + $0x300] sm:$0xff]
  %v1006 = vld [vmem:[%s214 + $0x308] sm:$0xff]
  %v1007 = vld [vmem:[%s214 + $0x318] sm:$0xff]
  %v1008 = vld [vmem:[%s214 + $0x320] sm:$0xff]
  %v1009 = vld [vmem:[%s214 + $0x1] sm:$0xff]
  %v1010 = vld [vmem:[%s214 + $0x9] sm:$0xff]
  %v1011 = vld [vmem:[%s214 + $0x19] sm:$0xff]
  %v1012 = vld [vmem:[%s214 + $0x21] sm:$0xff]
  %v1013 = vld [vmem:[%s214 + $0x31] sm:$0xff]
  %v1014 = vld [vmem:[%s214 + $0x39] sm:$0xff]
  %v1015 = vld [vmem:[%s214 + $0x49] sm:$0xff]
  %v1016 = vld [vmem:[%s214 + $0x51] sm:$0xff]
  %v1017 = vld [vmem:[%s214 + $0x61] sm:$0xff]
  %v1018 = vld [vmem:[%s214 + $0x69] sm:$0xff]
  %v1019 = vld [vmem:[%s214 + $0x79] sm:$0xff]
  %v1020 = vld [vmem:[%s214 + $0x81] sm:$0xff]
  %v1021 = vld [vmem:[%s214 + $0x91] sm:$0xff]
  %v1022 = vld [vmem:[%s214 + $0x99] sm:$0xff]
  %v1023 = vld [vmem:[%s214 + $0xa9] sm:$0xff]
  %v1024 = vld [vmem:[%s214 + $0xb1] sm:$0xff]
  %v1025 = vld [vmem:[%s214 + $0xc1] sm:$0xff]
  %v1026 = vld [vmem:[%s214 + $0xc9] sm:$0xff]
  %v1027 = vld [vmem:[%s214 + $0xd9] sm:$0xff]
  %v1028 = vld [vmem:[%s214 + $0xe1] sm:$0xff]
  %v1029 = vld [vmem:[%s214 + $0xf1] sm:$0xff]
  %v1030 = vld [vmem:[%s214 + $0xf9] sm:$0xff]
  %v1031 = vld [vmem:[%s214 + $0x109] sm:$0xff]
  %v1032 = vld [vmem:[%s214 + $0x111] sm:$0xff]
  %v1033 = vld [vmem:[%s214 + $0x121] sm:$0xff]
  %v1034 = vld [vmem:[%s214 + $0x129] sm:$0xff]
  %v1035 = vld [vmem:[%s214 + $0x139] sm:$0xff]
  %v1036 = vld [vmem:[%s214 + $0x141] sm:$0xff]
  %v1037 = vld [vmem:[%s214 + $0x151] sm:$0xff]
  %v1038 = vld [vmem:[%s214 + $0x159] sm:$0xff]
  %v1039 = vld [vmem:[%s214 + $0x169] sm:$0xff]
  %v1040 = vld [vmem:[%s214 + $0x171] sm:$0xff]
  %v1041 = vld [vmem:[%s214 + $0x1b1] sm:$0xff]
  %v1042 = vld [vmem:[%s214 + $0x1b9] sm:$0xff]
  %v1043 = vld [vmem:[%s214 + $0x1c9] sm:$0xff]
  %v1044 = vld [vmem:[%s214 + $0x1d1] sm:$0xff]
  %v1045 = vld [vmem:[%s214 + $0x1e1] sm:$0xff]
  %v1046 = vld [vmem:[%s214 + $0x1e9] sm:$0xff]
  %v1047 = vld [vmem:[%s214 + $0x1f9] sm:$0xff]
  %v1048 = vld [vmem:[%s214 + $0x201] sm:$0xff]
  %v1049 = vld [vmem:[%s214 + $0x211] sm:$0xff]
  %v1050 = vld [vmem:[%s214 + $0x219] sm:$0xff]
  %v1051 = vld [vmem:[%s214 + $0x229] sm:$0xff]
  %v1052 = vld [vmem:[%s214 + $0x231] sm:$0xff]
  %v1053 = vld [vmem:[%s214 + $0x241] sm:$0xff]
  %v1054 = vld [vmem:[%s214 + $0x249] sm:$0xff]
  %v1055 = vld [vmem:[%s214 + $0x259] sm:$0xff]
  %v1056 = vld [vmem:[%s214 + $0x261] sm:$0xff]
  %v1057 = vld [vmem:[%s214 + $0x271] sm:$0xff]
  %v1058 = vld [vmem:[%s214 + $0x279] sm:$0xff]
  %v1059 = vld [vmem:[%s214 + $0x289] sm:$0xff]
  %v1060 = vld [vmem:[%s214 + $0x291] sm:$0xff]
  %v1061 = vld [vmem:[%s214 + $0x2a1] sm:$0xff]
  %v1062 = vld [vmem:[%s214 + $0x2a9] sm:$0xff]
  %v1063 = vld [vmem:[%s214 + $0x2b9] sm:$0xff]
  %v1064 = vld [vmem:[%s214 + $0x2c1] sm:$0xff]
  %v1065 = vld [vmem:[%s214 + $0x2d1] sm:$0xff]
  %v1066 = vld [vmem:[%s214 + $0x2d9] sm:$0xff]
  %v1067 = vld [vmem:[%s214 + $0x2e9] sm:$0xff]
  %v1068 = vld [vmem:[%s214 + $0x2f1] sm:$0xff]
  %v1069 = vld [vmem:[%s214 + $0x301] sm:$0xff]
  %v1070 = vld [vmem:[%s214 + $0x309] sm:$0xff]
  %v1071 = vld [vmem:[%s214 + $0x319] sm:$0xff]
  %v1072 = vld [vmem:[%s214 + $0x321] sm:$0xff]
  %v1073 = vld [vmem:[%s214 + $0x2] sm:$0xff]
  %v1074 = vld [vmem:[%s214 + $0xa] sm:$0xff]
  %v1075 = vld [vmem:[%s214 + $0x1a] sm:$0xff]
  %v1076 = vld [vmem:[%s214 + $0x22] sm:$0xff]
  %v1077 = vld [vmem:[%s214 + $0x32] sm:$0xff]
  %v1078 = vld [vmem:[%s214 + $0x3a] sm:$0xff]
  %v1079 = vld [vmem:[%s214 + $0x4a] sm:$0xff]
  %v1080 = vld [vmem:[%s214 + $0x52] sm:$0xff]
  %v1081 = vld [vmem:[%s214 + $0x62] sm:$0xff]
  %v1082 = vld [vmem:[%s214 + $0x6a] sm:$0xff]
  %v1083 = vld [vmem:[%s214 + $0x7a] sm:$0xff]
  %v1084 = vld [vmem:[%s214 + $0x82] sm:$0xff]
  %v1085 = vld [vmem:[%s214 + $0x92] sm:$0xff]
  %v1086 = vld [vmem:[%s214 + $0x9a] sm:$0xff]
  %v1087 = vld [vmem:[%s214 + $0xaa] sm:$0xff]
  %v1088 = vld [vmem:[%s214 + $0xb2] sm:$0xff]
  %v1089 = vld [vmem:[%s214 + $0xc2] sm:$0xff]
  %v1090 = vld [vmem:[%s214 + $0xca] sm:$0xff]
  %v1091 = vld [vmem:[%s214 + $0xda] sm:$0xff]
  %v1092 = vld [vmem:[%s214 + $0xe2] sm:$0xff]
  %v1093 = vld [vmem:[%s214 + $0xf2] sm:$0xff]
  %v1094 = vld [vmem:[%s214 + $0xfa] sm:$0xff]
  %v1095 = vld [vmem:[%s214 + $0x10a] sm:$0xff]
  %v1096 = vld [vmem:[%s214 + $0x112] sm:$0xff]
  %v1097 = vld [vmem:[%s214 + $0x122] sm:$0xff]
  %v1098 = vld [vmem:[%s214 + $0x12a] sm:$0xff]
  %v1099 = vld [vmem:[%s214 + $0x13a] sm:$0xff]
  %v1100 = vld [vmem:[%s214 + $0x142] sm:$0xff]
  %v1101 = vld [vmem:[%s214 + $0x152] sm:$0xff]
  %v1102 = vld [vmem:[%s214 + $0x15a] sm:$0xff]
  %v1103 = vld [vmem:[%s214 + $0x16a] sm:$0xff]
  %v1104 = vld [vmem:[%s214 + $0x172] sm:$0xff]
  %v1105 = vld [vmem:[%s214 + $0x1b2] sm:$0xff]
  %v1106 = vld [vmem:[%s214 + $0x1ba] sm:$0xff]
  %v1107 = vld [vmem:[%s214 + $0x1ca] sm:$0xff]
  %v1108 = vld [vmem:[%s214 + $0x1d2] sm:$0xff]
  %v1109 = vld [vmem:[%s214 + $0x1e2] sm:$0xff]
  %v1110 = vld [vmem:[%s214 + $0x1ea] sm:$0xff]
  %v1111 = vld [vmem:[%s214 + $0x1fa] sm:$0xff]
  %v1112 = vld [vmem:[%s214 + $0x202] sm:$0xff]
  %v1113 = vld [vmem:[%s214 + $0x212] sm:$0xff]
  %v1114 = vld [vmem:[%s214 + $0x21a] sm:$0xff]
  %v1115 = vld [vmem:[%s214 + $0x22a] sm:$0xff]
  %v1116 = vld [vmem:[%s214 + $0x232] sm:$0xff]
  %v1117 = vld [vmem:[%s214 + $0x242] sm:$0xff]
  %v1118 = vld [vmem:[%s214 + $0x24a] sm:$0xff]
  %v1119 = vld [vmem:[%s214 + $0x25a] sm:$0xff]
  %v1120 = vld [vmem:[%s214 + $0x262] sm:$0xff]
  %v1121 = vld [vmem:[%s214 + $0x272] sm:$0xff]
  %v1122 = vld [vmem:[%s214 + $0x27a] sm:$0xff]
  %v1123 = vld [vmem:[%s214 + $0x28a] sm:$0xff]
  %v1124 = vld [vmem:[%s214 + $0x292] sm:$0xff]
  %v1125 = vld [vmem:[%s214 + $0x2a2] sm:$0xff]
  %v1126 = vld [vmem:[%s214 + $0x2aa] sm:$0xff]
  %v1127 = vld [vmem:[%s214 + $0x2ba] sm:$0xff]
  %v1128 = vld [vmem:[%s214 + $0x2c2] sm:$0xff]
  %v1129 = vld [vmem:[%s214 + $0x2d2] sm:$0xff]
  %v1130 = vld [vmem:[%s214 + $0x2da] sm:$0xff]
  %v1131 = vld [vmem:[%s214 + $0x2ea] sm:$0xff]
  %v1132 = vld [vmem:[%s214 + $0x2f2] sm:$0xff]
  %v1133 = vld [vmem:[%s214 + $0x302] sm:$0xff]
  %v1134 = vld [vmem:[%s214 + $0x30a] sm:$0xff]
  %v1135 = vld [vmem:[%s214 + $0x31a] sm:$0xff]
  %v1136 = vld [vmem:[%s214 + $0x322] sm:$0xff]
  %s1137 = scalar_lea.vmem [#allocation2], 48
  %v1138 = vld [vmem:[%s1137] sm:$0xff]
  %v1139 = vld [vmem:[%s1137 + $0x8] sm:$0xff]
  %v1140 = vld [vmem:[%s1137 + $0x18] sm:$0xff]
  %v1141 = vld [vmem:[%s1137 + $0x20] sm:$0xff]
  %v1142 = vld [vmem:[%s1137 + $0x30] sm:$0xff]
  %v1143 = vld [vmem:[%s1137 + $0x38] sm:$0xff]
  %v1144 = vld [vmem:[%s1137 + $0x48] sm:$0xff]
  %v1145 = vld [vmem:[%s1137 + $0x50] sm:$0xff]
  %v1146 = vld [vmem:[%s1137 + $0x60] sm:$0xff]
  %v1147 = vld [vmem:[%s1137 + $0x68] sm:$0xff]
  %v1148 = vld [vmem:[%s1137 + $0x78] sm:$0xff]
  %v1149 = vld [vmem:[%s1137 + $0x80] sm:$0xff]
  %v1150 = vld [vmem:[%s1137 + $0x90] sm:$0xff]
  %v1151 = vld [vmem:[%s1137 + $0x98] sm:$0xff]
  %v1152 = vld [vmem:[%s1137 + $0xa8] sm:$0xff]
  %v1153 = vld [vmem:[%s1137 + $0xb0] sm:$0xff]
  %v1154 = vld [vmem:[%s1137 + $0xc0] sm:$0xff]
  %v1155 = vld [vmem:[%s1137 + $0xc8] sm:$0xff]
  %v1156 = vld [vmem:[%s1137 + $0xd8] sm:$0xff]
  %v1157 = vld [vmem:[%s1137 + $0xe0] sm:$0xff]
  %v1158 = vld [vmem:[%s1137 + $0xf0] sm:$0xff]
  %v1159 = vld [vmem:[%s1137 + $0xf8] sm:$0xff]
  %v1160 = vld [vmem:[%s1137 + $0x108] sm:$0xff]
  %v1161 = vld [vmem:[%s1137 + $0x110] sm:$0xff]
  %v1162 = vld [vmem:[%s1137 + $0x120] sm:$0xff]
  %v1163 = vld [vmem:[%s1137 + $0x128] sm:$0xff]
  %v1164 = vld [vmem:[%s1137 + $0x138] sm:$0xff]
  %v1165 = vld [vmem:[%s1137 + $0x140] sm:$0xff]
  %v1166 = vld [vmem:[%s1137 + $0x150] sm:$0xff]
  %v1167 = vld [vmem:[%s1137 + $0x158] sm:$0xff]
  %v1168 = vld [vmem:[%s1137 + $0x168] sm:$0xff]
  %v1169 = vld [vmem:[%s1137 + $0x170] sm:$0xff]
  %v1170 = vld [vmem:[%s1137 + $0x1b0] sm:$0xff]
  %v1171 = vld [vmem:[%s1137 + $0x1b8] sm:$0xff]
  %v1172 = vld [vmem:[%s1137 + $0x1c8] sm:$0xff]
  %v1173 = vld [vmem:[%s1137 + $0x1d0] sm:$0xff]
  %v1174 = vld [vmem:[%s1137 + $0x1e0] sm:$0xff]
  %v1175 = vld [vmem:[%s1137 + $0x1e8] sm:$0xff]
  %v1176 = vld [vmem:[%s1137 + $0x1f8] sm:$0xff]
  %v1177 = vld [vmem:[%s1137 + $0x200] sm:$0xff]
  %v1178 = vld [vmem:[%s1137 + $0x210] sm:$0xff]
  %v1179 = vld [vmem:[%s1137 + $0x218] sm:$0xff]
  %v1180 = vld [vmem:[%s1137 + $0x228] sm:$0xff]
  %v1181 = vld [vmem:[%s1137 + $0x230] sm:$0xff]
  %v1182 = vld [vmem:[%s1137 + $0x240] sm:$0xff]
  %v1183 = vld [vmem:[%s1137 + $0x248] sm:$0xff]
  %v1184 = vld [vmem:[%s1137 + $0x258] sm:$0xff]
  %v1185 = vld [vmem:[%s1137 + $0x260] sm:$0xff]
  %v1186 = vld [vmem:[%s1137 + $0x270] sm:$0xff]
  %v1187 = vld [vmem:[%s1137 + $0x278] sm:$0xff]
  %v1188 = vld [vmem:[%s1137 + $0x288] sm:$0xff]
  %v1189 = vld [vmem:[%s1137 + $0x290] sm:$0xff]
  %v1190 = vld [vmem:[%s1137 + $0x2a0] sm:$0xff]
  %v1191 = vld [vmem:[%s1137 + $0x2a8] sm:$0xff]
  %v1192 = vld [vmem:[%s1137 + $0x2b8] sm:$0xff]
  %v1193 = vld [vmem:[%s1137 + $0x2c0] sm:$0xff]
  %v1194 = vld [vmem:[%s1137 + $0x2d0] sm:$0xff]
  %v1195 = vld [vmem:[%s1137 + $0x2d8] sm:$0xff]
  %v1196 = vld [vmem:[%s1137 + $0x2e8] sm:$0xff]
  %v1197 = vld [vmem:[%s1137 + $0x2f0] sm:$0xff]
  %v1198 = vld [vmem:[%s1137 + $0x300] sm:$0xff]
  %v1199 = vld [vmem:[%s1137 + $0x308] sm:$0xff]
  %v1200 = vld [vmem:[%s1137 + $0x318] sm:$0xff]
  %v1201 = vld [vmem:[%s1137 + $0x320] sm:$0xff]
  %v1202 = vld [vmem:[%s1137 + $0x1] sm:$0xff]
  %v1203 = vld [vmem:[%s1137 + $0x9] sm:$0xff]
  %v1204 = vld [vmem:[%s1137 + $0x19] sm:$0xff]
  %v1205 = vld [vmem:[%s1137 + $0x21] sm:$0xff]
  %v1206 = vld [vmem:[%s1137 + $0x31] sm:$0xff]
  %v1207 = vld [vmem:[%s1137 + $0x39] sm:$0xff]
  %v1208 = vld [vmem:[%s1137 + $0x49] sm:$0xff]
  %v1209 = vld [vmem:[%s1137 + $0x51] sm:$0xff]
  %v1210 = vld [vmem:[%s1137 + $0x61] sm:$0xff]
  %v1211 = vld [vmem:[%s1137 + $0x69] sm:$0xff]
  %v1212 = vld [vmem:[%s1137 + $0x79] sm:$0xff]
  %v1213 = vld [vmem:[%s1137 + $0x81] sm:$0xff]
  %v1214 = vld [vmem:[%s1137 + $0x91] sm:$0xff]
  %v1215 = vld [vmem:[%s1137 + $0x99] sm:$0xff]
  %v1216 = vld [vmem:[%s1137 + $0xa9] sm:$0xff]
  %v1217 = vld [vmem:[%s1137 + $0xb1] sm:$0xff]
  %v1218 = vld [vmem:[%s1137 + $0xc1] sm:$0xff]
  %v1219 = vld [vmem:[%s1137 + $0xc9] sm:$0xff]
  %v1220 = vld [vmem:[%s1137 + $0xd9] sm:$0xff]
  %v1221 = vld [vmem:[%s1137 + $0xe1] sm:$0xff]
  %v1222 = vld [vmem:[%s1137 + $0xf1] sm:$0xff]
  %v1223 = vld [vmem:[%s1137 + $0xf9] sm:$0xff]
  %v1224 = vld [vmem:[%s1137 + $0x109] sm:$0xff]
  %v1225 = vld [vmem:[%s1137 + $0x111] sm:$0xff]
  %v1226 = vld [vmem:[%s1137 + $0x121] sm:$0xff]
  %v1227 = vld [vmem:[%s1137 + $0x129] sm:$0xff]
  %v1228 = vld [vmem:[%s1137 + $0x139] sm:$0xff]
  %v1229 = vld [vmem:[%s1137 + $0x141] sm:$0xff]
  %v1230 = vld [vmem:[%s1137 + $0x151] sm:$0xff]
  %v1231 = vld [vmem:[%s1137 + $0x159] sm:$0xff]
  %v1232 = vld [vmem:[%s1137 + $0x169] sm:$0xff]
  %v1233 = vld [vmem:[%s1137 + $0x171] sm:$0xff]
  %v1234 = vld [vmem:[%s1137 + $0x1b1] sm:$0xff]
  %v1235 = vld [vmem:[%s1137 + $0x1b9] sm:$0xff]
  %v1236 = vld [vmem:[%s1137 + $0x1c9] sm:$0xff]
  %v1237 = vld [vmem:[%s1137 + $0x1d1] sm:$0xff]
  %v1238 = vld [vmem:[%s1137 + $0x1e1] sm:$0xff]
  %v1239 = vld [vmem:[%s1137 + $0x1e9] sm:$0xff]
  %v1240 = vld [vmem:[%s1137 + $0x1f9] sm:$0xff]
  %v1241 = vld [vmem:[%s1137 + $0x201] sm:$0xff]
  %v1242 = vld [vmem:[%s1137 + $0x211] sm:$0xff]
  %v1243 = vld [vmem:[%s1137 + $0x219] sm:$0xff]
  %v1244 = vld [vmem:[%s1137 + $0x229] sm:$0xff]
  %v1245 = vld [vmem:[%s1137 + $0x231] sm:$0xff]
  %v1246 = vld [vmem:[%s1137 + $0x241] sm:$0xff]
  %v1247 = vld [vmem:[%s1137 + $0x249] sm:$0xff]
  %v1248 = vld [vmem:[%s1137 + $0x259] sm:$0xff]
  %v1249 = vld [vmem:[%s1137 + $0x261] sm:$0xff]
  %v1250 = vld [vmem:[%s1137 + $0x271] sm:$0xff]
  %v1251 = vld [vmem:[%s1137 + $0x279] sm:$0xff]
  %v1252 = vld [vmem:[%s1137 + $0x289] sm:$0xff]
  %v1253 = vld [vmem:[%s1137 + $0x291] sm:$0xff]
  %v1254 = vld [vmem:[%s1137 + $0x2a1] sm:$0xff]
  %v1255 = vld [vmem:[%s1137 + $0x2a9] sm:$0xff]
  %v1256 = vld [vmem:[%s1137 + $0x2b9] sm:$0xff]
  %v1257 = vld [vmem:[%s1137 + $0x2c1] sm:$0xff]
  %v1258 = vld [vmem:[%s1137 + $0x2d1] sm:$0xff]
  %v1259 = vld [vmem:[%s1137 + $0x2d9] sm:$0xff]
  %v1260 = vld [vmem:[%s1137 + $0x2e9] sm:$0xff]
  %v1261 = vld [vmem:[%s1137 + $0x2f1] sm:$0xff]
  %v1262 = vld [vmem:[%s1137 + $0x301] sm:$0xff]
  %v1263 = vld [vmem:[%s1137 + $0x309] sm:$0xff]
  %v1264 = vld [vmem:[%s1137 + $0x319] sm:$0xff]
  %v1265 = vld [vmem:[%s1137 + $0x321] sm:$0xff]
  %v1266 = vld [vmem:[%s1137 + $0x2] sm:$0xff]
  %v1267 = vld [vmem:[%s1137 + $0xa] sm:$0xff]
  %v1268 = vld [vmem:[%s1137 + $0x1a] sm:$0xff]
  %v1269 = vld [vmem:[%s1137 + $0x22] sm:$0xff]
  %v1270 = vld [vmem:[%s1137 + $0x32] sm:$0xff]
  %v1271 = vld [vmem:[%s1137 + $0x3a] sm:$0xff]
  %v1272 = vld [vmem:[%s1137 + $0x4a] sm:$0xff]
  %v1273 = vld [vmem:[%s1137 + $0x52] sm:$0xff]
  %v1274 = vld [vmem:[%s1137 + $0x62] sm:$0xff]
  %v1275 = vld [vmem:[%s1137 + $0x6a] sm:$0xff]
  %v1276 = vld [vmem:[%s1137 + $0x7a] sm:$0xff]
  %v1277 = vld [vmem:[%s1137 + $0x82] sm:$0xff]
  %v1278 = vld [vmem:[%s1137 + $0x92] sm:$0xff]
  %v1279 = vld [vmem:[%s1137 + $0x9a] sm:$0xff]
  %v1280 = vld [vmem:[%s1137 + $0xaa] sm:$0xff]
  %v1281 = vld [vmem:[%s1137 + $0xb2] sm:$0xff]
  %v1282 = vld [vmem:[%s1137 + $0xc2] sm:$0xff]
  %v1283 = vld [vmem:[%s1137 + $0xca] sm:$0xff]
  %v1284 = vld [vmem:[%s1137 + $0xda] sm:$0xff]
  %v1285 = vld [vmem:[%s1137 + $0xe2] sm:$0xff]
  %v1286 = vld [vmem:[%s1137 + $0xf2] sm:$0xff]
  %v1287 = vld [vmem:[%s1137 + $0xfa] sm:$0xff]
  %v1288 = vld [vmem:[%s1137 + $0x10a] sm:$0xff]
  %v1289 = vld [vmem:[%s1137 + $0x112] sm:$0xff]
  %v1290 = vld [vmem:[%s1137 + $0x122] sm:$0xff]
  %v1291 = vld [vmem:[%s1137 + $0x12a] sm:$0xff]
  %v1292 = vld [vmem:[%s1137 + $0x13a] sm:$0xff]
  %v1293 = vld [vmem:[%s1137 + $0x142] sm:$0xff]
  %v1294 = vld [vmem:[%s1137 + $0x152] sm:$0xff]
  %v1295 = vld [vmem:[%s1137 + $0x15a] sm:$0xff]
  %v1296 = vld [vmem:[%s1137 + $0x16a] sm:$0xff]
  %v1297 = vld [vmem:[%s1137 + $0x172] sm:$0xff]
  %v1298 = vld [vmem:[%s1137 + $0x1b2] sm:$0xff]
  %v1299 = vld [vmem:[%s1137 + $0x1ba] sm:$0xff]
  %v1300 = vld [vmem:[%s1137 + $0x1ca] sm:$0xff]
  %v1301 = vld [vmem:[%s1137 + $0x1d2] sm:$0xff]
  %v1302 = vld [vmem:[%s1137 + $0x1e2] sm:$0xff]
  %v1303 = vld [vmem:[%s1137 + $0x1ea] sm:$0xff]
  %v1304 = vld [vmem:[%s1137 + $0x1fa] sm:$0xff]
  %v1305 = vld [vmem:[%s1137 + $0x202] sm:$0xff]
  %v1306 = vld [vmem:[%s1137 + $0x212] sm:$0xff]
  %v1307 = vld [vmem:[%s1137 + $0x21a] sm:$0xff]
  %v1308 = vld [vmem:[%s1137 + $0x22a] sm:$0xff]
  %v1309 = vld [vmem:[%s1137 + $0x232] sm:$0xff]
  %v1310 = vld [vmem:[%s1137 + $0x242] sm:$0xff]
  %v1311 = vld [vmem:[%s1137 + $0x24a] sm:$0xff]
  %v1312 = vld [vmem:[%s1137 + $0x25a] sm:$0xff]
  %v1313 = vld [vmem:[%s1137 + $0x262] sm:$0xff]
  %v1314 = vld [vmem:[%s1137 + $0x272] sm:$0xff]
  %v1315 = vld [vmem:[%s1137 + $0x27a] sm:$0xff]
  %v1316 = vld [vmem:[%s1137 + $0x28a] sm:$0xff]
  %v1317 = vld [vmem:[%s1137 + $0x292] sm:$0xff]
  %v1318 = vld [vmem:[%s1137 + $0x2a2] sm:$0xff]
  %v1319 = vld [vmem:[%s1137 + $0x2aa] sm:$0xff]
  %v1320 = vld [vmem:[%s1137 + $0x2ba] sm:$0xff]
  %v1321 = vld [vmem:[%s1137 + $0x2c2] sm:$0xff]
  %v1322 = vld [vmem:[%s1137 + $0x2d2] sm:$0xff]
  %v1323 = vld [vmem:[%s1137 + $0x2da] sm:$0xff]
  %v1324 = vld [vmem:[%s1137 + $0x2ea] sm:$0xff]
  %v1325 = vld [vmem:[%s1137 + $0x2f2] sm:$0xff]
  %v1326 = vld [vmem:[%s1137 + $0x302] sm:$0xff]
  %v1327 = vld [vmem:[%s1137 + $0x30a] sm:$0xff]
  %v1328 = vld [vmem:[%s1137 + $0x31a] sm:$0xff]
  %v1329 = vld [vmem:[%s1137 + $0x322] sm:$0xff]
  %1394 = vrot.lane.b32.xlu0 %v817, 8
  %v1395 = vpop.permute.xlu0 %1394
  %1396 = vrot.lane.b32.xlu0 %v818, 8
  %v1397 = vpop.permute.xlu0 %1396
  %1398 = vrot.lane.b32.xlu0 %v819, 8
  %v1399 = vpop.permute.xlu0 %1398
  %1400 = vrot.lane.b32.xlu0 %v820, 8
  %v1401 = vpop.permute.xlu0 %1400
  %1402 = vrot.lane.b32.xlu0 %v821, 8
  %v1403 = vpop.permute.xlu0 %1402
  %1404 = vrot.lane.b32.xlu0 %v822, 8
  %v1405 = vpop.permute.xlu0 %1404
  %1406 = vrot.lane.b32.xlu0 %v823, 8
  %v1407 = vpop.permute.xlu0 %1406
  %1408 = vrot.lane.b32.xlu0 %v824, 8
  %v1409 = vpop.permute.xlu0 %1408
  %1410 = vrot.lane.b32.xlu0 %v825, 8
  %v1411 = vpop.permute.xlu0 %1410
  %1412 = vrot.lane.b32.xlu0 %v826, 8
  %v1413 = vpop.permute.xlu0 %1412
  %1414 = vrot.lane.b32.xlu0 %v827, 8
  %v1415 = vpop.permute.xlu0 %1414
  %1416 = vrot.lane.b32.xlu0 %v828, 8
  %v1417 = vpop.permute.xlu0 %1416
  %1418 = vrot.lane.b32.xlu0 %v829, 8
  %v1419 = vpop.permute.xlu0 %1418
  %1420 = vrot.lane.b32.xlu0 %v830, 8
  %v1421 = vpop.permute.xlu0 %1420
  %1422 = vrot.lane.b32.xlu0 %v831, 8
  %v1423 = vpop.permute.xlu0 %1422
  %1424 = vrot.lane.b32.xlu0 %v832, 8
  %v1425 = vpop.permute.xlu0 %1424
  %1426 = vrot.lane.b32.xlu0 %v833, 8
  %v1427 = vpop.permute.xlu0 %1426
  %1428 = vrot.lane.b32.xlu0 %v834, 8
  %v1429 = vpop.permute.xlu0 %1428
  %1430 = vrot.lane.b32.xlu0 %v835, 8
  %v1431 = vpop.permute.xlu0 %1430
  %1432 = vrot.lane.b32.xlu0 %v836, 8
  %v1433 = vpop.permute.xlu0 %1432
  %1434 = vrot.lane.b32.xlu0 %v837, 8
  %v1435 = vpop.permute.xlu0 %1434
  %1436 = vrot.lane.b32.xlu0 %v838, 8
  %v1437 = vpop.permute.xlu0 %1436
  %1438 = vrot.lane.b32.xlu0 %v839, 8
  %v1439 = vpop.permute.xlu0 %1438
  %1440 = vrot.lane.b32.xlu0 %v840, 8
  %v1441 = vpop.permute.xlu0 %1440
  %1442 = vrot.lane.b32.xlu0 %v841, 8
  %v1443 = vpop.permute.xlu0 %1442
  %1444 = vrot.lane.b32.xlu0 %v842, 8
  %v1445 = vpop.permute.xlu0 %1444
  %1446 = vrot.lane.b32.xlu0 %v843, 8
  %v1447 = vpop.permute.xlu0 %1446
  %1448 = vrot.lane.b32.xlu0 %v844, 8
  %v1449 = vpop.permute.xlu0 %1448
  %1450 = vrot.lane.b32.xlu0 %v845, 8
  %v1451 = vpop.permute.xlu0 %1450
  %1452 = vrot.lane.b32.xlu0 %v846, 8
  %v1453 = vpop.permute.xlu0 %1452
  %1454 = vrot.lane.b32.xlu0 %v847, 8
  %v1455 = vpop.permute.xlu0 %1454
  %1456 = vrot.lane.b32.xlu0 %v848, 8
  %v1457 = vpop.permute.xlu0 %1456
  %1458 = vrot.lane.b32.xlu0 %v849, 8
  %v1459 = vpop.permute.xlu0 %1458
  %1460 = vrot.lane.b32.xlu0 %v850, 8
  %v1461 = vpop.permute.xlu0 %1460
  %1462 = vrot.lane.b32.xlu0 %v851, 8
  %v1463 = vpop.permute.xlu0 %1462
  %1464 = vrot.lane.b32.xlu0 %v852, 8
  %v1465 = vpop.permute.xlu0 %1464
  %1466 = vrot.lane.b32.xlu0 %v853, 8
  %v1467 = vpop.permute.xlu0 %1466
  %1468 = vrot.lane.b32.xlu0 %v854, 8
  %v1469 = vpop.permute.xlu0 %1468
  %1470 = vrot.lane.b32.xlu0 %v855, 8
  %v1471 = vpop.permute.xlu0 %1470
  %1472 = vrot.lane.b32.xlu0 %v856, 8
  %v1473 = vpop.permute.xlu0 %1472
  %1474 = vrot.lane.b32.xlu0 %v857, 8
  %v1475 = vpop.permute.xlu0 %1474
  %1476 = vrot.lane.b32.xlu0 %v858, 8
  %v1477 = vpop.permute.xlu0 %1476
  %1478 = vrot.lane.b32.xlu0 %v859, 8
  %v1479 = vpop.permute.xlu0 %1478
  %1480 = vrot.lane.b32.xlu0 %v860, 8
  %v1481 = vpop.permute.xlu0 %1480
  %1482 = vrot.lane.b32.xlu0 %v861, 8
  %v1483 = vpop.permute.xlu0 %1482
  %1484 = vrot.lane.b32.xlu0 %v862, 8
  %v1485 = vpop.permute.xlu0 %1484
  %1486 = vrot.lane.b32.xlu0 %v863, 8
  %v1487 = vpop.permute.xlu0 %1486
  %1488 = vrot.lane.b32.xlu0 %v864, 8
  %v1489 = vpop.permute.xlu0 %1488
  %1490 = vrot.lane.b32.xlu0 %v865, 8
  %v1491 = vpop.permute.xlu0 %1490
  %1492 = vrot.lane.b32.xlu0 %v866, 8
  %v1493 = vpop.permute.xlu0 %1492
  %1494 = vrot.lane.b32.xlu0 %v867, 8
  %v1495 = vpop.permute.xlu0 %1494
  %1496 = vrot.lane.b32.xlu0 %v868, 8
  %v1497 = vpop.permute.xlu0 %1496
  %1498 = vrot.lane.b32.xlu0 %v869, 8
  %v1499 = vpop.permute.xlu0 %1498
  %1500 = vrot.lane.b32.xlu0 %v870, 8
  %v1501 = vpop.permute.xlu0 %1500
  %1502 = vrot.lane.b32.xlu0 %v871, 8
  %v1503 = vpop.permute.xlu0 %1502
  %1504 = vrot.lane.b32.xlu0 %v872, 8
  %v1505 = vpop.permute.xlu0 %1504
  %1506 = vrot.lane.b32.xlu0 %v873, 8
  %v1507 = vpop.permute.xlu0 %1506
  %1508 = vrot.lane.b32.xlu0 %v874, 8
  %v1509 = vpop.permute.xlu0 %1508
  %1510 = vrot.lane.b32.xlu0 %v875, 8
  %v1511 = vpop.permute.xlu0 %1510
  %1512 = vrot.lane.b32.xlu0 %v876, 8
  %v1513 = vpop.permute.xlu0 %1512
  %1514 = vrot.lane.b32.xlu0 %v877, 8
  %v1515 = vpop.permute.xlu0 %1514
  %1516 = vrot.lane.b32.xlu0 %v878, 8
  %v1517 = vpop.permute.xlu0 %1516
  %1518 = vrot.lane.b32.xlu0 %v879, 8
  %v1519 = vpop.permute.xlu0 %1518
  %1520 = vrot.lane.b32.xlu0 %v880, 8
  %v1521 = vpop.permute.xlu0 %1520
  %1650 = vrot.lane.b32.xlu0 %v881, 16
  %v1651 = vpop.permute.xlu0 %1650
  %1652 = vrot.lane.b32.xlu0 %v882, 16
  %v1653 = vpop.permute.xlu0 %1652
  %1654 = vrot.lane.b32.xlu0 %v883, 16
  %v1655 = vpop.permute.xlu0 %1654
  %1656 = vrot.lane.b32.xlu0 %v884, 16
  %v1657 = vpop.permute.xlu0 %1656
  %1658 = vrot.lane.b32.xlu0 %v885, 16
  %v1659 = vpop.permute.xlu0 %1658
  %1660 = vrot.lane.b32.xlu0 %v886, 16
  %v1661 = vpop.permute.xlu0 %1660
  %1662 = vrot.lane.b32.xlu0 %v887, 16
  %v1663 = vpop.permute.xlu0 %1662
  %1664 = vrot.lane.b32.xlu0 %v888, 16
  %v1665 = vpop.permute.xlu0 %1664
  %1666 = vrot.lane.b32.xlu0 %v889, 16
  %v1667 = vpop.permute.xlu0 %1666
  %1668 = vrot.lane.b32.xlu0 %v890, 16
  %v1669 = vpop.permute.xlu0 %1668
  %1670 = vrot.lane.b32.xlu0 %v891, 16
  %v1671 = vpop.permute.xlu0 %1670
  %1672 = vrot.lane.b32.xlu0 %v892, 16
  %v1673 = vpop.permute.xlu0 %1672
  %1674 = vrot.lane.b32.xlu0 %v893, 16
  %v1675 = vpop.permute.xlu0 %1674
  %1676 = vrot.lane.b32.xlu0 %v894, 16
  %v1677 = vpop.permute.xlu0 %1676
  %1678 = vrot.lane.b32.xlu0 %v895, 16
  %v1679 = vpop.permute.xlu0 %1678
  %1680 = vrot.lane.b32.xlu0 %v896, 16
  %v1681 = vpop.permute.xlu0 %1680
  %1682 = vrot.lane.b32.xlu0 %v897, 16
  %v1683 = vpop.permute.xlu0 %1682
  %1684 = vrot.lane.b32.xlu0 %v898, 16
  %v1685 = vpop.permute.xlu0 %1684
  %1686 = vrot.lane.b32.xlu0 %v899, 16
  %v1687 = vpop.permute.xlu0 %1686
  %1688 = vrot.lane.b32.xlu0 %v900, 16
  %v1689 = vpop.permute.xlu0 %1688
  %1690 = vrot.lane.b32.xlu0 %v901, 16
  %v1691 = vpop.permute.xlu0 %1690
  %1692 = vrot.lane.b32.xlu0 %v902, 16
  %v1693 = vpop.permute.xlu0 %1692
  %1694 = vrot.lane.b32.xlu0 %v903, 16
  %v1695 = vpop.permute.xlu0 %1694
  %1696 = vrot.lane.b32.xlu0 %v904, 16
  %v1697 = vpop.permute.xlu0 %1696
  %1698 = vrot.lane.b32.xlu0 %v905, 16
  %v1699 = vpop.permute.xlu0 %1698
  %1700 = vrot.lane.b32.xlu0 %v906, 16
  %v1701 = vpop.permute.xlu0 %1700
  %1702 = vrot.lane.b32.xlu0 %v907, 16
  %v1703 = vpop.permute.xlu0 %1702
  %1704 = vrot.lane.b32.xlu0 %v908, 16
  %v1705 = vpop.permute.xlu0 %1704
  %1706 = vrot.lane.b32.xlu0 %v909, 16
  %v1707 = vpop.permute.xlu0 %1706
  %1708 = vrot.lane.b32.xlu0 %v910, 16
  %v1709 = vpop.permute.xlu0 %1708
  %1710 = vrot.lane.b32.xlu0 %v911, 16
  %v1711 = vpop.permute.xlu0 %1710
  %1712 = vrot.lane.b32.xlu0 %v912, 16
  %v1713 = vpop.permute.xlu0 %1712
  %1714 = vrot.lane.b32.xlu0 %v913, 16
  %v1715 = vpop.permute.xlu0 %1714
  %1716 = vrot.lane.b32.xlu0 %v914, 16
  %v1717 = vpop.permute.xlu0 %1716
  %1718 = vrot.lane.b32.xlu0 %v915, 16
  %v1719 = vpop.permute.xlu0 %1718
  %1720 = vrot.lane.b32.xlu0 %v916, 16
  %v1721 = vpop.permute.xlu0 %1720
  %1722 = vrot.lane.b32.xlu0 %v917, 16
  %v1723 = vpop.permute.xlu0 %1722
  %1724 = vrot.lane.b32.xlu0 %v918, 16
  %v1725 = vpop.permute.xlu0 %1724
  %1726 = vrot.lane.b32.xlu0 %v919, 16
  %v1727 = vpop.permute.xlu0 %1726
  %1728 = vrot.lane.b32.xlu0 %v920, 16
  %v1729 = vpop.permute.xlu0 %1728
  %1730 = vrot.lane.b32.xlu0 %v921, 16
  %v1731 = vpop.permute.xlu0 %1730
  %1732 = vrot.lane.b32.xlu0 %v922, 16
  %v1733 = vpop.permute.xlu0 %1732
  %1734 = vrot.lane.b32.xlu0 %v923, 16
  %v1735 = vpop.permute.xlu0 %1734
  %1736 = vrot.lane.b32.xlu0 %v924, 16
  %v1737 = vpop.permute.xlu0 %1736
  %1738 = vrot.lane.b32.xlu0 %v925, 16
  %v1739 = vpop.permute.xlu0 %1738
  %1740 = vrot.lane.b32.xlu0 %v926, 16
  %v1741 = vpop.permute.xlu0 %1740
  %1742 = vrot.lane.b32.xlu0 %v927, 16
  %v1743 = vpop.permute.xlu0 %1742
  %1744 = vrot.lane.b32.xlu0 %v928, 16
  %v1745 = vpop.permute.xlu0 %1744
  %1746 = vrot.lane.b32.xlu0 %v929, 16
  %v1747 = vpop.permute.xlu0 %1746
  %1748 = vrot.lane.b32.xlu0 %v930, 16
  %v1749 = vpop.permute.xlu0 %1748
  %1750 = vrot.lane.b32.xlu0 %v931, 16
  %v1751 = vpop.permute.xlu0 %1750
  %1752 = vrot.lane.b32.xlu0 %v932, 16
  %v1753 = vpop.permute.xlu0 %1752
  %1754 = vrot.lane.b32.xlu0 %v933, 16
  %v1755 = vpop.permute.xlu0 %1754
  %1756 = vrot.lane.b32.xlu0 %v934, 16
  %v1757 = vpop.permute.xlu0 %1756
  %1758 = vrot.lane.b32.xlu0 %v935, 16
  %v1759 = vpop.permute.xlu0 %1758
  %1760 = vrot.lane.b32.xlu0 %v936, 16
  %v1761 = vpop.permute.xlu0 %1760
  %1762 = vrot.lane.b32.xlu0 %v937, 16
  %v1763 = vpop.permute.xlu0 %1762
  %1764 = vrot.lane.b32.xlu0 %v938, 16
  %v1765 = vpop.permute.xlu0 %1764
  %1766 = vrot.lane.b32.xlu0 %v939, 16
  %v1767 = vpop.permute.xlu0 %1766
  %1768 = vrot.lane.b32.xlu0 %v940, 16
  %v1769 = vpop.permute.xlu0 %1768
  %1770 = vrot.lane.b32.xlu0 %v941, 16
  %v1771 = vpop.permute.xlu0 %1770
  %1772 = vrot.lane.b32.xlu0 %v942, 16
  %v1773 = vpop.permute.xlu0 %1772
  %1774 = vrot.lane.b32.xlu0 %v943, 16
  %v1775 = vpop.permute.xlu0 %1774
  %1776 = vrot.lane.b32.xlu0 %v944, 16
  %v1777 = vpop.permute.xlu0 %1776
  %1906 = vrot.lane.b32.xlu0 %v945, 24
  %v1907 = vpop.permute.xlu0 %1906
  %1908 = vrot.lane.b32.xlu0 %v946, 24
  %v1909 = vpop.permute.xlu0 %1908
  %1910 = vrot.lane.b32.xlu0 %v947, 24
  %v1911 = vpop.permute.xlu0 %1910
  %1912 = vrot.lane.b32.xlu0 %v948, 24
  %v1913 = vpop.permute.xlu0 %1912
  %1914 = vrot.lane.b32.xlu0 %v949, 24
  %v1915 = vpop.permute.xlu0 %1914
  %1916 = vrot.lane.b32.xlu0 %v950, 24
  %v1917 = vpop.permute.xlu0 %1916
  %1918 = vrot.lane.b32.xlu0 %v951, 24
  %v1919 = vpop.permute.xlu0 %1918
  %1920 = vrot.lane.b32.xlu0 %v952, 24
  %v1921 = vpop.permute.xlu0 %1920
  %1922 = vrot.lane.b32.xlu0 %v953, 24
  %v1923 = vpop.permute.xlu0 %1922
  %1924 = vrot.lane.b32.xlu0 %v954, 24
  %v1925 = vpop.permute.xlu0 %1924
  %1926 = vrot.lane.b32.xlu0 %v955, 24
  %v1927 = vpop.permute.xlu0 %1926
  %1928 = vrot.lane.b32.xlu0 %v956, 24
  %v1929 = vpop.permute.xlu0 %1928
  %1930 = vrot.lane.b32.xlu0 %v957, 24
  %v1931 = vpop.permute.xlu0 %1930
  %1932 = vrot.lane.b32.xlu0 %v958, 24
  %v1933 = vpop.permute.xlu0 %1932
  %1934 = vrot.lane.b32.xlu0 %v959, 24
  %v1935 = vpop.permute.xlu0 %1934
  %1936 = vrot.lane.b32.xlu0 %v960, 24
  %v1937 = vpop.permute.xlu0 %1936
  %1938 = vrot.lane.b32.xlu0 %v961, 24
  %v1939 = vpop.permute.xlu0 %1938
  %1940 = vrot.lane.b32.xlu0 %v962, 24
  %v1941 = vpop.permute.xlu0 %1940
  %1942 = vrot.lane.b32.xlu0 %v963, 24
  %v1943 = vpop.permute.xlu0 %1942
  %1944 = vrot.lane.b32.xlu0 %v964, 24
  %v1945 = vpop.permute.xlu0 %1944
  %1946 = vrot.lane.b32.xlu0 %v965, 24
  %v1947 = vpop.permute.xlu0 %1946
  %1948 = vrot.lane.b32.xlu0 %v966, 24
  %v1949 = vpop.permute.xlu0 %1948
  %1950 = vrot.lane.b32.xlu0 %v967, 24
  %v1951 = vpop.permute.xlu0 %1950
  %1952 = vrot.lane.b32.xlu0 %v968, 24
  %v1953 = vpop.permute.xlu0 %1952
  %1954 = vrot.lane.b32.xlu0 %v969, 24
  %v1955 = vpop.permute.xlu0 %1954
  %1956 = vrot.lane.b32.xlu0 %v970, 24
  %v1957 = vpop.permute.xlu0 %1956
  %1958 = vrot.lane.b32.xlu0 %v971, 24
  %v1959 = vpop.permute.xlu0 %1958
  %1960 = vrot.lane.b32.xlu0 %v972, 24
  %v1961 = vpop.permute.xlu0 %1960
  %1962 = vrot.lane.b32.xlu0 %v973, 24
  %v1963 = vpop.permute.xlu0 %1962
  %1964 = vrot.lane.b32.xlu0 %v974, 24
  %v1965 = vpop.permute.xlu0 %1964
  %1966 = vrot.lane.b32.xlu0 %v975, 24
  %v1967 = vpop.permute.xlu0 %1966
  %1968 = vrot.lane.b32.xlu0 %v976, 24
  %v1969 = vpop.permute.xlu0 %1968
  %1970 = vrot.lane.b32.xlu0 %v977, 24
  %v1971 = vpop.permute.xlu0 %1970
  %1972 = vrot.lane.b32.xlu0 %v978, 24
  %v1973 = vpop.permute.xlu0 %1972
  %1974 = vrot.lane.b32.xlu0 %v979, 24
  %v1975 = vpop.permute.xlu0 %1974
  %1976 = vrot.lane.b32.xlu0 %v980, 24
  %v1977 = vpop.permute.xlu0 %1976
  %1978 = vrot.lane.b32.xlu0 %v981, 24
  %v1979 = vpop.permute.xlu0 %1978
  %1980 = vrot.lane.b32.xlu0 %v982, 24
  %v1981 = vpop.permute.xlu0 %1980
  %1982 = vrot.lane.b32.xlu0 %v983, 24
  %v1983 = vpop.permute.xlu0 %1982
  %1984 = vrot.lane.b32.xlu0 %v984, 24
  %v1985 = vpop.permute.xlu0 %1984
  %1986 = vrot.lane.b32.xlu0 %v985, 24
  %v1987 = vpop.permute.xlu0 %1986
  %1988 = vrot.lane.b32.xlu0 %v986, 24
  %v1989 = vpop.permute.xlu0 %1988
  %1990 = vrot.lane.b32.xlu0 %v987, 24
  %v1991 = vpop.permute.xlu0 %1990
  %1992 = vrot.lane.b32.xlu0 %v988, 24
  %v1993 = vpop.permute.xlu0 %1992
  %1994 = vrot.lane.b32.xlu0 %v989, 24
  %v1995 = vpop.permute.xlu0 %1994
  %1996 = vrot.lane.b32.xlu0 %v990, 24
  %v1997 = vpop.permute.xlu0 %1996
  %1998 = vrot.lane.b32.xlu0 %v991, 24
  %v1999 = vpop.permute.xlu0 %1998
  %2000 = vrot.lane.b32.xlu0 %v992, 24
  %v2001 = vpop.permute.xlu0 %2000
  %2002 = vrot.lane.b32.xlu0 %v993, 24
  %v2003 = vpop.permute.xlu0 %2002
  %2004 = vrot.lane.b32.xlu0 %v994, 24
  %v2005 = vpop.permute.xlu0 %2004
  %2006 = vrot.lane.b32.xlu0 %v995, 24
  %v2007 = vpop.permute.xlu0 %2006
  %2008 = vrot.lane.b32.xlu0 %v996, 24
  %v2009 = vpop.permute.xlu0 %2008
  %2010 = vrot.lane.b32.xlu0 %v997, 24
  %v2011 = vpop.permute.xlu0 %2010
  %2012 = vrot.lane.b32.xlu0 %v998, 24
  %v2013 = vpop.permute.xlu0 %2012
  %2014 = vrot.lane.b32.xlu0 %v999, 24
  %v2015 = vpop.permute.xlu0 %2014
  %2016 = vrot.lane.b32.xlu0 %v1000, 24
  %v2017 = vpop.permute.xlu0 %2016
  %2018 = vrot.lane.b32.xlu0 %v1001, 24
  %v2019 = vpop.permute.xlu0 %2018
  %2020 = vrot.lane.b32.xlu0 %v1002, 24
  %v2021 = vpop.permute.xlu0 %2020
  %2022 = vrot.lane.b32.xlu0 %v1003, 24
  %v2023 = vpop.permute.xlu0 %2022
  %2024 = vrot.lane.b32.xlu0 %v1004, 24
  %v2025 = vpop.permute.xlu0 %2024
  %2026 = vrot.lane.b32.xlu0 %v1005, 24
  %v2027 = vpop.permute.xlu0 %2026
  %2028 = vrot.lane.b32.xlu0 %v1006, 24
  %v2029 = vpop.permute.xlu0 %2028
  %2030 = vrot.lane.b32.xlu0 %v1007, 24
  %v2031 = vpop.permute.xlu0 %2030
  %2032 = vrot.lane.b32.xlu0 %v1008, 24
  %v2033 = vpop.permute.xlu0 %2032
  %2162 = vrot.lane.b32.xlu0 %v1009, 32
  %v2163 = vpop.permute.xlu0 %2162
  %2164 = vrot.lane.b32.xlu0 %v1010, 32
  %v2165 = vpop.permute.xlu0 %2164
  %2166 = vrot.lane.b32.xlu0 %v1011, 32
  %v2167 = vpop.permute.xlu0 %2166
  %2168 = vrot.lane.b32.xlu0 %v1012, 32
  %v2169 = vpop.permute.xlu0 %2168
  %2170 = vrot.lane.b32.xlu0 %v1013, 32
  %v2171 = vpop.permute.xlu0 %2170
  %2172 = vrot.lane.b32.xlu0 %v1014, 32
  %v2173 = vpop.permute.xlu0 %2172
  %2174 = vrot.lane.b32.xlu0 %v1015, 32
  %v2175 = vpop.permute.xlu0 %2174
  %2176 = vrot.lane.b32.xlu0 %v1016, 32
  %v2177 = vpop.permute.xlu0 %2176
  %2178 = vrot.lane.b32.xlu0 %v1017, 32
  %v2179 = vpop.permute.xlu0 %2178
  %2180 = vrot.lane.b32.xlu0 %v1018, 32
  %v2181 = vpop.permute.xlu0 %2180
  %2182 = vrot.lane.b32.xlu0 %v1019, 32
  %v2183 = vpop.permute.xlu0 %2182
  %2184 = vrot.lane.b32.xlu0 %v1020, 32
  %v2185 = vpop.permute.xlu0 %2184
  %2186 = vrot.lane.b32.xlu0 %v1021, 32
  %v2187 = vpop.permute.xlu0 %2186
  %2188 = vrot.lane.b32.xlu0 %v1022, 32
  %v2189 = vpop.permute.xlu0 %2188
  %2190 = vrot.lane.b32.xlu0 %v1023, 32
  %v2191 = vpop.permute.xlu0 %2190
  %2192 = vrot.lane.b32.xlu0 %v1024, 32
  %v2193 = vpop.permute.xlu0 %2192
  %2194 = vrot.lane.b32.xlu0 %v1025, 32
  %v2195 = vpop.permute.xlu0 %2194
  %2196 = vrot.lane.b32.xlu0 %v1026, 32
  %v2197 = vpop.permute.xlu0 %2196
  %2198 = vrot.lane.b32.xlu0 %v1027, 32
  %v2199 = vpop.permute.xlu0 %2198
  %2200 = vrot.lane.b32.xlu0 %v1028, 32
  %v2201 = vpop.permute.xlu0 %2200
  %2202 = vrot.lane.b32.xlu0 %v1029, 32
  %v2203 = vpop.permute.xlu0 %2202
  %2204 = vrot.lane.b32.xlu0 %v1030, 32
  %v2205 = vpop.permute.xlu0 %2204
  %2206 = vrot.lane.b32.xlu0 %v1031, 32
  %v2207 = vpop.permute.xlu0 %2206
  %2208 = vrot.lane.b32.xlu0 %v1032, 32
  %v2209 = vpop.permute.xlu0 %2208
  %2210 = vrot.lane.b32.xlu0 %v1033, 32
  %v2211 = vpop.permute.xlu0 %2210
  %2212 = vrot.lane.b32.xlu0 %v1034, 32
  %v2213 = vpop.permute.xlu0 %2212
  %2214 = vrot.lane.b32.xlu0 %v1035, 32
  %v2215 = vpop.permute.xlu0 %2214
  %2216 = vrot.lane.b32.xlu0 %v1036, 32
  %v2217 = vpop.permute.xlu0 %2216
  %2218 = vrot.lane.b32.xlu0 %v1037, 32
  %v2219 = vpop.permute.xlu0 %2218
  %2220 = vrot.lane.b32.xlu0 %v1038, 32
  %v2221 = vpop.permute.xlu0 %2220
  %2222 = vrot.lane.b32.xlu0 %v1039, 32
  %v2223 = vpop.permute.xlu0 %2222
  %2224 = vrot.lane.b32.xlu0 %v1040, 32
  %v2225 = vpop.permute.xlu0 %2224
  %2226 = vrot.lane.b32.xlu0 %v1041, 32
  %v2227 = vpop.permute.xlu0 %2226
  %2228 = vrot.lane.b32.xlu0 %v1042, 32
  %v2229 = vpop.permute.xlu0 %2228
  %2230 = vrot.lane.b32.xlu0 %v1043, 32
  %v2231 = vpop.permute.xlu0 %2230
  %2232 = vrot.lane.b32.xlu0 %v1044, 32
  %v2233 = vpop.permute.xlu0 %2232
  %2234 = vrot.lane.b32.xlu0 %v1045, 32
  %v2235 = vpop.permute.xlu0 %2234
  %2236 = vrot.lane.b32.xlu0 %v1046, 32
  %v2237 = vpop.permute.xlu0 %2236
  %2238 = vrot.lane.b32.xlu0 %v1047, 32
  %v2239 = vpop.permute.xlu0 %2238
  %2240 = vrot.lane.b32.xlu0 %v1048, 32
  %v2241 = vpop.permute.xlu0 %2240
  %2242 = vrot.lane.b32.xlu0 %v1049, 32
  %v2243 = vpop.permute.xlu0 %2242
  %2244 = vrot.lane.b32.xlu0 %v1050, 32
  %v2245 = vpop.permute.xlu0 %2244
  %2246 = vrot.lane.b32.xlu0 %v1051, 32
  %v2247 = vpop.permute.xlu0 %2246
  %2248 = vrot.lane.b32.xlu0 %v1052, 32
  %v2249 = vpop.permute.xlu0 %2248
  %2250 = vrot.lane.b32.xlu0 %v1053, 32
  %v2251 = vpop.permute.xlu0 %2250
  %2252 = vrot.lane.b32.xlu0 %v1054, 32
  %v2253 = vpop.permute.xlu0 %2252
  %2254 = vrot.lane.b32.xlu0 %v1055, 32
  %v2255 = vpop.permute.xlu0 %2254
  %2256 = vrot.lane.b32.xlu0 %v1056, 32
  %v2257 = vpop.permute.xlu0 %2256
  %2258 = vrot.lane.b32.xlu0 %v1057, 32
  %v2259 = vpop.permute.xlu0 %2258
  %2260 = vrot.lane.b32.xlu0 %v1058, 32
  %v2261 = vpop.permute.xlu0 %2260
  %2262 = vrot.lane.b32.xlu0 %v1059, 32
  %v2263 = vpop.permute.xlu0 %2262
  %2264 = vrot.lane.b32.xlu0 %v1060, 32
  %v2265 = vpop.permute.xlu0 %2264
  %2266 = vrot.lane.b32.xlu0 %v1061, 32
  %v2267 = vpop.permute.xlu0 %2266
  %2268 = vrot.lane.b32.xlu0 %v1062, 32
  %v2269 = vpop.permute.xlu0 %2268
  %2270 = vrot.lane.b32.xlu0 %v1063, 32
  %v2271 = vpop.permute.xlu0 %2270
  %2272 = vrot.lane.b32.xlu0 %v1064, 32
  %v2273 = vpop.permute.xlu0 %2272
  %2274 = vrot.lane.b32.xlu0 %v1065, 32
  %v2275 = vpop.permute.xlu0 %2274
  %2276 = vrot.lane.b32.xlu0 %v1066, 32
  %v2277 = vpop.permute.xlu0 %2276
  %2278 = vrot.lane.b32.xlu0 %v1067, 32
  %v2279 = vpop.permute.xlu0 %2278
  %2280 = vrot.lane.b32.xlu0 %v1068, 32
  %v2281 = vpop.permute.xlu0 %2280
  %2282 = vrot.lane.b32.xlu0 %v1069, 32
  %v2283 = vpop.permute.xlu0 %2282
  %2284 = vrot.lane.b32.xlu0 %v1070, 32
  %v2285 = vpop.permute.xlu0 %2284
  %2286 = vrot.lane.b32.xlu0 %v1071, 32
  %v2287 = vpop.permute.xlu0 %2286
  %2288 = vrot.lane.b32.xlu0 %v1072, 32
  %v2289 = vpop.permute.xlu0 %2288
  %2418 = vrot.lane.b32.xlu0 %v1073, 40
  %v2419 = vpop.permute.xlu0 %2418
  %2420 = vrot.lane.b32.xlu0 %v1074, 40
  %v2421 = vpop.permute.xlu0 %2420
  %2422 = vrot.lane.b32.xlu0 %v1075, 40
  %v2423 = vpop.permute.xlu0 %2422
  %2424 = vrot.lane.b32.xlu0 %v1076, 40
  %v2425 = vpop.permute.xlu0 %2424
  %2426 = vrot.lane.b32.xlu0 %v1077, 40
  %v2427 = vpop.permute.xlu0 %2426
  %2428 = vrot.lane.b32.xlu0 %v1078, 40
  %v2429 = vpop.permute.xlu0 %2428
  %2430 = vrot.lane.b32.xlu0 %v1079, 40
  %v2431 = vpop.permute.xlu0 %2430
  %2432 = vrot.lane.b32.xlu0 %v1080, 40
  %v2433 = vpop.permute.xlu0 %2432
  %2434 = vrot.lane.b32.xlu0 %v1081, 40
  %v2435 = vpop.permute.xlu0 %2434
  %2436 = vrot.lane.b32.xlu0 %v1082, 40
  %v2437 = vpop.permute.xlu0 %2436
  %2438 = vrot.lane.b32.xlu0 %v1083, 40
  %v2439 = vpop.permute.xlu0 %2438
  %2440 = vrot.lane.b32.xlu0 %v1084, 40
  %v2441 = vpop.permute.xlu0 %2440
  %2442 = vrot.lane.b32.xlu0 %v1085, 40
  %v2443 = vpop.permute.xlu0 %2442
  %2444 = vrot.lane.b32.xlu0 %v1086, 40
  %v2445 = vpop.permute.xlu0 %2444
  %2446 = vrot.lane.b32.xlu0 %v1087, 40
  %v2447 = vpop.permute.xlu0 %2446
  %2448 = vrot.lane.b32.xlu0 %v1088, 40
  %v2449 = vpop.permute.xlu0 %2448
  %2450 = vrot.lane.b32.xlu0 %v1089, 40
  %v2451 = vpop.permute.xlu0 %2450
  %2452 = vrot.lane.b32.xlu0 %v1090, 40
  %v2453 = vpop.permute.xlu0 %2452
  %2454 = vrot.lane.b32.xlu0 %v1091, 40
  %v2455 = vpop.permute.xlu0 %2454
  %2456 = vrot.lane.b32.xlu0 %v1092, 40
  %v2457 = vpop.permute.xlu0 %2456
  %2458 = vrot.lane.b32.xlu0 %v1093, 40
  %v2459 = vpop.permute.xlu0 %2458
  %2460 = vrot.lane.b32.xlu0 %v1094, 40
  %v2461 = vpop.permute.xlu0 %2460
  %2462 = vrot.lane.b32.xlu0 %v1095, 40
  %v2463 = vpop.permute.xlu0 %2462
  %2464 = vrot.lane.b32.xlu0 %v1096, 40
  %v2465 = vpop.permute.xlu0 %2464
  %2466 = vrot.lane.b32.xlu0 %v1097, 40
  %v2467 = vpop.permute.xlu0 %2466
  %2468 = vrot.lane.b32.xlu0 %v1098, 40
  %v2469 = vpop.permute.xlu0 %2468
  %2470 = vrot.lane.b32.xlu0 %v1099, 40
  %v2471 = vpop.permute.xlu0 %2470
  %2472 = vrot.lane.b32.xlu0 %v1100, 40
  %v2473 = vpop.permute.xlu0 %2472
  %2474 = vrot.lane.b32.xlu0 %v1101, 40
  %v2475 = vpop.permute.xlu0 %2474
  %2476 = vrot.lane.b32.xlu0 %v1102, 40
  %v2477 = vpop.permute.xlu0 %2476
  %2478 = vrot.lane.b32.xlu0 %v1103, 40
  %v2479 = vpop.permute.xlu0 %2478
  %2480 = vrot.lane.b32.xlu0 %v1104, 40
  %v2481 = vpop.permute.xlu0 %2480
  %2482 = vrot.lane.b32.xlu0 %v1105, 40
  %v2483 = vpop.permute.xlu0 %2482
  %2484 = vrot.lane.b32.xlu0 %v1106, 40
  %v2485 = vpop.permute.xlu0 %2484
  %2486 = vrot.lane.b32.xlu0 %v1107, 40
  %v2487 = vpop.permute.xlu0 %2486
  %2488 = vrot.lane.b32.xlu0 %v1108, 40
  %v2489 = vpop.permute.xlu0 %2488
  %2490 = vrot.lane.b32.xlu0 %v1109, 40
  %v2491 = vpop.permute.xlu0 %2490
  %2492 = vrot.lane.b32.xlu0 %v1110, 40
  %v2493 = vpop.permute.xlu0 %2492
  %2494 = vrot.lane.b32.xlu0 %v1111, 40
  %v2495 = vpop.permute.xlu0 %2494
  %2496 = vrot.lane.b32.xlu0 %v1112, 40
  %v2497 = vpop.permute.xlu0 %2496
  %2498 = vrot.lane.b32.xlu0 %v1113, 40
  %v2499 = vpop.permute.xlu0 %2498
  %2500 = vrot.lane.b32.xlu0 %v1114, 40
  %v2501 = vpop.permute.xlu0 %2500
  %2502 = vrot.lane.b32.xlu0 %v1115, 40
  %v2503 = vpop.permute.xlu0 %2502
  %2504 = vrot.lane.b32.xlu0 %v1116, 40
  %v2505 = vpop.permute.xlu0 %2504
  %2506 = vrot.lane.b32.xlu0 %v1117, 40
  %v2507 = vpop.permute.xlu0 %2506
  %2508 = vrot.lane.b32.xlu0 %v1118, 40
  %v2509 = vpop.permute.xlu0 %2508
  %2510 = vrot.lane.b32.xlu0 %v1119, 40
  %v2511 = vpop.permute.xlu0 %2510
  %2512 = vrot.lane.b32.xlu0 %v1120, 40
  %v2513 = vpop.permute.xlu0 %2512
  %2514 = vrot.lane.b32.xlu0 %v1121, 40
  %v2515 = vpop.permute.xlu0 %2514
  %2516 = vrot.lane.b32.xlu0 %v1122, 40
  %v2517 = vpop.permute.xlu0 %2516
  %2518 = vrot.lane.b32.xlu0 %v1123, 40
  %v2519 = vpop.permute.xlu0 %2518
  %2520 = vrot.lane.b32.xlu0 %v1124, 40
  %v2521 = vpop.permute.xlu0 %2520
  %2522 = vrot.lane.b32.xlu0 %v1125, 40
  %v2523 = vpop.permute.xlu0 %2522
  %2524 = vrot.lane.b32.xlu0 %v1126, 40
  %v2525 = vpop.permute.xlu0 %2524
  %2526 = vrot.lane.b32.xlu0 %v1127, 40
  %v2527 = vpop.permute.xlu0 %2526
  %2528 = vrot.lane.b32.xlu0 %v1128, 40
  %v2529 = vpop.permute.xlu0 %2528
  %2530 = vrot.lane.b32.xlu0 %v1129, 40
  %v2531 = vpop.permute.xlu0 %2530
  %2532 = vrot.lane.b32.xlu0 %v1130, 40
  %v2533 = vpop.permute.xlu0 %2532
  %2534 = vrot.lane.b32.xlu0 %v1131, 40
  %v2535 = vpop.permute.xlu0 %2534
  %2536 = vrot.lane.b32.xlu0 %v1132, 40
  %v2537 = vpop.permute.xlu0 %2536
  %2538 = vrot.lane.b32.xlu0 %v1133, 40
  %v2539 = vpop.permute.xlu0 %2538
  %2540 = vrot.lane.b32.xlu0 %v1134, 40
  %v2541 = vpop.permute.xlu0 %2540
  %2542 = vrot.lane.b32.xlu0 %v1135, 40
  %v2543 = vpop.permute.xlu0 %2542
  %2544 = vrot.lane.b32.xlu0 %v1136, 40
  %v2545 = vpop.permute.xlu0 %2544
  %2674 = vrot.lane.b32.xlu0 %v1138, 48
  %v2675 = vpop.permute.xlu0 %2674
  %2676 = vrot.lane.b32.xlu0 %v1139, 48
  %v2677 = vpop.permute.xlu0 %2676
  %2678 = vrot.lane.b32.xlu0 %v1140, 48
  %v2679 = vpop.permute.xlu0 %2678
  %2680 = vrot.lane.b32.xlu0 %v1141, 48
  %v2681 = vpop.permute.xlu0 %2680
  %2682 = vrot.lane.b32.xlu0 %v1142, 48
  %v2683 = vpop.permute.xlu0 %2682
  %2684 = vrot.lane.b32.xlu0 %v1143, 48
  %v2685 = vpop.permute.xlu0 %2684
  %2686 = vrot.lane.b32.xlu0 %v1144, 48
  %v2687 = vpop.permute.xlu0 %2686
  %2688 = vrot.lane.b32.xlu0 %v1145, 48
  %v2689 = vpop.permute.xlu0 %2688
  %2690 = vrot.lane.b32.xlu0 %v1146, 48
  %v2691 = vpop.permute.xlu0 %2690
  %2692 = vrot.lane.b32.xlu0 %v1147, 48
  %v2693 = vpop.permute.xlu0 %2692
  %2694 = vrot.lane.b32.xlu0 %v1148, 48
  %v2695 = vpop.permute.xlu0 %2694
  %2696 = vrot.lane.b32.xlu0 %v1149, 48
  %v2697 = vpop.permute.xlu0 %2696
  %2698 = vrot.lane.b32.xlu0 %v1150, 48
  %v2699 = vpop.permute.xlu0 %2698
  %2700 = vrot.lane.b32.xlu0 %v1151, 48
  %v2701 = vpop.permute.xlu0 %2700
  %2702 = vrot.lane.b32.xlu0 %v1152, 48
  %v2703 = vpop.permute.xlu0 %2702
  %2704 = vrot.lane.b32.xlu0 %v1153, 48
  %v2705 = vpop.permute.xlu0 %2704
  %2706 = vrot.lane.b32.xlu0 %v1154, 48
  %v2707 = vpop.permute.xlu0 %2706
  %2708 = vrot.lane.b32.xlu0 %v1155, 48
  %v2709 = vpop.permute.xlu0 %2708
  %2710 = vrot.lane.b32.xlu0 %v1156, 48
  %v2711 = vpop.permute.xlu0 %2710
  %2712 = vrot.lane.b32.xlu0 %v1157, 48
  %v2713 = vpop.permute.xlu0 %2712
  %2714 = vrot.lane.b32.xlu0 %v1158, 48
  %v2715 = vpop.permute.xlu0 %2714
  %2716 = vrot.lane.b32.xlu0 %v1159, 48
  %v2717 = vpop.permute.xlu0 %2716
  %2718 = vrot.lane.b32.xlu0 %v1160, 48
  %v2719 = vpop.permute.xlu0 %2718
  %2720 = vrot.lane.b32.xlu0 %v1161, 48
  %v2721 = vpop.permute.xlu0 %2720
  %2722 = vrot.lane.b32.xlu0 %v1162, 48
  %v2723 = vpop.permute.xlu0 %2722
  %2724 = vrot.lane.b32.xlu0 %v1163, 48
  %v2725 = vpop.permute.xlu0 %2724
  %2726 = vrot.lane.b32.xlu0 %v1164, 48
  %v2727 = vpop.permute.xlu0 %2726
  %2728 = vrot.lane.b32.xlu0 %v1165, 48
  %v2729 = vpop.permute.xlu0 %2728
  %2730 = vrot.lane.b32.xlu0 %v1166, 48
  %v2731 = vpop.permute.xlu0 %2730
  %2732 = vrot.lane.b32.xlu0 %v1167, 48
  %v2733 = vpop.permute.xlu0 %2732
  %2734 = vrot.lane.b32.xlu0 %v1168, 48
  %v2735 = vpop.permute.xlu0 %2734
  %2736 = vrot.lane.b32.xlu0 %v1169, 48
  %v2737 = vpop.permute.xlu0 %2736
  %2738 = vrot.lane.b32.xlu0 %v1170, 48
  %v2739 = vpop.permute.xlu0 %2738
  %2740 = vrot.lane.b32.xlu0 %v1171, 48
  %v2741 = vpop.permute.xlu0 %2740
  %2742 = vrot.lane.b32.xlu0 %v1172, 48
  %v2743 = vpop.permute.xlu0 %2742
  %2744 = vrot.lane.b32.xlu0 %v1173, 48
  %v2745 = vpop.permute.xlu0 %2744
  %2746 = vrot.lane.b32.xlu0 %v1174, 48
  %v2747 = vpop.permute.xlu0 %2746
  %2748 = vrot.lane.b32.xlu0 %v1175, 48
  %v2749 = vpop.permute.xlu0 %2748
  %2750 = vrot.lane.b32.xlu0 %v1176, 48
  %v2751 = vpop.permute.xlu0 %2750
  %2752 = vrot.lane.b32.xlu0 %v1177, 48
  %v2753 = vpop.permute.xlu0 %2752
  %2754 = vrot.lane.b32.xlu0 %v1178, 48
  %v2755 = vpop.permute.xlu0 %2754
  %2756 = vrot.lane.b32.xlu0 %v1179, 48
  %v2757 = vpop.permute.xlu0 %2756
  %2758 = vrot.lane.b32.xlu0 %v1180, 48
  %v2759 = vpop.permute.xlu0 %2758
  %2760 = vrot.lane.b32.xlu0 %v1181, 48
  %v2761 = vpop.permute.xlu0 %2760
  %2762 = vrot.lane.b32.xlu0 %v1182, 48
  %v2763 = vpop.permute.xlu0 %2762
  %2764 = vrot.lane.b32.xlu0 %v1183, 48
  %v2765 = vpop.permute.xlu0 %2764
  %2766 = vrot.lane.b32.xlu0 %v1184, 48
  %v2767 = vpop.permute.xlu0 %2766
  %2768 = vrot.lane.b32.xlu0 %v1185, 48
  %v2769 = vpop.permute.xlu0 %2768
  %2770 = vrot.lane.b32.xlu0 %v1186, 48
  %v2771 = vpop.permute.xlu0 %2770
  %2772 = vrot.lane.b32.xlu0 %v1187, 48
  %v2773 = vpop.permute.xlu0 %2772
  %2774 = vrot.lane.b32.xlu0 %v1188, 48
  %v2775 = vpop.permute.xlu0 %2774
  %2776 = vrot.lane.b32.xlu0 %v1189, 48
  %v2777 = vpop.permute.xlu0 %2776
  %2778 = vrot.lane.b32.xlu0 %v1190, 48
  %v2779 = vpop.permute.xlu0 %2778
  %2780 = vrot.lane.b32.xlu0 %v1191, 48
  %v2781 = vpop.permute.xlu0 %2780
  %2782 = vrot.lane.b32.xlu0 %v1192, 48
  %v2783 = vpop.permute.xlu0 %2782
  %2784 = vrot.lane.b32.xlu0 %v1193, 48
  %v2785 = vpop.permute.xlu0 %2784
  %2786 = vrot.lane.b32.xlu0 %v1194, 48
  %v2787 = vpop.permute.xlu0 %2786
  %2788 = vrot.lane.b32.xlu0 %v1195, 48
  %v2789 = vpop.permute.xlu0 %2788
  %2790 = vrot.lane.b32.xlu0 %v1196, 48
  %v2791 = vpop.permute.xlu0 %2790
  %2792 = vrot.lane.b32.xlu0 %v1197, 48
  %v2793 = vpop.permute.xlu0 %2792
  %2794 = vrot.lane.b32.xlu0 %v1198, 48
  %v2795 = vpop.permute.xlu0 %2794
  %2796 = vrot.lane.b32.xlu0 %v1199, 48
  %v2797 = vpop.permute.xlu0 %2796
  %2798 = vrot.lane.b32.xlu0 %v1200, 48
  %v2799 = vpop.permute.xlu0 %2798
  %2800 = vrot.lane.b32.xlu0 %v1201, 48
  %v2801 = vpop.permute.xlu0 %2800
  %2930 = vrot.lane.b32.xlu0 %v1202, 56
  %v2931 = vpop.permute.xlu0 %2930
  %2932 = vrot.lane.b32.xlu0 %v1203, 56
  %v2933 = vpop.permute.xlu0 %2932
  %2934 = vrot.lane.b32.xlu0 %v1204, 56
  %v2935 = vpop.permute.xlu0 %2934
  %2936 = vrot.lane.b32.xlu0 %v1205, 56
  %v2937 = vpop.permute.xlu0 %2936
  %2938 = vrot.lane.b32.xlu0 %v1206, 56
  %v2939 = vpop.permute.xlu0 %2938
  %2940 = vrot.lane.b32.xlu0 %v1207, 56
  %v2941 = vpop.permute.xlu0 %2940
  %2942 = vrot.lane.b32.xlu0 %v1208, 56
  %v2943 = vpop.permute.xlu0 %2942
  %2944 = vrot.lane.b32.xlu0 %v1209, 56
  %v2945 = vpop.permute.xlu0 %2944
  %2946 = vrot.lane.b32.xlu0 %v1210, 56
  %v2947 = vpop.permute.xlu0 %2946
  %2948 = vrot.lane.b32.xlu0 %v1211, 56
  %v2949 = vpop.permute.xlu0 %2948
  %2950 = vrot.lane.b32.xlu0 %v1212, 56
  %v2951 = vpop.permute.xlu0 %2950
  %2952 = vrot.lane.b32.xlu0 %v1213, 56
  %v2953 = vpop.permute.xlu0 %2952
  %2954 = vrot.lane.b32.xlu0 %v1214, 56
  %v2955 = vpop.permute.xlu0 %2954
  %2956 = vrot.lane.b32.xlu0 %v1215, 56
  %v2957 = vpop.permute.xlu0 %2956
  %2958 = vrot.lane.b32.xlu0 %v1216, 56
  %v2959 = vpop.permute.xlu0 %2958
  %2960 = vrot.lane.b32.xlu0 %v1217, 56
  %v2961 = vpop.permute.xlu0 %2960
  %2962 = vrot.lane.b32.xlu0 %v1218, 56
  %v2963 = vpop.permute.xlu0 %2962
  %2964 = vrot.lane.b32.xlu0 %v1219, 56
  %v2965 = vpop.permute.xlu0 %2964
  %2966 = vrot.lane.b32.xlu0 %v1220, 56
  %v2967 = vpop.permute.xlu0 %2966
  %2968 = vrot.lane.b32.xlu0 %v1221, 56
  %v2969 = vpop.permute.xlu0 %2968
  %2970 = vrot.lane.b32.xlu0 %v1222, 56
  %v2971 = vpop.permute.xlu0 %2970
  %2972 = vrot.lane.b32.xlu0 %v1223, 56
  %v2973 = vpop.permute.xlu0 %2972
  %2974 = vrot.lane.b32.xlu0 %v1224, 56
  %v2975 = vpop.permute.xlu0 %2974
  %2976 = vrot.lane.b32.xlu0 %v1225, 56
  %v2977 = vpop.permute.xlu0 %2976
  %2978 = vrot.lane.b32.xlu0 %v1226, 56
  %v2979 = vpop.permute.xlu0 %2978
  %2980 = vrot.lane.b32.xlu0 %v1227, 56
  %v2981 = vpop.permute.xlu0 %2980
  %2982 = vrot.lane.b32.xlu0 %v1228, 56
  %v2983 = vpop.permute.xlu0 %2982
  %2984 = vrot.lane.b32.xlu0 %v1229, 56
  %v2985 = vpop.permute.xlu0 %2984
  %2986 = vrot.lane.b32.xlu0 %v1230, 56
  %v2987 = vpop.permute.xlu0 %2986
  %2988 = vrot.lane.b32.xlu0 %v1231, 56
  %v2989 = vpop.permute.xlu0 %2988
  %2990 = vrot.lane.b32.xlu0 %v1232, 56
  %v2991 = vpop.permute.xlu0 %2990
  %2992 = vrot.lane.b32.xlu0 %v1233, 56
  %v2993 = vpop.permute.xlu0 %2992
  %2994 = vrot.lane.b32.xlu0 %v1234, 56
  %v2995 = vpop.permute.xlu0 %2994
  %2996 = vrot.lane.b32.xlu0 %v1235, 56
  %v2997 = vpop.permute.xlu0 %2996
  %2998 = vrot.lane.b32.xlu0 %v1236, 56
  %v2999 = vpop.permute.xlu0 %2998
  %3000 = vrot.lane.b32.xlu0 %v1237, 56
  %v3001 = vpop.permute.xlu0 %3000
  %3002 = vrot.lane.b32.xlu0 %v1238, 56
  %v3003 = vpop.permute.xlu0 %3002
  %3004 = vrot.lane.b32.xlu0 %v1239, 56
  %v3005 = vpop.permute.xlu0 %3004
  %3006 = vrot.lane.b32.xlu0 %v1240, 56
  %v3007 = vpop.permute.xlu0 %3006
  %3008 = vrot.lane.b32.xlu0 %v1241, 56
  %v3009 = vpop.permute.xlu0 %3008
  %3010 = vrot.lane.b32.xlu0 %v1242, 56
  %v3011 = vpop.permute.xlu0 %3010
  %3012 = vrot.lane.b32.xlu0 %v1243, 56
  %v3013 = vpop.permute.xlu0 %3012
  %3014 = vrot.lane.b32.xlu0 %v1244, 56
  %v3015 = vpop.permute.xlu0 %3014
  %3016 = vrot.lane.b32.xlu0 %v1245, 56
  %v3017 = vpop.permute.xlu0 %3016
  %3018 = vrot.lane.b32.xlu0 %v1246, 56
  %v3019 = vpop.permute.xlu0 %3018
  %3020 = vrot.lane.b32.xlu0 %v1247, 56
  %v3021 = vpop.permute.xlu0 %3020
  %3022 = vrot.lane.b32.xlu0 %v1248, 56
  %v3023 = vpop.permute.xlu0 %3022
  %3024 = vrot.lane.b32.xlu0 %v1249, 56
  %v3025 = vpop.permute.xlu0 %3024
  %3026 = vrot.lane.b32.xlu0 %v1250, 56
  %v3027 = vpop.permute.xlu0 %3026
  %3028 = vrot.lane.b32.xlu0 %v1251, 56
  %v3029 = vpop.permute.xlu0 %3028
  %3030 = vrot.lane.b32.xlu0 %v1252, 56
  %v3031 = vpop.permute.xlu0 %3030
  %3032 = vrot.lane.b32.xlu0 %v1253, 56
  %v3033 = vpop.permute.xlu0 %3032
  %3034 = vrot.lane.b32.xlu0 %v1254, 56
  %v3035 = vpop.permute.xlu0 %3034
  %3036 = vrot.lane.b32.xlu0 %v1255, 56
  %v3037 = vpop.permute.xlu0 %3036
  %3038 = vrot.lane.b32.xlu0 %v1256, 56
  %v3039 = vpop.permute.xlu0 %3038
  %3040 = vrot.lane.b32.xlu0 %v1257, 56
  %v3041 = vpop.permute.xlu0 %3040
  %3042 = vrot.lane.b32.xlu0 %v1258, 56
  %v3043 = vpop.permute.xlu0 %3042
  %3044 = vrot.lane.b32.xlu0 %v1259, 56
  %v3045 = vpop.permute.xlu0 %3044
  %3046 = vrot.lane.b32.xlu0 %v1260, 56
  %v3047 = vpop.permute.xlu0 %3046
  %3048 = vrot.lane.b32.xlu0 %v1261, 56
  %v3049 = vpop.permute.xlu0 %3048
  %3050 = vrot.lane.b32.xlu0 %v1262, 56
  %v3051 = vpop.permute.xlu0 %3050
  %3052 = vrot.lane.b32.xlu0 %v1263, 56
  %v3053 = vpop.permute.xlu0 %3052
  %3054 = vrot.lane.b32.xlu0 %v1264, 56
  %v3055 = vpop.permute.xlu0 %3054
  %3056 = vrot.lane.b32.xlu0 %v1265, 56
  %v3057 = vpop.permute.xlu0 %3056
  %3186 = vrot.lane.b32.xlu0 %v1266, 64
  %v3187 = vpop.permute.xlu0 %3186
  %3188 = vrot.lane.b32.xlu0 %v1267, 64
  %v3189 = vpop.permute.xlu0 %3188
  %3190 = vrot.lane.b32.xlu0 %v1268, 64
  %v3191 = vpop.permute.xlu0 %3190
  %3192 = vrot.lane.b32.xlu0 %v1269, 64
  %v3193 = vpop.permute.xlu0 %3192
  %3194 = vrot.lane.b32.xlu0 %v1270, 64
  %v3195 = vpop.permute.xlu0 %3194
  %3196 = vrot.lane.b32.xlu0 %v1271, 64
  %v3197 = vpop.permute.xlu0 %3196
  %3198 = vrot.lane.b32.xlu0 %v1272, 64
  %v3199 = vpop.permute.xlu0 %3198
  %3200 = vrot.lane.b32.xlu0 %v1273, 64
  %v3201 = vpop.permute.xlu0 %3200
  %3202 = vrot.lane.b32.xlu0 %v1274, 64
  %v3203 = vpop.permute.xlu0 %3202
  %3204 = vrot.lane.b32.xlu0 %v1275, 64
  %v3205 = vpop.permute.xlu0 %3204
  %3206 = vrot.lane.b32.xlu0 %v1276, 64
  %v3207 = vpop.permute.xlu0 %3206
  %3208 = vrot.lane.b32.xlu0 %v1277, 64
  %v3209 = vpop.permute.xlu0 %3208
  %3210 = vrot.lane.b32.xlu0 %v1278, 64
  %v3211 = vpop.permute.xlu0 %3210
  %3212 = vrot.lane.b32.xlu0 %v1279, 64
  %v3213 = vpop.permute.xlu0 %3212
  %3214 = vrot.lane.b32.xlu0 %v1280, 64
  %v3215 = vpop.permute.xlu0 %3214
  %3216 = vrot.lane.b32.xlu0 %v1281, 64
  %v3217 = vpop.permute.xlu0 %3216
  %3218 = vrot.lane.b32.xlu0 %v1282, 64
  %v3219 = vpop.permute.xlu0 %3218
  %3220 = vrot.lane.b32.xlu0 %v1283, 64
  %v3221 = vpop.permute.xlu0 %3220
  %3222 = vrot.lane.b32.xlu0 %v1284, 64
  %v3223 = vpop.permute.xlu0 %3222
  %3224 = vrot.lane.b32.xlu0 %v1285, 64
  %v3225 = vpop.permute.xlu0 %3224
  %3226 = vrot.lane.b32.xlu0 %v1286, 64
  %v3227 = vpop.permute.xlu0 %3226
  %3228 = vrot.lane.b32.xlu0 %v1287, 64
  %v3229 = vpop.permute.xlu0 %3228
  %3230 = vrot.lane.b32.xlu0 %v1288, 64
  %v3231 = vpop.permute.xlu0 %3230
  %3232 = vrot.lane.b32.xlu0 %v1289, 64
  %v3233 = vpop.permute.xlu0 %3232
  %3234 = vrot.lane.b32.xlu0 %v1290, 64
  %v3235 = vpop.permute.xlu0 %3234
  %3236 = vrot.lane.b32.xlu0 %v1291, 64
  %v3237 = vpop.permute.xlu0 %3236
  %3238 = vrot.lane.b32.xlu0 %v1292, 64
  %v3239 = vpop.permute.xlu0 %3238
  %3240 = vrot.lane.b32.xlu0 %v1293, 64
  %v3241 = vpop.permute.xlu0 %3240
  %3242 = vrot.lane.b32.xlu0 %v1294, 64
  %v3243 = vpop.permute.xlu0 %3242
  %3244 = vrot.lane.b32.xlu0 %v1295, 64
  %v3245 = vpop.permute.xlu0 %3244
  %3246 = vrot.lane.b32.xlu0 %v1296, 64
  %v3247 = vpop.permute.xlu0 %3246
  %3248 = vrot.lane.b32.xlu0 %v1297, 64
  %v3249 = vpop.permute.xlu0 %3248
  %3250 = vrot.lane.b32.xlu0 %v1298, 64
  %v3251 = vpop.permute.xlu0 %3250
  %3252 = vrot.lane.b32.xlu0 %v1299, 64
  %v3253 = vpop.permute.xlu0 %3252
  %3254 = vrot.lane.b32.xlu0 %v1300, 64
  %v3255 = vpop.permute.xlu0 %3254
  %3256 = vrot.lane.b32.xlu0 %v1301, 64
  %v3257 = vpop.permute.xlu0 %3256
  %3258 = vrot.lane.b32.xlu0 %v1302, 64
  %v3259 = vpop.permute.xlu0 %3258
  %3260 = vrot.lane.b32.xlu0 %v1303, 64
  %v3261 = vpop.permute.xlu0 %3260
  %3262 = vrot.lane.b32.xlu0 %v1304, 64
  %v3263 = vpop.permute.xlu0 %3262
  %3264 = vrot.lane.b32.xlu0 %v1305, 64
  %v3265 = vpop.permute.xlu0 %3264
  %3266 = vrot.lane.b32.xlu0 %v1306, 64
  %v3267 = vpop.permute.xlu0 %3266
  %3268 = vrot.lane.b32.xlu0 %v1307, 64
  %v3269 = vpop.permute.xlu0 %3268
  %3270 = vrot.lane.b32.xlu0 %v1308, 64
  %v3271 = vpop.permute.xlu0 %3270
  %3272 = vrot.lane.b32.xlu0 %v1309, 64
  %v3273 = vpop.permute.xlu0 %3272
  %3274 = vrot.lane.b32.xlu0 %v1310, 64
  %v3275 = vpop.permute.xlu0 %3274
  %3276 = vrot.lane.b32.xlu0 %v1311, 64
  %v3277 = vpop.permute.xlu0 %3276
  %3278 = vrot.lane.b32.xlu0 %v1312, 64
  %v3279 = vpop.permute.xlu0 %3278
  %3280 = vrot.lane.b32.xlu0 %v1313, 64
  %v3281 = vpop.permute.xlu0 %3280
  %3282 = vrot.lane.b32.xlu0 %v1314, 64
  %v3283 = vpop.permute.xlu0 %3282
  %3284 = vrot.lane.b32.xlu0 %v1315, 64
  %v3285 = vpop.permute.xlu0 %3284
  %3286 = vrot.lane.b32.xlu0 %v1316, 64
  %v3287 = vpop.permute.xlu0 %3286
  %3288 = vrot.lane.b32.xlu0 %v1317, 64
  %v3289 = vpop.permute.xlu0 %3288
  %3290 = vrot.lane.b32.xlu0 %v1318, 64
  %v3291 = vpop.permute.xlu0 %3290
  %3292 = vrot.lane.b32.xlu0 %v1319, 64
  %v3293 = vpop.permute.xlu0 %3292
  %3294 = vrot.lane.b32.xlu0 %v1320, 64
  %v3295 = vpop.permute.xlu0 %3294
  %3296 = vrot.lane.b32.xlu0 %v1321, 64
  %v3297 = vpop.permute.xlu0 %3296
  %3298 = vrot.lane.b32.xlu0 %v1322, 64
  %v3299 = vpop.permute.xlu0 %3298
  %3300 = vrot.lane.b32.xlu0 %v1323, 64
  %v3301 = vpop.permute.xlu0 %3300
  %3302 = vrot.lane.b32.xlu0 %v1324, 64
  %v3303 = vpop.permute.xlu0 %3302
  %3304 = vrot.lane.b32.xlu0 %v1325, 64
  %v3305 = vpop.permute.xlu0 %3304
  %3306 = vrot.lane.b32.xlu0 %v1326, 64
  %v3307 = vpop.permute.xlu0 %3306
  %3308 = vrot.lane.b32.xlu0 %v1327, 64
  %v3309 = vpop.permute.xlu0 %3308
  %3310 = vrot.lane.b32.xlu0 %v1328, 64
  %v3311 = vpop.permute.xlu0 %3310
  %3312 = vrot.lane.b32.xlu0 %v1329, 64
  %v3313 = vpop.permute.xlu0 %3312
  %v3378 = vsel %vm40, %v753, %v1395
  %v3379 = vsel %vm40, %v754, %v1397
  %v3380 = vsel %vm40, %v755, %v1399
  %v3381 = vsel %vm40, %v756, %v1401
  %v3382 = vsel %vm40, %v757, %v1403
  %v3383 = vsel %vm40, %v758, %v1405
  %v3384 = vsel %vm40, %v759, %v1407
  %v3385 = vsel %vm40, %v760, %v1409
  %v3386 = vsel %vm40, %v761, %v1411
  %v3387 = vsel %vm40, %v762, %v1413
  %v3388 = vsel %vm40, %v763, %v1415
  %v3389 = vsel %vm40, %v764, %v1417
  %v3390 = vsel %vm40, %v765, %v1419
  %v3391 = vsel %vm40, %v766, %v1421
  %v3392 = vsel %vm40, %v767, %v1423
  %v3393 = vsel %vm40, %v768, %v1425
  %v3394 = vsel %vm40, %v769, %v1427
  %v3395 = vsel %vm40, %v770, %v1429
  %v3396 = vsel %vm40, %v771, %v1431
  %v3397 = vsel %vm40, %v772, %v1433
  %v3398 = vsel %vm40, %v773, %v1435
  %v3399 = vsel %vm40, %v774, %v1437
  %v3400 = vsel %vm40, %v775, %v1439
  %v3401 = vsel %vm40, %v776, %v1441
  %v3402 = vsel %vm40, %v777, %v1443
  %v3403 = vsel %vm40, %v778, %v1445
  %v3404 = vsel %vm40, %v779, %v1447
  %v3405 = vsel %vm40, %v780, %v1449
  %v3406 = vsel %vm40, %v781, %v1451
  %v3407 = vsel %vm40, %v782, %v1453
  %v3408 = vsel %vm40, %v783, %v1455
  %v3409 = vsel %vm40, %v784, %v1457
  %v3410 = vsel %vm40, %v785, %v1459
  %v3411 = vsel %vm40, %v786, %v1461
  %v3412 = vsel %vm40, %v787, %v1463
  %v3413 = vsel %vm40, %v788, %v1465
  %v3414 = vsel %vm40, %v789, %v1467
  %v3415 = vsel %vm40, %v790, %v1469
  %v3416 = vsel %vm40, %v791, %v1471
  %v3417 = vsel %vm40, %v792, %v1473
  %v3418 = vsel %vm40, %v793, %v1475
  %v3419 = vsel %vm40, %v794, %v1477
  %v3420 = vsel %vm40, %v795, %v1479
  %v3421 = vsel %vm40, %v796, %v1481
  %v3422 = vsel %vm40, %v797, %v1483
  %v3423 = vsel %vm40, %v798, %v1485
  %v3424 = vsel %vm40, %v799, %v1487
  %v3425 = vsel %vm40, %v800, %v1489
  %v3426 = vsel %vm40, %v801, %v1491
  %v3427 = vsel %vm40, %v802, %v1493
  %v3428 = vsel %vm40, %v803, %v1495
  %v3429 = vsel %vm40, %v804, %v1497
  %v3430 = vsel %vm40, %v805, %v1499
  %v3431 = vsel %vm40, %v806, %v1501
  %v3432 = vsel %vm40, %v807, %v1503
  %v3433 = vsel %vm40, %v808, %v1505
  %v3434 = vsel %vm40, %v809, %v1507
  %v3435 = vsel %vm40, %v810, %v1509
  %v3436 = vsel %vm40, %v811, %v1511
  %v3437 = vsel %vm40, %v812, %v1513
  %v3438 = vsel %vm40, %v813, %v1515
  %v3439 = vsel %vm40, %v814, %v1517
  %v3440 = vsel %vm40, %v815, %v1519
  %v3441 = vsel %vm40, %v816, %v1521
  %vm3442 = vcmask 130048
  %v3443 = vsel %vm3442, %v3378, %v1651
  %v3444 = vsel %vm3442, %v3379, %v1653
  %v3445 = vsel %vm3442, %v3380, %v1655
  %v3446 = vsel %vm3442, %v3381, %v1657
  %v3447 = vsel %vm3442, %v3382, %v1659
  %v3448 = vsel %vm3442, %v3383, %v1661
  %v3449 = vsel %vm3442, %v3384, %v1663
  %v3450 = vsel %vm3442, %v3385, %v1665
  %v3451 = vsel %vm3442, %v3386, %v1667
  %v3452 = vsel %vm3442, %v3387, %v1669
  %v3453 = vsel %vm3442, %v3388, %v1671
  %v3454 = vsel %vm3442, %v3389, %v1673
  %v3455 = vsel %vm3442, %v3390, %v1675
  %v3456 = vsel %vm3442, %v3391, %v1677
  %v3457 = vsel %vm3442, %v3392, %v1679
  %v3458 = vsel %vm3442, %v3393, %v1681
  %v3459 = vsel %vm3442, %v3394, %v1683
  %v3460 = vsel %vm3442, %v3395, %v1685
  %v3461 = vsel %vm3442, %v3396, %v1687
  %v3462 = vsel %vm3442, %v3397, %v1689
  %v3463 = vsel %vm3442, %v3398, %v1691
  %v3464 = vsel %vm3442, %v3399, %v1693
  %v3465 = vsel %vm3442, %v3400, %v1695
  %v3466 = vsel %vm3442, %v3401, %v1697
  %v3467 = vsel %vm3442, %v3402, %v1699
  %v3468 = vsel %vm3442, %v3403, %v1701
  %v3469 = vsel %vm3442, %v3404, %v1703
  %v3470 = vsel %vm3442, %v3405, %v1705
  %v3471 = vsel %vm3442, %v3406, %v1707
  %v3472 = vsel %vm3442, %v3407, %v1709
  %v3473 = vsel %vm3442, %v3408, %v1711
  %v3474 = vsel %vm3442, %v3409, %v1713
  %v3475 = vsel %vm3442, %v3410, %v1715
  %v3476 = vsel %vm3442, %v3411, %v1717
  %v3477 = vsel %vm3442, %v3412, %v1719
  %v3478 = vsel %vm3442, %v3413, %v1721
  %v3479 = vsel %vm3442, %v3414, %v1723
  %v3480 = vsel %vm3442, %v3415, %v1725
  %v3481 = vsel %vm3442, %v3416, %v1727
  %v3482 = vsel %vm3442, %v3417, %v1729
  %v3483 = vsel %vm3442, %v3418, %v1731
  %v3484 = vsel %vm3442, %v3419, %v1733
  %v3485 = vsel %vm3442, %v3420, %v1735
  %v3486 = vsel %vm3442, %v3421, %v1737
  %v3487 = vsel %vm3442, %v3422, %v1739
  %v3488 = vsel %vm3442, %v3423, %v1741
  %v3489 = vsel %vm3442, %v3424, %v1743
  %v3490 = vsel %vm3442, %v3425, %v1745
  %v3491 = vsel %vm3442, %v3426, %v1747
  %v3492 = vsel %vm3442, %v3427, %v1749
  %v3493 = vsel %vm3442, %v3428, %v1751
  %v3494 = vsel %vm3442, %v3429, %v1753
  %v3495 = vsel %vm3442, %v3430, %v1755
  %v3496 = vsel %vm3442, %v3431, %v1757
  %v3497 = vsel %vm3442, %v3432, %v1759
  %v3498 = vsel %vm3442, %v3433, %v1761
  %v3499 = vsel %vm3442, %v3434, %v1763
  %v3500 = vsel %vm3442, %v3435, %v1765
  %v3501 = vsel %vm3442, %v3436, %v1767
  %v3502 = vsel %vm3442, %v3437, %v1769
  %v3503 = vsel %vm3442, %v3438, %v1771
  %v3504 = vsel %vm3442, %v3439, %v1773
  %v3505 = vsel %vm3442, %v3440, %v1775
  %v3506 = vsel %vm3442, %v3441, %v1777
  %vm3507 = vcmask 195584
  %v3508 = vsel %vm3507, %v3443, %v1907
  %v3509 = vsel %vm3507, %v3444, %v1909
  %v3510 = vsel %vm3507, %v3445, %v1911
  %v3511 = vsel %vm3507, %v3446, %v1913
  %v3512 = vsel %vm3507, %v3447, %v1915
  %v3513 = vsel %vm3507, %v3448, %v1917
  %v3514 = vsel %vm3507, %v3449, %v1919
  %v3515 = vsel %vm3507, %v3450, %v1921
  %v3516 = vsel %vm3507, %v3451, %v1923
  %v3517 = vsel %vm3507, %v3452, %v1925
  %v3518 = vsel %vm3507, %v3453, %v1927
  %v3519 = vsel %vm3507, %v3454, %v1929
  %v3520 = vsel %vm3507, %v3455, %v1931
  %v3521 = vsel %vm3507, %v3456, %v1933
  %v3522 = vsel %vm3507, %v3457, %v1935
  %v3523 = vsel %vm3507, %v3458, %v1937
  %v3524 = vsel %vm3507, %v3459, %v1939
  %v3525 = vsel %vm3507, %v3460, %v1941
  %v3526 = vsel %vm3507, %v3461, %v1943
  %v3527 = vsel %vm3507, %v3462, %v1945
  %v3528 = vsel %vm3507, %v3463, %v1947
  %v3529 = vsel %vm3507, %v3464, %v1949
  %v3530 = vsel %vm3507, %v3465, %v1951
  %v3531 = vsel %vm3507, %v3466, %v1953
  %v3532 = vsel %vm3507, %v3467, %v1955
  %v3533 = vsel %vm3507, %v3468, %v1957
  %v3534 = vsel %vm3507, %v3469, %v1959
  %v3535 = vsel %vm3507, %v3470, %v1961
  %v3536 = vsel %vm3507, %v3471, %v1963
  %v3537 = vsel %vm3507, %v3472, %v1965
  %v3538 = vsel %vm3507, %v3473, %v1967
  %v3539 = vsel %vm3507, %v3474, %v1969
  %v3540 = vsel %vm3507, %v3475, %v1971
  %v3541 = vsel %vm3507, %v3476, %v1973
  %v3542 = vsel %vm3507, %v3477, %v1975
  %v3543 = vsel %vm3507, %v3478, %v1977
  %v3544 = vsel %vm3507, %v3479, %v1979
  %v3545 = vsel %vm3507, %v3480, %v1981
  %v3546 = vsel %vm3507, %v3481, %v1983
  %v3547 = vsel %vm3507, %v3482, %v1985
  %v3548 = vsel %vm3507, %v3483, %v1987
  %v3549 = vsel %vm3507, %v3484, %v1989
  %v3550 = vsel %vm3507, %v3485, %v1991
  %v3551 = vsel %vm3507, %v3486, %v1993
  %v3552 = vsel %vm3507, %v3487, %v1995
  %v3553 = vsel %vm3507, %v3488, %v1997
  %v3554 = vsel %vm3507, %v3489, %v1999
  %v3555 = vsel %vm3507, %v3490, %v2001
  %v3556 = vsel %vm3507, %v3491, %v2003
  %v3557 = vsel %vm3507, %v3492, %v2005
  %v3558 = vsel %vm3507, %v3493, %v2007
  %v3559 = vsel %vm3507, %v3494, %v2009
  %v3560 = vsel %vm3507, %v3495, %v2011
  %v3561 = vsel %vm3507, %v3496, %v2013
  %v3562 = vsel %vm3507, %v3497, %v2015
  %v3563 = vsel %vm3507, %v3498, %v2017
  %v3564 = vsel %vm3507, %v3499, %v2019
  %v3565 = vsel %vm3507, %v3500, %v2021
  %v3566 = vsel %vm3507, %v3501, %v2023
  %v3567 = vsel %vm3507, %v3502, %v2025
  %v3568 = vsel %vm3507, %v3503, %v2027
  %v3569 = vsel %vm3507, %v3504, %v2029
  %v3570 = vsel %vm3507, %v3505, %v2031
  %v3571 = vsel %vm3507, %v3506, %v2033
  %v3572 = vsel %vm665, %v3508, %v2163
  %v3573 = vsel %vm665, %v3509, %v2165
  %v3574 = vsel %vm665, %v3510, %v2167
  %v3575 = vsel %vm665, %v3511, %v2169
  %v3576 = vsel %vm665, %v3512, %v2171
  %v3577 = vsel %vm665, %v3513, %v2173
  %v3578 = vsel %vm665, %v3514, %v2175
  %v3579 = vsel %vm665, %v3515, %v2177
  %v3580 = vsel %vm665, %v3516, %v2179
  %v3581 = vsel %vm665, %v3517, %v2181
  %v3582 = vsel %vm665, %v3518, %v2183
  %v3583 = vsel %vm665, %v3519, %v2185
  %v3584 = vsel %vm665, %v3520, %v2187
  %v3585 = vsel %vm665, %v3521, %v2189
  %v3586 = vsel %vm665, %v3522, %v2191
  %v3587 = vsel %vm665, %v3523, %v2193
  %v3588 = vsel %vm665, %v3524, %v2195
  %v3589 = vsel %vm665, %v3525, %v2197
  %v3590 = vsel %vm665, %v3526, %v2199
  %v3591 = vsel %vm665, %v3527, %v2201
  %v3592 = vsel %vm665, %v3528, %v2203
  %v3593 = vsel %vm665, %v3529, %v2205
  %v3594 = vsel %vm665, %v3530, %v2207
  %v3595 = vsel %vm665, %v3531, %v2209
  %v3596 = vsel %vm665, %v3532, %v2211
  %v3597 = vsel %vm665, %v3533, %v2213
  %v3598 = vsel %vm665, %v3534, %v2215
  %v3599 = vsel %vm665, %v3535, %v2217
  %v3600 = vsel %vm665, %v3536, %v2219
  %v3601 = vsel %vm665, %v3537, %v2221
  %v3602 = vsel %vm665, %v3538, %v2223
  %v3603 = vsel %vm665, %v3539, %v2225
  %v3604 = vsel %vm665, %v3540, %v2227
  %v3605 = vsel %vm665, %v3541, %v2229
  %v3606 = vsel %vm665, %v3542, %v2231
  %v3607 = vsel %vm665, %v3543, %v2233
  %v3608 = vsel %vm665, %v3544, %v2235
  %v3609 = vsel %vm665, %v3545, %v2237
  %v3610 = vsel %vm665, %v3546, %v2239
  %v3611 = vsel %vm665, %v3547, %v2241
  %v3612 = vsel %vm665, %v3548, %v2243
  %v3613 = vsel %vm665, %v3549, %v2245
  %v3614 = vsel %vm665, %v3550, %v2247
  %v3615 = vsel %vm665, %v3551, %v2249
  %v3616 = vsel %vm665, %v3552, %v2251
  %v3617 = vsel %vm665, %v3553, %v2253
  %v3618 = vsel %vm665, %v3554, %v2255
  %v3619 = vsel %vm665, %v3555, %v2257
  %v3620 = vsel %vm665, %v3556, %v2259
  %v3621 = vsel %vm665, %v3557, %v2261
  %v3622 = vsel %vm665, %v3558, %v2263
  %v3623 = vsel %vm665, %v3559, %v2265
  %v3624 = vsel %vm665, %v3560, %v2267
  %v3625 = vsel %vm665, %v3561, %v2269
  %v3626 = vsel %vm665, %v3562, %v2271
  %v3627 = vsel %vm665, %v3563, %v2273
  %v3628 = vsel %vm665, %v3564, %v2275
  %v3629 = vsel %vm665, %v3565, %v2277
  %v3630 = vsel %vm665, %v3566, %v2279
  %v3631 = vsel %vm665, %v3567, %v2281
  %v3632 = vsel %vm665, %v3568, %v2283
  %v3633 = vsel %vm665, %v3569, %v2285
  %v3634 = vsel %vm665, %v3570, %v2287
  %v3635 = vsel %vm665, %v3571, %v2289
  %vm3636 = vcmask 326656
  %v3637 = vsel %vm3636, %v3572, %v2419
  %v3638 = vsel %vm3636, %v3573, %v2421
  %v3639 = vsel %vm3636, %v3574, %v2423
  %v3640 = vsel %vm3636, %v3575, %v2425
  %v3641 = vsel %vm3636, %v3576, %v2427
  %v3642 = vsel %vm3636, %v3577, %v2429
  %v3643 = vsel %vm3636, %v3578, %v2431
  %v3644 = vsel %vm3636, %v3579, %v2433
  %v3645 = vsel %vm3636, %v3580, %v2435
  %v3646 = vsel %vm3636, %v3581, %v2437
  %v3647 = vsel %vm3636, %v3582, %v2439
  %v3648 = vsel %vm3636, %v3583, %v2441
  %v3649 = vsel %vm3636, %v3584, %v2443
  %v3650 = vsel %vm3636, %v3585, %v2445
  %v3651 = vsel %vm3636, %v3586, %v2447
  %v3652 = vsel %vm3636, %v3587, %v2449
  %v3653 = vsel %vm3636, %v3588, %v2451
  %v3654 = vsel %vm3636, %v3589, %v2453
  %v3655 = vsel %vm3636, %v3590, %v2455
  %v3656 = vsel %vm3636, %v3591, %v2457
  %v3657 = vsel %vm3636, %v3592, %v2459
  %v3658 = vsel %vm3636, %v3593, %v2461
  %v3659 = vsel %vm3636, %v3594, %v2463
  %v3660 = vsel %vm3636, %v3595, %v2465
  %v3661 = vsel %vm3636, %v3596, %v2467
  %v3662 = vsel %vm3636, %v3597, %v2469
  %v3663 = vsel %vm3636, %v3598, %v2471
  %v3664 = vsel %vm3636, %v3599, %v2473
  %v3665 = vsel %vm3636, %v3600, %v2475
  %v3666 = vsel %vm3636, %v3601, %v2477
  %v3667 = vsel %vm3636, %v3602, %v2479
  %v3668 = vsel %vm3636, %v3603, %v2481
  %v3669 = vsel %vm3636, %v3604, %v2483
  %v3670 = vsel %vm3636, %v3605, %v2485
  %v3671 = vsel %vm3636, %v3606, %v2487
  %v3672 = vsel %vm3636, %v3607, %v2489
  %v3673 = vsel %vm3636, %v3608, %v2491
  %v3674 = vsel %vm3636, %v3609, %v2493
  %v3675 = vsel %vm3636, %v3610, %v2495
  %v3676 = vsel %vm3636, %v3611, %v2497
  %v3677 = vsel %vm3636, %v3612, %v2499
  %v3678 = vsel %vm3636, %v3613, %v2501
  %v3679 = vsel %vm3636, %v3614, %v2503
  %v3680 = vsel %vm3636, %v3615, %v2505
  %v3681 = vsel %vm3636, %v3616, %v2507
  %v3682 = vsel %vm3636, %v3617, %v2509
  %v3683 = vsel %vm3636, %v3618, %v2511
  %v3684 = vsel %vm3636, %v3619, %v2513
  %v3685 = vsel %vm3636, %v3620, %v2515
  %v3686 = vsel %vm3636, %v3621, %v2517
  %v3687 = vsel %vm3636, %v3622, %v2519
  %v3688 = vsel %vm3636, %v3623, %v2521
  %v3689 = vsel %vm3636, %v3624, %v2523
  %v3690 = vsel %vm3636, %v3625, %v2525
  %v3691 = vsel %vm3636, %v3626, %v2527
  %v3692 = vsel %vm3636, %v3627, %v2529
  %v3693 = vsel %vm3636, %v3628, %v2531
  %v3694 = vsel %vm3636, %v3629, %v2533
  %v3695 = vsel %vm3636, %v3630, %v2535
  %v3696 = vsel %vm3636, %v3631, %v2537
  %v3697 = vsel %vm3636, %v3632, %v2539
  %v3698 = vsel %vm3636, %v3633, %v2541
  %v3699 = vsel %vm3636, %v3634, %v2543
  %v3700 = vsel %vm3636, %v3635, %v2545
  %vm3701 = vcmask 392192
  %v3702 = vsel %vm3701, %v3637, %v2675
  %v3703 = vsel %vm3701, %v3638, %v2677
  %v3704 = vsel %vm3701, %v3639, %v2679
  %v3705 = vsel %vm3701, %v3640, %v2681
  %v3706 = vsel %vm3701, %v3641, %v2683
  %v3707 = vsel %vm3701, %v3642, %v2685
  %v3708 = vsel %vm3701, %v3643, %v2687
  %v3709 = vsel %vm3701, %v3644, %v2689
  %v3710 = vsel %vm3701, %v3645, %v2691
  %v3711 = vsel %vm3701, %v3646, %v2693
  %v3712 = vsel %vm3701, %v3647, %v2695
  %v3713 = vsel %vm3701, %v3648, %v2697
  %v3714 = vsel %vm3701, %v3649, %v2699
  %v3715 = vsel %vm3701, %v3650, %v2701
  %v3716 = vsel %vm3701, %v3651, %v2703
  %v3717 = vsel %vm3701, %v3652, %v2705
  %v3718 = vsel %vm3701, %v3653, %v2707
  %v3719 = vsel %vm3701, %v3654, %v2709
  %v3720 = vsel %vm3701, %v3655, %v2711
  %v3721 = vsel %vm3701, %v3656, %v2713
  %v3722 = vsel %vm3701, %v3657, %v2715
  %v3723 = vsel %vm3701, %v3658, %v2717
  %v3724 = vsel %vm3701, %v3659, %v2719
  %v3725 = vsel %vm3701, %v3660, %v2721
  %v3726 = vsel %vm3701, %v3661, %v2723
  %v3727 = vsel %vm3701, %v3662, %v2725
  %v3728 = vsel %vm3701, %v3663, %v2727
  %v3729 = vsel %vm3701, %v3664, %v2729
  %v3730 = vsel %vm3701, %v3665, %v2731
  %v3731 = vsel %vm3701, %v3666, %v2733
  %v3732 = vsel %vm3701, %v3667, %v2735
  %v3733 = vsel %vm3701, %v3668, %v2737
  %v3734 = vsel %vm3701, %v3669, %v2739
  %v3735 = vsel %vm3701, %v3670, %v2741
  %v3736 = vsel %vm3701, %v3671, %v2743
  %v3737 = vsel %vm3701, %v3672, %v2745
  %v3738 = vsel %vm3701, %v3673, %v2747
  %v3739 = vsel %vm3701, %v3674, %v2749
  %v3740 = vsel %vm3701, %v3675, %v2751
  %v3741 = vsel %vm3701, %v3676, %v2753
  %v3742 = vsel %vm3701, %v3677, %v2755
  %v3743 = vsel %vm3701, %v3678, %v2757
  %v3744 = vsel %vm3701, %v3679, %v2759
  %v3745 = vsel %vm3701, %v3680, %v2761
  %v3746 = vsel %vm3701, %v3681, %v2763
  %v3747 = vsel %vm3701, %v3682, %v2765
  %v3748 = vsel %vm3701, %v3683, %v2767
  %v3749 = vsel %vm3701, %v3684, %v2769
  %v3750 = vsel %vm3701, %v3685, %v2771
  %v3751 = vsel %vm3701, %v3686, %v2773
  %v3752 = vsel %vm3701, %v3687, %v2775
  %v3753 = vsel %vm3701, %v3688, %v2777
  %v3754 = vsel %vm3701, %v3689, %v2779
  %v3755 = vsel %vm3701, %v3690, %v2781
  %v3756 = vsel %vm3701, %v3691, %v2783
  %v3757 = vsel %vm3701, %v3692, %v2785
  %v3758 = vsel %vm3701, %v3693, %v2787
  %v3759 = vsel %vm3701, %v3694, %v2789
  %v3760 = vsel %vm3701, %v3695, %v2791
  %v3761 = vsel %vm3701, %v3696, %v2793
  %v3762 = vsel %vm3701, %v3697, %v2795
  %v3763 = vsel %vm3701, %v3698, %v2797
  %v3764 = vsel %vm3701, %v3699, %v2799
  %v3765 = vsel %vm3701, %v3700, %v2801
  %vm3766 = vcmask 457728
  %v3767 = vsel %vm3766, %v3702, %v2931
  %v3768 = vsel %vm3766, %v3703, %v2933
  %v3769 = vsel %vm3766, %v3704, %v2935
  %v3770 = vsel %vm3766, %v3705, %v2937
  %v3771 = vsel %vm3766, %v3706, %v2939
  %v3772 = vsel %vm3766, %v3707, %v2941
  %v3773 = vsel %vm3766, %v3708, %v2943
  %v3774 = vsel %vm3766, %v3709, %v2945
  %v3775 = vsel %vm3766, %v3710, %v2947
  %v3776 = vsel %vm3766, %v3711, %v2949
  %v3777 = vsel %vm3766, %v3712, %v2951
  %v3778 = vsel %vm3766, %v3713, %v2953
  %v3779 = vsel %vm3766, %v3714, %v2955
  %v3780 = vsel %vm3766, %v3715, %v2957
  %v3781 = vsel %vm3766, %v3716, %v2959
  %v3782 = vsel %vm3766, %v3717, %v2961
  %v3783 = vsel %vm3766, %v3718, %v2963
  %v3784 = vsel %vm3766, %v3719, %v2965
  %v3785 = vsel %vm3766, %v3720, %v2967
  %v3786 = vsel %vm3766, %v3721, %v2969
  %v3787 = vsel %vm3766, %v3722, %v2971
  %v3788 = vsel %vm3766, %v3723, %v2973
  %v3789 = vsel %vm3766, %v3724, %v2975
  %v3790 = vsel %vm3766, %v3725, %v2977
  %v3791 = vsel %vm3766, %v3726, %v2979
  %v3792 = vsel %vm3766, %v3727, %v2981
  %v3793 = vsel %vm3766, %v3728, %v2983
  %v3794 = vsel %vm3766, %v3729, %v2985
  %v3795 = vsel %vm3766, %v3730, %v2987
  %v3796 = vsel %vm3766, %v3731, %v2989
  %v3797 = vsel %vm3766, %v3732, %v2991
  %v3798 = vsel %vm3766, %v3733, %v2993
  %v3799 = vsel %vm3766, %v3734, %v2995
  %v3800 = vsel %vm3766, %v3735, %v2997
  %v3801 = vsel %vm3766, %v3736, %v2999
  %v3802 = vsel %vm3766, %v3737, %v3001
  %v3803 = vsel %vm3766, %v3738, %v3003
  %v3804 = vsel %vm3766, %v3739, %v3005
  %v3805 = vsel %vm3766, %v3740, %v3007
  %v3806 = vsel %vm3766, %v3741, %v3009
  %v3807 = vsel %vm3766, %v3742, %v3011
  %v3808 = vsel %vm3766, %v3743, %v3013
  %v3809 = vsel %vm3766, %v3744, %v3015
  %v3810 = vsel %vm3766, %v3745, %v3017
  %v3811 = vsel %vm3766, %v3746, %v3019
  %v3812 = vsel %vm3766, %v3747, %v3021
  %v3813 = vsel %vm3766, %v3748, %v3023
  %v3814 = vsel %vm3766, %v3749, %v3025
  %v3815 = vsel %vm3766, %v3750, %v3027
  %v3816 = vsel %vm3766, %v3751, %v3029
  %v3817 = vsel %vm3766, %v3752, %v3031
  %v3818 = vsel %vm3766, %v3753, %v3033
  %v3819 = vsel %vm3766, %v3754, %v3035
  %v3820 = vsel %vm3766, %v3755, %v3037
  %v3821 = vsel %vm3766, %v3756, %v3039
  %v3822 = vsel %vm3766, %v3757, %v3041
  %v3823 = vsel %vm3766, %v3758, %v3043
  %v3824 = vsel %vm3766, %v3759, %v3045
  %v3825 = vsel %vm3766, %v3760, %v3047
  %v3826 = vsel %vm3766, %v3761, %v3049
  %v3827 = vsel %vm3766, %v3762, %v3051
  %v3828 = vsel %vm3766, %v3763, %v3053
  %v3829 = vsel %vm3766, %v3764, %v3055
  %v3830 = vsel %vm3766, %v3765, %v3057
  %vm3831 = vcmask 523264
  %v3832 = vsel %vm3831, %v3767, %v3187
  %v3833 = vsel %vm3831, %v3768, %v3189
  %v3834 = vsel %vm3831, %v3769, %v3191
  %v3835 = vsel %vm3831, %v3770, %v3193
  %v3836 = vsel %vm3831, %v3771, %v3195
  %v3837 = vsel %vm3831, %v3772, %v3197
  %v3838 = vsel %vm3831, %v3773, %v3199
  %v3839 = vsel %vm3831, %v3774, %v3201
  %v3840 = vsel %vm3831, %v3775, %v3203
  %v3841 = vsel %vm3831, %v3776, %v3205
  %v3842 = vsel %vm3831, %v3777, %v3207
  %v3843 = vsel %vm3831, %v3778, %v3209
  %v3844 = vsel %vm3831, %v3779, %v3211
  %v3845 = vsel %vm3831, %v3780, %v3213
  %v3846 = vsel %vm3831, %v3781, %v3215
  %v3847 = vsel %vm3831, %v3782, %v3217
  %v3848 = vsel %vm3831, %v3783, %v3219
  %v3849 = vsel %vm3831, %v3784, %v3221
  %v3850 = vsel %vm3831, %v3785, %v3223
  %v3851 = vsel %vm3831, %v3786, %v3225
  %v3852 = vsel %vm3831, %v3787, %v3227
  %v3853 = vsel %vm3831, %v3788, %v3229
  %v3854 = vsel %vm3831, %v3789, %v3231
  %v3855 = vsel %vm3831, %v3790, %v3233
  %v3856 = vsel %vm3831, %v3791, %v3235
  %v3857 = vsel %vm3831, %v3792, %v3237
  %v3858 = vsel %vm3831, %v3793, %v3239
  %v3859 = vsel %vm3831, %v3794, %v3241
  %v3860 = vsel %vm3831, %v3795, %v3243
  %v3861 = vsel %vm3831, %v3796, %v3245
  %v3862 = vsel %vm3831, %v3797, %v3247
  %v3863 = vsel %vm3831, %v3798, %v3249
  %v3864 = vsel %vm3831, %v3799, %v3251
  %v3865 = vsel %vm3831, %v3800, %v3253
  %v3866 = vsel %vm3831, %v3801, %v3255
  %v3867 = vsel %vm3831, %v3802, %v3257
  %v3868 = vsel %vm3831, %v3803, %v3259
  %v3869 = vsel %vm3831, %v3804, %v3261
  %v3870 = vsel %vm3831, %v3805, %v3263
  %v3871 = vsel %vm3831, %v3806, %v3265
  %v3872 = vsel %vm3831, %v3807, %v3267
  %v3873 = vsel %vm3831, %v3808, %v3269
  %v3874 = vsel %vm3831, %v3809, %v3271
  %v3875 = vsel %vm3831, %v3810, %v3273
  %v3876 = vsel %vm3831, %v3811, %v3275
  %v3877 = vsel %vm3831, %v3812, %v3277
  %v3878 = vsel %vm3831, %v3813, %v3279
  %v3879 = vsel %vm3831, %v3814, %v3281
  %v3880 = vsel %vm3831, %v3815, %v3283
  %v3881 = vsel %vm3831, %v3816, %v3285
  %v3882 = vsel %vm3831, %v3817, %v3287
  %v3883 = vsel %vm3831, %v3818, %v3289
  %v3884 = vsel %vm3831, %v3819, %v3291
  %v3885 = vsel %vm3831, %v3820, %v3293
  %v3886 = vsel %vm3831, %v3821, %v3295
  %v3887 = vsel %vm3831, %v3822, %v3297
  %v3888 = vsel %vm3831, %v3823, %v3299
  %v3889 = vsel %vm3831, %v3824, %v3301
  %v3890 = vsel %vm3831, %v3825, %v3303
  %v3891 = vsel %vm3831, %v3826, %v3305
  %v3892 = vsel %vm3831, %v3827, %v3307
  %v3893 = vsel %vm3831, %v3828, %v3309
  %v3894 = vsel %vm3831, %v3829, %v3311
  %v3895 = vsel %vm3831, %v3830, %v3313
  %v3896 = vpack.c.bf16 %v3833, %v3832
  %v3897 = vpack.c.bf16 %v3835, %v3834
  %v3898 = vpack.c.bf16 %v3837, %v3836
  %v3899 = vpack.c.bf16 %v3839, %v3838
  %v3900 = vpack.c.bf16 %v3841, %v3840
  %v3901 = vpack.c.bf16 %v3843, %v3842
  %v3902 = vpack.c.bf16 %v3845, %v3844
  %v3903 = vpack.c.bf16 %v3847, %v3846
  %v3904 = vpack.c.bf16 %v3849, %v3848
  %v3905 = vpack.c.bf16 %v3851, %v3850
  %v3906 = vpack.c.bf16 %v3853, %v3852
  %v3907 = vpack.c.bf16 %v3855, %v3854
  %v3908 = vpack.c.bf16 %v3857, %v3856
  %v3909 = vpack.c.bf16 %v3859, %v3858
  %v3910 = vpack.c.bf16 %v3861, %v3860
  %v3911 = vpack.c.bf16 %v3863, %v3862
  %v3912 = vpack.c.bf16 %v3865, %v3864
  %v3913 = vpack.c.bf16 %v3867, %v3866
  %v3914 = vpack.c.bf16 %v3869, %v3868
  %v3915 = vpack.c.bf16 %v3871, %v3870
  %v3916 = vpack.c.bf16 %v3873, %v3872
  %v3917 = vpack.c.bf16 %v3875, %v3874
  %v3918 = vpack.c.bf16 %v3877, %v3876
  %v3919 = vpack.c.bf16 %v3879, %v3878
  %v3920 = vpack.c.bf16 %v3881, %v3880
  %v3921 = vpack.c.bf16 %v3883, %v3882
  %v3922 = vpack.c.bf16 %v3885, %v3884
  %v3923 = vpack.c.bf16 %v3887, %v3886
  %v3924 = vpack.c.bf16 %v3889, %v3888
  %v3925 = vpack.c.bf16 %v3891, %v3890
  %v3926 = vpack.c.bf16 %v3893, %v3892
  %v3927 = vpack.c.bf16 %v3895, %v3894
  %v3928 = vld [vmem:[%s2] sm:$0xf]
  %v3929 = vld [vmem:[%s2 + $0x4] sm:$0xf]
  %v3930 = vld [vmem:[%s2 + $0x8] sm:$0xf]
  %v3931 = vld [vmem:[%s2 + $0xc] sm:$0xf]
  %v3932 = vld [vmem:[%s2 + $0x10] sm:$0xf]
  %v3933 = vld [vmem:[%s2 + $0x14] sm:$0xf]
  %v3934 = vld [vmem:[%s2 + $0x18] sm:$0xf]
  %v3935 = vld [vmem:[%s2 + $0x1c] sm:$0xf]
  %v3936 = vld [vmem:[%s2 + $0x20] sm:$0xf]
  %v3937 = vld [vmem:[%s3] sm:$0x1]
  %v3939 = vlaneseq
  %v3940 = vshrl.u32 %v3939, 7
  %v3941 = vsub.s32 0, %v3940
  %v3942 = vrot.slane %v3937, %v3941
  %v3953 = vunpack.c.l.b16 %v3928
  %v3954 = vunpack.c.l.b16 %v3929
  %v3955 = vunpack.c.l.b16 %v3930
  %v3956 = vunpack.c.l.b16 %v3931
  %v3957 = vunpack.c.l.b16 %v3932
  %v3958 = vunpack.c.l.b16 %v3933
  %v3959 = vunpack.c.l.b16 %v3934
  %v3960 = vunpack.c.l.b16 %v3935
  %v3961 = vunpack.c.l.b16 %v3936
  %v3962 = vpack.c.b16 %v3954, %v3953
  %v3963 = vpack.c.b16 %v3956, %v3955
  %v3964 = vpack.c.b16 %v3958, %v3957
  %v3965 = vpack.c.b16 %v3960, %v3959
  %v3966 = vpack.c.b16 %v3961, %v3961
  %vm3971 = vcmask 588800
  %v3973 = vsel %vm3971, %v3896, 0
  %v3976 = vsel %vm3971, %v3897, 0
  %v3979 = vsel %vm3971, %v3898, 0
  %v3982 = vsel %vm3971, %v3899, 0
  %v3985 = vsel %vm3971, %v3900, 0
  %v3988 = vsel %vm3971, %v3901, 0
  %v3991 = vsel %vm3971, %v3902, 0
  %v3994 = vsel %vm3971, %v3903, 0
  %v3997 = vsel %vm3971, %v3904, 0
  %v4000 = vsel %vm3971, %v3905, 0
  %v4003 = vsel %vm3971, %v3906, 0
  %v4006 = vsel %vm3971, %v3907, 0
  %v4009 = vsel %vm3971, %v3908, 0
  %v4012 = vsel %vm3971, %v3909, 0
  %v4015 = vsel %vm3971, %v3910, 0
  %v4018 = vsel %vm3971, %v3911, 0
  %v4021 = vsel %vm3971, %v3912, 0
  %v4024 = vsel %vm3971, %v3913, 0
  %v4027 = vsel %vm3971, %v3914, 0
  %v4030 = vsel %vm3971, %v3915, 0
  %v4033 = vsel %vm3971, %v3916, 0
  %v4036 = vsel %vm3971, %v3917, 0
  %v4039 = vsel %vm3971, %v3918, 0
  %v4042 = vsel %vm3971, %v3919, 0
  %v4045 = vsel %vm3971, %v3920, 0
  %v4048 = vsel %vm3971, %v3921, 0
  %v4051 = vsel %vm3971, %v3922, 0
  %v4054 = vsel %vm3971, %v3923, 0
  %v4057 = vsel %vm3971, %v3924, 0
  %v4060 = vsel %vm3971, %v3925, 0
  %v4063 = vsel %vm3971, %v3926, 0
  %v4066 = vsel %vm3971, %v3927, 0
  %vm4068 = vcmask 1043456
  %v4070 = vsel %vm4068, %v3966, 0
  %4072 = vmatprep.subr.bf16.mxu0 0
  %4073 = vmatpush1.bf16.msra.mxu0 0
  %4074 = vmatprep.subr.bf16.mxu0 0
  %4075 = vmatpush1.bf16.msra.mxu0 0
  %4076 = vmatprep.subr.bf16.mxu0 0
  %4077 = vmatpush1.bf16.msra.mxu0 0
  %4078 = vmatprep.subr.bf16.mxu0 0
  %4079 = vmatpush1.bf16.msra.mxu0 %v4070
  %4080 = vmatprep.subr.bf16.mxu0 0
  %4081 = vmatpush1.bf16.msra.mxu0 %v3965
  %4082 = vmatprep.subr.bf16.mxu0 0
  %4083 = vmatpush1.bf16.msra.mxu0 %v3964
  %4084 = vmatprep.subr.bf16.mxu0 0
  %4085 = vmatpush1.bf16.msra.mxu0 %v3963
  %4086 = vmatprep.subr.bf16.mxu0 0
  %4087 = vmatpush1.bf16.msra.mxu0 %v3962
  %4088 = vmatprep.subr.bf16.mxu0 0
  %4089 = vmatpush2.bf16.msra.mxu0 0
  %4090 = vmatprep.subr.bf16.mxu0 0
  %4091 = vmatpush2.bf16.msra.mxu0 0
  %4092 = vmatprep.subr.bf16.mxu0 0
  %4093 = vmatpush2.bf16.msra.mxu0 0
  %4094 = vmatprep.subr.bf16.mxu0 0
  %4095 = vmatpush2.bf16.msra.mxu0 0
  %4096 = vmatprep.subr.bf16.mxu0 0
  %4097 = vmatpush2.bf16.msra.mxu0 0
  %4098 = vmatprep.subr.bf16.mxu0 0
  %4099 = vmatpush2.bf16.msra.mxu0 0
  %4100 = vmatprep.subr.bf16.mxu0 0
  %4101 = vmatpush2.bf16.msra.mxu0 0
  %4102 = vmatprep.subr.bf16.mxu0 0
  %4103 = vmatpush2.bf16.msra.mxu0 0
  %4104 = vmatprep.mubr.bf16.mxu0 0
  %4105 = vmatmul.mubr.bf16.gmra.mxu0 %v3973
  %v4106 = vpop.f32.mrf.mxu0
  %v4107 = vadd.f32 %v3942, %v4106
  %v4108 = vpop.f32.mrf.mxu0
  %v4109 = vpop.f32.mrf.mxu0
  %v4110 = vadd.f32 %v3942, %v4109
  %v4111 = vpop.f32.mrf.mxu0
  %4112 = vmatprep.mubr.bf16.mxu0 0
  %4113 = vmatmul.mubr.bf16.gmra.mxu0 %v3976
  %v4114 = vpop.f32.mrf.mxu0
  %v4115 = vadd.f32 %v3942, %v4114
  %v4116 = vpop.f32.mrf.mxu0
  %v4117 = vpop.f32.mrf.mxu0
  %v4118 = vadd.f32 %v3942, %v4117
  %v4119 = vpop.f32.mrf.mxu0
  %4120 = vmatprep.mubr.bf16.mxu0 0
  %4121 = vmatmul.mubr.bf16.gmra.mxu0 %v3979
  %v4122 = vpop.f32.mrf.mxu0
  %v4123 = vadd.f32 %v3942, %v4122
  %v4124 = vpop.f32.mrf.mxu0
  %v4125 = vpop.f32.mrf.mxu0
  %v4126 = vadd.f32 %v3942, %v4125
  %v4127 = vpop.f32.mrf.mxu0
  %4128 = vmatprep.mubr.bf16.mxu0 0
  %4129 = vmatmul.mubr.bf16.gmra.mxu0 %v3982
  %v4130 = vpop.f32.mrf.mxu0
  %v4131 = vadd.f32 %v3942, %v4130
  %v4132 = vpop.f32.mrf.mxu0
  %v4133 = vpop.f32.mrf.mxu0
  %v4134 = vadd.f32 %v3942, %v4133
  %v4135 = vpop.f32.mrf.mxu0
  %4136 = vmatprep.mubr.bf16.mxu0 0
  %4137 = vmatmul.mubr.bf16.gmra.mxu0 %v3985
  %v4138 = vpop.f32.mrf.mxu0
  %v4139 = vadd.f32 %v3942, %v4138
  %v4140 = vpop.f32.mrf.mxu0
  %v4141 = vpop.f32.mrf.mxu0
  %v4142 = vadd.f32 %v3942, %v4141
  %v4143 = vpop.f32.mrf.mxu0
  %4144 = vmatprep.mubr.bf16.mxu0 0
  %4145 = vmatmul.mubr.bf16.gmra.mxu0 %v3988
  %v4146 = vpop.f32.mrf.mxu0
  %v4147 = vadd.f32 %v3942, %v4146
  %v4148 = vpop.f32.mrf.mxu0
  %v4149 = vpop.f32.mrf.mxu0
  %v4150 = vadd.f32 %v3942, %v4149
  %v4151 = vpop.f32.mrf.mxu0
  %4152 = vmatprep.mubr.bf16.mxu0 0
  %4153 = vmatmul.mubr.bf16.gmra.mxu0 %v3991
  %v4154 = vpop.f32.mrf.mxu0
  %v4155 = vadd.f32 %v3942, %v4154
  %v4156 = vpop.f32.mrf.mxu0
  %v4157 = vpop.f32.mrf.mxu0
  %v4158 = vadd.f32 %v3942, %v4157
  %v4159 = vpop.f32.mrf.mxu0
  %4160 = vmatprep.mubr.bf16.mxu0 0
  %4161 = vmatmul.mubr.bf16.gmra.mxu0 %v3994
  %v4162 = vpop.f32.mrf.mxu0
  %v4163 = vadd.f32 %v3942, %v4162
  %v4164 = vpop.f32.mrf.mxu0
  %v4165 = vpop.f32.mrf.mxu0
  %v4166 = vadd.f32 %v3942, %v4165
  %v4167 = vpop.f32.mrf.mxu0
  %4168 = vmatprep.mubr.bf16.mxu0 0
  %4169 = vmatmul.mubr.bf16.gmra.mxu0 %v3997
  %v4170 = vpop.f32.mrf.mxu0
  %v4171 = vadd.f32 %v3942, %v4170
  %v4172 = vpop.f32.mrf.mxu0
  %v4173 = vpop.f32.mrf.mxu0
  %v4174 = vadd.f32 %v3942, %v4173
  %v4175 = vpop.f32.mrf.mxu0
  %4176 = vmatprep.mubr.bf16.mxu0 0
  %4177 = vmatmul.mubr.bf16.gmra.mxu0 %v4000
  %v4178 = vpop.f32.mrf.mxu0
  %v4179 = vadd.f32 %v3942, %v4178
  %v4180 = vpop.f32.mrf.mxu0
  %v4181 = vpop.f32.mrf.mxu0
  %v4182 = vadd.f32 %v3942, %v4181
  %v4183 = vpop.f32.mrf.mxu0
  %4184 = vmatprep.mubr.bf16.mxu0 0
  %4185 = vmatmul.mubr.bf16.gmra.mxu0 %v4003
  %v4186 = vpop.f32.mrf.mxu0
  %v4187 = vadd.f32 %v3942, %v4186
  %v4188 = vpop.f32.mrf.mxu0
  %v4189 = vpop.f32.mrf.mxu0
  %v4190 = vadd.f32 %v3942, %v4189
  %v4191 = vpop.f32.mrf.mxu0
  %4192 = vmatprep.mubr.bf16.mxu0 0
  %4193 = vmatmul.mubr.bf16.gmra.mxu0 %v4006
  %v4194 = vpop.f32.mrf.mxu0
  %v4195 = vadd.f32 %v3942, %v4194
  %v4196 = vpop.f32.mrf.mxu0
  %v4197 = vpop.f32.mrf.mxu0
  %v4198 = vadd.f32 %v3942, %v4197
  %v4199 = vpop.f32.mrf.mxu0
  %4200 = vmatprep.mubr.bf16.mxu0 0
  %4201 = vmatmul.mubr.bf16.gmra.mxu0 %v4009
  %v4202 = vpop.f32.mrf.mxu0
  %v4203 = vadd.f32 %v3942, %v4202
  %v4204 = vpop.f32.mrf.mxu0
  %v4205 = vpop.f32.mrf.mxu0
  %v4206 = vadd.f32 %v3942, %v4205
  %v4207 = vpop.f32.mrf.mxu0
  %4208 = vmatprep.mubr.bf16.mxu0 0
  %4209 = vmatmul.mubr.bf16.gmra.mxu0 %v4012
  %v4210 = vpop.f32.mrf.mxu0
  %v4211 = vadd.f32 %v3942, %v4210
  %v4212 = vpop.f32.mrf.mxu0
  %v4213 = vpop.f32.mrf.mxu0
  %v4214 = vadd.f32 %v3942, %v4213
  %v4215 = vpop.f32.mrf.mxu0
  %4216 = vmatprep.mubr.bf16.mxu0 0
  %4217 = vmatmul.mubr.bf16.gmra.mxu0 %v4015
  %v4218 = vpop.f32.mrf.mxu0
  %v4219 = vadd.f32 %v3942, %v4218
  %v4220 = vpop.f32.mrf.mxu0
  %v4221 = vpop.f32.mrf.mxu0
  %v4222 = vadd.f32 %v3942, %v4221
  %v4223 = vpop.f32.mrf.mxu0
  %4224 = vmatprep.mubr.bf16.mxu0 0
  %4225 = vmatmul.mubr.bf16.gmra.mxu0 %v4018
  %v4226 = vpop.f32.mrf.mxu0
  %v4227 = vadd.f32 %v3942, %v4226
  %v4228 = vpop.f32.mrf.mxu0
  %v4229 = vpop.f32.mrf.mxu0
  %v4230 = vadd.f32 %v3942, %v4229
  %v4231 = vpop.f32.mrf.mxu0
  %4232 = vmatprep.mubr.bf16.mxu0 0
  %4233 = vmatmul.mubr.bf16.gmra.mxu0 %v4021
  %v4234 = vpop.f32.mrf.mxu0
  %v4235 = vadd.f32 %v3942, %v4234
  %v4236 = vpop.f32.mrf.mxu0
  %v4237 = vpop.f32.mrf.mxu0
  %v4238 = vadd.f32 %v3942, %v4237
  %v4239 = vpop.f32.mrf.mxu0
  %4240 = vmatprep.mubr.bf16.mxu0 0
  %4241 = vmatmul.mubr.bf16.gmra.mxu0 %v4024
  %v4242 = vpop.f32.mrf.mxu0
  %v4243 = vadd.f32 %v3942, %v4242
  %v4244 = vpop.f32.mrf.mxu0
  %v4245 = vpop.f32.mrf.mxu0
  %v4246 = vadd.f32 %v3942, %v4245
  %v4247 = vpop.f32.mrf.mxu0
  %4248 = vmatprep.mubr.bf16.mxu0 0
  %4249 = vmatmul.mubr.bf16.gmra.mxu0 %v4027
  %v4250 = vpop.f32.mrf.mxu0
  %v4251 = vadd.f32 %v3942, %v4250
  %v4252 = vpop.f32.mrf.mxu0
  %v4253 = vpop.f32.mrf.mxu0
  %v4254 = vadd.f32 %v3942, %v4253
  %v4255 = vpop.f32.mrf.mxu0
  %4256 = vmatprep.mubr.bf16.mxu0 0
  %4257 = vmatmul.mubr.bf16.gmra.mxu0 %v4030
  %v4258 = vpop.f32.mrf.mxu0
  %v4259 = vadd.f32 %v3942, %v4258
  %v4260 = vpop.f32.mrf.mxu0
  %v4261 = vpop.f32.mrf.mxu0
  %v4262 = vadd.f32 %v3942, %v4261
  %v4263 = vpop.f32.mrf.mxu0
  %4264 = vmatprep.mubr.bf16.mxu0 0
  %4265 = vmatmul.mubr.bf16.gmra.mxu0 %v4033
  %v4266 = vpop.f32.mrf.mxu0
  %v4267 = vadd.f32 %v3942, %v4266
  %v4268 = vpop.f32.mrf.mxu0
  %v4269 = vpop.f32.mrf.mxu0
  %v4270 = vadd.f32 %v3942, %v4269
  %v4271 = vpop.f32.mrf.mxu0
  %4272 = vmatprep.mubr.bf16.mxu0 0
  %4273 = vmatmul.mubr.bf16.gmra.mxu0 %v4036
  %v4274 = vpop.f32.mrf.mxu0
  %v4275 = vadd.f32 %v3942, %v4274
  %v4276 = vpop.f32.mrf.mxu0
  %v4277 = vpop.f32.mrf.mxu0
  %v4278 = vadd.f32 %v3942, %v4277
  %v4279 = vpop.f32.mrf.mxu0
  %4280 = vmatprep.mubr.bf16.mxu0 0
  %4281 = vmatmul.mubr.bf16.gmra.mxu0 %v4039
  %v4282 = vpop.f32.mrf.mxu0
  %v4283 = vadd.f32 %v3942, %v4282
  %v4284 = vpop.f32.mrf.mxu0
  %v4285 = vpop.f32.mrf.mxu0
  %v4286 = vadd.f32 %v3942, %v4285
  %v4287 = vpop.f32.mrf.mxu0
  %4288 = vmatprep.mubr.bf16.mxu0 0
  %4289 = vmatmul.mubr.bf16.gmra.mxu0 %v4042
  %v4290 = vpop.f32.mrf.mxu0
  %v4291 = vadd.f32 %v3942, %v4290
  %v4292 = vpop.f32.mrf.mxu0
  %v4293 = vpop.f32.mrf.mxu0
  %v4294 = vadd.f32 %v3942, %v4293
  %v4295 = vpop.f32.mrf.mxu0
  %4296 = vmatprep.mubr.bf16.mxu0 0
  %4297 = vmatmul.mubr.bf16.gmra.mxu0 %v4045
  %v4298 = vpop.f32.mrf.mxu0
  %v4299 = vadd.f32 %v3942, %v4298
  %v4300 = vpop.f32.mrf.mxu0
  %v4301 = vpop.f32.mrf.mxu0
  %v4302 = vadd.f32 %v3942, %v4301
  %v4303 = vpop.f32.mrf.mxu0
  %4304 = vmatprep.mubr.bf16.mxu0 0
  %4305 = vmatmul.mubr.bf16.gmra.mxu0 %v4048
  %v4306 = vpop.f32.mrf.mxu0
  %v4307 = vadd.f32 %v3942, %v4306
  %v4308 = vpop.f32.mrf.mxu0
  %v4309 = vpop.f32.mrf.mxu0
  %v4310 = vadd.f32 %v3942, %v4309
  %v4311 = vpop.f32.mrf.mxu0
  %4312 = vmatprep.mubr.bf16.mxu0 0
  %4313 = vmatmul.mubr.bf16.gmra.mxu0 %v4051
  %v4314 = vpop.f32.mrf.mxu0
  %v4315 = vadd.f32 %v3942, %v4314
  %v4316 = vpop.f32.mrf.mxu0
  %v4317 = vpop.f32.mrf.mxu0
  %v4318 = vadd.f32 %v3942, %v4317
  %v4319 = vpop.f32.mrf.mxu0
  %4320 = vmatprep.mubr.bf16.mxu0 0
  %4321 = vmatmul.mubr.bf16.gmra.mxu0 %v4054
  %v4322 = vpop.f32.mrf.mxu0
  %v4323 = vadd.f32 %v3942, %v4322
  %v4324 = vpop.f32.mrf.mxu0
  %v4325 = vpop.f32.mrf.mxu0
  %v4326 = vadd.f32 %v3942, %v4325
  %v4327 = vpop.f32.mrf.mxu0
  %4328 = vmatprep.mubr.bf16.mxu0 0
  %4329 = vmatmul.mubr.bf16.gmra.mxu0 %v4057
  %v4330 = vpop.f32.mrf.mxu0
  %v4331 = vadd.f32 %v3942, %v4330
  %v4332 = vpop.f32.mrf.mxu0
  %v4333 = vpop.f32.mrf.mxu0
  %v4334 = vadd.f32 %v3942, %v4333
  %v4335 = vpop.f32.mrf.mxu0
  %4336 = vmatprep.mubr.bf16.mxu0 0
  %4337 = vmatmul.mubr.bf16.gmra.mxu0 %v4060
  %v4338 = vpop.f32.mrf.mxu0
  %v4339 = vadd.f32 %v3942, %v4338
  %v4340 = vpop.f32.mrf.mxu0
  %v4341 = vpop.f32.mrf.mxu0
  %v4342 = vadd.f32 %v3942, %v4341
  %v4343 = vpop.f32.mrf.mxu0
  %4344 = vmatprep.mubr.bf16.mxu0 0
  %4345 = vmatmul.mubr.bf16.gmra.mxu0 %v4063
  %v4346 = vpop.f32.mrf.mxu0
  %v4347 = vadd.f32 %v3942, %v4346
  %v4348 = vpop.f32.mrf.mxu0
  %v4349 = vpop.f32.mrf.mxu0
  %v4350 = vadd.f32 %v3942, %v4349
  %v4351 = vpop.f32.mrf.mxu0
  %4352 = vmatprep.mubr.bf16.mxu0 0
  %4353 = vmatmul.mubr.bf16.gmra.mxu0 %v4066
  %v4354 = vpop.f32.mrf.mxu0
  %v4355 = vadd.f32 %v3942, %v4354
  %v4356 = vpop.f32.mrf.mxu0
  %v4357 = vpop.f32.mrf.mxu0
  %v4358 = vadd.f32 %v3942, %v4357
  %v4359 = vpop.f32.mrf.mxu0
  %4360 = vdwg.mxu0
  %v4361 = vld [vmem:[#allocation4] sm:$0x1]
  %s4362 = vtos %v4361
  %vm4363 = vcmp.gt.f32.partialorder %v4107, 0.0
  %vm4364 = vcmp.gt.f32.partialorder %v4110, 0.0
  %vm4365 = vcmp.gt.f32.partialorder %v4115, 0.0
  %vm4366 = vcmp.gt.f32.partialorder %v4118, 0.0
  %vm4367 = vcmp.gt.f32.partialorder %v4123, 0.0
  %vm4368 = vcmp.gt.f32.partialorder %v4126, 0.0
  %vm4369 = vcmp.gt.f32.partialorder %v4131, 0.0
  %vm4370 = vcmp.gt.f32.partialorder %v4134, 0.0
  %vm4371 = vcmp.gt.f32.partialorder %v4139, 0.0
  %vm4372 = vcmp.gt.f32.partialorder %v4142, 0.0
  %vm4373 = vcmp.gt.f32.partialorder %v4147, 0.0
  %vm4374 = vcmp.gt.f32.partialorder %v4150, 0.0
  %vm4375 = vcmp.gt.f32.partialorder %v4155, 0.0
  %vm4376 = vcmp.gt.f32.partialorder %v4158, 0.0
  %vm4377 = vcmp.gt.f32.partialorder %v4163, 0.0
  %vm4378 = vcmp.gt.f32.partialorder %v4166, 0.0
  %vm4379 = vcmp.gt.f32.partialorder %v4171, 0.0
  %vm4380 = vcmp.gt.f32.partialorder %v4174, 0.0
  %vm4381 = vcmp.gt.f32.partialorder %v4179, 0.0
  %vm4382 = vcmp.gt.f32.partialorder %v4182, 0.0
  %vm4383 = vcmp.gt.f32.partialorder %v4187, 0.0
  %vm4384 = vcmp.gt.f32.partialorder %v4190, 0.0
  %vm4385 = vcmp.gt.f32.partialorder %v4195, 0.0
  %vm4386 = vcmp.gt.f32.partialorder %v4198, 0.0
  %vm4387 = vcmp.gt.f32.partialorder %v4203, 0.0
  %vm4388 = vcmp.gt.f32.partialorder %v4206, 0.0
  %vm4389 = vcmp.gt.f32.partialorder %v4211, 0.0
  %vm4390 = vcmp.gt.f32.partialorder %v4214, 0.0
  %vm4391 = vcmp.gt.f32.partialorder %v4219, 0.0
  %vm4392 = vcmp.gt.f32.partialorder %v4222, 0.0
  %vm4393 = vcmp.gt.f32.partialorder %v4227, 0.0
  %vm4394 = vcmp.gt.f32.partialorder %v4230, 0.0
  %vm4395 = vcmp.gt.f32.partialorder %v4235, 0.0
  %vm4396 = vcmp.gt.f32.partialorder %v4238, 0.0
  %vm4397 = vcmp.gt.f32.partialorder %v4243, 0.0
  %vm4398 = vcmp.gt.f32.partialorder %v4246, 0.0
  %vm4399 = vcmp.gt.f32.partialorder %v4251, 0.0
  %vm4400 = vcmp.gt.f32.partialorder %v4254, 0.0
  %vm4401 = vcmp.gt.f32.partialorder %v4259, 0.0
  %vm4402 = vcmp.gt.f32.partialorder %v4262, 0.0
  %vm4403 = vcmp.gt.f32.partialorder %v4267, 0.0
  %vm4404 = vcmp.gt.f32.partialorder %v4270, 0.0
  %vm4405 = vcmp.gt.f32.partialorder %v4275, 0.0
  %vm4406 = vcmp.gt.f32.partialorder %v4278, 0.0
  %vm4407 = vcmp.gt.f32.partialorder %v4283, 0.0
  %vm4408 = vcmp.gt.f32.partialorder %v4286, 0.0
  %vm4409 = vcmp.gt.f32.partialorder %v4291, 0.0
  %vm4410 = vcmp.gt.f32.partialorder %v4294, 0.0
  %vm4411 = vcmp.gt.f32.partialorder %v4299, 0.0
  %vm4412 = vcmp.gt.f32.partialorder %v4302, 0.0
  %vm4413 = vcmp.gt.f32.partialorder %v4307, 0.0
  %vm4414 = vcmp.gt.f32.partialorder %v4310, 0.0
  %vm4415 = vcmp.gt.f32.partialorder %v4315, 0.0
  %vm4416 = vcmp.gt.f32.partialorder %v4318, 0.0
  %vm4417 = vcmp.gt.f32.partialorder %v4323, 0.0
  %vm4418 = vcmp.gt.f32.partialorder %v4326, 0.0
  %vm4419 = vcmp.gt.f32.partialorder %v4331, 0.0
  %vm4420 = vcmp.gt.f32.partialorder %v4334, 0.0
  %vm4421 = vcmp.gt.f32.partialorder %v4339, 0.0
  %vm4422 = vcmp.gt.f32.partialorder %v4342, 0.0
  %vm4423 = vcmp.gt.f32.partialorder %v4347, 0.0
  %vm4424 = vcmp.gt.f32.partialorder %v4350, 0.0
  %vm4425 = vcmp.gt.f32.partialorder %v4355, 0.0
  %vm4426 = vcmp.gt.f32.partialorder %v4358, 0.0
  %v4427 = vstv %s4362
  %v4428 = vmul.f32 %v4427, %v4107
  %v4429 = vmul.f32 %v4427, %v4110
  %v4430 = vmul.f32 %v4427, %v4115
  %v4431 = vmul.f32 %v4427, %v4118
  %v4432 = vmul.f32 %v4427, %v4123
  %v4433 = vmul.f32 %v4427, %v4126
  %v4434 = vmul.f32 %v4427, %v4131
  %v4435 = vmul.f32 %v4427, %v4134
  %v4436 = vmul.f32 %v4427, %v4139
  %v4437 = vmul.f32 %v4427, %v4142
  %v4438 = vmul.f32 %v4427, %v4147
  %v4439 = vmul.f32 %v4427, %v4150
  %v4440 = vmul.f32 %v4427, %v4155
  %v4441 = vmul.f32 %v4427, %v4158
  %v4442 = vmul.f32 %v4427, %v4163
  %v4443 = vmul.f32 %v4427, %v4166
  %v4444 = vmul.f32 %v4427, %v4171
  %v4445 = vmul.f32 %v4427, %v4174
  %v4446 = vmul.f32 %v4427, %v4179
  %v4447 = vmul.f32 %v4427, %v4182
  %v4448 = vmul.f32 %v4427, %v4187
  %v4449 = vmul.f32 %v4427, %v4190
  %v4450 = vmul.f32 %v4427, %v4195
  %v4451 = vmul.f32 %v4427, %v4198
  %v4452 = vmul.f32 %v4427, %v4203
  %v4453 = vmul.f32 %v4427, %v4206
  %v4454 = vmul.f32 %v4427, %v4211
  %v4455 = vmul.f32 %v4427, %v4214
  %v4456 = vmul.f32 %v4427, %v4219
  %v4457 = vmul.f32 %v4427, %v4222
  %v4458 = vmul.f32 %v4427, %v4227
  %v4459 = vmul.f32 %v4427, %v4230
  %v4460 = vmul.f32 %v4427, %v4235
  %v4461 = vmul.f32 %v4427, %v4238
  %v4462 = vmul.f32 %v4427, %v4243
  %v4463 = vmul.f32 %v4427, %v4246
  %v4464 = vmul.f32 %v4427, %v4251
  %v4465 = vmul.f32 %v4427, %v4254
  %v4466 = vmul.f32 %v4427, %v4259
  %v4467 = vmul.f32 %v4427, %v4262
  %v4468 = vmul.f32 %v4427, %v4267
  %v4469 = vmul.f32 %v4427, %v4270
  %v4470 = vmul.f32 %v4427, %v4275
  %v4471 = vmul.f32 %v4427, %v4278
  %v4472 = vmul.f32 %v4427, %v4283
  %v4473 = vmul.f32 %v4427, %v4286
  %v4474 = vmul.f32 %v4427, %v4291
  %v4475 = vmul.f32 %v4427, %v4294
  %v4476 = vmul.f32 %v4427, %v4299
  %v4477 = vmul.f32 %v4427, %v4302
  %v4478 = vmul.f32 %v4427, %v4307
  %v4479 = vmul.f32 %v4427, %v4310
  %v4480 = vmul.f32 %v4427, %v4315
  %v4481 = vmul.f32 %v4427, %v4318
  %v4482 = vmul.f32 %v4427, %v4323
  %v4483 = vmul.f32 %v4427, %v4326
  %v4484 = vmul.f32 %v4427, %v4331
  %v4485 = vmul.f32 %v4427, %v4334
  %v4486 = vmul.f32 %v4427, %v4339
  %v4487 = vmul.f32 %v4427, %v4342
  %v4488 = vmul.f32 %v4427, %v4347
  %v4489 = vmul.f32 %v4427, %v4350
  %v4490 = vmul.f32 %v4427, %v4355
  %v4491 = vmul.f32 %v4427, %v4358
  %v4492 = vsel %vm4363, %v4107, %v4428
  %v4493 = vsel %vm4364, %v4110, %v4429
  %v4494 = vsel %vm4365, %v4115, %v4430
  %v4495 = vsel %vm4366, %v4118, %v4431
  %v4496 = vsel %vm4367, %v4123, %v4432
  %v4497 = vsel %vm4368, %v4126, %v4433
  %v4498 = vsel %vm4369, %v4131, %v4434
  %v4499 = vsel %vm4370, %v4134, %v4435
  %v4500 = vsel %vm4371, %v4139, %v4436
  %v4501 = vsel %vm4372, %v4142, %v4437
  %v4502 = vsel %vm4373, %v4147, %v4438
  %v4503 = vsel %vm4374, %v4150, %v4439
  %v4504 = vsel %vm4375, %v4155, %v4440
  %v4505 = vsel %vm4376, %v4158, %v4441
  %v4506 = vsel %vm4377, %v4163, %v4442
  %v4507 = vsel %vm4378, %v4166, %v4443
  %v4508 = vsel %vm4379, %v4171, %v4444
  %v4509 = vsel %vm4380, %v4174, %v4445
  %v4510 = vsel %vm4381, %v4179, %v4446
  %v4511 = vsel %vm4382, %v4182, %v4447
  %v4512 = vsel %vm4383, %v4187, %v4448
  %v4513 = vsel %vm4384, %v4190, %v4449
  %v4514 = vsel %vm4385, %v4195, %v4450
  %v4515 = vsel %vm4386, %v4198, %v4451
  %v4516 = vsel %vm4387, %v4203, %v4452
  %v4517 = vsel %vm4388, %v4206, %v4453
  %v4518 = vsel %vm4389, %v4211, %v4454
  %v4519 = vsel %vm4390, %v4214, %v4455
  %v4520 = vsel %vm4391, %v4219, %v4456
  %v4521 = vsel %vm4392, %v4222, %v4457
  %v4522 = vsel %vm4393, %v4227, %v4458
  %v4523 = vsel %vm4394, %v4230, %v4459
  %v4524 = vsel %vm4395, %v4235, %v4460
  %v4525 = vsel %vm4396, %v4238, %v4461
  %v4526 = vsel %vm4397, %v4243, %v4462
  %v4527 = vsel %vm4398, %v4246, %v4463
  %v4528 = vsel %vm4399, %v4251, %v4464
  %v4529 = vsel %vm4400, %v4254, %v4465
  %v4530 = vsel %vm4401, %v4259, %v4466
  %v4531 = vsel %vm4402, %v4262, %v4467
  %v4532 = vsel %vm4403, %v4267, %v4468
  %v4533 = vsel %vm4404, %v4270, %v4469
  %v4534 = vsel %vm4405, %v4275, %v4470
  %v4535 = vsel %vm4406, %v4278, %v4471
  %v4536 = vsel %vm4407, %v4283, %v4472
  %v4537 = vsel %vm4408, %v4286, %v4473
  %v4538 = vsel %vm4409, %v4291, %v4474
  %v4539 = vsel %vm4410, %v4294, %v4475
  %v4540 = vsel %vm4411, %v4299, %v4476
  %v4541 = vsel %vm4412, %v4302, %v4477
  %v4542 = vsel %vm4413, %v4307, %v4478
  %v4543 = vsel %vm4414, %v4310, %v4479
  %v4544 = vsel %vm4415, %v4315, %v4480
  %v4545 = vsel %vm4416, %v4318, %v4481
  %v4546 = vsel %vm4417, %v4323, %v4482
  %v4547 = vsel %vm4418, %v4326, %v4483
  %v4548 = vsel %vm4419, %v4331, %v4484
  %v4549 = vsel %vm4420, %v4334, %v4485
  %v4550 = vsel %vm4421, %v4339, %v4486
  %v4551 = vsel %vm4422, %v4342, %v4487
  %v4552 = vsel %vm4423, %v4347, %v4488
  %v4553 = vsel %vm4424, %v4350, %v4489
  %v4554 = vsel %vm4425, %v4355, %v4490
  %v4555 = vsel %vm4426, %v4358, %v4491
  %s4556 = scalar_lea.vmem [#allocation3], 24
  %4557 = vst.msk [vmem:[%s4556 + $0x1] sm:$0xff] %vm665, %v4492
  %4558 = vst.msk [vmem:[%s4556 + $0x9] sm:$0xff] %vm665, %v4493
  %4559 = vst.msk [vmem:[%s4556 + $0x19] sm:$0xff] %vm665, %v4494
  %4560 = vst.msk [vmem:[%s4556 + $0x21] sm:$0xff] %vm665, %v4495
  %4561 = vst.msk [vmem:[%s4556 + $0x31] sm:$0xff] %vm665, %v4496
  %4562 = vst.msk [vmem:[%s4556 + $0x39] sm:$0xff] %vm665, %v4497
  %4563 = vst.msk [vmem:[%s4556 + $0x49] sm:$0xff] %vm665, %v4498
  %4564 = vst.msk [vmem:[%s4556 + $0x51] sm:$0xff] %vm665, %v4499
  %4565 = vst.msk [vmem:[%s4556 + $0x61] sm:$0xff] %vm665, %v4500
  %4566 = vst.msk [vmem:[%s4556 + $0x69] sm:$0xff] %vm665, %v4501
  %4567 = vst.msk [vmem:[%s4556 + $0x79] sm:$0xff] %vm665, %v4502
  %4568 = vst.msk [vmem:[%s4556 + $0x81] sm:$0xff] %vm665, %v4503
  %4569 = vst.msk [vmem:[%s4556 + $0x91] sm:$0xff] %vm665, %v4504
  %4570 = vst.msk [vmem:[%s4556 + $0x99] sm:$0xff] %vm665, %v4505
  %4571 = vst.msk [vmem:[%s4556 + $0xa9] sm:$0xff] %vm665, %v4506
  %4572 = vst.msk [vmem:[%s4556 + $0xb1] sm:$0xff] %vm665, %v4507
  %4573 = vst.msk [vmem:[%s4556 + $0xc1] sm:$0xff] %vm665, %v4508
  %4574 = vst.msk [vmem:[%s4556 + $0xc9] sm:$0xff] %vm665, %v4509
  %4575 = vst.msk [vmem:[%s4556 + $0xd9] sm:$0xff] %vm665, %v4510
  %4576 = vst.msk [vmem:[%s4556 + $0xe1] sm:$0xff] %vm665, %v4511
  %4577 = vst.msk [vmem:[%s4556 + $0xf1] sm:$0xff] %vm665, %v4512
  %4578 = vst.msk [vmem:[%s4556 + $0xf9] sm:$0xff] %vm665, %v4513
  %4579 = vst.msk [vmem:[%s4556 + $0x109] sm:$0xff] %vm665, %v4514
  %4580 = vst.msk [vmem:[%s4556 + $0x111] sm:$0xff] %vm665, %v4515
  %4581 = vst.msk [vmem:[%s4556 + $0x121] sm:$0xff] %vm665, %v4516
  %4582 = vst.msk [vmem:[%s4556 + $0x129] sm:$0xff] %vm665, %v4517
  %4583 = vst.msk [vmem:[%s4556 + $0x139] sm:$0xff] %vm665, %v4518
  %4584 = vst.msk [vmem:[%s4556 + $0x141] sm:$0xff] %vm665, %v4519
  %4585 = vst.msk [vmem:[%s4556 + $0x151] sm:$0xff] %vm665, %v4520
  %4586 = vst.msk [vmem:[%s4556 + $0x159] sm:$0xff] %vm665, %v4521
  %4587 = vst.msk [vmem:[%s4556 + $0x169] sm:$0xff] %vm665, %v4522
  %4588 = vst.msk [vmem:[%s4556 + $0x171] sm:$0xff] %vm665, %v4523
  %4589 = vst.msk [vmem:[%s4556 + $0x1b1] sm:$0xff] %vm665, %v4524
  %4590 = vst.msk [vmem:[%s4556 + $0x1b9] sm:$0xff] %vm665, %v4525
  %4591 = vst.msk [vmem:[%s4556 + $0x1c9] sm:$0xff] %vm665, %v4526
  %4592 = vst.msk [vmem:[%s4556 + $0x1d1] sm:$0xff] %vm665, %v4527
  %4593 = vst.msk [vmem:[%s4556 + $0x1e1] sm:$0xff] %vm665, %v4528
  %4594 = vst.msk [vmem:[%s4556 + $0x1e9] sm:$0xff] %vm665, %v4529
  %4595 = vst.msk [vmem:[%s4556 + $0x1f9] sm:$0xff] %vm665, %v4530
  %4596 = vst.msk [vmem:[%s4556 + $0x201] sm:$0xff] %vm665, %v4531
  %4597 = vst.msk [vmem:[%s4556 + $0x211] sm:$0xff] %vm665, %v4532
  %4598 = vst.msk [vmem:[%s4556 + $0x219] sm:$0xff] %vm665, %v4533
  %4599 = vst.msk [vmem:[%s4556 + $0x229] sm:$0xff] %vm665, %v4534
  %4600 = vst.msk [vmem:[%s4556 + $0x231] sm:$0xff] %vm665, %v4535
  %4601 = vst.msk [vmem:[%s4556 + $0x241] sm:$0xff] %vm665, %v4536
  %4602 = vst.msk [vmem:[%s4556 + $0x249] sm:$0xff] %vm665, %v4537
  %4603 = vst.msk [vmem:[%s4556 + $0x259] sm:$0xff] %vm665, %v4538
  %4604 = vst.msk [vmem:[%s4556 + $0x261] sm:$0xff] %vm665, %v4539
  %4605 = vst.msk [vmem:[%s4556 + $0x271] sm:$0xff] %vm665, %v4540
  %4606 = vst.msk [vmem:[%s4556 + $0x279] sm:$0xff] %vm665, %v4541
  %4607 = vst.msk [vmem:[%s4556 + $0x289] sm:$0xff] %vm665, %v4542
  %4608 = vst.msk [vmem:[%s4556 + $0x291] sm:$0xff] %vm665, %v4543
  %4609 = vst.msk [vmem:[%s4556 + $0x2a1] sm:$0xff] %vm665, %v4544
  %4610 = vst.msk [vmem:[%s4556 + $0x2a9] sm:$0xff] %vm665, %v4545
  %4611 = vst.msk [vmem:[%s4556 + $0x2b9] sm:$0xff] %vm665, %v4546
  %4612 = vst.msk [vmem:[%s4556 + $0x2c1] sm:$0xff] %vm665, %v4547
  %4613 = vst.msk [vmem:[%s4556 + $0x2d1] sm:$0xff] %vm665, %v4548
  %4614 = vst.msk [vmem:[%s4556 + $0x2d9] sm:$0xff] %vm665, %v4549
  %4615 = vst.msk [vmem:[%s4556 + $0x2e9] sm:$0xff] %vm665, %v4550
  %4616 = vst.msk [vmem:[%s4556 + $0x2f1] sm:$0xff] %vm665, %v4551
  %4617 = vst.msk [vmem:[%s4556 + $0x301] sm:$0xff] %vm665, %v4552
  %4618 = vst.msk [vmem:[%s4556 + $0x309] sm:$0xff] %vm665, %v4553
  %4619 = vst.msk [vmem:[%s4556 + $0x319] sm:$0xff] %vm665, %v4554
  %4620 = vst.msk [vmem:[%s4556 + $0x321] sm:$0xff] %vm665, %v4555
  %v4621 = vld [vmem:[#allocation3] sm:$0xff]
  %v4622 = vld [vmem:[#allocation3 + $0x8] sm:$0xff]
  %v4623 = vld [vmem:[#allocation3 + $0x18] sm:$0xff]
  %v4624 = vld [vmem:[#allocation3 + $0x20] sm:$0xff]
  %v4625 = vld [vmem:[#allocation3 + $0x30] sm:$0xff]
  %v4626 = vld [vmem:[#allocation3 + $0x38] sm:$0xff]
  %v4627 = vld [vmem:[#allocation3 + $0x48] sm:$0xff]
  %v4628 = vld [vmem:[#allocation3 + $0x50] sm:$0xff]
  %v4629 = vld [vmem:[#allocation3 + $0x60] sm:$0xff]
  %v4630 = vld [vmem:[#allocation3 + $0x68] sm:$0xff]
  %v4631 = vld [vmem:[#allocation3 + $0x78] sm:$0xff]
  %v4632 = vld [vmem:[#allocation3 + $0x80] sm:$0xff]
  %v4633 = vld [vmem:[#allocation3 + $0x90] sm:$0xff]
  %v4634 = vld [vmem:[#allocation3 + $0x98] sm:$0xff]
  %v4635 = vld [vmem:[#allocation3 + $0xa8] sm:$0xff]
  %v4636 = vld [vmem:[#allocation3 + $0xb0] sm:$0xff]
  %v4637 = vld [vmem:[#allocation3 + $0xc0] sm:$0xff]
  %v4638 = vld [vmem:[#allocation3 + $0xc8] sm:$0xff]
  %v4639 = vld [vmem:[#allocation3 + $0xd8] sm:$0xff]
  %v4640 = vld [vmem:[#allocation3 + $0xe0] sm:$0xff]
  %v4641 = vld [vmem:[#allocation3 + $0xf0] sm:$0xff]
  %v4642 = vld [vmem:[#allocation3 + $0xf8] sm:$0xff]
  %v4643 = vld [vmem:[#allocation3 + $0x108] sm:$0xff]
  %v4644 = vld [vmem:[#allocation3 + $0x110] sm:$0xff]
  %v4645 = vld [vmem:[#allocation3 + $0x120] sm:$0xff]
  %v4646 = vld [vmem:[#allocation3 + $0x128] sm:$0xff]
  %v4647 = vld [vmem:[#allocation3 + $0x138] sm:$0xff]
  %v4648 = vld [vmem:[#allocation3 + $0x140] sm:$0xff]
  %v4649 = vld [vmem:[#allocation3 + $0x150] sm:$0xff]
  %v4650 = vld [vmem:[#allocation3 + $0x158] sm:$0xff]
  %v4651 = vld [vmem:[#allocation3 + $0x168] sm:$0xff]
  %v4652 = vld [vmem:[#allocation3 + $0x170] sm:$0xff]
  %v4653 = vld [vmem:[#allocation3 + $0x1b0] sm:$0xff]
  %v4654 = vld [vmem:[#allocation3 + $0x1b8] sm:$0xff]
  %v4655 = vld [vmem:[#allocation3 + $0x1c8] sm:$0xff]
  %v4656 = vld [vmem:[#allocation3 + $0x1d0] sm:$0xff]
  %v4657 = vld [vmem:[#allocation3 + $0x1e0] sm:$0xff]
  %v4658 = vld [vmem:[#allocation3 + $0x1e8] sm:$0xff]
  %v4659 = vld [vmem:[#allocation3 + $0x1f8] sm:$0xff]
  %v4660 = vld [vmem:[#allocation3 + $0x200] sm:$0xff]
  %v4661 = vld [vmem:[#allocation3 + $0x210] sm:$0xff]
  %v4662 = vld [vmem:[#allocation3 + $0x218] sm:$0xff]
  %v4663 = vld [vmem:[#allocation3 + $0x228] sm:$0xff]
  %v4664 = vld [vmem:[#allocation3 + $0x230] sm:$0xff]
  %v4665 = vld [vmem:[#allocation3 + $0x240] sm:$0xff]
  %v4666 = vld [vmem:[#allocation3 + $0x248] sm:$0xff]
  %v4667 = vld [vmem:[#allocation3 + $0x258] sm:$0xff]
  %v4668 = vld [vmem:[#allocation3 + $0x260] sm:$0xff]
  %v4669 = vld [vmem:[#allocation3 + $0x270] sm:$0xff]
  %v4670 = vld [vmem:[#allocation3 + $0x278] sm:$0xff]
  %v4671 = vld [vmem:[#allocation3 + $0x288] sm:$0xff]
  %v4672 = vld [vmem:[#allocation3 + $0x290] sm:$0xff]
  %v4673 = vld [vmem:[#allocation3 + $0x2a0] sm:$0xff]
  %v4674 = vld [vmem:[#allocation3 + $0x2a8] sm:$0xff]
  %v4675 = vld [vmem:[#allocation3 + $0x2b8] sm:$0xff]
  %v4676 = vld [vmem:[#allocation3 + $0x2c0] sm:$0xff]
  %v4677 = vld [vmem:[#allocation3 + $0x2d0] sm:$0xff]
  %v4678 = vld [vmem:[#allocation3 + $0x2d8] sm:$0xff]
  %v4679 = vld [vmem:[#allocation3 + $0x2e8] sm:$0xff]
  %v4680 = vld [vmem:[#allocation3 + $0x2f0] sm:$0xff]
  %v4681 = vld [vmem:[#allocation3 + $0x300] sm:$0xff]
  %v4682 = vld [vmem:[#allocation3 + $0x308] sm:$0xff]
  %v4683 = vld [vmem:[#allocation3 + $0x318] sm:$0xff]
  %v4684 = vld [vmem:[#allocation3 + $0x320] sm:$0xff]
  %v4685 = vld [vmem:[#allocation3 + $0x1] sm:$0xff]
  %v4686 = vld [vmem:[#allocation3 + $0x9] sm:$0xff]
  %v4687 = vld [vmem:[#allocation3 + $0x19] sm:$0xff]
  %v4688 = vld [vmem:[#allocation3 + $0x21] sm:$0xff]
  %v4689 = vld [vmem:[#allocation3 + $0x31] sm:$0xff]
  %v4690 = vld [vmem:[#allocation3 + $0x39] sm:$0xff]
  %v4691 = vld [vmem:[#allocation3 + $0x49] sm:$0xff]
  %v4692 = vld [vmem:[#allocation3 + $0x51] sm:$0xff]
  %v4693 = vld [vmem:[#allocation3 + $0x61] sm:$0xff]
  %v4694 = vld [vmem:[#allocation3 + $0x69] sm:$0xff]
  %v4695 = vld [vmem:[#allocation3 + $0x79] sm:$0xff]
  %v4696 = vld [vmem:[#allocation3 + $0x81] sm:$0xff]
  %v4697 = vld [vmem:[#allocation3 + $0x91] sm:$0xff]
  %v4698 = vld [vmem:[#allocation3 + $0x99] sm:$0xff]
  %v4699 = vld [vmem:[#allocation3 + $0xa9] sm:$0xff]
  %v4700 = vld [vmem:[#allocation3 + $0xb1] sm:$0xff]
  %v4701 = vld [vmem:[#allocation3 + $0xc1] sm:$0xff]
  %v4702 = vld [vmem:[#allocation3 + $0xc9] sm:$0xff]
  %v4703 = vld [vmem:[#allocation3 + $0xd9] sm:$0xff]
  %v4704 = vld [vmem:[#allocation3 + $0xe1] sm:$0xff]
  %v4705 = vld [vmem:[#allocation3 + $0xf1] sm:$0xff]
  %v4706 = vld [vmem:[#allocation3 + $0xf9] sm:$0xff]
  %v4707 = vld [vmem:[#allocation3 + $0x109] sm:$0xff]
  %v4708 = vld [vmem:[#allocation3 + $0x111] sm:$0xff]
  %v4709 = vld [vmem:[#allocation3 + $0x121] sm:$0xff]
  %v4710 = vld [vmem:[#allocation3 + $0x129] sm:$0xff]
  %v4711 = vld [vmem:[#allocation3 + $0x139] sm:$0xff]
  %v4712 = vld [vmem:[#allocation3 + $0x141] sm:$0xff]
  %v4713 = vld [vmem:[#allocation3 + $0x151] sm:$0xff]
  %v4714 = vld [vmem:[#allocation3 + $0x159] sm:$0xff]
  %v4715 = vld [vmem:[#allocation3 + $0x169] sm:$0xff]
  %v4716 = vld [vmem:[#allocation3 + $0x171] sm:$0xff]
  %v4717 = vld [vmem:[#allocation3 + $0x1b1] sm:$0xff]
  %v4718 = vld [vmem:[#allocation3 + $0x1b9] sm:$0xff]
  %v4719 = vld [vmem:[#allocation3 + $0x1c9] sm:$0xff]
  %v4720 = vld [vmem:[#allocation3 + $0x1d1] sm:$0xff]
  %v4721 = vld [vmem:[#allocation3 + $0x1e1] sm:$0xff]
  %v4722 = vld [vmem:[#allocation3 + $0x1e9] sm:$0xff]
  %v4723 = vld [vmem:[#allocation3 + $0x1f9] sm:$0xff]
  %v4724 = vld [vmem:[#allocation3 + $0x201] sm:$0xff]
  %v4725 = vld [vmem:[#allocation3 + $0x211] sm:$0xff]
  %v4726 = vld [vmem:[#allocation3 + $0x219] sm:$0xff]
  %v4727 = vld [vmem:[#allocation3 + $0x229] sm:$0xff]
  %v4728 = vld [vmem:[#allocation3 + $0x231] sm:$0xff]
  %v4729 = vld [vmem:[#allocation3 + $0x241] sm:$0xff]
  %v4730 = vld [vmem:[#allocation3 + $0x249] sm:$0xff]
  %v4731 = vld [vmem:[#allocation3 + $0x259] sm:$0xff]
  %v4732 = vld [vmem:[#allocation3 + $0x261] sm:$0xff]
  %v4733 = vld [vmem:[#allocation3 + $0x271] sm:$0xff]
  %v4734 = vld [vmem:[#allocation3 + $0x279] sm:$0xff]
  %v4735 = vld [vmem:[#allocation3 + $0x289] sm:$0xff]
  %v4736 = vld [vmem:[#allocation3 + $0x291] sm:$0xff]
  %v4737 = vld [vmem:[#allocation3 + $0x2a1] sm:$0xff]
  %v4738 = vld [vmem:[#allocation3 + $0x2a9] sm:$0xff]
  %v4739 = vld [vmem:[#allocation3 + $0x2b9] sm:$0xff]
  %v4740 = vld [vmem:[#allocation3 + $0x2c1] sm:$0xff]
  %v4741 = vld [vmem:[#allocation3 + $0x2d1] sm:$0xff]
  %v4742 = vld [vmem:[#allocation3 + $0x2d9] sm:$0xff]
  %v4743 = vld [vmem:[#allocation3 + $0x2e9] sm:$0xff]
  %v4744 = vld [vmem:[#allocation3 + $0x2f1] sm:$0xff]
  %v4745 = vld [vmem:[#allocation3 + $0x301] sm:$0xff]
  %v4746 = vld [vmem:[#allocation3 + $0x309] sm:$0xff]
  %v4747 = vld [vmem:[#allocation3 + $0x319] sm:$0xff]
  %v4748 = vld [vmem:[#allocation3 + $0x321] sm:$0xff]
  %v4749 = vld [vmem:[#allocation3 + $0x2] sm:$0xff]
  %v4750 = vld [vmem:[#allocation3 + $0xa] sm:$0xff]
  %v4751 = vld [vmem:[#allocation3 + $0x1a] sm:$0xff]
  %v4752 = vld [vmem:[#allocation3 + $0x22] sm:$0xff]
  %v4753 = vld [vmem:[#allocation3 + $0x32] sm:$0xff]
  %v4754 = vld [vmem:[#allocation3 + $0x3a] sm:$0xff]
  %v4755 = vld [vmem:[#allocation3 + $0x4a] sm:$0xff]
  %v4756 = vld [vmem:[#allocation3 + $0x52] sm:$0xff]
  %v4757 = vld [vmem:[#allocation3 + $0x62] sm:$0xff]
  %v4758 = vld [vmem:[#allocation3 + $0x6a] sm:$0xff]
  %v4759 = vld [vmem:[#allocation3 + $0x7a] sm:$0xff]
  %v4760 = vld [vmem:[#allocation3 + $0x82] sm:$0xff]
  %v4761 = vld [vmem:[#allocation3 + $0x92] sm:$0xff]
  %v4762 = vld [vmem:[#allocation3 + $0x9a] sm:$0xff]
  %v4763 = vld [vmem:[#allocation3 + $0xaa] sm:$0xff]
  %v4764 = vld [vmem:[#allocation3 + $0xb2] sm:$0xff]
  %v4765 = vld [vmem:[#allocation3 + $0xc2] sm:$0xff]
  %v4766 = vld [vmem:[#allocation3 + $0xca] sm:$0xff]
  %v4767 = vld [vmem:[#allocation3 + $0xda] sm:$0xff]
  %v4768 = vld [vmem:[#allocation3 + $0xe2] sm:$0xff]
  %v4769 = vld [vmem:[#allocation3 + $0xf2] sm:$0xff]
  %v4770 = vld [vmem:[#allocation3 + $0xfa] sm:$0xff]
  %v4771 = vld [vmem:[#allocation3 + $0x10a] sm:$0xff]
  %v4772 = vld [vmem:[#allocation3 + $0x112] sm:$0xff]
  %v4773 = vld [vmem:[#allocation3 + $0x122] sm:$0xff]
  %v4774 = vld [vmem:[#allocation3 + $0x12a] sm:$0xff]
  %v4775 = vld [vmem:[#allocation3 + $0x13a] sm:$0xff]
  %v4776 = vld [vmem:[#allocation3 + $0x142] sm:$0xff]
  %v4777 = vld [vmem:[#allocation3 + $0x152] sm:$0xff]
  %v4778 = vld [vmem:[#allocation3 + $0x15a] sm:$0xff]
  %v4779 = vld [vmem:[#allocation3 + $0x16a] sm:$0xff]
  %v4780 = vld [vmem:[#allocation3 + $0x172] sm:$0xff]
  %v4781 = vld [vmem:[#allocation3 + $0x1b2] sm:$0xff]
  %v4782 = vld [vmem:[#allocation3 + $0x1ba] sm:$0xff]
  %v4783 = vld [vmem:[#allocation3 + $0x1ca] sm:$0xff]
  %v4784 = vld [vmem:[#allocation3 + $0x1d2] sm:$0xff]
  %v4785 = vld [vmem:[#allocation3 + $0x1e2] sm:$0xff]
  %v4786 = vld [vmem:[#allocation3 + $0x1ea] sm:$0xff]
  %v4787 = vld [vmem:[#allocation3 + $0x1fa] sm:$0xff]
  %v4788 = vld [vmem:[#allocation3 + $0x202] sm:$0xff]
  %v4789 = vld [vmem:[#allocation3 + $0x212] sm:$0xff]
  %v4790 = vld [vmem:[#allocation3 + $0x21a] sm:$0xff]
  %v4791 = vld [vmem:[#allocation3 + $0x22a] sm:$0xff]
  %v4792 = vld [vmem:[#allocation3 + $0x232] sm:$0xff]
  %v4793 = vld [vmem:[#allocation3 + $0x242] sm:$0xff]
  %v4794 = vld [vmem:[#allocation3 + $0x24a] sm:$0xff]
  %v4795 = vld [vmem:[#allocation3 + $0x25a] sm:$0xff]
  %v4796 = vld [vmem:[#allocation3 + $0x262] sm:$0xff]
  %v4797 = vld [vmem:[#allocation3 + $0x272] sm:$0xff]
  %v4798 = vld [vmem:[#allocation3 + $0x27a] sm:$0xff]
  %v4799 = vld [vmem:[#allocation3 + $0x28a] sm:$0xff]
  %v4800 = vld [vmem:[#allocation3 + $0x292] sm:$0xff]
  %v4801 = vld [vmem:[#allocation3 + $0x2a2] sm:$0xff]
  %v4802 = vld [vmem:[#allocation3 + $0x2aa] sm:$0xff]
  %v4803 = vld [vmem:[#allocation3 + $0x2ba] sm:$0xff]
  %v4804 = vld [vmem:[#allocation3 + $0x2c2] sm:$0xff]
  %v4805 = vld [vmem:[#allocation3 + $0x2d2] sm:$0xff]
  %v4806 = vld [vmem:[#allocation3 + $0x2da] sm:$0xff]
  %v4807 = vld [vmem:[#allocation3 + $0x2ea] sm:$0xff]
  %v4808 = vld [vmem:[#allocation3 + $0x2f2] sm:$0xff]
  %v4809 = vld [vmem:[#allocation3 + $0x302] sm:$0xff]
  %v4810 = vld [vmem:[#allocation3 + $0x30a] sm:$0xff]
  %v4811 = vld [vmem:[#allocation3 + $0x31a] sm:$0xff]
  %v4812 = vld [vmem:[#allocation3 + $0x322] sm:$0xff]
  %v4813 = vld [vmem:[%s4556] sm:$0xff]
  %v4814 = vld [vmem:[%s4556 + $0x8] sm:$0xff]
  %v4815 = vld [vmem:[%s4556 + $0x18] sm:$0xff]
  %v4816 = vld [vmem:[%s4556 + $0x20] sm:$0xff]
  %v4817 = vld [vmem:[%s4556 + $0x30] sm:$0xff]
  %v4818 = vld [vmem:[%s4556 + $0x38] sm:$0xff]
  %v4819 = vld [vmem:[%s4556 + $0x48] sm:$0xff]
  %v4820 = vld [vmem:[%s4556 + $0x50] sm:$0xff]
  %v4821 = vld [vmem:[%s4556 + $0x60] sm:$0xff]
  %v4822 = vld [vmem:[%s4556 + $0x68] sm:$0xff]
  %v4823 = vld [vmem:[%s4556 + $0x78] sm:$0xff]
  %v4824 = vld [vmem:[%s4556 + $0x80] sm:$0xff]
  %v4825 = vld [vmem:[%s4556 + $0x90] sm:$0xff]
  %v4826 = vld [vmem:[%s4556 + $0x98] sm:$0xff]
  %v4827 = vld [vmem:[%s4556 + $0xa8] sm:$0xff]
  %v4828 = vld [vmem:[%s4556 + $0xb0] sm:$0xff]
  %v4829 = vld [vmem:[%s4556 + $0xc0] sm:$0xff]
  %v4830 = vld [vmem:[%s4556 + $0xc8] sm:$0xff]
  %v4831 = vld [vmem:[%s4556 + $0xd8] sm:$0xff]
  %v4832 = vld [vmem:[%s4556 + $0xe0] sm:$0xff]
  %v4833 = vld [vmem:[%s4556 + $0xf0] sm:$0xff]
  %v4834 = vld [vmem:[%s4556 + $0xf8] sm:$0xff]
  %v4835 = vld [vmem:[%s4556 + $0x108] sm:$0xff]
  %v4836 = vld [vmem:[%s4556 + $0x110] sm:$0xff]
  %v4837 = vld [vmem:[%s4556 + $0x120] sm:$0xff]
  %v4838 = vld [vmem:[%s4556 + $0x128] sm:$0xff]
  %v4839 = vld [vmem:[%s4556 + $0x138] sm:$0xff]
  %v4840 = vld [vmem:[%s4556 + $0x140] sm:$0xff]
  %v4841 = vld [vmem:[%s4556 + $0x150] sm:$0xff]
  %v4842 = vld [vmem:[%s4556 + $0x158] sm:$0xff]
  %v4843 = vld [vmem:[%s4556 + $0x168] sm:$0xff]
  %v4844 = vld [vmem:[%s4556 + $0x170] sm:$0xff]
  %v4845 = vld [vmem:[%s4556 + $0x1b0] sm:$0xff]
  %v4846 = vld [vmem:[%s4556 + $0x1b8] sm:$0xff]
  %v4847 = vld [vmem:[%s4556 + $0x1c8] sm:$0xff]
  %v4848 = vld [vmem:[%s4556 + $0x1d0] sm:$0xff]
  %v4849 = vld [vmem:[%s4556 + $0x1e0] sm:$0xff]
  %v4850 = vld [vmem:[%s4556 + $0x1e8] sm:$0xff]
  %v4851 = vld [vmem:[%s4556 + $0x1f8] sm:$0xff]
  %v4852 = vld [vmem:[%s4556 + $0x200] sm:$0xff]
  %v4853 = vld [vmem:[%s4556 + $0x210] sm:$0xff]
  %v4854 = vld [vmem:[%s4556 + $0x218] sm:$0xff]
  %v4855 = vld [vmem:[%s4556 + $0x228] sm:$0xff]
  %v4856 = vld [vmem:[%s4556 + $0x230] sm:$0xff]
  %v4857 = vld [vmem:[%s4556 + $0x240] sm:$0xff]
  %v4858 = vld [vmem:[%s4556 + $0x248] sm:$0xff]
  %v4859 = vld [vmem:[%s4556 + $0x258] sm:$0xff]
  %v4860 = vld [vmem:[%s4556 + $0x260] sm:$0xff]
  %v4861 = vld [vmem:[%s4556 + $0x270] sm:$0xff]
  %v4862 = vld [vmem:[%s4556 + $0x278] sm:$0xff]
  %v4863 = vld [vmem:[%s4556 + $0x288] sm:$0xff]
  %v4864 = vld [vmem:[%s4556 + $0x290] sm:$0xff]
  %v4865 = vld [vmem:[%s4556 + $0x2a0] sm:$0xff]
  %v4866 = vld [vmem:[%s4556 + $0x2a8] sm:$0xff]
  %v4867 = vld [vmem:[%s4556 + $0x2b8] sm:$0xff]
  %v4868 = vld [vmem:[%s4556 + $0x2c0] sm:$0xff]
  %v4869 = vld [vmem:[%s4556 + $0x2d0] sm:$0xff]
  %v4870 = vld [vmem:[%s4556 + $0x2d8] sm:$0xff]
  %v4871 = vld [vmem:[%s4556 + $0x2e8] sm:$0xff]
  %v4872 = vld [vmem:[%s4556 + $0x2f0] sm:$0xff]
  %v4873 = vld [vmem:[%s4556 + $0x300] sm:$0xff]
  %v4874 = vld [vmem:[%s4556 + $0x308] sm:$0xff]
  %v4875 = vld [vmem:[%s4556 + $0x318] sm:$0xff]
  %v4876 = vld [vmem:[%s4556 + $0x320] sm:$0xff]
  %v4877 = vld [vmem:[%s4556 + $0x1] sm:$0xff]
  %v4878 = vld [vmem:[%s4556 + $0x9] sm:$0xff]
  %v4879 = vld [vmem:[%s4556 + $0x19] sm:$0xff]
  %v4880 = vld [vmem:[%s4556 + $0x21] sm:$0xff]
  %v4881 = vld [vmem:[%s4556 + $0x31] sm:$0xff]
  %v4882 = vld [vmem:[%s4556 + $0x39] sm:$0xff]
  %v4883 = vld [vmem:[%s4556 + $0x49] sm:$0xff]
  %v4884 = vld [vmem:[%s4556 + $0x51] sm:$0xff]
  %v4885 = vld [vmem:[%s4556 + $0x61] sm:$0xff]
  %v4886 = vld [vmem:[%s4556 + $0x69] sm:$0xff]
  %v4887 = vld [vmem:[%s4556 + $0x79] sm:$0xff]
  %v4888 = vld [vmem:[%s4556 + $0x81] sm:$0xff]
  %v4889 = vld [vmem:[%s4556 + $0x91] sm:$0xff]
  %v4890 = vld [vmem:[%s4556 + $0x99] sm:$0xff]
  %v4891 = vld [vmem:[%s4556 + $0xa9] sm:$0xff]
  %v4892 = vld [vmem:[%s4556 + $0xb1] sm:$0xff]
  %v4893 = vld [vmem:[%s4556 + $0xc1] sm:$0xff]
  %v4894 = vld [vmem:[%s4556 + $0xc9] sm:$0xff]
  %v4895 = vld [vmem:[%s4556 + $0xd9] sm:$0xff]
  %v4896 = vld [vmem:[%s4556 + $0xe1] sm:$0xff]
  %v4897 = vld [vmem:[%s4556 + $0xf1] sm:$0xff]
  %v4898 = vld [vmem:[%s4556 + $0xf9] sm:$0xff]
  %v4899 = vld [vmem:[%s4556 + $0x109] sm:$0xff]
  %v4900 = vld [vmem:[%s4556 + $0x111] sm:$0xff]
  %v4901 = vld [vmem:[%s4556 + $0x121] sm:$0xff]
  %v4902 = vld [vmem:[%s4556 + $0x129] sm:$0xff]
  %v4903 = vld [vmem:[%s4556 + $0x139] sm:$0xff]
  %v4904 = vld [vmem:[%s4556 + $0x141] sm:$0xff]
  %v4905 = vld [vmem:[%s4556 + $0x151] sm:$0xff]
  %v4906 = vld [vmem:[%s4556 + $0x159] sm:$0xff]
  %v4907 = vld [vmem:[%s4556 + $0x169] sm:$0xff]
  %v4908 = vld [vmem:[%s4556 + $0x171] sm:$0xff]
  %v4909 = vld [vmem:[%s4556 + $0x1b1] sm:$0xff]
  %v4910 = vld [vmem:[%s4556 + $0x1b9] sm:$0xff]
  %v4911 = vld [vmem:[%s4556 + $0x1c9] sm:$0xff]
  %v4912 = vld [vmem:[%s4556 + $0x1d1] sm:$0xff]
  %v4913 = vld [vmem:[%s4556 + $0x1e1] sm:$0xff]
  %v4914 = vld [vmem:[%s4556 + $0x1e9] sm:$0xff]
  %v4915 = vld [vmem:[%s4556 + $0x1f9] sm:$0xff]
  %v4916 = vld [vmem:[%s4556 + $0x201] sm:$0xff]
  %v4917 = vld [vmem:[%s4556 + $0x211] sm:$0xff]
  %v4918 = vld [vmem:[%s4556 + $0x219] sm:$0xff]
  %v4919 = vld [vmem:[%s4556 + $0x229] sm:$0xff]
  %v4920 = vld [vmem:[%s4556 + $0x231] sm:$0xff]
  %v4921 = vld [vmem:[%s4556 + $0x241] sm:$0xff]
  %v4922 = vld [vmem:[%s4556 + $0x249] sm:$0xff]
  %v4923 = vld [vmem:[%s4556 + $0x259] sm:$0xff]
  %v4924 = vld [vmem:[%s4556 + $0x261] sm:$0xff]
  %v4925 = vld [vmem:[%s4556 + $0x271] sm:$0xff]
  %v4926 = vld [vmem:[%s4556 + $0x279] sm:$0xff]
  %v4927 = vld [vmem:[%s4556 + $0x289] sm:$0xff]
  %v4928 = vld [vmem:[%s4556 + $0x291] sm:$0xff]
  %v4929 = vld [vmem:[%s4556 + $0x2a1] sm:$0xff]
  %v4930 = vld [vmem:[%s4556 + $0x2a9] sm:$0xff]
  %v4931 = vld [vmem:[%s4556 + $0x2b9] sm:$0xff]
  %v4932 = vld [vmem:[%s4556 + $0x2c1] sm:$0xff]
  %v4933 = vld [vmem:[%s4556 + $0x2d1] sm:$0xff]
  %v4934 = vld [vmem:[%s4556 + $0x2d9] sm:$0xff]
  %v4935 = vld [vmem:[%s4556 + $0x2e9] sm:$0xff]
  %v4936 = vld [vmem:[%s4556 + $0x2f1] sm:$0xff]
  %v4937 = vld [vmem:[%s4556 + $0x301] sm:$0xff]
  %v4938 = vld [vmem:[%s4556 + $0x309] sm:$0xff]
  %v4939 = vld [vmem:[%s4556 + $0x319] sm:$0xff]
  %v4940 = vld [vmem:[%s4556 + $0x321] sm:$0xff]
  %v4941 = vld [vmem:[%s4556 + $0x2] sm:$0xff]
  %v4942 = vld [vmem:[%s4556 + $0xa] sm:$0xff]
  %v4943 = vld [vmem:[%s4556 + $0x1a] sm:$0xff]
  %v4944 = vld [vmem:[%s4556 + $0x22] sm:$0xff]
  %v4945 = vld [vmem:[%s4556 + $0x32] sm:$0xff]
  %v4946 = vld [vmem:[%s4556 + $0x3a] sm:$0xff]
  %v4947 = vld [vmem:[%s4556 + $0x4a] sm:$0xff]
  %v4948 = vld [vmem:[%s4556 + $0x52] sm:$0xff]
  %v4949 = vld [vmem:[%s4556 + $0x62] sm:$0xff]
  %v4950 = vld [vmem:[%s4556 + $0x6a] sm:$0xff]
  %v4951 = vld [vmem:[%s4556 + $0x7a] sm:$0xff]
  %v4952 = vld [vmem:[%s4556 + $0x82] sm:$0xff]
  %v4953 = vld [vmem:[%s4556 + $0x92] sm:$0xff]
  %v4954 = vld [vmem:[%s4556 + $0x9a] sm:$0xff]
  %v4955 = vld [vmem:[%s4556 + $0xaa] sm:$0xff]
  %v4956 = vld [vmem:[%s4556 + $0xb2] sm:$0xff]
  %v4957 = vld [vmem:[%s4556 + $0xc2] sm:$0xff]
  %v4958 = vld [vmem:[%s4556 + $0xca] sm:$0xff]
  %v4959 = vld [vmem:[%s4556 + $0xda] sm:$0xff]
  %v4960 = vld [vmem:[%s4556 + $0xe2] sm:$0xff]
  %v4961 = vld [vmem:[%s4556 + $0xf2] sm:$0xff]
  %v4962 = vld [vmem:[%s4556 + $0xfa] sm:$0xff]
  %v4963 = vld [vmem:[%s4556 + $0x10a] sm:$0xff]
  %v4964 = vld [vmem:[%s4556 + $0x112] sm:$0xff]
  %v4965 = vld [vmem:[%s4556 + $0x122] sm:$0xff]
  %v4966 = vld [vmem:[%s4556 + $0x12a] sm:$0xff]
  %v4967 = vld [vmem:[%s4556 + $0x13a] sm:$0xff]
  %v4968 = vld [vmem:[%s4556 + $0x142] sm:$0xff]
  %v4969 = vld [vmem:[%s4556 + $0x152] sm:$0xff]
  %v4970 = vld [vmem:[%s4556 + $0x15a] sm:$0xff]
  %v4971 = vld [vmem:[%s4556 + $0x16a] sm:$0xff]
  %v4972 = vld [vmem:[%s4556 + $0x172] sm:$0xff]
  %v4973 = vld [vmem:[%s4556 + $0x1b2] sm:$0xff]
  %v4974 = vld [vmem:[%s4556 + $0x1ba] sm:$0xff]
  %v4975 = vld [vmem:[%s4556 + $0x1ca] sm:$0xff]
  %v4976 = vld [vmem:[%s4556 + $0x1d2] sm:$0xff]
  %v4977 = vld [vmem:[%s4556 + $0x1e2] sm:$0xff]
  %v4978 = vld [vmem:[%s4556 + $0x1ea] sm:$0xff]
  %v4979 = vld [vmem:[%s4556 + $0x1fa] sm:$0xff]
  %v4980 = vld [vmem:[%s4556 + $0x202] sm:$0xff]
  %v4981 = vld [vmem:[%s4556 + $0x212] sm:$0xff]
  %v4982 = vld [vmem:[%s4556 + $0x21a] sm:$0xff]
  %v4983 = vld [vmem:[%s4556 + $0x22a] sm:$0xff]
  %v4984 = vld [vmem:[%s4556 + $0x232] sm:$0xff]
  %v4985 = vld [vmem:[%s4556 + $0x242] sm:$0xff]
  %v4986 = vld [vmem:[%s4556 + $0x24a] sm:$0xff]
  %v4987 = vld [vmem:[%s4556 + $0x25a] sm:$0xff]
  %v4988 = vld [vmem:[%s4556 + $0x262] sm:$0xff]
  %v4989 = vld [vmem:[%s4556 + $0x272] sm:$0xff]
  %v4990 = vld [vmem:[%s4556 + $0x27a] sm:$0xff]
  %v4991 = vld [vmem:[%s4556 + $0x28a] sm:$0xff]
  %v4992 = vld [vmem:[%s4556 + $0x292] sm:$0xff]
  %v4993 = vld [vmem:[%s4556 + $0x2a2] sm:$0xff]
  %v4994 = vld [vmem:[%s4556 + $0x2aa] sm:$0xff]
  %v4995 = vld [vmem:[%s4556 + $0x2ba] sm:$0xff]
  %v4996 = vld [vmem:[%s4556 + $0x2c2] sm:$0xff]
  %v4997 = vld [vmem:[%s4556 + $0x2d2] sm:$0xff]
  %v4998 = vld [vmem:[%s4556 + $0x2da] sm:$0xff]
  %v4999 = vld [vmem:[%s4556 + $0x2ea] sm:$0xff]
  %v5000 = vld [vmem:[%s4556 + $0x2f2] sm:$0xff]
  %v5001 = vld [vmem:[%s4556 + $0x302] sm:$0xff]
  %v5002 = vld [vmem:[%s4556 + $0x30a] sm:$0xff]
  %v5003 = vld [vmem:[%s4556 + $0x31a] sm:$0xff]
  %v5004 = vld [vmem:[%s4556 + $0x322] sm:$0xff]
  %s5005 = scalar_lea.vmem [#allocation3], 48
  %v5006 = vld [vmem:[%s5005] sm:$0xff]
  %v5007 = vld [vmem:[%s5005 + $0x8] sm:$0xff]
  %v5008 = vld [vmem:[%s5005 + $0x18] sm:$0xff]
  %v5009 = vld [vmem:[%s5005 + $0x20] sm:$0xff]
  %v5010 = vld [vmem:[%s5005 + $0x30] sm:$0xff]
  %v5011 = vld [vmem:[%s5005 + $0x38] sm:$0xff]
  %v5012 = vld [vmem:[%s5005 + $0x48] sm:$0xff]
  %v5013 = vld [vmem:[%s5005 + $0x50] sm:$0xff]
  %v5014 = vld [vmem:[%s5005 + $0x60] sm:$0xff]
  %v5015 = vld [vmem:[%s5005 + $0x68] sm:$0xff]
  %v5016 = vld [vmem:[%s5005 + $0x78] sm:$0xff]
  %v5017 = vld [vmem:[%s5005 + $0x80] sm:$0xff]
  %v5018 = vld [vmem:[%s5005 + $0x90] sm:$0xff]
  %v5019 = vld [vmem:[%s5005 + $0x98] sm:$0xff]
  %v5020 = vld [vmem:[%s5005 + $0xa8] sm:$0xff]
  %v5021 = vld [vmem:[%s5005 + $0xb0] sm:$0xff]
  %v5022 = vld [vmem:[%s5005 + $0xc0] sm:$0xff]
  %v5023 = vld [vmem:[%s5005 + $0xc8] sm:$0xff]
  %v5024 = vld [vmem:[%s5005 + $0xd8] sm:$0xff]
  %v5025 = vld [vmem:[%s5005 + $0xe0] sm:$0xff]
  %v5026 = vld [vmem:[%s5005 + $0xf0] sm:$0xff]
  %v5027 = vld [vmem:[%s5005 + $0xf8] sm:$0xff]
  %v5028 = vld [vmem:[%s5005 + $0x108] sm:$0xff]
  %v5029 = vld [vmem:[%s5005 + $0x110] sm:$0xff]
  %v5030 = vld [vmem:[%s5005 + $0x120] sm:$0xff]
  %v5031 = vld [vmem:[%s5005 + $0x128] sm:$0xff]
  %v5032 = vld [vmem:[%s5005 + $0x138] sm:$0xff]
  %v5033 = vld [vmem:[%s5005 + $0x140] sm:$0xff]
  %v5034 = vld [vmem:[%s5005 + $0x150] sm:$0xff]
  %v5035 = vld [vmem:[%s5005 + $0x158] sm:$0xff]
  %v5036 = vld [vmem:[%s5005 + $0x168] sm:$0xff]
  %v5037 = vld [vmem:[%s5005 + $0x170] sm:$0xff]
  %v5038 = vld [vmem:[%s5005 + $0x1b0] sm:$0xff]
  %v5039 = vld [vmem:[%s5005 + $0x1b8] sm:$0xff]
  %v5040 = vld [vmem:[%s5005 + $0x1c8] sm:$0xff]
  %v5041 = vld [vmem:[%s5005 + $0x1d0] sm:$0xff]
  %v5042 = vld [vmem:[%s5005 + $0x1e0] sm:$0xff]
  %v5043 = vld [vmem:[%s5005 + $0x1e8] sm:$0xff]
  %v5044 = vld [vmem:[%s5005 + $0x1f8] sm:$0xff]
  %v5045 = vld [vmem:[%s5005 + $0x200] sm:$0xff]
  %v5046 = vld [vmem:[%s5005 + $0x210] sm:$0xff]
  %v5047 = vld [vmem:[%s5005 + $0x218] sm:$0xff]
  %v5048 = vld [vmem:[%s5005 + $0x228] sm:$0xff]
  %v5049 = vld [vmem:[%s5005 + $0x230] sm:$0xff]
  %v5050 = vld [vmem:[%s5005 + $0x240] sm:$0xff]
  %v5051 = vld [vmem:[%s5005 + $0x248] sm:$0xff]
  %v5052 = vld [vmem:[%s5005 + $0x258] sm:$0xff]
  %v5053 = vld [vmem:[%s5005 + $0x260] sm:$0xff]
  %v5054 = vld [vmem:[%s5005 + $0x270] sm:$0xff]
  %v5055 = vld [vmem:[%s5005 + $0x278] sm:$0xff]
  %v5056 = vld [vmem:[%s5005 + $0x288] sm:$0xff]
  %v5057 = vld [vmem:[%s5005 + $0x290] sm:$0xff]
  %v5058 = vld [vmem:[%s5005 + $0x2a0] sm:$0xff]
  %v5059 = vld [vmem:[%s5005 + $0x2a8] sm:$0xff]
  %v5060 = vld [vmem:[%s5005 + $0x2b8] sm:$0xff]
  %v5061 = vld [vmem:[%s5005 + $0x2c0] sm:$0xff]
  %v5062 = vld [vmem:[%s5005 + $0x2d0] sm:$0xff]
  %v5063 = vld [vmem:[%s5005 + $0x2d8] sm:$0xff]
  %v5064 = vld [vmem:[%s5005 + $0x2e8] sm:$0xff]
  %v5065 = vld [vmem:[%s5005 + $0x2f0] sm:$0xff]
  %v5066 = vld [vmem:[%s5005 + $0x300] sm:$0xff]
  %v5067 = vld [vmem:[%s5005 + $0x308] sm:$0xff]
  %v5068 = vld [vmem:[%s5005 + $0x318] sm:$0xff]
  %v5069 = vld [vmem:[%s5005 + $0x320] sm:$0xff]
  %v5070 = vld [vmem:[%s5005 + $0x1] sm:$0xff]
  %v5071 = vld [vmem:[%s5005 + $0x9] sm:$0xff]
  %v5072 = vld [vmem:[%s5005 + $0x19] sm:$0xff]
  %v5073 = vld [vmem:[%s5005 + $0x21] sm:$0xff]
  %v5074 = vld [vmem:[%s5005 + $0x31] sm:$0xff]
  %v5075 = vld [vmem:[%s5005 + $0x39] sm:$0xff]
  %v5076 = vld [vmem:[%s5005 + $0x49] sm:$0xff]
  %v5077 = vld [vmem:[%s5005 + $0x51] sm:$0xff]
  %v5078 = vld [vmem:[%s5005 + $0x61] sm:$0xff]
  %v5079 = vld [vmem:[%s5005 + $0x69] sm:$0xff]
  %v5080 = vld [vmem:[%s5005 + $0x79] sm:$0xff]
  %v5081 = vld [vmem:[%s5005 + $0x81] sm:$0xff]
  %v5082 = vld [vmem:[%s5005 + $0x91] sm:$0xff]
  %v5083 = vld [vmem:[%s5005 + $0x99] sm:$0xff]
  %v5084 = vld [vmem:[%s5005 + $0xa9] sm:$0xff]
  %v5085 = vld [vmem:[%s5005 + $0xb1] sm:$0xff]
  %v5086 = vld [vmem:[%s5005 + $0xc1] sm:$0xff]
  %v5087 = vld [vmem:[%s5005 + $0xc9] sm:$0xff]
  %v5088 = vld [vmem:[%s5005 + $0xd9] sm:$0xff]
  %v5089 = vld [vmem:[%s5005 + $0xe1] sm:$0xff]
  %v5090 = vld [vmem:[%s5005 + $0xf1] sm:$0xff]
  %v5091 = vld [vmem:[%s5005 + $0xf9] sm:$0xff]
  %v5092 = vld [vmem:[%s5005 + $0x109] sm:$0xff]
  %v5093 = vld [vmem:[%s5005 + $0x111] sm:$0xff]
  %v5094 = vld [vmem:[%s5005 + $0x121] sm:$0xff]
  %v5095 = vld [vmem:[%s5005 + $0x129] sm:$0xff]
  %v5096 = vld [vmem:[%s5005 + $0x139] sm:$0xff]
  %v5097 = vld [vmem:[%s5005 + $0x141] sm:$0xff]
  %v5098 = vld [vmem:[%s5005 + $0x151] sm:$0xff]
  %v5099 = vld [vmem:[%s5005 + $0x159] sm:$0xff]
  %v5100 = vld [vmem:[%s5005 + $0x169] sm:$0xff]
  %v5101 = vld [vmem:[%s5005 + $0x171] sm:$0xff]
  %v5102 = vld [vmem:[%s5005 + $0x1b1] sm:$0xff]
  %v5103 = vld [vmem:[%s5005 + $0x1b9] sm:$0xff]
  %v5104 = vld [vmem:[%s5005 + $0x1c9] sm:$0xff]
  %v5105 = vld [vmem:[%s5005 + $0x1d1] sm:$0xff]
  %v5106 = vld [vmem:[%s5005 + $0x1e1] sm:$0xff]
  %v5107 = vld [vmem:[%s5005 + $0x1e9] sm:$0xff]
  %v5108 = vld [vmem:[%s5005 + $0x1f9] sm:$0xff]
  %v5109 = vld [vmem:[%s5005 + $0x201] sm:$0xff]
  %v5110 = vld [vmem:[%s5005 + $0x211] sm:$0xff]
  %v5111 = vld [vmem:[%s5005 + $0x219] sm:$0xff]
  %v5112 = vld [vmem:[%s5005 + $0x229] sm:$0xff]
  %v5113 = vld [vmem:[%s5005 + $0x231] sm:$0xff]
  %v5114 = vld [vmem:[%s5005 + $0x241] sm:$0xff]
  %v5115 = vld [vmem:[%s5005 + $0x249] sm:$0xff]
  %v5116 = vld [vmem:[%s5005 + $0x259] sm:$0xff]
  %v5117 = vld [vmem:[%s5005 + $0x261] sm:$0xff]
  %v5118 = vld [vmem:[%s5005 + $0x271] sm:$0xff]
  %v5119 = vld [vmem:[%s5005 + $0x279] sm:$0xff]
  %v5120 = vld [vmem:[%s5005 + $0x289] sm:$0xff]
  %v5121 = vld [vmem:[%s5005 + $0x291] sm:$0xff]
  %v5122 = vld [vmem:[%s5005 + $0x2a1] sm:$0xff]
  %v5123 = vld [vmem:[%s5005 + $0x2a9] sm:$0xff]
  %v5124 = vld [vmem:[%s5005 + $0x2b9] sm:$0xff]
  %v5125 = vld [vmem:[%s5005 + $0x2c1] sm:$0xff]
  %v5126 = vld [vmem:[%s5005 + $0x2d1] sm:$0xff]
  %v5127 = vld [vmem:[%s5005 + $0x2d9] sm:$0xff]
  %v5128 = vld [vmem:[%s5005 + $0x2e9] sm:$0xff]
  %v5129 = vld [vmem:[%s5005 + $0x2f1] sm:$0xff]
  %v5130 = vld [vmem:[%s5005 + $0x301] sm:$0xff]
  %v5131 = vld [vmem:[%s5005 + $0x309] sm:$0xff]
  %v5132 = vld [vmem:[%s5005 + $0x319] sm:$0xff]
  %v5133 = vld [vmem:[%s5005 + $0x321] sm:$0xff]
  %v5134 = vld [vmem:[%s5005 + $0x2] sm:$0xff]
  %v5135 = vld [vmem:[%s5005 + $0xa] sm:$0xff]
  %v5136 = vld [vmem:[%s5005 + $0x1a] sm:$0xff]
  %v5137 = vld [vmem:[%s5005 + $0x22] sm:$0xff]
  %v5138 = vld [vmem:[%s5005 + $0x32] sm:$0xff]
  %v5139 = vld [vmem:[%s5005 + $0x3a] sm:$0xff]
  %v5140 = vld [vmem:[%s5005 + $0x4a] sm:$0xff]
  %v5141 = vld [vmem:[%s5005 + $0x52] sm:$0xff]
  %v5142 = vld [vmem:[%s5005 + $0x62] sm:$0xff]
  %v5143 = vld [vmem:[%s5005 + $0x6a] sm:$0xff]
  %v5144 = vld [vmem:[%s5005 + $0x7a] sm:$0xff]
  %v5145 = vld [vmem:[%s5005 + $0x82] sm:$0xff]
  %v5146 = vld [vmem:[%s5005 + $0x92] sm:$0xff]
  %v5147 = vld [vmem:[%s5005 + $0x9a] sm:$0xff]
  %v5148 = vld [vmem:[%s5005 + $0xaa] sm:$0xff]
  %v5149 = vld [vmem:[%s5005 + $0xb2] sm:$0xff]
  %v5150 = vld [vmem:[%s5005 + $0xc2] sm:$0xff]
  %v5151 = vld [vmem:[%s5005 + $0xca] sm:$0xff]
  %v5152 = vld [vmem:[%s5005 + $0xda] sm:$0xff]
  %v5153 = vld [vmem:[%s5005 + $0xe2] sm:$0xff]
  %v5154 = vld [vmem:[%s5005 + $0xf2] sm:$0xff]
  %v5155 = vld [vmem:[%s5005 + $0xfa] sm:$0xff]
  %v5156 = vld [vmem:[%s5005 + $0x10a] sm:$0xff]
  %v5157 = vld [vmem:[%s5005 + $0x112] sm:$0xff]
  %v5158 = vld [vmem:[%s5005 + $0x122] sm:$0xff]
  %v5159 = vld [vmem:[%s5005 + $0x12a] sm:$0xff]
  %v5160 = vld [vmem:[%s5005 + $0x13a] sm:$0xff]
  %v5161 = vld [vmem:[%s5005 + $0x142] sm:$0xff]
  %v5162 = vld [vmem:[%s5005 + $0x152] sm:$0xff]
  %v5163 = vld [vmem:[%s5005 + $0x15a] sm:$0xff]
  %v5164 = vld [vmem:[%s5005 + $0x16a] sm:$0xff]
  %v5165 = vld [vmem:[%s5005 + $0x172] sm:$0xff]
  %v5166 = vld [vmem:[%s5005 + $0x1b2] sm:$0xff]
  %v5167 = vld [vmem:[%s5005 + $0x1ba] sm:$0xff]
  %v5168 = vld [vmem:[%s5005 + $0x1ca] sm:$0xff]
  %v5169 = vld [vmem:[%s5005 + $0x1d2] sm:$0xff]
  %v5170 = vld [vmem:[%s5005 + $0x1e2] sm:$0xff]
  %v5171 = vld [vmem:[%s5005 + $0x1ea] sm:$0xff]
  %v5172 = vld [vmem:[%s5005 + $0x1fa] sm:$0xff]
  %v5173 = vld [vmem:[%s5005 + $0x202] sm:$0xff]
  %v5174 = vld [vmem:[%s5005 + $0x212] sm:$0xff]
  %v5175 = vld [vmem:[%s5005 + $0x21a] sm:$0xff]
  %v5176 = vld [vmem:[%s5005 + $0x22a] sm:$0xff]
  %v5177 = vld [vmem:[%s5005 + $0x232] sm:$0xff]
  %v5178 = vld [vmem:[%s5005 + $0x242] sm:$0xff]
  %v5179 = vld [vmem:[%s5005 + $0x24a] sm:$0xff]
  %v5180 = vld [vmem:[%s5005 + $0x25a] sm:$0xff]
  %v5181 = vld [vmem:[%s5005 + $0x262] sm:$0xff]
  %v5182 = vld [vmem:[%s5005 + $0x272] sm:$0xff]
  %v5183 = vld [vmem:[%s5005 + $0x27a] sm:$0xff]
  %v5184 = vld [vmem:[%s5005 + $0x28a] sm:$0xff]
  %v5185 = vld [vmem:[%s5005 + $0x292] sm:$0xff]
  %v5186 = vld [vmem:[%s5005 + $0x2a2] sm:$0xff]
  %v5187 = vld [vmem:[%s5005 + $0x2aa] sm:$0xff]
  %v5188 = vld [vmem:[%s5005 + $0x2ba] sm:$0xff]
  %v5189 = vld [vmem:[%s5005 + $0x2c2] sm:$0xff]
  %v5190 = vld [vmem:[%s5005 + $0x2d2] sm:$0xff]
  %v5191 = vld [vmem:[%s5005 + $0x2da] sm:$0xff]
  %v5192 = vld [vmem:[%s5005 + $0x2ea] sm:$0xff]
  %v5193 = vld [vmem:[%s5005 + $0x2f2] sm:$0xff]
  %v5194 = vld [vmem:[%s5005 + $0x302] sm:$0xff]
  %v5195 = vld [vmem:[%s5005 + $0x30a] sm:$0xff]
  %v5196 = vld [vmem:[%s5005 + $0x31a] sm:$0xff]
  %v5197 = vld [vmem:[%s5005 + $0x322] sm:$0xff]
  %5262 = vrot.lane.b32.xlu0 %v4685, 32
  %v5263 = vpop.permute.xlu0 %5262
  %5264 = vrot.lane.b32.xlu0 %v4686, 32
  %v5265 = vpop.permute.xlu0 %5264
  %5266 = vrot.lane.b32.xlu0 %v4687, 32
  %v5267 = vpop.permute.xlu0 %5266
  %5268 = vrot.lane.b32.xlu0 %v4688, 32
  %v5269 = vpop.permute.xlu0 %5268
  %5270 = vrot.lane.b32.xlu0 %v4689, 32
  %v5271 = vpop.permute.xlu0 %5270
  %5272 = vrot.lane.b32.xlu0 %v4690, 32
  %v5273 = vpop.permute.xlu0 %5272
  %5274 = vrot.lane.b32.xlu0 %v4691, 32
  %v5275 = vpop.permute.xlu0 %5274
  %5276 = vrot.lane.b32.xlu0 %v4692, 32
  %v5277 = vpop.permute.xlu0 %5276
  %5278 = vrot.lane.b32.xlu0 %v4693, 32
  %v5279 = vpop.permute.xlu0 %5278
  %5280 = vrot.lane.b32.xlu0 %v4694, 32
  %v5281 = vpop.permute.xlu0 %5280
  %5282 = vrot.lane.b32.xlu0 %v4695, 32
  %v5283 = vpop.permute.xlu0 %5282
  %5284 = vrot.lane.b32.xlu0 %v4696, 32
  %v5285 = vpop.permute.xlu0 %5284
  %5286 = vrot.lane.b32.xlu0 %v4697, 32
  %v5287 = vpop.permute.xlu0 %5286
  %5288 = vrot.lane.b32.xlu0 %v4698, 32
  %v5289 = vpop.permute.xlu0 %5288
  %5290 = vrot.lane.b32.xlu0 %v4699, 32
  %v5291 = vpop.permute.xlu0 %5290
  %5292 = vrot.lane.b32.xlu0 %v4700, 32
  %v5293 = vpop.permute.xlu0 %5292
  %5294 = vrot.lane.b32.xlu0 %v4701, 32
  %v5295 = vpop.permute.xlu0 %5294
  %5296 = vrot.lane.b32.xlu0 %v4702, 32
  %v5297 = vpop.permute.xlu0 %5296
  %5298 = vrot.lane.b32.xlu0 %v4703, 32
  %v5299 = vpop.permute.xlu0 %5298
  %5300 = vrot.lane.b32.xlu0 %v4704, 32
  %v5301 = vpop.permute.xlu0 %5300
  %5302 = vrot.lane.b32.xlu0 %v4705, 32
  %v5303 = vpop.permute.xlu0 %5302
  %5304 = vrot.lane.b32.xlu0 %v4706, 32
  %v5305 = vpop.permute.xlu0 %5304
  %5306 = vrot.lane.b32.xlu0 %v4707, 32
  %v5307 = vpop.permute.xlu0 %5306
  %5308 = vrot.lane.b32.xlu0 %v4708, 32
  %v5309 = vpop.permute.xlu0 %5308
  %5310 = vrot.lane.b32.xlu0 %v4709, 32
  %v5311 = vpop.permute.xlu0 %5310
  %5312 = vrot.lane.b32.xlu0 %v4710, 32
  %v5313 = vpop.permute.xlu0 %5312
  %5314 = vrot.lane.b32.xlu0 %v4711, 32
  %v5315 = vpop.permute.xlu0 %5314
  %5316 = vrot.lane.b32.xlu0 %v4712, 32
  %v5317 = vpop.permute.xlu0 %5316
  %5318 = vrot.lane.b32.xlu0 %v4713, 32
  %v5319 = vpop.permute.xlu0 %5318
  %5320 = vrot.lane.b32.xlu0 %v4714, 32
  %v5321 = vpop.permute.xlu0 %5320
  %5322 = vrot.lane.b32.xlu0 %v4715, 32
  %v5323 = vpop.permute.xlu0 %5322
  %5324 = vrot.lane.b32.xlu0 %v4716, 32
  %v5325 = vpop.permute.xlu0 %5324
  %5326 = vrot.lane.b32.xlu0 %v4717, 32
  %v5327 = vpop.permute.xlu0 %5326
  %5328 = vrot.lane.b32.xlu0 %v4718, 32
  %v5329 = vpop.permute.xlu0 %5328
  %5330 = vrot.lane.b32.xlu0 %v4719, 32
  %v5331 = vpop.permute.xlu0 %5330
  %5332 = vrot.lane.b32.xlu0 %v4720, 32
  %v5333 = vpop.permute.xlu0 %5332
  %5334 = vrot.lane.b32.xlu0 %v4721, 32
  %v5335 = vpop.permute.xlu0 %5334
  %5336 = vrot.lane.b32.xlu0 %v4722, 32
  %v5337 = vpop.permute.xlu0 %5336
  %5338 = vrot.lane.b32.xlu0 %v4723, 32
  %v5339 = vpop.permute.xlu0 %5338
  %5340 = vrot.lane.b32.xlu0 %v4724, 32
  %v5341 = vpop.permute.xlu0 %5340
  %5342 = vrot.lane.b32.xlu0 %v4725, 32
  %v5343 = vpop.permute.xlu0 %5342
  %5344 = vrot.lane.b32.xlu0 %v4726, 32
  %v5345 = vpop.permute.xlu0 %5344
  %5346 = vrot.lane.b32.xlu0 %v4727, 32
  %v5347 = vpop.permute.xlu0 %5346
  %5348 = vrot.lane.b32.xlu0 %v4728, 32
  %v5349 = vpop.permute.xlu0 %5348
  %5350 = vrot.lane.b32.xlu0 %v4729, 32
  %v5351 = vpop.permute.xlu0 %5350
  %5352 = vrot.lane.b32.xlu0 %v4730, 32
  %v5353 = vpop.permute.xlu0 %5352
  %5354 = vrot.lane.b32.xlu0 %v4731, 32
  %v5355 = vpop.permute.xlu0 %5354
  %5356 = vrot.lane.b32.xlu0 %v4732, 32
  %v5357 = vpop.permute.xlu0 %5356
  %5358 = vrot.lane.b32.xlu0 %v4733, 32
  %v5359 = vpop.permute.xlu0 %5358
  %5360 = vrot.lane.b32.xlu0 %v4734, 32
  %v5361 = vpop.permute.xlu0 %5360
  %5362 = vrot.lane.b32.xlu0 %v4735, 32
  %v5363 = vpop.permute.xlu0 %5362
  %5364 = vrot.lane.b32.xlu0 %v4736, 32
  %v5365 = vpop.permute.xlu0 %5364
  %5366 = vrot.lane.b32.xlu0 %v4737, 32
  %v5367 = vpop.permute.xlu0 %5366
  %5368 = vrot.lane.b32.xlu0 %v4738, 32
  %v5369 = vpop.permute.xlu0 %5368
  %5370 = vrot.lane.b32.xlu0 %v4739, 32
  %v5371 = vpop.permute.xlu0 %5370
  %5372 = vrot.lane.b32.xlu0 %v4740, 32
  %v5373 = vpop.permute.xlu0 %5372
  %5374 = vrot.lane.b32.xlu0 %v4741, 32
  %v5375 = vpop.permute.xlu0 %5374
  %5376 = vrot.lane.b32.xlu0 %v4742, 32
  %v5377 = vpop.permute.xlu0 %5376
  %5378 = vrot.lane.b32.xlu0 %v4743, 32
  %v5379 = vpop.permute.xlu0 %5378
  %5380 = vrot.lane.b32.xlu0 %v4744, 32
  %v5381 = vpop.permute.xlu0 %5380
  %5382 = vrot.lane.b32.xlu0 %v4745, 32
  %v5383 = vpop.permute.xlu0 %5382
  %5384 = vrot.lane.b32.xlu0 %v4746, 32
  %v5385 = vpop.permute.xlu0 %5384
  %5386 = vrot.lane.b32.xlu0 %v4747, 32
  %v5387 = vpop.permute.xlu0 %5386
  %5388 = vrot.lane.b32.xlu0 %v4748, 32
  %v5389 = vpop.permute.xlu0 %5388
  %5518 = vrot.lane.b32.xlu0 %v4749, 64
  %v5519 = vpop.permute.xlu0 %5518
  %5520 = vrot.lane.b32.xlu0 %v4750, 64
  %v5521 = vpop.permute.xlu0 %5520
  %5522 = vrot.lane.b32.xlu0 %v4751, 64
  %v5523 = vpop.permute.xlu0 %5522
  %5524 = vrot.lane.b32.xlu0 %v4752, 64
  %v5525 = vpop.permute.xlu0 %5524
  %5526 = vrot.lane.b32.xlu0 %v4753, 64
  %v5527 = vpop.permute.xlu0 %5526
  %5528 = vrot.lane.b32.xlu0 %v4754, 64
  %v5529 = vpop.permute.xlu0 %5528
  %5530 = vrot.lane.b32.xlu0 %v4755, 64
  %v5531 = vpop.permute.xlu0 %5530
  %5532 = vrot.lane.b32.xlu0 %v4756, 64
  %v5533 = vpop.permute.xlu0 %5532
  %5534 = vrot.lane.b32.xlu0 %v4757, 64
  %v5535 = vpop.permute.xlu0 %5534
  %5536 = vrot.lane.b32.xlu0 %v4758, 64
  %v5537 = vpop.permute.xlu0 %5536
  %5538 = vrot.lane.b32.xlu0 %v4759, 64
  %v5539 = vpop.permute.xlu0 %5538
  %5540 = vrot.lane.b32.xlu0 %v4760, 64
  %v5541 = vpop.permute.xlu0 %5540
  %5542 = vrot.lane.b32.xlu0 %v4761, 64
  %v5543 = vpop.permute.xlu0 %5542
  %5544 = vrot.lane.b32.xlu0 %v4762, 64
  %v5545 = vpop.permute.xlu0 %5544
  %5546 = vrot.lane.b32.xlu0 %v4763, 64
  %v5547 = vpop.permute.xlu0 %5546
  %5548 = vrot.lane.b32.xlu0 %v4764, 64
  %v5549 = vpop.permute.xlu0 %5548
  %5550 = vrot.lane.b32.xlu0 %v4765, 64
  %v5551 = vpop.permute.xlu0 %5550
  %5552 = vrot.lane.b32.xlu0 %v4766, 64
  %v5553 = vpop.permute.xlu0 %5552
  %5554 = vrot.lane.b32.xlu0 %v4767, 64
  %v5555 = vpop.permute.xlu0 %5554
  %5556 = vrot.lane.b32.xlu0 %v4768, 64
  %v5557 = vpop.permute.xlu0 %5556
  %5558 = vrot.lane.b32.xlu0 %v4769, 64
  %v5559 = vpop.permute.xlu0 %5558
  %5560 = vrot.lane.b32.xlu0 %v4770, 64
  %v5561 = vpop.permute.xlu0 %5560
  %5562 = vrot.lane.b32.xlu0 %v4771, 64
  %v5563 = vpop.permute.xlu0 %5562
  %5564 = vrot.lane.b32.xlu0 %v4772, 64
  %v5565 = vpop.permute.xlu0 %5564
  %5566 = vrot.lane.b32.xlu0 %v4773, 64
  %v5567 = vpop.permute.xlu0 %5566
  %5568 = vrot.lane.b32.xlu0 %v4774, 64
  %v5569 = vpop.permute.xlu0 %5568
  %5570 = vrot.lane.b32.xlu0 %v4775, 64
  %v5571 = vpop.permute.xlu0 %5570
  %5572 = vrot.lane.b32.xlu0 %v4776, 64
  %v5573 = vpop.permute.xlu0 %5572
  %5574 = vrot.lane.b32.xlu0 %v4777, 64
  %v5575 = vpop.permute.xlu0 %5574
  %5576 = vrot.lane.b32.xlu0 %v4778, 64
  %v5577 = vpop.permute.xlu0 %5576
  %5578 = vrot.lane.b32.xlu0 %v4779, 64
  %v5579 = vpop.permute.xlu0 %5578
  %5580 = vrot.lane.b32.xlu0 %v4780, 64
  %v5581 = vpop.permute.xlu0 %5580
  %5582 = vrot.lane.b32.xlu0 %v4781, 64
  %v5583 = vpop.permute.xlu0 %5582
  %5584 = vrot.lane.b32.xlu0 %v4782, 64
  %v5585 = vpop.permute.xlu0 %5584
  %5586 = vrot.lane.b32.xlu0 %v4783, 64
  %v5587 = vpop.permute.xlu0 %5586
  %5588 = vrot.lane.b32.xlu0 %v4784, 64
  %v5589 = vpop.permute.xlu0 %5588
  %5590 = vrot.lane.b32.xlu0 %v4785, 64
  %v5591 = vpop.permute.xlu0 %5590
  %5592 = vrot.lane.b32.xlu0 %v4786, 64
  %v5593 = vpop.permute.xlu0 %5592
  %5594 = vrot.lane.b32.xlu0 %v4787, 64
  %v5595 = vpop.permute.xlu0 %5594
  %5596 = vrot.lane.b32.xlu0 %v4788, 64
  %v5597 = vpop.permute.xlu0 %5596
  %5598 = vrot.lane.b32.xlu0 %v4789, 64
  %v5599 = vpop.permute.xlu0 %5598
  %5600 = vrot.lane.b32.xlu0 %v4790, 64
  %v5601 = vpop.permute.xlu0 %5600
  %5602 = vrot.lane.b32.xlu0 %v4791, 64
  %v5603 = vpop.permute.xlu0 %5602
  %5604 = vrot.lane.b32.xlu0 %v4792, 64
  %v5605 = vpop.permute.xlu0 %5604
  %5606 = vrot.lane.b32.xlu0 %v4793, 64
  %v5607 = vpop.permute.xlu0 %5606
  %5608 = vrot.lane.b32.xlu0 %v4794, 64
  %v5609 = vpop.permute.xlu0 %5608
  %5610 = vrot.lane.b32.xlu0 %v4795, 64
  %v5611 = vpop.permute.xlu0 %5610
  %5612 = vrot.lane.b32.xlu0 %v4796, 64
  %v5613 = vpop.permute.xlu0 %5612
  %5614 = vrot.lane.b32.xlu0 %v4797, 64
  %v5615 = vpop.permute.xlu0 %5614
  %5616 = vrot.lane.b32.xlu0 %v4798, 64
  %v5617 = vpop.permute.xlu0 %5616
  %5618 = vrot.lane.b32.xlu0 %v4799, 64
  %v5619 = vpop.permute.xlu0 %5618
  %5620 = vrot.lane.b32.xlu0 %v4800, 64
  %v5621 = vpop.permute.xlu0 %5620
  %5622 = vrot.lane.b32.xlu0 %v4801, 64
  %v5623 = vpop.permute.xlu0 %5622
  %5624 = vrot.lane.b32.xlu0 %v4802, 64
  %v5625 = vpop.permute.xlu0 %5624
  %5626 = vrot.lane.b32.xlu0 %v4803, 64
  %v5627 = vpop.permute.xlu0 %5626
  %5628 = vrot.lane.b32.xlu0 %v4804, 64
  %v5629 = vpop.permute.xlu0 %5628
  %5630 = vrot.lane.b32.xlu0 %v4805, 64
  %v5631 = vpop.permute.xlu0 %5630
  %5632 = vrot.lane.b32.xlu0 %v4806, 64
  %v5633 = vpop.permute.xlu0 %5632
  %5634 = vrot.lane.b32.xlu0 %v4807, 64
  %v5635 = vpop.permute.xlu0 %5634
  %5636 = vrot.lane.b32.xlu0 %v4808, 64
  %v5637 = vpop.permute.xlu0 %5636
  %5638 = vrot.lane.b32.xlu0 %v4809, 64
  %v5639 = vpop.permute.xlu0 %5638
  %5640 = vrot.lane.b32.xlu0 %v4810, 64
  %v5641 = vpop.permute.xlu0 %5640
  %5642 = vrot.lane.b32.xlu0 %v4811, 64
  %v5643 = vpop.permute.xlu0 %5642
  %5644 = vrot.lane.b32.xlu0 %v4812, 64
  %v5645 = vpop.permute.xlu0 %5644
  %5774 = vrot.lane.b32.xlu0 %v4813, 96
  %v5775 = vpop.permute.xlu0 %5774
  %5776 = vrot.lane.b32.xlu0 %v4814, 96
  %v5777 = vpop.permute.xlu0 %5776
  %5778 = vrot.lane.b32.xlu0 %v4815, 96
  %v5779 = vpop.permute.xlu0 %5778
  %5780 = vrot.lane.b32.xlu0 %v4816, 96
  %v5781 = vpop.permute.xlu0 %5780
  %5782 = vrot.lane.b32.xlu0 %v4817, 96
  %v5783 = vpop.permute.xlu0 %5782
  %5784 = vrot.lane.b32.xlu0 %v4818, 96
  %v5785 = vpop.permute.xlu0 %5784
  %5786 = vrot.lane.b32.xlu0 %v4819, 96
  %v5787 = vpop.permute.xlu0 %5786
  %5788 = vrot.lane.b32.xlu0 %v4820, 96
  %v5789 = vpop.permute.xlu0 %5788
  %5790 = vrot.lane.b32.xlu0 %v4821, 96
  %v5791 = vpop.permute.xlu0 %5790
  %5792 = vrot.lane.b32.xlu0 %v4822, 96
  %v5793 = vpop.permute.xlu0 %5792
  %5794 = vrot.lane.b32.xlu0 %v4823, 96
  %v5795 = vpop.permute.xlu0 %5794
  %5796 = vrot.lane.b32.xlu0 %v4824, 96
  %v5797 = vpop.permute.xlu0 %5796
  %5798 = vrot.lane.b32.xlu0 %v4825, 96
  %v5799 = vpop.permute.xlu0 %5798
  %5800 = vrot.lane.b32.xlu0 %v4826, 96
  %v5801 = vpop.permute.xlu0 %5800
  %5802 = vrot.lane.b32.xlu0 %v4827, 96
  %v5803 = vpop.permute.xlu0 %5802
  %5804 = vrot.lane.b32.xlu0 %v4828, 96
  %v5805 = vpop.permute.xlu0 %5804
  %5806 = vrot.lane.b32.xlu0 %v4829, 96
  %v5807 = vpop.permute.xlu0 %5806
  %5808 = vrot.lane.b32.xlu0 %v4830, 96
  %v5809 = vpop.permute.xlu0 %5808
  %5810 = vrot.lane.b32.xlu0 %v4831, 96
  %v5811 = vpop.permute.xlu0 %5810
  %5812 = vrot.lane.b32.xlu0 %v4832, 96
  %v5813 = vpop.permute.xlu0 %5812
  %5814 = vrot.lane.b32.xlu0 %v4833, 96
  %v5815 = vpop.permute.xlu0 %5814
  %5816 = vrot.lane.b32.xlu0 %v4834, 96
  %v5817 = vpop.permute.xlu0 %5816
  %5818 = vrot.lane.b32.xlu0 %v4835, 96
  %v5819 = vpop.permute.xlu0 %5818
  %5820 = vrot.lane.b32.xlu0 %v4836, 96
  %v5821 = vpop.permute.xlu0 %5820
  %5822 = vrot.lane.b32.xlu0 %v4837, 96
  %v5823 = vpop.permute.xlu0 %5822
  %5824 = vrot.lane.b32.xlu0 %v4838, 96
  %v5825 = vpop.permute.xlu0 %5824
  %5826 = vrot.lane.b32.xlu0 %v4839, 96
  %v5827 = vpop.permute.xlu0 %5826
  %5828 = vrot.lane.b32.xlu0 %v4840, 96
  %v5829 = vpop.permute.xlu0 %5828
  %5830 = vrot.lane.b32.xlu0 %v4841, 96
  %v5831 = vpop.permute.xlu0 %5830
  %5832 = vrot.lane.b32.xlu0 %v4842, 96
  %v5833 = vpop.permute.xlu0 %5832
  %5834 = vrot.lane.b32.xlu0 %v4843, 96
  %v5835 = vpop.permute.xlu0 %5834
  %5836 = vrot.lane.b32.xlu0 %v4844, 96
  %v5837 = vpop.permute.xlu0 %5836
  %5838 = vrot.lane.b32.xlu0 %v4845, 96
  %v5839 = vpop.permute.xlu0 %5838
  %5840 = vrot.lane.b32.xlu0 %v4846, 96
  %v5841 = vpop.permute.xlu0 %5840
  %5842 = vrot.lane.b32.xlu0 %v4847, 96
  %v5843 = vpop.permute.xlu0 %5842
  %5844 = vrot.lane.b32.xlu0 %v4848, 96
  %v5845 = vpop.permute.xlu0 %5844
  %5846 = vrot.lane.b32.xlu0 %v4849, 96
  %v5847 = vpop.permute.xlu0 %5846
  %5848 = vrot.lane.b32.xlu0 %v4850, 96
  %v5849 = vpop.permute.xlu0 %5848
  %5850 = vrot.lane.b32.xlu0 %v4851, 96
  %v5851 = vpop.permute.xlu0 %5850
  %5852 = vrot.lane.b32.xlu0 %v4852, 96
  %v5853 = vpop.permute.xlu0 %5852
  %5854 = vrot.lane.b32.xlu0 %v4853, 96
  %v5855 = vpop.permute.xlu0 %5854
  %5856 = vrot.lane.b32.xlu0 %v4854, 96
  %v5857 = vpop.permute.xlu0 %5856
  %5858 = vrot.lane.b32.xlu0 %v4855, 96
  %v5859 = vpop.permute.xlu0 %5858
  %5860 = vrot.lane.b32.xlu0 %v4856, 96
  %v5861 = vpop.permute.xlu0 %5860
  %5862 = vrot.lane.b32.xlu0 %v4857, 96
  %v5863 = vpop.permute.xlu0 %5862
  %5864 = vrot.lane.b32.xlu0 %v4858, 96
  %v5865 = vpop.permute.xlu0 %5864
  %5866 = vrot.lane.b32.xlu0 %v4859, 96
  %v5867 = vpop.permute.xlu0 %5866
  %5868 = vrot.lane.b32.xlu0 %v4860, 96
  %v5869 = vpop.permute.xlu0 %5868
  %5870 = vrot.lane.b32.xlu0 %v4861, 96
  %v5871 = vpop.permute.xlu0 %5870
  %5872 = vrot.lane.b32.xlu0 %v4862, 96
  %v5873 = vpop.permute.xlu0 %5872
  %5874 = vrot.lane.b32.xlu0 %v4863, 96
  %v5875 = vpop.permute.xlu0 %5874
  %5876 = vrot.lane.b32.xlu0 %v4864, 96
  %v5877 = vpop.permute.xlu0 %5876
  %5878 = vrot.lane.b32.xlu0 %v4865, 96
  %v5879 = vpop.permute.xlu0 %5878
  %5880 = vrot.lane.b32.xlu0 %v4866, 96
  %v5881 = vpop.permute.xlu0 %5880
  %5882 = vrot.lane.b32.xlu0 %v4867, 96
  %v5883 = vpop.permute.xlu0 %5882
  %5884 = vrot.lane.b32.xlu0 %v4868, 96
  %v5885 = vpop.permute.xlu0 %5884
  %5886 = vrot.lane.b32.xlu0 %v4869, 96
  %v5887 = vpop.permute.xlu0 %5886
  %5888 = vrot.lane.b32.xlu0 %v4870, 96
  %v5889 = vpop.permute.xlu0 %5888
  %5890 = vrot.lane.b32.xlu0 %v4871, 96
  %v5891 = vpop.permute.xlu0 %5890
  %5892 = vrot.lane.b32.xlu0 %v4872, 96
  %v5893 = vpop.permute.xlu0 %5892
  %5894 = vrot.lane.b32.xlu0 %v4873, 96
  %v5895 = vpop.permute.xlu0 %5894
  %5896 = vrot.lane.b32.xlu0 %v4874, 96
  %v5897 = vpop.permute.xlu0 %5896
  %5898 = vrot.lane.b32.xlu0 %v4875, 96
  %v5899 = vpop.permute.xlu0 %5898
  %5900 = vrot.lane.b32.xlu0 %v4876, 96
  %v5901 = vpop.permute.xlu0 %5900
  %6030 = vrot.lane.b32.xlu0 %v4941, 32
  %v6031 = vpop.permute.xlu0 %6030
  %6032 = vrot.lane.b32.xlu0 %v4942, 32
  %v6033 = vpop.permute.xlu0 %6032
  %6034 = vrot.lane.b32.xlu0 %v4943, 32
  %v6035 = vpop.permute.xlu0 %6034
  %6036 = vrot.lane.b32.xlu0 %v4944, 32
  %v6037 = vpop.permute.xlu0 %6036
  %6038 = vrot.lane.b32.xlu0 %v4945, 32
  %v6039 = vpop.permute.xlu0 %6038
  %6040 = vrot.lane.b32.xlu0 %v4946, 32
  %v6041 = vpop.permute.xlu0 %6040
  %6042 = vrot.lane.b32.xlu0 %v4947, 32
  %v6043 = vpop.permute.xlu0 %6042
  %6044 = vrot.lane.b32.xlu0 %v4948, 32
  %v6045 = vpop.permute.xlu0 %6044
  %6046 = vrot.lane.b32.xlu0 %v4949, 32
  %v6047 = vpop.permute.xlu0 %6046
  %6048 = vrot.lane.b32.xlu0 %v4950, 32
  %v6049 = vpop.permute.xlu0 %6048
  %6050 = vrot.lane.b32.xlu0 %v4951, 32
  %v6051 = vpop.permute.xlu0 %6050
  %6052 = vrot.lane.b32.xlu0 %v4952, 32
  %v6053 = vpop.permute.xlu0 %6052
  %6054 = vrot.lane.b32.xlu0 %v4953, 32
  %v6055 = vpop.permute.xlu0 %6054
  %6056 = vrot.lane.b32.xlu0 %v4954, 32
  %v6057 = vpop.permute.xlu0 %6056
  %6058 = vrot.lane.b32.xlu0 %v4955, 32
  %v6059 = vpop.permute.xlu0 %6058
  %6060 = vrot.lane.b32.xlu0 %v4956, 32
  %v6061 = vpop.permute.xlu0 %6060
  %6062 = vrot.lane.b32.xlu0 %v4957, 32
  %v6063 = vpop.permute.xlu0 %6062
  %6064 = vrot.lane.b32.xlu0 %v4958, 32
  %v6065 = vpop.permute.xlu0 %6064
  %6066 = vrot.lane.b32.xlu0 %v4959, 32
  %v6067 = vpop.permute.xlu0 %6066
  %6068 = vrot.lane.b32.xlu0 %v4960, 32
  %v6069 = vpop.permute.xlu0 %6068
  %6070 = vrot.lane.b32.xlu0 %v4961, 32
  %v6071 = vpop.permute.xlu0 %6070
  %6072 = vrot.lane.b32.xlu0 %v4962, 32
  %v6073 = vpop.permute.xlu0 %6072
  %6074 = vrot.lane.b32.xlu0 %v4963, 32
  %v6075 = vpop.permute.xlu0 %6074
  %6076 = vrot.lane.b32.xlu0 %v4964, 32
  %v6077 = vpop.permute.xlu0 %6076
  %6078 = vrot.lane.b32.xlu0 %v4965, 32
  %v6079 = vpop.permute.xlu0 %6078
  %6080 = vrot.lane.b32.xlu0 %v4966, 32
  %v6081 = vpop.permute.xlu0 %6080
  %6082 = vrot.lane.b32.xlu0 %v4967, 32
  %v6083 = vpop.permute.xlu0 %6082
  %6084 = vrot.lane.b32.xlu0 %v4968, 32
  %v6085 = vpop.permute.xlu0 %6084
  %6086 = vrot.lane.b32.xlu0 %v4969, 32
  %v6087 = vpop.permute.xlu0 %6086
  %6088 = vrot.lane.b32.xlu0 %v4970, 32
  %v6089 = vpop.permute.xlu0 %6088
  %6090 = vrot.lane.b32.xlu0 %v4971, 32
  %v6091 = vpop.permute.xlu0 %6090
  %6092 = vrot.lane.b32.xlu0 %v4972, 32
  %v6093 = vpop.permute.xlu0 %6092
  %6094 = vrot.lane.b32.xlu0 %v4973, 32
  %v6095 = vpop.permute.xlu0 %6094
  %6096 = vrot.lane.b32.xlu0 %v4974, 32
  %v6097 = vpop.permute.xlu0 %6096
  %6098 = vrot.lane.b32.xlu0 %v4975, 32
  %v6099 = vpop.permute.xlu0 %6098
  %6100 = vrot.lane.b32.xlu0 %v4976, 32
  %v6101 = vpop.permute.xlu0 %6100
  %6102 = vrot.lane.b32.xlu0 %v4977, 32
  %v6103 = vpop.permute.xlu0 %6102
  %6104 = vrot.lane.b32.xlu0 %v4978, 32
  %v6105 = vpop.permute.xlu0 %6104
  %6106 = vrot.lane.b32.xlu0 %v4979, 32
  %v6107 = vpop.permute.xlu0 %6106
  %6108 = vrot.lane.b32.xlu0 %v4980, 32
  %v6109 = vpop.permute.xlu0 %6108
  %6110 = vrot.lane.b32.xlu0 %v4981, 32
  %v6111 = vpop.permute.xlu0 %6110
  %6112 = vrot.lane.b32.xlu0 %v4982, 32
  %v6113 = vpop.permute.xlu0 %6112
  %6114 = vrot.lane.b32.xlu0 %v4983, 32
  %v6115 = vpop.permute.xlu0 %6114
  %6116 = vrot.lane.b32.xlu0 %v4984, 32
  %v6117 = vpop.permute.xlu0 %6116
  %6118 = vrot.lane.b32.xlu0 %v4985, 32
  %v6119 = vpop.permute.xlu0 %6118
  %6120 = vrot.lane.b32.xlu0 %v4986, 32
  %v6121 = vpop.permute.xlu0 %6120
  %6122 = vrot.lane.b32.xlu0 %v4987, 32
  %v6123 = vpop.permute.xlu0 %6122
  %6124 = vrot.lane.b32.xlu0 %v4988, 32
  %v6125 = vpop.permute.xlu0 %6124
  %6126 = vrot.lane.b32.xlu0 %v4989, 32
  %v6127 = vpop.permute.xlu0 %6126
  %6128 = vrot.lane.b32.xlu0 %v4990, 32
  %v6129 = vpop.permute.xlu0 %6128
  %6130 = vrot.lane.b32.xlu0 %v4991, 32
  %v6131 = vpop.permute.xlu0 %6130
  %6132 = vrot.lane.b32.xlu0 %v4992, 32
  %v6133 = vpop.permute.xlu0 %6132
  %6134 = vrot.lane.b32.xlu0 %v4993, 32
  %v6135 = vpop.permute.xlu0 %6134
  %6136 = vrot.lane.b32.xlu0 %v4994, 32
  %v6137 = vpop.permute.xlu0 %6136
  %6138 = vrot.lane.b32.xlu0 %v4995, 32
  %v6139 = vpop.permute.xlu0 %6138
  %6140 = vrot.lane.b32.xlu0 %v4996, 32
  %v6141 = vpop.permute.xlu0 %6140
  %6142 = vrot.lane.b32.xlu0 %v4997, 32
  %v6143 = vpop.permute.xlu0 %6142
  %6144 = vrot.lane.b32.xlu0 %v4998, 32
  %v6145 = vpop.permute.xlu0 %6144
  %6146 = vrot.lane.b32.xlu0 %v4999, 32
  %v6147 = vpop.permute.xlu0 %6146
  %6148 = vrot.lane.b32.xlu0 %v5000, 32
  %v6149 = vpop.permute.xlu0 %6148
  %6150 = vrot.lane.b32.xlu0 %v5001, 32
  %v6151 = vpop.permute.xlu0 %6150
  %6152 = vrot.lane.b32.xlu0 %v5002, 32
  %v6153 = vpop.permute.xlu0 %6152
  %6154 = vrot.lane.b32.xlu0 %v5003, 32
  %v6155 = vpop.permute.xlu0 %6154
  %6156 = vrot.lane.b32.xlu0 %v5004, 32
  %v6157 = vpop.permute.xlu0 %6156
  %6286 = vrot.lane.b32.xlu0 %v5006, 64
  %v6287 = vpop.permute.xlu0 %6286
  %6288 = vrot.lane.b32.xlu0 %v5007, 64
  %v6289 = vpop.permute.xlu0 %6288
  %6290 = vrot.lane.b32.xlu0 %v5008, 64
  %v6291 = vpop.permute.xlu0 %6290
  %6292 = vrot.lane.b32.xlu0 %v5009, 64
  %v6293 = vpop.permute.xlu0 %6292
  %6294 = vrot.lane.b32.xlu0 %v5010, 64
  %v6295 = vpop.permute.xlu0 %6294
  %6296 = vrot.lane.b32.xlu0 %v5011, 64
  %v6297 = vpop.permute.xlu0 %6296
  %6298 = vrot.lane.b32.xlu0 %v5012, 64
  %v6299 = vpop.permute.xlu0 %6298
  %6300 = vrot.lane.b32.xlu0 %v5013, 64
  %v6301 = vpop.permute.xlu0 %6300
  %6302 = vrot.lane.b32.xlu0 %v5014, 64
  %v6303 = vpop.permute.xlu0 %6302
  %6304 = vrot.lane.b32.xlu0 %v5015, 64
  %v6305 = vpop.permute.xlu0 %6304
  %6306 = vrot.lane.b32.xlu0 %v5016, 64
  %v6307 = vpop.permute.xlu0 %6306
  %6308 = vrot.lane.b32.xlu0 %v5017, 64
  %v6309 = vpop.permute.xlu0 %6308
  %6310 = vrot.lane.b32.xlu0 %v5018, 64
  %v6311 = vpop.permute.xlu0 %6310
  %6312 = vrot.lane.b32.xlu0 %v5019, 64
  %v6313 = vpop.permute.xlu0 %6312
  %6314 = vrot.lane.b32.xlu0 %v5020, 64
  %v6315 = vpop.permute.xlu0 %6314
  %6316 = vrot.lane.b32.xlu0 %v5021, 64
  %v6317 = vpop.permute.xlu0 %6316
  %6318 = vrot.lane.b32.xlu0 %v5022, 64
  %v6319 = vpop.permute.xlu0 %6318
  %6320 = vrot.lane.b32.xlu0 %v5023, 64
  %v6321 = vpop.permute.xlu0 %6320
  %6322 = vrot.lane.b32.xlu0 %v5024, 64
  %v6323 = vpop.permute.xlu0 %6322
  %6324 = vrot.lane.b32.xlu0 %v5025, 64
  %v6325 = vpop.permute.xlu0 %6324
  %6326 = vrot.lane.b32.xlu0 %v5026, 64
  %v6327 = vpop.permute.xlu0 %6326
  %6328 = vrot.lane.b32.xlu0 %v5027, 64
  %v6329 = vpop.permute.xlu0 %6328
  %6330 = vrot.lane.b32.xlu0 %v5028, 64
  %v6331 = vpop.permute.xlu0 %6330
  %6332 = vrot.lane.b32.xlu0 %v5029, 64
  %v6333 = vpop.permute.xlu0 %6332
  %6334 = vrot.lane.b32.xlu0 %v5030, 64
  %v6335 = vpop.permute.xlu0 %6334
  %6336 = vrot.lane.b32.xlu0 %v5031, 64
  %v6337 = vpop.permute.xlu0 %6336
  %6338 = vrot.lane.b32.xlu0 %v5032, 64
  %v6339 = vpop.permute.xlu0 %6338
  %6340 = vrot.lane.b32.xlu0 %v5033, 64
  %v6341 = vpop.permute.xlu0 %6340
  %6342 = vrot.lane.b32.xlu0 %v5034, 64
  %v6343 = vpop.permute.xlu0 %6342
  %6344 = vrot.lane.b32.xlu0 %v5035, 64
  %v6345 = vpop.permute.xlu0 %6344
  %6346 = vrot.lane.b32.xlu0 %v5036, 64
  %v6347 = vpop.permute.xlu0 %6346
  %6348 = vrot.lane.b32.xlu0 %v5037, 64
  %v6349 = vpop.permute.xlu0 %6348
  %6350 = vrot.lane.b32.xlu0 %v5038, 64
  %v6351 = vpop.permute.xlu0 %6350
  %6352 = vrot.lane.b32.xlu0 %v5039, 64
  %v6353 = vpop.permute.xlu0 %6352
  %6354 = vrot.lane.b32.xlu0 %v5040, 64
  %v6355 = vpop.permute.xlu0 %6354
  %6356 = vrot.lane.b32.xlu0 %v5041, 64
  %v6357 = vpop.permute.xlu0 %6356
  %6358 = vrot.lane.b32.xlu0 %v5042, 64
  %v6359 = vpop.permute.xlu0 %6358
  %6360 = vrot.lane.b32.xlu0 %v5043, 64
  %v6361 = vpop.permute.xlu0 %6360
  %6362 = vrot.lane.b32.xlu0 %v5044, 64
  %v6363 = vpop.permute.xlu0 %6362
  %6364 = vrot.lane.b32.xlu0 %v5045, 64
  %v6365 = vpop.permute.xlu0 %6364
  %6366 = vrot.lane.b32.xlu0 %v5046, 64
  %v6367 = vpop.permute.xlu0 %6366
  %6368 = vrot.lane.b32.xlu0 %v5047, 64
  %v6369 = vpop.permute.xlu0 %6368
  %6370 = vrot.lane.b32.xlu0 %v5048, 64
  %v6371 = vpop.permute.xlu0 %6370
  %6372 = vrot.lane.b32.xlu0 %v5049, 64
  %v6373 = vpop.permute.xlu0 %6372
  %6374 = vrot.lane.b32.xlu0 %v5050, 64
  %v6375 = vpop.permute.xlu0 %6374
  %6376 = vrot.lane.b32.xlu0 %v5051, 64
  %v6377 = vpop.permute.xlu0 %6376
  %6378 = vrot.lane.b32.xlu0 %v5052, 64
  %v6379 = vpop.permute.xlu0 %6378
  %6380 = vrot.lane.b32.xlu0 %v5053, 64
  %v6381 = vpop.permute.xlu0 %6380
  %6382 = vrot.lane.b32.xlu0 %v5054, 64
  %v6383 = vpop.permute.xlu0 %6382
  %6384 = vrot.lane.b32.xlu0 %v5055, 64
  %v6385 = vpop.permute.xlu0 %6384
  %6386 = vrot.lane.b32.xlu0 %v5056, 64
  %v6387 = vpop.permute.xlu0 %6386
  %6388 = vrot.lane.b32.xlu0 %v5057, 64
  %v6389 = vpop.permute.xlu0 %6388
  %6390 = vrot.lane.b32.xlu0 %v5058, 64
  %v6391 = vpop.permute.xlu0 %6390
  %6392 = vrot.lane.b32.xlu0 %v5059, 64
  %v6393 = vpop.permute.xlu0 %6392
  %6394 = vrot.lane.b32.xlu0 %v5060, 64
  %v6395 = vpop.permute.xlu0 %6394
  %6396 = vrot.lane.b32.xlu0 %v5061, 64
  %v6397 = vpop.permute.xlu0 %6396
  %6398 = vrot.lane.b32.xlu0 %v5062, 64
  %v6399 = vpop.permute.xlu0 %6398
  %6400 = vrot.lane.b32.xlu0 %v5063, 64
  %v6401 = vpop.permute.xlu0 %6400
  %6402 = vrot.lane.b32.xlu0 %v5064, 64
  %v6403 = vpop.permute.xlu0 %6402
  %6404 = vrot.lane.b32.xlu0 %v5065, 64
  %v6405 = vpop.permute.xlu0 %6404
  %6406 = vrot.lane.b32.xlu0 %v5066, 64
  %v6407 = vpop.permute.xlu0 %6406
  %6408 = vrot.lane.b32.xlu0 %v5067, 64
  %v6409 = vpop.permute.xlu0 %6408
  %6410 = vrot.lane.b32.xlu0 %v5068, 64
  %v6411 = vpop.permute.xlu0 %6410
  %6412 = vrot.lane.b32.xlu0 %v5069, 64
  %v6413 = vpop.permute.xlu0 %6412
  %6542 = vrot.lane.b32.xlu0 %v5070, 96
  %v6543 = vpop.permute.xlu0 %6542
  %6544 = vrot.lane.b32.xlu0 %v5071, 96
  %v6545 = vpop.permute.xlu0 %6544
  %6546 = vrot.lane.b32.xlu0 %v5072, 96
  %v6547 = vpop.permute.xlu0 %6546
  %6548 = vrot.lane.b32.xlu0 %v5073, 96
  %v6549 = vpop.permute.xlu0 %6548
  %6550 = vrot.lane.b32.xlu0 %v5074, 96
  %v6551 = vpop.permute.xlu0 %6550
  %6552 = vrot.lane.b32.xlu0 %v5075, 96
  %v6553 = vpop.permute.xlu0 %6552
  %6554 = vrot.lane.b32.xlu0 %v5076, 96
  %v6555 = vpop.permute.xlu0 %6554
  %6556 = vrot.lane.b32.xlu0 %v5077, 96
  %v6557 = vpop.permute.xlu0 %6556
  %6558 = vrot.lane.b32.xlu0 %v5078, 96
  %v6559 = vpop.permute.xlu0 %6558
  %6560 = vrot.lane.b32.xlu0 %v5079, 96
  %v6561 = vpop.permute.xlu0 %6560
  %6562 = vrot.lane.b32.xlu0 %v5080, 96
  %v6563 = vpop.permute.xlu0 %6562
  %6564 = vrot.lane.b32.xlu0 %v5081, 96
  %v6565 = vpop.permute.xlu0 %6564
  %6566 = vrot.lane.b32.xlu0 %v5082, 96
  %v6567 = vpop.permute.xlu0 %6566
  %6568 = vrot.lane.b32.xlu0 %v5083, 96
  %v6569 = vpop.permute.xlu0 %6568
  %6570 = vrot.lane.b32.xlu0 %v5084, 96
  %v6571 = vpop.permute.xlu0 %6570
  %6572 = vrot.lane.b32.xlu0 %v5085, 96
  %v6573 = vpop.permute.xlu0 %6572
  %6574 = vrot.lane.b32.xlu0 %v5086, 96
  %v6575 = vpop.permute.xlu0 %6574
  %6576 = vrot.lane.b32.xlu0 %v5087, 96
  %v6577 = vpop.permute.xlu0 %6576
  %6578 = vrot.lane.b32.xlu0 %v5088, 96
  %v6579 = vpop.permute.xlu0 %6578
  %6580 = vrot.lane.b32.xlu0 %v5089, 96
  %v6581 = vpop.permute.xlu0 %6580
  %6582 = vrot.lane.b32.xlu0 %v5090, 96
  %v6583 = vpop.permute.xlu0 %6582
  %6584 = vrot.lane.b32.xlu0 %v5091, 96
  %v6585 = vpop.permute.xlu0 %6584
  %6586 = vrot.lane.b32.xlu0 %v5092, 96
  %v6587 = vpop.permute.xlu0 %6586
  %6588 = vrot.lane.b32.xlu0 %v5093, 96
  %v6589 = vpop.permute.xlu0 %6588
  %6590 = vrot.lane.b32.xlu0 %v5094, 96
  %v6591 = vpop.permute.xlu0 %6590
  %6592 = vrot.lane.b32.xlu0 %v5095, 96
  %v6593 = vpop.permute.xlu0 %6592
  %6594 = vrot.lane.b32.xlu0 %v5096, 96
  %v6595 = vpop.permute.xlu0 %6594
  %6596 = vrot.lane.b32.xlu0 %v5097, 96
  %v6597 = vpop.permute.xlu0 %6596
  %6598 = vrot.lane.b32.xlu0 %v5098, 96
  %v6599 = vpop.permute.xlu0 %6598
  %6600 = vrot.lane.b32.xlu0 %v5099, 96
  %v6601 = vpop.permute.xlu0 %6600
  %6602 = vrot.lane.b32.xlu0 %v5100, 96
  %v6603 = vpop.permute.xlu0 %6602
  %6604 = vrot.lane.b32.xlu0 %v5101, 96
  %v6605 = vpop.permute.xlu0 %6604
  %6606 = vrot.lane.b32.xlu0 %v5102, 96
  %v6607 = vpop.permute.xlu0 %6606
  %6608 = vrot.lane.b32.xlu0 %v5103, 96
  %v6609 = vpop.permute.xlu0 %6608
  %6610 = vrot.lane.b32.xlu0 %v5104, 96
  %v6611 = vpop.permute.xlu0 %6610
  %6612 = vrot.lane.b32.xlu0 %v5105, 96
  %v6613 = vpop.permute.xlu0 %6612
  %6614 = vrot.lane.b32.xlu0 %v5106, 96
  %v6615 = vpop.permute.xlu0 %6614
  %6616 = vrot.lane.b32.xlu0 %v5107, 96
  %v6617 = vpop.permute.xlu0 %6616
  %6618 = vrot.lane.b32.xlu0 %v5108, 96
  %v6619 = vpop.permute.xlu0 %6618
  %6620 = vrot.lane.b32.xlu0 %v5109, 96
  %v6621 = vpop.permute.xlu0 %6620
  %6622 = vrot.lane.b32.xlu0 %v5110, 96
  %v6623 = vpop.permute.xlu0 %6622
  %6624 = vrot.lane.b32.xlu0 %v5111, 96
  %v6625 = vpop.permute.xlu0 %6624
  %6626 = vrot.lane.b32.xlu0 %v5112, 96
  %v6627 = vpop.permute.xlu0 %6626
  %6628 = vrot.lane.b32.xlu0 %v5113, 96
  %v6629 = vpop.permute.xlu0 %6628
  %6630 = vrot.lane.b32.xlu0 %v5114, 96
  %v6631 = vpop.permute.xlu0 %6630
  %6632 = vrot.lane.b32.xlu0 %v5115, 96
  %v6633 = vpop.permute.xlu0 %6632
  %6634 = vrot.lane.b32.xlu0 %v5116, 96
  %v6635 = vpop.permute.xlu0 %6634
  %6636 = vrot.lane.b32.xlu0 %v5117, 96
  %v6637 = vpop.permute.xlu0 %6636
  %6638 = vrot.lane.b32.xlu0 %v5118, 96
  %v6639 = vpop.permute.xlu0 %6638
  %6640 = vrot.lane.b32.xlu0 %v5119, 96
  %v6641 = vpop.permute.xlu0 %6640
  %6642 = vrot.lane.b32.xlu0 %v5120, 96
  %v6643 = vpop.permute.xlu0 %6642
  %6644 = vrot.lane.b32.xlu0 %v5121, 96
  %v6645 = vpop.permute.xlu0 %6644
  %6646 = vrot.lane.b32.xlu0 %v5122, 96
  %v6647 = vpop.permute.xlu0 %6646
  %6648 = vrot.lane.b32.xlu0 %v5123, 96
  %v6649 = vpop.permute.xlu0 %6648
  %6650 = vrot.lane.b32.xlu0 %v5124, 96
  %v6651 = vpop.permute.xlu0 %6650
  %6652 = vrot.lane.b32.xlu0 %v5125, 96
  %v6653 = vpop.permute.xlu0 %6652
  %6654 = vrot.lane.b32.xlu0 %v5126, 96
  %v6655 = vpop.permute.xlu0 %6654
  %6656 = vrot.lane.b32.xlu0 %v5127, 96
  %v6657 = vpop.permute.xlu0 %6656
  %6658 = vrot.lane.b32.xlu0 %v5128, 96
  %v6659 = vpop.permute.xlu0 %6658
  %6660 = vrot.lane.b32.xlu0 %v5129, 96
  %v6661 = vpop.permute.xlu0 %6660
  %6662 = vrot.lane.b32.xlu0 %v5130, 96
  %v6663 = vpop.permute.xlu0 %6662
  %6664 = vrot.lane.b32.xlu0 %v5131, 96
  %v6665 = vpop.permute.xlu0 %6664
  %6666 = vrot.lane.b32.xlu0 %v5132, 96
  %v6667 = vpop.permute.xlu0 %6666
  %6668 = vrot.lane.b32.xlu0 %v5133, 96
  %v6669 = vpop.permute.xlu0 %6668
  %v6734 = vsel %vm665, %v4621, %v5263
  %v6735 = vsel %vm665, %v4622, %v5265
  %v6736 = vsel %vm665, %v4623, %v5267
  %v6737 = vsel %vm665, %v4624, %v5269
  %v6738 = vsel %vm665, %v4625, %v5271
  %v6739 = vsel %vm665, %v4626, %v5273
  %v6740 = vsel %vm665, %v4627, %v5275
  %v6741 = vsel %vm665, %v4628, %v5277
  %v6742 = vsel %vm665, %v4629, %v5279
  %v6743 = vsel %vm665, %v4630, %v5281
  %v6744 = vsel %vm665, %v4631, %v5283
  %v6745 = vsel %vm665, %v4632, %v5285
  %v6746 = vsel %vm665, %v4633, %v5287
  %v6747 = vsel %vm665, %v4634, %v5289
  %v6748 = vsel %vm665, %v4635, %v5291
  %v6749 = vsel %vm665, %v4636, %v5293
  %v6750 = vsel %vm665, %v4637, %v5295
  %v6751 = vsel %vm665, %v4638, %v5297
  %v6752 = vsel %vm665, %v4639, %v5299
  %v6753 = vsel %vm665, %v4640, %v5301
  %v6754 = vsel %vm665, %v4641, %v5303
  %v6755 = vsel %vm665, %v4642, %v5305
  %v6756 = vsel %vm665, %v4643, %v5307
  %v6757 = vsel %vm665, %v4644, %v5309
  %v6758 = vsel %vm665, %v4645, %v5311
  %v6759 = vsel %vm665, %v4646, %v5313
  %v6760 = vsel %vm665, %v4647, %v5315
  %v6761 = vsel %vm665, %v4648, %v5317
  %v6762 = vsel %vm665, %v4649, %v5319
  %v6763 = vsel %vm665, %v4650, %v5321
  %v6764 = vsel %vm665, %v4651, %v5323
  %v6765 = vsel %vm665, %v4652, %v5325
  %v6766 = vsel %vm665, %v4653, %v5327
  %v6767 = vsel %vm665, %v4654, %v5329
  %v6768 = vsel %vm665, %v4655, %v5331
  %v6769 = vsel %vm665, %v4656, %v5333
  %v6770 = vsel %vm665, %v4657, %v5335
  %v6771 = vsel %vm665, %v4658, %v5337
  %v6772 = vsel %vm665, %v4659, %v5339
  %v6773 = vsel %vm665, %v4660, %v5341
  %v6774 = vsel %vm665, %v4661, %v5343
  %v6775 = vsel %vm665, %v4662, %v5345
  %v6776 = vsel %vm665, %v4663, %v5347
  %v6777 = vsel %vm665, %v4664, %v5349
  %v6778 = vsel %vm665, %v4665, %v5351
  %v6779 = vsel %vm665, %v4666, %v5353
  %v6780 = vsel %vm665, %v4667, %v5355
  %v6781 = vsel %vm665, %v4668, %v5357
  %v6782 = vsel %vm665, %v4669, %v5359
  %v6783 = vsel %vm665, %v4670, %v5361
  %v6784 = vsel %vm665, %v4671, %v5363
  %v6785 = vsel %vm665, %v4672, %v5365
  %v6786 = vsel %vm665, %v4673, %v5367
  %v6787 = vsel %vm665, %v4674, %v5369
  %v6788 = vsel %vm665, %v4675, %v5371
  %v6789 = vsel %vm665, %v4676, %v5373
  %v6790 = vsel %vm665, %v4677, %v5375
  %v6791 = vsel %vm665, %v4678, %v5377
  %v6792 = vsel %vm665, %v4679, %v5379
  %v6793 = vsel %vm665, %v4680, %v5381
  %v6794 = vsel %vm665, %v4681, %v5383
  %v6795 = vsel %vm665, %v4682, %v5385
  %v6796 = vsel %vm665, %v4683, %v5387
  %v6797 = vsel %vm665, %v4684, %v5389
  %v6798 = vsel %vm3831, %v6734, %v5519
  %v6799 = vsel %vm3831, %v6735, %v5521
  %v6800 = vsel %vm3831, %v6736, %v5523
  %v6801 = vsel %vm3831, %v6737, %v5525
  %v6802 = vsel %vm3831, %v6738, %v5527
  %v6803 = vsel %vm3831, %v6739, %v5529
  %v6804 = vsel %vm3831, %v6740, %v5531
  %v6805 = vsel %vm3831, %v6741, %v5533
  %v6806 = vsel %vm3831, %v6742, %v5535
  %v6807 = vsel %vm3831, %v6743, %v5537
  %v6808 = vsel %vm3831, %v6744, %v5539
  %v6809 = vsel %vm3831, %v6745, %v5541
  %v6810 = vsel %vm3831, %v6746, %v5543
  %v6811 = vsel %vm3831, %v6747, %v5545
  %v6812 = vsel %vm3831, %v6748, %v5547
  %v6813 = vsel %vm3831, %v6749, %v5549
  %v6814 = vsel %vm3831, %v6750, %v5551
  %v6815 = vsel %vm3831, %v6751, %v5553
  %v6816 = vsel %vm3831, %v6752, %v5555
  %v6817 = vsel %vm3831, %v6753, %v5557
  %v6818 = vsel %vm3831, %v6754, %v5559
  %v6819 = vsel %vm3831, %v6755, %v5561
  %v6820 = vsel %vm3831, %v6756, %v5563
  %v6821 = vsel %vm3831, %v6757, %v5565
  %v6822 = vsel %vm3831, %v6758, %v5567
  %v6823 = vsel %vm3831, %v6759, %v5569
  %v6824 = vsel %vm3831, %v6760, %v5571
  %v6825 = vsel %vm3831, %v6761, %v5573
  %v6826 = vsel %vm3831, %v6762, %v5575
  %v6827 = vsel %vm3831, %v6763, %v5577
  %v6828 = vsel %vm3831, %v6764, %v5579
  %v6829 = vsel %vm3831, %v6765, %v5581
  %v6830 = vsel %vm3831, %v6766, %v5583
  %v6831 = vsel %vm3831, %v6767, %v5585
  %v6832 = vsel %vm3831, %v6768, %v5587
  %v6833 = vsel %vm3831, %v6769, %v5589
  %v6834 = vsel %vm3831, %v6770, %v5591
  %v6835 = vsel %vm3831, %v6771, %v5593
  %v6836 = vsel %vm3831, %v6772, %v5595
  %v6837 = vsel %vm3831, %v6773, %v5597
  %v6838 = vsel %vm3831, %v6774, %v5599
  %v6839 = vsel %vm3831, %v6775, %v5601
  %v6840 = vsel %vm3831, %v6776, %v5603
  %v6841 = vsel %vm3831, %v6777, %v5605
  %v6842 = vsel %vm3831, %v6778, %v5607
  %v6843 = vsel %vm3831, %v6779, %v5609
  %v6844 = vsel %vm3831, %v6780, %v5611
  %v6845 = vsel %vm3831, %v6781, %v5613
  %v6846 = vsel %vm3831, %v6782, %v5615
  %v6847 = vsel %vm3831, %v6783, %v5617
  %v6848 = vsel %vm3831, %v6784, %v5619
  %v6849 = vsel %vm3831, %v6785, %v5621
  %v6850 = vsel %vm3831, %v6786, %v5623
  %v6851 = vsel %vm3831, %v6787, %v5625
  %v6852 = vsel %vm3831, %v6788, %v5627
  %v6853 = vsel %vm3831, %v6789, %v5629
  %v6854 = vsel %vm3831, %v6790, %v5631
  %v6855 = vsel %vm3831, %v6791, %v5633
  %v6856 = vsel %vm3831, %v6792, %v5635
  %v6857 = vsel %vm3831, %v6793, %v5637
  %v6858 = vsel %vm3831, %v6794, %v5639
  %v6859 = vsel %vm3831, %v6795, %v5641
  %v6860 = vsel %vm3831, %v6796, %v5643
  %v6861 = vsel %vm3831, %v6797, %v5645
  %vm6862 = vcmask 785408
  %v6863 = vsel %vm6862, %v6798, %v5775
  %v6864 = vsel %vm6862, %v6799, %v5777
  %v6865 = vsel %vm6862, %v6800, %v5779
  %v6866 = vsel %vm6862, %v6801, %v5781
  %v6867 = vsel %vm6862, %v6802, %v5783
  %v6868 = vsel %vm6862, %v6803, %v5785
  %v6869 = vsel %vm6862, %v6804, %v5787
  %v6870 = vsel %vm6862, %v6805, %v5789
  %v6871 = vsel %vm6862, %v6806, %v5791
  %v6872 = vsel %vm6862, %v6807, %v5793
  %v6873 = vsel %vm6862, %v6808, %v5795
  %v6874 = vsel %vm6862, %v6809, %v5797
  %v6875 = vsel %vm6862, %v6810, %v5799
  %v6876 = vsel %vm6862, %v6811, %v5801
  %v6877 = vsel %vm6862, %v6812, %v5803
  %v6878 = vsel %vm6862, %v6813, %v5805
  %v6879 = vsel %vm6862, %v6814, %v5807
  %v6880 = vsel %vm6862, %v6815, %v5809
  %v6881 = vsel %vm6862, %v6816, %v5811
  %v6882 = vsel %vm6862, %v6817, %v5813
  %v6883 = vsel %vm6862, %v6818, %v5815
  %v6884 = vsel %vm6862, %v6819, %v5817
  %v6885 = vsel %vm6862, %v6820, %v5819
  %v6886 = vsel %vm6862, %v6821, %v5821
  %v6887 = vsel %vm6862, %v6822, %v5823
  %v6888 = vsel %vm6862, %v6823, %v5825
  %v6889 = vsel %vm6862, %v6824, %v5827
  %v6890 = vsel %vm6862, %v6825, %v5829
  %v6891 = vsel %vm6862, %v6826, %v5831
  %v6892 = vsel %vm6862, %v6827, %v5833
  %v6893 = vsel %vm6862, %v6828, %v5835
  %v6894 = vsel %vm6862, %v6829, %v5837
  %v6895 = vsel %vm6862, %v6830, %v5839
  %v6896 = vsel %vm6862, %v6831, %v5841
  %v6897 = vsel %vm6862, %v6832, %v5843
  %v6898 = vsel %vm6862, %v6833, %v5845
  %v6899 = vsel %vm6862, %v6834, %v5847
  %v6900 = vsel %vm6862, %v6835, %v5849
  %v6901 = vsel %vm6862, %v6836, %v5851
  %v6902 = vsel %vm6862, %v6837, %v5853
  %v6903 = vsel %vm6862, %v6838, %v5855
  %v6904 = vsel %vm6862, %v6839, %v5857
  %v6905 = vsel %vm6862, %v6840, %v5859
  %v6906 = vsel %vm6862, %v6841, %v5861
  %v6907 = vsel %vm6862, %v6842, %v5863
  %v6908 = vsel %vm6862, %v6843, %v5865
  %v6909 = vsel %vm6862, %v6844, %v5867
  %v6910 = vsel %vm6862, %v6845, %v5869
  %v6911 = vsel %vm6862, %v6846, %v5871
  %v6912 = vsel %vm6862, %v6847, %v5873
  %v6913 = vsel %vm6862, %v6848, %v5875
  %v6914 = vsel %vm6862, %v6849, %v5877
  %v6915 = vsel %vm6862, %v6850, %v5879
  %v6916 = vsel %vm6862, %v6851, %v5881
  %v6917 = vsel %vm6862, %v6852, %v5883
  %v6918 = vsel %vm6862, %v6853, %v5885
  %v6919 = vsel %vm6862, %v6854, %v5887
  %v6920 = vsel %vm6862, %v6855, %v5889
  %v6921 = vsel %vm6862, %v6856, %v5891
  %v6922 = vsel %vm6862, %v6857, %v5893
  %v6923 = vsel %vm6862, %v6858, %v5895
  %v6924 = vsel %vm6862, %v6859, %v5897
  %v6925 = vsel %vm6862, %v6860, %v5899
  %v6926 = vsel %vm6862, %v6861, %v5901
  %v6927 = vsel %vm665, %v4877, %v6031
  %v6928 = vsel %vm665, %v4878, %v6033
  %v6929 = vsel %vm665, %v4879, %v6035
  %v6930 = vsel %vm665, %v4880, %v6037
  %v6931 = vsel %vm665, %v4881, %v6039
  %v6932 = vsel %vm665, %v4882, %v6041
  %v6933 = vsel %vm665, %v4883, %v6043
  %v6934 = vsel %vm665, %v4884, %v6045
  %v6935 = vsel %vm665, %v4885, %v6047
  %v6936 = vsel %vm665, %v4886, %v6049
  %v6937 = vsel %vm665, %v4887, %v6051
  %v6938 = vsel %vm665, %v4888, %v6053
  %v6939 = vsel %vm665, %v4889, %v6055
  %v6940 = vsel %vm665, %v4890, %v6057
  %v6941 = vsel %vm665, %v4891, %v6059
  %v6942 = vsel %vm665, %v4892, %v6061
  %v6943 = vsel %vm665, %v4893, %v6063
  %v6944 = vsel %vm665, %v4894, %v6065
  %v6945 = vsel %vm665, %v4895, %v6067
  %v6946 = vsel %vm665, %v4896, %v6069
  %v6947 = vsel %vm665, %v4897, %v6071
  %v6948 = vsel %vm665, %v4898, %v6073
  %v6949 = vsel %vm665, %v4899, %v6075
  %v6950 = vsel %vm665, %v4900, %v6077
  %v6951 = vsel %vm665, %v4901, %v6079
  %v6952 = vsel %vm665, %v4902, %v6081
  %v6953 = vsel %vm665, %v4903, %v6083
  %v6954 = vsel %vm665, %v4904, %v6085
  %v6955 = vsel %vm665, %v4905, %v6087
  %v6956 = vsel %vm665, %v4906, %v6089
  %v6957 = vsel %vm665, %v4907, %v6091
  %v6958 = vsel %vm665, %v4908, %v6093
  %v6959 = vsel %vm665, %v4909, %v6095
  %v6960 = vsel %vm665, %v4910, %v6097
  %v6961 = vsel %vm665, %v4911, %v6099
  %v6962 = vsel %vm665, %v4912, %v6101
  %v6963 = vsel %vm665, %v4913, %v6103
  %v6964 = vsel %vm665, %v4914, %v6105
  %v6965 = vsel %vm665, %v4915, %v6107
  %v6966 = vsel %vm665, %v4916, %v6109
  %v6967 = vsel %vm665, %v4917, %v6111
  %v6968 = vsel %vm665, %v4918, %v6113
  %v6969 = vsel %vm665, %v4919, %v6115
  %v6970 = vsel %vm665, %v4920, %v6117
  %v6971 = vsel %vm665, %v4921, %v6119
  %v6972 = vsel %vm665, %v4922, %v6121
  %v6973 = vsel %vm665, %v4923, %v6123
  %v6974 = vsel %vm665, %v4924, %v6125
  %v6975 = vsel %vm665, %v4925, %v6127
  %v6976 = vsel %vm665, %v4926, %v6129
  %v6977 = vsel %vm665, %v4927, %v6131
  %v6978 = vsel %vm665, %v4928, %v6133
  %v6979 = vsel %vm665, %v4929, %v6135
  %v6980 = vsel %vm665, %v4930, %v6137
  %v6981 = vsel %vm665, %v4931, %v6139
  %v6982 = vsel %vm665, %v4932, %v6141
  %v6983 = vsel %vm665, %v4933, %v6143
  %v6984 = vsel %vm665, %v4934, %v6145
  %v6985 = vsel %vm665, %v4935, %v6147
  %v6986 = vsel %vm665, %v4936, %v6149
  %v6987 = vsel %vm665, %v4937, %v6151
  %v6988 = vsel %vm665, %v4938, %v6153
  %v6989 = vsel %vm665, %v4939, %v6155
  %v6990 = vsel %vm665, %v4940, %v6157
  %v6991 = vsel %vm3831, %v6927, %v6287
  %v6992 = vsel %vm3831, %v6928, %v6289
  %v6993 = vsel %vm3831, %v6929, %v6291
  %v6994 = vsel %vm3831, %v6930, %v6293
  %v6995 = vsel %vm3831, %v6931, %v6295
  %v6996 = vsel %vm3831, %v6932, %v6297
  %v6997 = vsel %vm3831, %v6933, %v6299
  %v6998 = vsel %vm3831, %v6934, %v6301
  %v6999 = vsel %vm3831, %v6935, %v6303
  %v7000 = vsel %vm3831, %v6936, %v6305
  %v7001 = vsel %vm3831, %v6937, %v6307
  %v7002 = vsel %vm3831, %v6938, %v6309
  %v7003 = vsel %vm3831, %v6939, %v6311
  %v7004 = vsel %vm3831, %v6940, %v6313
  %v7005 = vsel %vm3831, %v6941, %v6315
  %v7006 = vsel %vm3831, %v6942, %v6317
  %v7007 = vsel %vm3831, %v6943, %v6319
  %v7008 = vsel %vm3831, %v6944, %v6321
  %v7009 = vsel %vm3831, %v6945, %v6323
  %v7010 = vsel %vm3831, %v6946, %v6325
  %v7011 = vsel %vm3831, %v6947, %v6327
  %v7012 = vsel %vm3831, %v6948, %v6329
  %v7013 = vsel %vm3831, %v6949, %v6331
  %v7014 = vsel %vm3831, %v6950, %v6333
  %v7015 = vsel %vm3831, %v6951, %v6335
  %v7016 = vsel %vm3831, %v6952, %v6337
  %v7017 = vsel %vm3831, %v6953, %v6339
  %v7018 = vsel %vm3831, %v6954, %v6341
  %v7019 = vsel %vm3831, %v6955, %v6343
  %v7020 = vsel %vm3831, %v6956, %v6345
  %v7021 = vsel %vm3831, %v6957, %v6347
  %v7022 = vsel %vm3831, %v6958, %v6349
  %v7023 = vsel %vm3831, %v6959, %v6351
  %v7024 = vsel %vm3831, %v6960, %v6353
  %v7025 = vsel %vm3831, %v6961, %v6355
  %v7026 = vsel %vm3831, %v6962, %v6357
  %v7027 = vsel %vm3831, %v6963, %v6359
  %v7028 = vsel %vm3831, %v6964, %v6361
  %v7029 = vsel %vm3831, %v6965, %v6363
  %v7030 = vsel %vm3831, %v6966, %v6365
  %v7031 = vsel %vm3831, %v6967, %v6367
  %v7032 = vsel %vm3831, %v6968, %v6369
  %v7033 = vsel %vm3831, %v6969, %v6371
  %v7034 = vsel %vm3831, %v6970, %v6373
  %v7035 = vsel %vm3831, %v6971, %v6375
  %v7036 = vsel %vm3831, %v6972, %v6377
  %v7037 = vsel %vm3831, %v6973, %v6379
  %v7038 = vsel %vm3831, %v6974, %v6381
  %v7039 = vsel %vm3831, %v6975, %v6383
  %v7040 = vsel %vm3831, %v6976, %v6385
  %v7041 = vsel %vm3831, %v6977, %v6387
  %v7042 = vsel %vm3831, %v6978, %v6389
  %v7043 = vsel %vm3831, %v6979, %v6391
  %v7044 = vsel %vm3831, %v6980, %v6393
  %v7045 = vsel %vm3831, %v6981, %v6395
  %v7046 = vsel %vm3831, %v6982, %v6397
  %v7047 = vsel %vm3831, %v6983, %v6399
  %v7048 = vsel %vm3831, %v6984, %v6401
  %v7049 = vsel %vm3831, %v6985, %v6403
  %v7050 = vsel %vm3831, %v6986, %v6405
  %v7051 = vsel %vm3831, %v6987, %v6407
  %v7052 = vsel %vm3831, %v6988, %v6409
  %v7053 = vsel %vm3831, %v6989, %v6411
  %v7054 = vsel %vm3831, %v6990, %v6413
  %v7055 = vsel %vm6862, %v6991, %v6543
  %v7056 = vsel %vm6862, %v6992, %v6545
  %v7057 = vsel %vm6862, %v6993, %v6547
  %v7058 = vsel %vm6862, %v6994, %v6549
  %v7059 = vsel %vm6862, %v6995, %v6551
  %v7060 = vsel %vm6862, %v6996, %v6553
  %v7061 = vsel %vm6862, %v6997, %v6555
  %v7062 = vsel %vm6862, %v6998, %v6557
  %v7063 = vsel %vm6862, %v6999, %v6559
  %v7064 = vsel %vm6862, %v7000, %v6561
  %v7065 = vsel %vm6862, %v7001, %v6563
  %v7066 = vsel %vm6862, %v7002, %v6565
  %v7067 = vsel %vm6862, %v7003, %v6567
  %v7068 = vsel %vm6862, %v7004, %v6569
  %v7069 = vsel %vm6862, %v7005, %v6571
  %v7070 = vsel %vm6862, %v7006, %v6573
  %v7071 = vsel %vm6862, %v7007, %v6575
  %v7072 = vsel %vm6862, %v7008, %v6577
  %v7073 = vsel %vm6862, %v7009, %v6579
  %v7074 = vsel %vm6862, %v7010, %v6581
  %v7075 = vsel %vm6862, %v7011, %v6583
  %v7076 = vsel %vm6862, %v7012, %v6585
  %v7077 = vsel %vm6862, %v7013, %v6587
  %v7078 = vsel %vm6862, %v7014, %v6589
  %v7079 = vsel %vm6862, %v7015, %v6591
  %v7080 = vsel %vm6862, %v7016, %v6593
  %v7081 = vsel %vm6862, %v7017, %v6595
  %v7082 = vsel %vm6862, %v7018, %v6597
  %v7083 = vsel %vm6862, %v7019, %v6599
  %v7084 = vsel %vm6862, %v7020, %v6601
  %v7085 = vsel %vm6862, %v7021, %v6603
  %v7086 = vsel %vm6862, %v7022, %v6605
  %v7087 = vsel %vm6862, %v7023, %v6607
  %v7088 = vsel %vm6862, %v7024, %v6609
  %v7089 = vsel %vm6862, %v7025, %v6611
  %v7090 = vsel %vm6862, %v7026, %v6613
  %v7091 = vsel %vm6862, %v7027, %v6615
  %v7092 = vsel %vm6862, %v7028, %v6617
  %v7093 = vsel %vm6862, %v7029, %v6619
  %v7094 = vsel %vm6862, %v7030, %v6621
  %v7095 = vsel %vm6862, %v7031, %v6623
  %v7096 = vsel %vm6862, %v7032, %v6625
  %v7097 = vsel %vm6862, %v7033, %v6627
  %v7098 = vsel %vm6862, %v7034, %v6629
  %v7099 = vsel %vm6862, %v7035, %v6631
  %v7100 = vsel %vm6862, %v7036, %v6633
  %v7101 = vsel %vm6862, %v7037, %v6635
  %v7102 = vsel %vm6862, %v7038, %v6637
  %v7103 = vsel %vm6862, %v7039, %v6639
  %v7104 = vsel %vm6862, %v7040, %v6641
  %v7105 = vsel %vm6862, %v7041, %v6643
  %v7106 = vsel %vm6862, %v7042, %v6645
  %v7107 = vsel %vm6862, %v7043, %v6647
  %v7108 = vsel %vm6862, %v7044, %v6649
  %v7109 = vsel %vm6862, %v7045, %v6651
  %v7110 = vsel %vm6862, %v7046, %v6653
  %v7111 = vsel %vm6862, %v7047, %v6655
  %v7112 = vsel %vm6862, %v7048, %v6657
  %v7113 = vsel %vm6862, %v7049, %v6659
  %v7114 = vsel %vm6862, %v7050, %v6661
  %v7115 = vsel %vm6862, %v7051, %v6663
  %v7116 = vsel %vm6862, %v7052, %v6665
  %v7117 = vsel %vm6862, %v7053, %v6667
  %v7118 = vsel %vm6862, %v7054, %v6669
  %v7119 = vpack.c.bf16 %v6864, %v6863
  %v7120 = vpack.c.bf16 %v7056, %v7055
  %v7121 = vpack.c.bf16 %v5135, %v5134
  %v7122 = vpack.c.bf16 %v6866, %v6865
  %v7123 = vpack.c.bf16 %v7058, %v7057
  %v7124 = vpack.c.bf16 %v5137, %v5136
  %v7125 = vpack.c.bf16 %v6868, %v6867
  %v7126 = vpack.c.bf16 %v7060, %v7059
  %v7127 = vpack.c.bf16 %v5139, %v5138
  %v7128 = vpack.c.bf16 %v6870, %v6869
  %v7129 = vpack.c.bf16 %v7062, %v7061
  %v7130 = vpack.c.bf16 %v5141, %v5140
  %v7131 = vpack.c.bf16 %v6872, %v6871
  %v7132 = vpack.c.bf16 %v7064, %v7063
  %v7133 = vpack.c.bf16 %v5143, %v5142
  %v7134 = vpack.c.bf16 %v6874, %v6873
  %v7135 = vpack.c.bf16 %v7066, %v7065
  %v7136 = vpack.c.bf16 %v5145, %v5144
  %v7137 = vpack.c.bf16 %v6876, %v6875
  %v7138 = vpack.c.bf16 %v7068, %v7067
  %v7139 = vpack.c.bf16 %v5147, %v5146
  %v7140 = vpack.c.bf16 %v6878, %v6877
  %v7141 = vpack.c.bf16 %v7070, %v7069
  %v7142 = vpack.c.bf16 %v5149, %v5148
  %v7143 = vpack.c.bf16 %v6880, %v6879
  %v7144 = vpack.c.bf16 %v7072, %v7071
  %v7145 = vpack.c.bf16 %v5151, %v5150
  %v7146 = vpack.c.bf16 %v6882, %v6881
  %v7147 = vpack.c.bf16 %v7074, %v7073
  %v7148 = vpack.c.bf16 %v5153, %v5152
  %v7149 = vpack.c.bf16 %v6884, %v6883
  %v7150 = vpack.c.bf16 %v7076, %v7075
  %v7151 = vpack.c.bf16 %v5155, %v5154
  %v7152 = vpack.c.bf16 %v6886, %v6885
  %v7153 = vpack.c.bf16 %v7078, %v7077
  %v7154 = vpack.c.bf16 %v5157, %v5156
  %v7155 = vpack.c.bf16 %v6888, %v6887
  %v7156 = vpack.c.bf16 %v7080, %v7079
  %v7157 = vpack.c.bf16 %v5159, %v5158
  %v7158 = vpack.c.bf16 %v6890, %v6889
  %v7159 = vpack.c.bf16 %v7082, %v7081
  %v7160 = vpack.c.bf16 %v5161, %v5160
  %v7161 = vpack.c.bf16 %v6892, %v6891
  %v7162 = vpack.c.bf16 %v7084, %v7083
  %v7163 = vpack.c.bf16 %v5163, %v5162
  %v7164 = vpack.c.bf16 %v6894, %v6893
  %v7165 = vpack.c.bf16 %v7086, %v7085
  %v7166 = vpack.c.bf16 %v5165, %v5164
  %v7167 = vpack.c.bf16 %v6896, %v6895
  %v7168 = vpack.c.bf16 %v7088, %v7087
  %v7169 = vpack.c.bf16 %v5167, %v5166
  %v7170 = vpack.c.bf16 %v6898, %v6897
  %v7171 = vpack.c.bf16 %v7090, %v7089
  %v7172 = vpack.c.bf16 %v5169, %v5168
  %v7173 = vpack.c.bf16 %v6900, %v6899
  %v7174 = vpack.c.bf16 %v7092, %v7091
  %v7175 = vpack.c.bf16 %v5171, %v5170
  %v7176 = vpack.c.bf16 %v6902, %v6901
  %v7177 = vpack.c.bf16 %v7094, %v7093
  %v7178 = vpack.c.bf16 %v5173, %v5172
  %v7179 = vpack.c.bf16 %v6904, %v6903
  %v7180 = vpack.c.bf16 %v7096, %v7095
  %v7181 = vpack.c.bf16 %v5175, %v5174
  %v7182 = vpack.c.bf16 %v6906, %v6905
  %v7183 = vpack.c.bf16 %v7098, %v7097
  %v7184 = vpack.c.bf16 %v5177, %v5176
  %v7185 = vpack.c.bf16 %v6908, %v6907
  %v7186 = vpack.c.bf16 %v7100, %v7099
  %v7187 = vpack.c.bf16 %v5179, %v5178
  %v7188 = vpack.c.bf16 %v6910, %v6909
  %v7189 = vpack.c.bf16 %v7102, %v7101
  %v7190 = vpack.c.bf16 %v5181, %v5180
  %v7191 = vpack.c.bf16 %v6912, %v6911
  %v7192 = vpack.c.bf16 %v7104, %v7103
  %v7193 = vpack.c.bf16 %v5183, %v5182
  %v7194 = vpack.c.bf16 %v6914, %v6913
  %v7195 = vpack.c.bf16 %v7106, %v7105
  %v7196 = vpack.c.bf16 %v5185, %v5184
  %v7197 = vpack.c.bf16 %v6916, %v6915
  %v7198 = vpack.c.bf16 %v7108, %v7107
  %v7199 = vpack.c.bf16 %v5187, %v5186
  %v7200 = vpack.c.bf16 %v6918, %v6917
  %v7201 = vpack.c.bf16 %v7110, %v7109
  %v7202 = vpack.c.bf16 %v5189, %v5188
  %v7203 = vpack.c.bf16 %v6920, %v6919
  %v7204 = vpack.c.bf16 %v7112, %v7111
  %v7205 = vpack.c.bf16 %v5191, %v5190
  %v7206 = vpack.c.bf16 %v6922, %v6921
  %v7207 = vpack.c.bf16 %v7114, %v7113
  %v7208 = vpack.c.bf16 %v5193, %v5192
  %v7209 = vpack.c.bf16 %v6924, %v6923
  %v7210 = vpack.c.bf16 %v7116, %v7115
  %v7211 = vpack.c.bf16 %v5195, %v5194
  %v7212 = vpack.c.bf16 %v6926, %v6925
  %v7213 = vpack.c.bf16 %v7118, %v7117
  %v7214 = vpack.c.bf16 %v5197, %v5196
  %v7215 = vld [vmem:[%s5] sm:$0xf]
  %v7216 = vld [vmem:[%s5 + $0x4] sm:$0xf]
  %v7217 = vld [vmem:[%s5 + $0x8] sm:$0xf]
  %v7218 = vld [vmem:[%s5 + $0xc] sm:$0xf]
  %v7219 = vld [vmem:[%s5 + $0x10] sm:$0xf]
  %v7220 = vld [vmem:[%s5 + $0x14] sm:$0xf]
  %v7221 = vld [vmem:[%s5 + $0x18] sm:$0xf]
  %v7222 = vld [vmem:[%s5 + $0x1c] sm:$0xf]
  %v7223 = vld [vmem:[%s5 + $0x20] sm:$0xf]
  %v7224 = vld [vmem:[%s5 + $0x24] sm:$0xf]
  %v7225 = vld [vmem:[%s5 + $0x28] sm:$0xf]
  %v7226 = vld [vmem:[%s5 + $0x2c] sm:$0xf]
  %v7227 = vld [vmem:[%s5 + $0x30] sm:$0xf]
  %v7228 = vld [vmem:[%s5 + $0x34] sm:$0xf]
  %v7229 = vld [vmem:[%s5 + $0x38] sm:$0xf]
  %v7230 = vld [vmem:[%s5 + $0x3c] sm:$0xf]
  %v7231 = vld [vmem:[%s5 + $0x40] sm:$0xf]
  %v7232 = vld [vmem:[%s5 + $0x44] sm:$0xf]
  %v7233 = vld [vmem:[%s5 + $0x48] sm:$0xf]
  %v7234 = vld [vmem:[%s5 + $0x4c] sm:$0xf]
  %v7235 = vld [vmem:[%s5 + $0x50] sm:$0xf]
  %v7236 = vld [vmem:[%s5 + $0x54] sm:$0xf]
  %v7237 = vld [vmem:[%s5 + $0x58] sm:$0xf]
  %v7238 = vld [vmem:[%s5 + $0x5c] sm:$0xf]
  %v7239 = vld [vmem:[%s5 + $0x60] sm:$0xf]
  %v7240 = vld [vmem:[%s5 + $0x64] sm:$0xf]
  %v7241 = vld [vmem:[%s5 + $0x68] sm:$0xf]
  %v7242 = vld [vmem:[%s5 + $0x6c] sm:$0xf]
  %v7243 = vld [vmem:[%s5 + $0x70] sm:$0xf]
  %v7244 = vld [vmem:[%s5 + $0x74] sm:$0xf]
  %v7245 = vld [vmem:[%s5 + $0x78] sm:$0xf]
  %v7246 = vld [vmem:[%s5 + $0x7c] sm:$0xf]
  %v7247 = vld [vmem:[%s5 + $0x80] sm:$0xf]
  %v7248 = vld [vmem:[%s5 + $0x84] sm:$0xf]
  %v7249 = vld [vmem:[%s5 + $0x88] sm:$0xf]
  %v7250 = vld [vmem:[%s5 + $0x8c] sm:$0xf]
  %v7251 = vld [vmem:[%s6] sm:$0x1]
  %v7253 = vlaneseq
  %v7254 = vshrl.u32 %v7253, 7
  %v7255 = vsub.s32 0, %v7254
  %v7256 = vrot.slane %v7251, %v7255
  %v7294 = vunpack.c.l.b16 %v7215
  %v7295 = vunpack.c.l.b16 %v7216
  %v7296 = vunpack.c.l.b16 %v7217
  %v7297 = vunpack.c.l.b16 %v7218
  %v7298 = vunpack.c.l.b16 %v7219
  %v7299 = vunpack.c.l.b16 %v7220
  %v7300 = vunpack.c.l.b16 %v7221
  %v7301 = vunpack.c.l.b16 %v7222
  %v7302 = vunpack.c.l.b16 %v7223
  %v7303 = vunpack.c.l.b16 %v7224
  %v7304 = vunpack.c.l.b16 %v7225
  %v7305 = vunpack.c.l.b16 %v7226
  %v7306 = vunpack.c.l.b16 %v7227
  %v7307 = vunpack.c.l.b16 %v7228
  %v7308 = vunpack.c.l.b16 %v7229
  %v7309 = vunpack.c.l.b16 %v7230
  %v7310 = vunpack.c.l.b16 %v7231
  %v7311 = vunpack.c.l.b16 %v7232
  %v7312 = vunpack.c.l.b16 %v7233
  %v7313 = vunpack.c.l.b16 %v7234
  %v7314 = vunpack.c.l.b16 %v7235
  %v7315 = vunpack.c.l.b16 %v7236
  %v7316 = vunpack.c.l.b16 %v7237
  %v7317 = vunpack.c.l.b16 %v7238
  %v7318 = vunpack.c.l.b16 %v7239
  %v7319 = vunpack.c.l.b16 %v7240
  %v7320 = vunpack.c.l.b16 %v7241
  %v7321 = vunpack.c.l.b16 %v7242
  %v7322 = vunpack.c.l.b16 %v7243
  %v7323 = vunpack.c.l.b16 %v7244
  %v7324 = vunpack.c.l.b16 %v7245
  %v7325 = vunpack.c.l.b16 %v7246
  %v7326 = vunpack.c.l.b16 %v7247
  %v7327 = vunpack.c.l.b16 %v7248
  %v7328 = vunpack.c.l.b16 %v7249
  %v7329 = vunpack.c.l.b16 %v7250
  %v7330 = vpack.c.b16 %v7295, %v7294
  %v7331 = vpack.c.b16 %v7297, %v7296
  %v7332 = vpack.c.b16 %v7299, %v7298
  %v7333 = vpack.c.b16 %v7301, %v7300
  %v7334 = vpack.c.b16 %v7303, %v7302
  %v7335 = vpack.c.b16 %v7305, %v7304
  %v7336 = vpack.c.b16 %v7307, %v7306
  %v7337 = vpack.c.b16 %v7309, %v7308
  %v7338 = vpack.c.b16 %v7311, %v7310
  %v7339 = vpack.c.b16 %v7313, %v7312
  %v7340 = vpack.c.b16 %v7315, %v7314
  %v7341 = vpack.c.b16 %v7317, %v7316
  %v7342 = vpack.c.b16 %v7319, %v7318
  %v7343 = vpack.c.b16 %v7321, %v7320
  %v7344 = vpack.c.b16 %v7323, %v7322
  %v7345 = vpack.c.b16 %v7325, %v7324
  %v7346 = vpack.c.b16 %v7327, %v7326
  %v7347 = vpack.c.b16 %v7329, %v7328
  %v7367 = vsel %vm665, %v7121, 0
  %v7370 = vsel %vm665, %v7124, 0
  %v7373 = vsel %vm665, %v7127, 0
  %v7376 = vsel %vm665, %v7130, 0
  %v7379 = vsel %vm665, %v7133, 0
  %v7382 = vsel %vm665, %v7136, 0
  %v7385 = vsel %vm665, %v7139, 0
  %v7388 = vsel %vm665, %v7142, 0
  %v7391 = vsel %vm665, %v7145, 0
  %v7394 = vsel %vm665, %v7148, 0
  %v7397 = vsel %vm665, %v7151, 0
  %v7400 = vsel %vm665, %v7154, 0
  %v7403 = vsel %vm665, %v7157, 0
  %v7406 = vsel %vm665, %v7160, 0
  %v7409 = vsel %vm665, %v7163, 0
  %v7412 = vsel %vm665, %v7166, 0
  %v7415 = vsel %vm665, %v7169, 0
  %v7418 = vsel %vm665, %v7172, 0
  %v7421 = vsel %vm665, %v7175, 0
  %v7424 = vsel %vm665, %v7178, 0
  %v7427 = vsel %vm665, %v7181, 0
  %v7430 = vsel %vm665, %v7184, 0
  %v7433 = vsel %vm665, %v7187, 0
  %v7436 = vsel %vm665, %v7190, 0
  %v7439 = vsel %vm665, %v7193, 0
  %v7442 = vsel %vm665, %v7196, 0
  %v7445 = vsel %vm665, %v7199, 0
  %v7448 = vsel %vm665, %v7202, 0
  %v7451 = vsel %vm665, %v7205, 0
  %v7454 = vsel %vm665, %v7208, 0
  %v7457 = vsel %vm665, %v7211, 0
  %v7460 = vsel %vm665, %v7214, 0
  %7462 = vmatprep.subr.bf16.mxu0 0
  %7463 = vmatpush1.bf16.msra.mxu0 %v7337
  %7464 = vmatprep.subr.bf16.mxu0 0
  %7465 = vmatpush1.bf16.msra.mxu0 %v7336
  %7466 = vmatprep.subr.bf16.mxu0 0
  %7467 = vmatpush1.bf16.msra.mxu0 %v7335
  %7468 = vmatprep.subr.bf16.mxu0 0
  %7469 = vmatpush1.bf16.msra.mxu0 %v7334
  %7470 = vmatprep.subr.bf16.mxu0 0
  %7471 = vmatpush1.bf16.msra.mxu0 %v7333
  %7472 = vmatprep.subr.bf16.mxu0 0
  %7473 = vmatpush1.bf16.msra.mxu0 %v7332
  %7474 = vmatprep.subr.bf16.mxu0 0
  %7475 = vmatpush1.bf16.msra.mxu0 %v7331
  %7476 = vmatprep.subr.bf16.mxu0 0
  %7477 = vmatpush1.bf16.msra.mxu0 %v7330
  %7478 = vmatprep.subr.bf16.mxu0 0
  %7479 = vmatpush2.bf16.msra.mxu0 %v7345
  %7480 = vmatprep.subr.bf16.mxu0 0
  %7481 = vmatpush2.bf16.msra.mxu0 %v7344
  %7482 = vmatprep.subr.bf16.mxu0 0
  %7483 = vmatpush2.bf16.msra.mxu0 %v7343
  %7484 = vmatprep.subr.bf16.mxu0 0
  %7485 = vmatpush2.bf16.msra.mxu0 %v7342
  %7486 = vmatprep.subr.bf16.mxu0 0
  %7487 = vmatpush2.bf16.msra.mxu0 %v7341
  %7488 = vmatprep.subr.bf16.mxu0 0
  %7489 = vmatpush2.bf16.msra.mxu0 %v7340
  %7490 = vmatprep.subr.bf16.mxu0 0
  %7491 = vmatpush2.bf16.msra.mxu0 %v7339
  %7492 = vmatprep.subr.bf16.mxu0 0
  %7493 = vmatpush2.bf16.msra.mxu0 %v7338
  %7494 = vmatprep.mubr.bf16.mxu0 %v7120
  %7495 = vmatmul.mubr.bf16.gmra.mxu0 %v7119
  %v7496 = vpop.f32.mrf.mxu0
  %v7497 = vadd.f32 %v7256, %v7496
  %v7498 = vpop.f32.mrf.mxu0
  %v7499 = vpop.f32.mrf.mxu0
  %v7500 = vadd.f32 %v7256, %v7499
  %v7501 = vpop.f32.mrf.mxu0
  %7502 = vmatprep.mubr.bf16.mxu0 %v7123
  %7503 = vmatmul.mubr.bf16.gmra.mxu0 %v7122
  %v7504 = vpop.f32.mrf.mxu0
  %v7505 = vadd.f32 %v7256, %v7504
  %v7506 = vpop.f32.mrf.mxu0
  %v7507 = vpop.f32.mrf.mxu0
  %v7508 = vadd.f32 %v7256, %v7507
  %v7509 = vpop.f32.mrf.mxu0
  %7510 = vmatprep.mubr.bf16.mxu0 %v7126
  %7511 = vmatmul.mubr.bf16.gmra.mxu0 %v7125
  %v7512 = vpop.f32.mrf.mxu0
  %v7513 = vadd.f32 %v7256, %v7512
  %v7514 = vpop.f32.mrf.mxu0
  %v7515 = vpop.f32.mrf.mxu0
  %v7516 = vadd.f32 %v7256, %v7515
  %v7517 = vpop.f32.mrf.mxu0
  %7518 = vmatprep.mubr.bf16.mxu0 %v7129
  %7519 = vmatmul.mubr.bf16.gmra.mxu0 %v7128
  %v7520 = vpop.f32.mrf.mxu0
  %v7521 = vadd.f32 %v7256, %v7520
  %v7522 = vpop.f32.mrf.mxu0
  %v7523 = vpop.f32.mrf.mxu0
  %v7524 = vadd.f32 %v7256, %v7523
  %v7525 = vpop.f32.mrf.mxu0
  %7526 = vmatprep.mubr.bf16.mxu0 %v7132
  %7527 = vmatmul.mubr.bf16.gmra.mxu0 %v7131
  %v7528 = vpop.f32.mrf.mxu0
  %v7529 = vadd.f32 %v7256, %v7528
  %v7530 = vpop.f32.mrf.mxu0
  %v7531 = vpop.f32.mrf.mxu0
  %v7532 = vadd.f32 %v7256, %v7531
  %v7533 = vpop.f32.mrf.mxu0
  %7534 = vmatprep.mubr.bf16.mxu0 %v7135
  %7535 = vmatmul.mubr.bf16.gmra.mxu0 %v7134
  %v7536 = vpop.f32.mrf.mxu0
  %v7537 = vadd.f32 %v7256, %v7536
  %v7538 = vpop.f32.mrf.mxu0
  %v7539 = vpop.f32.mrf.mxu0
  %v7540 = vadd.f32 %v7256, %v7539
  %v7541 = vpop.f32.mrf.mxu0
  %7542 = vmatprep.mubr.bf16.mxu0 %v7138
  %7543 = vmatmul.mubr.bf16.gmra.mxu0 %v7137
  %v7544 = vpop.f32.mrf.mxu0
  %v7545 = vadd.f32 %v7256, %v7544
  %v7546 = vpop.f32.mrf.mxu0
  %v7547 = vpop.f32.mrf.mxu0
  %v7548 = vadd.f32 %v7256, %v7547
  %v7549 = vpop.f32.mrf.mxu0
  %7550 = vmatprep.mubr.bf16.mxu0 %v7141
  %7551 = vmatmul.mubr.bf16.gmra.mxu0 %v7140
  %v7552 = vpop.f32.mrf.mxu0
  %v7553 = vadd.f32 %v7256, %v7552
  %v7554 = vpop.f32.mrf.mxu0
  %v7555 = vpop.f32.mrf.mxu0
  %v7556 = vadd.f32 %v7256, %v7555
  %v7557 = vpop.f32.mrf.mxu0
  %7558 = vmatprep.mubr.bf16.mxu0 %v7144
  %7559 = vmatmul.mubr.bf16.gmra.mxu0 %v7143
  %v7560 = vpop.f32.mrf.mxu0
  %v7561 = vadd.f32 %v7256, %v7560
  %v7562 = vpop.f32.mrf.mxu0
  %v7563 = vpop.f32.mrf.mxu0
  %v7564 = vadd.f32 %v7256, %v7563
  %v7565 = vpop.f32.mrf.mxu0
  %7566 = vmatprep.mubr.bf16.mxu0 %v7147
  %7567 = vmatmul.mubr.bf16.gmra.mxu0 %v7146
  %v7568 = vpop.f32.mrf.mxu0
  %v7569 = vadd.f32 %v7256, %v7568
  %v7570 = vpop.f32.mrf.mxu0
  %v7571 = vpop.f32.mrf.mxu0
  %v7572 = vadd.f32 %v7256, %v7571
  %v7573 = vpop.f32.mrf.mxu0
  %7574 = vmatprep.mubr.bf16.mxu0 %v7150
  %7575 = vmatmul.mubr.bf16.gmra.mxu0 %v7149
  %v7576 = vpop.f32.mrf.mxu0
  %v7577 = vadd.f32 %v7256, %v7576
  %v7578 = vpop.f32.mrf.mxu0
  %v7579 = vpop.f32.mrf.mxu0
  %v7580 = vadd.f32 %v7256, %v7579
  %v7581 = vpop.f32.mrf.mxu0
  %7582 = vmatprep.mubr.bf16.mxu0 %v7153
  %7583 = vmatmul.mubr.bf16.gmra.mxu0 %v7152
  %v7584 = vpop.f32.mrf.mxu0
  %v7585 = vadd.f32 %v7256, %v7584
  %v7586 = vpop.f32.mrf.mxu0
  %v7587 = vpop.f32.mrf.mxu0
  %v7588 = vadd.f32 %v7256, %v7587
  %v7589 = vpop.f32.mrf.mxu0
  %7590 = vmatprep.mubr.bf16.mxu0 %v7156
  %7591 = vmatmul.mubr.bf16.gmra.mxu0 %v7155
  %v7592 = vpop.f32.mrf.mxu0
  %v7593 = vadd.f32 %v7256, %v7592
  %v7594 = vpop.f32.mrf.mxu0
  %v7595 = vpop.f32.mrf.mxu0
  %v7596 = vadd.f32 %v7256, %v7595
  %v7597 = vpop.f32.mrf.mxu0
  %7598 = vmatprep.mubr.bf16.mxu0 %v7159
  %7599 = vmatmul.mubr.bf16.gmra.mxu0 %v7158
  %v7600 = vpop.f32.mrf.mxu0
  %v7601 = vadd.f32 %v7256, %v7600
  %v7602 = vpop.f32.mrf.mxu0
  %v7603 = vpop.f32.mrf.mxu0
  %v7604 = vadd.f32 %v7256, %v7603
  %v7605 = vpop.f32.mrf.mxu0
  %7606 = vmatprep.mubr.bf16.mxu0 %v7162
  %7607 = vmatmul.mubr.bf16.gmra.mxu0 %v7161
  %v7608 = vpop.f32.mrf.mxu0
  %v7609 = vadd.f32 %v7256, %v7608
  %v7610 = vpop.f32.mrf.mxu0
  %v7611 = vpop.f32.mrf.mxu0
  %v7612 = vadd.f32 %v7256, %v7611
  %v7613 = vpop.f32.mrf.mxu0
  %7614 = vmatprep.mubr.bf16.mxu0 %v7165
  %7615 = vmatmul.mubr.bf16.gmra.mxu0 %v7164
  %v7616 = vpop.f32.mrf.mxu0
  %v7617 = vadd.f32 %v7256, %v7616
  %v7618 = vpop.f32.mrf.mxu0
  %v7619 = vpop.f32.mrf.mxu0
  %v7620 = vadd.f32 %v7256, %v7619
  %v7621 = vpop.f32.mrf.mxu0
  %7622 = vmatprep.mubr.bf16.mxu0 %v7168
  %7623 = vmatmul.mubr.bf16.gmra.mxu0 %v7167
  %v7624 = vpop.f32.mrf.mxu0
  %v7625 = vadd.f32 %v7256, %v7624
  %v7626 = vpop.f32.mrf.mxu0
  %v7627 = vpop.f32.mrf.mxu0
  %v7628 = vadd.f32 %v7256, %v7627
  %v7629 = vpop.f32.mrf.mxu0
  %7630 = vmatprep.mubr.bf16.mxu0 %v7171
  %7631 = vmatmul.mubr.bf16.gmra.mxu0 %v7170
  %v7632 = vpop.f32.mrf.mxu0
  %v7633 = vadd.f32 %v7256, %v7632
  %v7634 = vpop.f32.mrf.mxu0
  %v7635 = vpop.f32.mrf.mxu0
  %v7636 = vadd.f32 %v7256, %v7635
  %v7637 = vpop.f32.mrf.mxu0
  %7638 = vmatprep.mubr.bf16.mxu0 %v7174
  %7639 = vmatmul.mubr.bf16.gmra.mxu0 %v7173
  %v7640 = vpop.f32.mrf.mxu0
  %v7641 = vadd.f32 %v7256, %v7640
  %v7642 = vpop.f32.mrf.mxu0
  %v7643 = vpop.f32.mrf.mxu0
  %v7644 = vadd.f32 %v7256, %v7643
  %v7645 = vpop.f32.mrf.mxu0
  %7646 = vmatprep.mubr.bf16.mxu0 %v7177
  %7647 = vmatmul.mubr.bf16.gmra.mxu0 %v7176
  %v7648 = vpop.f32.mrf.mxu0
  %v7649 = vadd.f32 %v7256, %v7648
  %v7650 = vpop.f32.mrf.mxu0
  %v7651 = vpop.f32.mrf.mxu0
  %v7652 = vadd.f32 %v7256, %v7651
  %v7653 = vpop.f32.mrf.mxu0
  %7654 = vmatprep.mubr.bf16.mxu0 %v7180
  %7655 = vmatmul.mubr.bf16.gmra.mxu0 %v7179
  %v7656 = vpop.f32.mrf.mxu0
  %v7657 = vadd.f32 %v7256, %v7656
  %v7658 = vpop.f32.mrf.mxu0
  %v7659 = vpop.f32.mrf.mxu0
  %v7660 = vadd.f32 %v7256, %v7659
  %v7661 = vpop.f32.mrf.mxu0
  %7662 = vmatprep.mubr.bf16.mxu0 %v7183
  %7663 = vmatmul.mubr.bf16.gmra.mxu0 %v7182
  %v7664 = vpop.f32.mrf.mxu0
  %v7665 = vadd.f32 %v7256, %v7664
  %v7666 = vpop.f32.mrf.mxu0
  %v7667 = vpop.f32.mrf.mxu0
  %v7668 = vadd.f32 %v7256, %v7667
  %v7669 = vpop.f32.mrf.mxu0
  %7670 = vmatprep.mubr.bf16.mxu0 %v7186
  %7671 = vmatmul.mubr.bf16.gmra.mxu0 %v7185
  %v7672 = vpop.f32.mrf.mxu0
  %v7673 = vadd.f32 %v7256, %v7672
  %v7674 = vpop.f32.mrf.mxu0
  %v7675 = vpop.f32.mrf.mxu0
  %v7676 = vadd.f32 %v7256, %v7675
  %v7677 = vpop.f32.mrf.mxu0
  %7678 = vmatprep.mubr.bf16.mxu0 %v7189
  %7679 = vmatmul.mubr.bf16.gmra.mxu0 %v7188
  %v7680 = vpop.f32.mrf.mxu0
  %v7681 = vadd.f32 %v7256, %v7680
  %v7682 = vpop.f32.mrf.mxu0
  %v7683 = vpop.f32.mrf.mxu0
  %v7684 = vadd.f32 %v7256, %v7683
  %v7685 = vpop.f32.mrf.mxu0
  %7686 = vmatprep.mubr.bf16.mxu0 %v7192
  %7687 = vmatmul.mubr.bf16.gmra.mxu0 %v7191
  %v7688 = vpop.f32.mrf.mxu0
  %v7689 = vadd.f32 %v7256, %v7688
  %v7690 = vpop.f32.mrf.mxu0
  %v7691 = vpop.f32.mrf.mxu0
  %v7692 = vadd.f32 %v7256, %v7691
  %v7693 = vpop.f32.mrf.mxu0
  %7694 = vmatprep.mubr.bf16.mxu0 %v7195
  %7695 = vmatmul.mubr.bf16.gmra.mxu0 %v7194
  %v7696 = vpop.f32.mrf.mxu0
  %v7697 = vadd.f32 %v7256, %v7696
  %v7698 = vpop.f32.mrf.mxu0
  %v7699 = vpop.f32.mrf.mxu0
  %v7700 = vadd.f32 %v7256, %v7699
  %v7701 = vpop.f32.mrf.mxu0
  %7702 = vmatprep.mubr.bf16.mxu0 %v7198
  %7703 = vmatmul.mubr.bf16.gmra.mxu0 %v7197
  %v7704 = vpop.f32.mrf.mxu0
  %v7705 = vadd.f32 %v7256, %v7704
  %v7706 = vpop.f32.mrf.mxu0
  %v7707 = vpop.f32.mrf.mxu0
  %v7708 = vadd.f32 %v7256, %v7707
  %v7709 = vpop.f32.mrf.mxu0
  %7710 = vmatprep.mubr.bf16.mxu0 %v7201
  %7711 = vmatmul.mubr.bf16.gmra.mxu0 %v7200
  %v7712 = vpop.f32.mrf.mxu0
  %v7713 = vadd.f32 %v7256, %v7712
  %v7714 = vpop.f32.mrf.mxu0
  %v7715 = vpop.f32.mrf.mxu0
  %v7716 = vadd.f32 %v7256, %v7715
  %v7717 = vpop.f32.mrf.mxu0
  %7718 = vmatprep.mubr.bf16.mxu0 %v7204
  %7719 = vmatmul.mubr.bf16.gmra.mxu0 %v7203
  %v7720 = vpop.f32.mrf.mxu0
  %v7721 = vadd.f32 %v7256, %v7720
  %v7722 = vpop.f32.mrf.mxu0
  %v7723 = vpop.f32.mrf.mxu0
  %v7724 = vadd.f32 %v7256, %v7723
  %v7725 = vpop.f32.mrf.mxu0
  %7726 = vmatprep.mubr.bf16.mxu0 %v7207
  %7727 = vmatmul.mubr.bf16.gmra.mxu0 %v7206
  %v7728 = vpop.f32.mrf.mxu0
  %v7729 = vadd.f32 %v7256, %v7728
  %v7730 = vpop.f32.mrf.mxu0
  %v7731 = vpop.f32.mrf.mxu0
  %v7732 = vadd.f32 %v7256, %v7731
  %v7733 = vpop.f32.mrf.mxu0
  %7734 = vmatprep.mubr.bf16.mxu0 %v7210
  %7735 = vmatmul.mubr.bf16.gmra.mxu0 %v7209
  %v7736 = vpop.f32.mrf.mxu0
  %v7737 = vadd.f32 %v7256, %v7736
  %v7738 = vpop.f32.mrf.mxu0
  %v7739 = vpop.f32.mrf.mxu0
  %v7740 = vadd.f32 %v7256, %v7739
  %v7741 = vpop.f32.mrf.mxu0
  %7742 = vmatprep.mubr.bf16.mxu0 %v7213
  %7743 = vmatmul.mubr.bf16.gmra.mxu0 %v7212
  %v7744 = vpop.f32.mrf.mxu0
  %v7745 = vadd.f32 %v7256, %v7744
  %v7746 = vpop.f32.mrf.mxu0
  %v7747 = vpop.f32.mrf.mxu0
  %v7748 = vadd.f32 %v7256, %v7747
  %v7749 = vpop.f32.mrf.mxu0
  %7750 = vdwg.mxu0
  %7751 = vmatprep.subr.bf16.mxu0 0
  %7752 = vmatpush1.bf16.msra.mxu0 0
  %7753 = vmatprep.subr.bf16.mxu0 0
  %7754 = vmatpush1.bf16.msra.mxu0 0
  %7755 = vmatprep.subr.bf16.mxu0 0
  %7756 = vmatpush1.bf16.msra.mxu0 0
  %7757 = vmatprep.subr.bf16.mxu0 0
  %7758 = vmatpush1.bf16.msra.mxu0 0
  %7759 = vmatprep.subr.bf16.mxu0 0
  %7760 = vmatpush1.bf16.msra.mxu0 0
  %7761 = vmatprep.subr.bf16.mxu0 0
  %7762 = vmatpush1.bf16.msra.mxu0 0
  %7763 = vmatprep.subr.bf16.mxu0 0
  %7764 = vmatpush1.bf16.msra.mxu0 %v7347
  %7765 = vmatprep.subr.bf16.mxu0 0
  %7766 = vmatpush1.bf16.msra.mxu0 %v7346
  %7767 = vmatprep.subr.bf16.mxu0 0
  %7768 = vmatpush2.bf16.msra.mxu0 0
  %7769 = vmatprep.subr.bf16.mxu0 0
  %7770 = vmatpush2.bf16.msra.mxu0 0
  %7771 = vmatprep.subr.bf16.mxu0 0
  %7772 = vmatpush2.bf16.msra.mxu0 0
  %7773 = vmatprep.subr.bf16.mxu0 0
  %7774 = vmatpush2.bf16.msra.mxu0 0
  %7775 = vmatprep.subr.bf16.mxu0 0
  %7776 = vmatpush2.bf16.msra.mxu0 0
  %7777 = vmatprep.subr.bf16.mxu0 0
  %7778 = vmatpush2.bf16.msra.mxu0 0
  %7779 = vmatprep.subr.bf16.mxu0 0
  %7780 = vmatpush2.bf16.msra.mxu0 0
  %7781 = vmatprep.subr.bf16.mxu0 0
  %7782 = vmatpush2.bf16.msra.mxu0 0
  %7783 = vmatprep.mubr.bf16.mxu0 0
  %7784 = vmatmul.mubr.bf16.gmra.mxu0 %v7367
  %v7785 = vpop.f32.mrf.mxu0
  %v7786 = vadd.f32 %v7497, %v7785
  %v7787 = vpop.f32.mrf.mxu0
  %v7788 = vpop.f32.mrf.mxu0
  %v7789 = vadd.f32 %v7500, %v7788
  %v7790 = vpop.f32.mrf.mxu0
  %7791 = vmatprep.mubr.bf16.mxu0 0
  %7792 = vmatmul.mubr.bf16.gmra.mxu0 %v7370
  %v7793 = vpop.f32.mrf.mxu0
  %v7794 = vadd.f32 %v7505, %v7793
  %v7795 = vpop.f32.mrf.mxu0
  %v7796 = vpop.f32.mrf.mxu0
  %v7797 = vadd.f32 %v7508, %v7796
  %v7798 = vpop.f32.mrf.mxu0
  %7799 = vmatprep.mubr.bf16.mxu0 0
  %7800 = vmatmul.mubr.bf16.gmra.mxu0 %v7373
  %v7801 = vpop.f32.mrf.mxu0
  %v7802 = vadd.f32 %v7513, %v7801
  %v7803 = vpop.f32.mrf.mxu0
  %v7804 = vpop.f32.mrf.mxu0
  %v7805 = vadd.f32 %v7516, %v7804
  %v7806 = vpop.f32.mrf.mxu0
  %7807 = vmatprep.mubr.bf16.mxu0 0
  %7808 = vmatmul.mubr.bf16.gmra.mxu0 %v7376
  %v7809 = vpop.f32.mrf.mxu0
  %v7810 = vadd.f32 %v7521, %v7809
  %v7811 = vpop.f32.mrf.mxu0
  %v7812 = vpop.f32.mrf.mxu0
  %v7813 = vadd.f32 %v7524, %v7812
  %v7814 = vpop.f32.mrf.mxu0
  %7815 = vmatprep.mubr.bf16.mxu0 0
  %7816 = vmatmul.mubr.bf16.gmra.mxu0 %v7379
  %v7817 = vpop.f32.mrf.mxu0
  %v7818 = vadd.f32 %v7529, %v7817
  %v7819 = vpop.f32.mrf.mxu0
  %v7820 = vpop.f32.mrf.mxu0
  %v7821 = vadd.f32 %v7532, %v7820
  %v7822 = vpop.f32.mrf.mxu0
  %7823 = vmatprep.mubr.bf16.mxu0 0
  %7824 = vmatmul.mubr.bf16.gmra.mxu0 %v7382
  %v7825 = vpop.f32.mrf.mxu0
  %v7826 = vadd.f32 %v7537, %v7825
  %v7827 = vpop.f32.mrf.mxu0
  %v7828 = vpop.f32.mrf.mxu0
  %v7829 = vadd.f32 %v7540, %v7828
  %v7830 = vpop.f32.mrf.mxu0
  %7831 = vmatprep.mubr.bf16.mxu0 0
  %7832 = vmatmul.mubr.bf16.gmra.mxu0 %v7385
  %v7833 = vpop.f32.mrf.mxu0
  %v7834 = vadd.f32 %v7545, %v7833
  %v7835 = vpop.f32.mrf.mxu0
  %v7836 = vpop.f32.mrf.mxu0
  %v7837 = vadd.f32 %v7548, %v7836
  %v7838 = vpop.f32.mrf.mxu0
  %7839 = vmatprep.mubr.bf16.mxu0 0
  %7840 = vmatmul.mubr.bf16.gmra.mxu0 %v7388
  %v7841 = vpop.f32.mrf.mxu0
  %v7842 = vadd.f32 %v7553, %v7841
  %v7843 = vpop.f32.mrf.mxu0
  %v7844 = vpop.f32.mrf.mxu0
  %v7845 = vadd.f32 %v7556, %v7844
  %v7846 = vpop.f32.mrf.mxu0
  %7847 = vmatprep.mubr.bf16.mxu0 0
  %7848 = vmatmul.mubr.bf16.gmra.mxu0 %v7391
  %v7849 = vpop.f32.mrf.mxu0
  %v7850 = vadd.f32 %v7561, %v7849
  %v7851 = vpop.f32.mrf.mxu0
  %v7852 = vpop.f32.mrf.mxu0
  %v7853 = vadd.f32 %v7564, %v7852
  %v7854 = vpop.f32.mrf.mxu0
  %7855 = vmatprep.mubr.bf16.mxu0 0
  %7856 = vmatmul.mubr.bf16.gmra.mxu0 %v7394
  %v7857 = vpop.f32.mrf.mxu0
  %v7858 = vadd.f32 %v7569, %v7857
  %v7859 = vpop.f32.mrf.mxu0
  %v7860 = vpop.f32.mrf.mxu0
  %v7861 = vadd.f32 %v7572, %v7860
  %v7862 = vpop.f32.mrf.mxu0
  %7863 = vmatprep.mubr.bf16.mxu0 0
  %7864 = vmatmul.mubr.bf16.gmra.mxu0 %v7397
  %v7865 = vpop.f32.mrf.mxu0
  %v7866 = vadd.f32 %v7577, %v7865
  %v7867 = vpop.f32.mrf.mxu0
  %v7868 = vpop.f32.mrf.mxu0
  %v7869 = vadd.f32 %v7580, %v7868
  %v7870 = vpop.f32.mrf.mxu0
  %7871 = vmatprep.mubr.bf16.mxu0 0
  %7872 = vmatmul.mubr.bf16.gmra.mxu0 %v7400
  %v7873 = vpop.f32.mrf.mxu0
  %v7874 = vadd.f32 %v7585, %v7873
  %v7875 = vpop.f32.mrf.mxu0
  %v7876 = vpop.f32.mrf.mxu0
  %v7877 = vadd.f32 %v7588, %v7876
  %v7878 = vpop.f32.mrf.mxu0
  %7879 = vmatprep.mubr.bf16.mxu0 0
  %7880 = vmatmul.mubr.bf16.gmra.mxu0 %v7403
  %v7881 = vpop.f32.mrf.mxu0
  %v7882 = vadd.f32 %v7593, %v7881
  %v7883 = vpop.f32.mrf.mxu0
  %v7884 = vpop.f32.mrf.mxu0
  %v7885 = vadd.f32 %v7596, %v7884
  %v7886 = vpop.f32.mrf.mxu0
  %7887 = vmatprep.mubr.bf16.mxu0 0
  %7888 = vmatmul.mubr.bf16.gmra.mxu0 %v7406
  %v7889 = vpop.f32.mrf.mxu0
  %v7890 = vadd.f32 %v7601, %v7889
  %v7891 = vpop.f32.mrf.mxu0
  %v7892 = vpop.f32.mrf.mxu0
  %v7893 = vadd.f32 %v7604, %v7892
  %v7894 = vpop.f32.mrf.mxu0
  %7895 = vmatprep.mubr.bf16.mxu0 0
  %7896 = vmatmul.mubr.bf16.gmra.mxu0 %v7409
  %v7897 = vpop.f32.mrf.mxu0
  %v7898 = vadd.f32 %v7609, %v7897
  %v7899 = vpop.f32.mrf.mxu0
  %v7900 = vpop.f32.mrf.mxu0
  %v7901 = vadd.f32 %v7612, %v7900
  %v7902 = vpop.f32.mrf.mxu0
  %7903 = vmatprep.mubr.bf16.mxu0 0
  %7904 = vmatmul.mubr.bf16.gmra.mxu0 %v7412
  %v7905 = vpop.f32.mrf.mxu0
  %v7906 = vadd.f32 %v7617, %v7905
  %v7907 = vpop.f32.mrf.mxu0
  %v7908 = vpop.f32.mrf.mxu0
  %v7909 = vadd.f32 %v7620, %v7908
  %v7910 = vpop.f32.mrf.mxu0
  %7911 = vmatprep.mubr.bf16.mxu0 0
  %7912 = vmatmul.mubr.bf16.gmra.mxu0 %v7415
  %v7913 = vpop.f32.mrf.mxu0
  %v7914 = vadd.f32 %v7625, %v7913
  %v7915 = vpop.f32.mrf.mxu0
  %v7916 = vpop.f32.mrf.mxu0
  %v7917 = vadd.f32 %v7628, %v7916
  %v7918 = vpop.f32.mrf.mxu0
  %7919 = vmatprep.mubr.bf16.mxu0 0
  %7920 = vmatmul.mubr.bf16.gmra.mxu0 %v7418
  %v7921 = vpop.f32.mrf.mxu0
  %v7922 = vadd.f32 %v7633, %v7921
  %v7923 = vpop.f32.mrf.mxu0
  %v7924 = vpop.f32.mrf.mxu0
  %v7925 = vadd.f32 %v7636, %v7924
  %v7926 = vpop.f32.mrf.mxu0
  %7927 = vmatprep.mubr.bf16.mxu0 0
  %7928 = vmatmul.mubr.bf16.gmra.mxu0 %v7421
  %v7929 = vpop.f32.mrf.mxu0
  %v7930 = vadd.f32 %v7641, %v7929
  %v7931 = vpop.f32.mrf.mxu0
  %v7932 = vpop.f32.mrf.mxu0
  %v7933 = vadd.f32 %v7644, %v7932
  %v7934 = vpop.f32.mrf.mxu0
  %7935 = vmatprep.mubr.bf16.mxu0 0
  %7936 = vmatmul.mubr.bf16.gmra.mxu0 %v7424
  %v7937 = vpop.f32.mrf.mxu0
  %v7938 = vadd.f32 %v7649, %v7937
  %v7939 = vpop.f32.mrf.mxu0
  %v7940 = vpop.f32.mrf.mxu0
  %v7941 = vadd.f32 %v7652, %v7940
  %v7942 = vpop.f32.mrf.mxu0
  %7943 = vmatprep.mubr.bf16.mxu0 0
  %7944 = vmatmul.mubr.bf16.gmra.mxu0 %v7427
  %v7945 = vpop.f32.mrf.mxu0
  %v7946 = vadd.f32 %v7657, %v7945
  %v7947 = vpop.f32.mrf.mxu0
  %v7948 = vpop.f32.mrf.mxu0
  %v7949 = vadd.f32 %v7660, %v7948
  %v7950 = vpop.f32.mrf.mxu0
  %7951 = vmatprep.mubr.bf16.mxu0 0
  %7952 = vmatmul.mubr.bf16.gmra.mxu0 %v7430
  %v7953 = vpop.f32.mrf.mxu0
  %v7954 = vadd.f32 %v7665, %v7953
  %v7955 = vpop.f32.mrf.mxu0
  %v7956 = vpop.f32.mrf.mxu0
  %v7957 = vadd.f32 %v7668, %v7956
  %v7958 = vpop.f32.mrf.mxu0
  %7959 = vmatprep.mubr.bf16.mxu0 0
  %7960 = vmatmul.mubr.bf16.gmra.mxu0 %v7433
  %v7961 = vpop.f32.mrf.mxu0
  %v7962 = vadd.f32 %v7673, %v7961
  %v7963 = vpop.f32.mrf.mxu0
  %v7964 = vpop.f32.mrf.mxu0
  %v7965 = vadd.f32 %v7676, %v7964
  %v7966 = vpop.f32.mrf.mxu0
  %7967 = vmatprep.mubr.bf16.mxu0 0
  %7968 = vmatmul.mubr.bf16.gmra.mxu0 %v7436
  %v7969 = vpop.f32.mrf.mxu0
  %v7970 = vadd.f32 %v7681, %v7969
  %v7971 = vpop.f32.mrf.mxu0
  %v7972 = vpop.f32.mrf.mxu0
  %v7973 = vadd.f32 %v7684, %v7972
  %v7974 = vpop.f32.mrf.mxu0
  %7975 = vmatprep.mubr.bf16.mxu0 0
  %7976 = vmatmul.mubr.bf16.gmra.mxu0 %v7439
  %v7977 = vpop.f32.mrf.mxu0
  %v7978 = vadd.f32 %v7689, %v7977
  %v7979 = vpop.f32.mrf.mxu0
  %v7980 = vpop.f32.mrf.mxu0
  %v7981 = vadd.f32 %v7692, %v7980
  %v7982 = vpop.f32.mrf.mxu0
  %7983 = vmatprep.mubr.bf16.mxu0 0
  %7984 = vmatmul.mubr.bf16.gmra.mxu0 %v7442
  %v7985 = vpop.f32.mrf.mxu0
  %v7986 = vadd.f32 %v7697, %v7985
  %v7987 = vpop.f32.mrf.mxu0
  %v7988 = vpop.f32.mrf.mxu0
  %v7989 = vadd.f32 %v7700, %v7988
  %v7990 = vpop.f32.mrf.mxu0
  %7991 = vmatprep.mubr.bf16.mxu0 0
  %7992 = vmatmul.mubr.bf16.gmra.mxu0 %v7445
  %v7993 = vpop.f32.mrf.mxu0
  %v7994 = vadd.f32 %v7705, %v7993
  %v7995 = vpop.f32.mrf.mxu0
  %v7996 = vpop.f32.mrf.mxu0
  %v7997 = vadd.f32 %v7708, %v7996
  %v7998 = vpop.f32.mrf.mxu0
  %7999 = vmatprep.mubr.bf16.mxu0 0
  %8000 = vmatmul.mubr.bf16.gmra.mxu0 %v7448
  %v8001 = vpop.f32.mrf.mxu0
  %v8002 = vadd.f32 %v7713, %v8001
  %v8003 = vpop.f32.mrf.mxu0
  %v8004 = vpop.f32.mrf.mxu0
  %v8005 = vadd.f32 %v7716, %v8004
  %v8006 = vpop.f32.mrf.mxu0
  %8007 = vmatprep.mubr.bf16.mxu0 0
  %8008 = vmatmul.mubr.bf16.gmra.mxu0 %v7451
  %v8009 = vpop.f32.mrf.mxu0
  %v8010 = vadd.f32 %v7721, %v8009
  %v8011 = vpop.f32.mrf.mxu0
  %v8012 = vpop.f32.mrf.mxu0
  %v8013 = vadd.f32 %v7724, %v8012
  %v8014 = vpop.f32.mrf.mxu0
  %8015 = vmatprep.mubr.bf16.mxu0 0
  %8016 = vmatmul.mubr.bf16.gmra.mxu0 %v7454
  %v8017 = vpop.f32.mrf.mxu0
  %v8018 = vadd.f32 %v7729, %v8017
  %v8019 = vpop.f32.mrf.mxu0
  %v8020 = vpop.f32.mrf.mxu0
  %v8021 = vadd.f32 %v7732, %v8020
  %v8022 = vpop.f32.mrf.mxu0
  %8023 = vmatprep.mubr.bf16.mxu0 0
  %8024 = vmatmul.mubr.bf16.gmra.mxu0 %v7457
  %v8025 = vpop.f32.mrf.mxu0
  %v8026 = vadd.f32 %v7737, %v8025
  %v8027 = vpop.f32.mrf.mxu0
  %v8028 = vpop.f32.mrf.mxu0
  %v8029 = vadd.f32 %v7740, %v8028
  %v8030 = vpop.f32.mrf.mxu0
  %8031 = vmatprep.mubr.bf16.mxu0 0
  %8032 = vmatmul.mubr.bf16.gmra.mxu0 %v7460
  %v8033 = vpop.f32.mrf.mxu0
  %v8034 = vadd.f32 %v7745, %v8033
  %v8035 = vpop.f32.mrf.mxu0
  %v8036 = vpop.f32.mrf.mxu0
  %v8037 = vadd.f32 %v7748, %v8036
  %v8038 = vpop.f32.mrf.mxu0
  %8039 = vdwg.mxu0
  %v8040 = vld [vmem:[#allocation5] sm:$0x1]
  %s8041 = vtos %v8040
  %vm8042 = vcmp.gt.f32.partialorder %v7786, 0.0
  %vm8043 = vcmp.gt.f32.partialorder %v7789, 0.0
  %vm8044 = vcmp.gt.f32.partialorder %v7794, 0.0
  %vm8045 = vcmp.gt.f32.partialorder %v7797, 0.0
  %vm8046 = vcmp.gt.f32.partialorder %v7802, 0.0
  %vm8047 = vcmp.gt.f32.partialorder %v7805, 0.0
  %vm8048 = vcmp.gt.f32.partialorder %v7810, 0.0
  %vm8049 = vcmp.gt.f32.partialorder %v7813, 0.0
  %vm8050 = vcmp.gt.f32.partialorder %v7818, 0.0
  %vm8051 = vcmp.gt.f32.partialorder %v7821, 0.0
  %vm8052 = vcmp.gt.f32.partialorder %v7826, 0.0
  %vm8053 = vcmp.gt.f32.partialorder %v7829, 0.0
  %vm8054 = vcmp.gt.f32.partialorder %v7834, 0.0
  %vm8055 = vcmp.gt.f32.partialorder %v7837, 0.0
  %vm8056 = vcmp.gt.f32.partialorder %v7842, 0.0
  %vm8057 = vcmp.gt.f32.partialorder %v7845, 0.0
  %vm8058 = vcmp.gt.f32.partialorder %v7850, 0.0
  %vm8059 = vcmp.gt.f32.partialorder %v7853, 0.0
  %vm8060 = vcmp.gt.f32.partialorder %v7858, 0.0
  %vm8061 = vcmp.gt.f32.partialorder %v7861, 0.0
  %vm8062 = vcmp.gt.f32.partialorder %v7866, 0.0
  %vm8063 = vcmp.gt.f32.partialorder %v7869, 0.0
  %vm8064 = vcmp.gt.f32.partialorder %v7874, 0.0
  %vm8065 = vcmp.gt.f32.partialorder %v7877, 0.0
  %vm8066 = vcmp.gt.f32.partialorder %v7882, 0.0
  %vm8067 = vcmp.gt.f32.partialorder %v7885, 0.0
  %vm8068 = vcmp.gt.f32.partialorder %v7890, 0.0
  %vm8069 = vcmp.gt.f32.partialorder %v7893, 0.0
  %vm8070 = vcmp.gt.f32.partialorder %v7898, 0.0
  %vm8071 = vcmp.gt.f32.partialorder %v7901, 0.0
  %vm8072 = vcmp.gt.f32.partialorder %v7906, 0.0
  %vm8073 = vcmp.gt.f32.partialorder %v7909, 0.0
  %vm8074 = vcmp.gt.f32.partialorder %v7914, 0.0
  %vm8075 = vcmp.gt.f32.partialorder %v7917, 0.0
  %vm8076 = vcmp.gt.f32.partialorder %v7922, 0.0
  %vm8077 = vcmp.gt.f32.partialorder %v7925, 0.0
  %vm8078 = vcmp.gt.f32.partialorder %v7930, 0.0
  %vm8079 = vcmp.gt.f32.partialorder %v7933, 0.0
  %vm8080 = vcmp.gt.f32.partialorder %v7938, 0.0
  %vm8081 = vcmp.gt.f32.partialorder %v7941, 0.0
  %vm8082 = vcmp.gt.f32.partialorder %v7946, 0.0
  %vm8083 = vcmp.gt.f32.partialorder %v7949, 0.0
  %vm8084 = vcmp.gt.f32.partialorder %v7954, 0.0
  %vm8085 = vcmp.gt.f32.partialorder %v7957, 0.0
  %vm8086 = vcmp.gt.f32.partialorder %v7962, 0.0
  %vm8087 = vcmp.gt.f32.partialorder %v7965, 0.0
  %vm8088 = vcmp.gt.f32.partialorder %v7970, 0.0
  %vm8089 = vcmp.gt.f32.partialorder %v7973, 0.0
  %vm8090 = vcmp.gt.f32.partialorder %v7978, 0.0
  %vm8091 = vcmp.gt.f32.partialorder %v7981, 0.0
  %vm8092 = vcmp.gt.f32.partialorder %v7986, 0.0
  %vm8093 = vcmp.gt.f32.partialorder %v7989, 0.0
  %vm8094 = vcmp.gt.f32.partialorder %v7994, 0.0
  %vm8095 = vcmp.gt.f32.partialorder %v7997, 0.0
  %vm8096 = vcmp.gt.f32.partialorder %v8002, 0.0
  %vm8097 = vcmp.gt.f32.partialorder %v8005, 0.0
  %vm8098 = vcmp.gt.f32.partialorder %v8010, 0.0
  %vm8099 = vcmp.gt.f32.partialorder %v8013, 0.0
  %vm8100 = vcmp.gt.f32.partialorder %v8018, 0.0
  %vm8101 = vcmp.gt.f32.partialorder %v8021, 0.0
  %vm8102 = vcmp.gt.f32.partialorder %v8026, 0.0
  %vm8103 = vcmp.gt.f32.partialorder %v8029, 0.0
  %vm8104 = vcmp.gt.f32.partialorder %v8034, 0.0
  %vm8105 = vcmp.gt.f32.partialorder %v8037, 0.0
  %v8106 = vstv %s8041
  %v8107 = vmul.f32 %v8106, %v7786
  %v8108 = vmul.f32 %v8106, %v7789
  %v8109 = vmul.f32 %v8106, %v7794
  %v8110 = vmul.f32 %v8106, %v7797
  %v8111 = vmul.f32 %v8106, %v7802
  %v8112 = vmul.f32 %v8106, %v7805
  %v8113 = vmul.f32 %v8106, %v7810
  %v8114 = vmul.f32 %v8106, %v7813
  %v8115 = vmul.f32 %v8106, %v7818
  %v8116 = vmul.f32 %v8106, %v7821
  %v8117 = vmul.f32 %v8106, %v7826
  %v8118 = vmul.f32 %v8106, %v7829
  %v8119 = vmul.f32 %v8106, %v7834
  %v8120 = vmul.f32 %v8106, %v7837
  %v8121 = vmul.f32 %v8106, %v7842
  %v8122 = vmul.f32 %v8106, %v7845
  %v8123 = vmul.f32 %v8106, %v7850
  %v8124 = vmul.f32 %v8106, %v7853
  %v8125 = vmul.f32 %v8106, %v7858
  %v8126 = vmul.f32 %v8106, %v7861
  %v8127 = vmul.f32 %v8106, %v7866
  %v8128 = vmul.f32 %v8106, %v7869
  %v8129 = vmul.f32 %v8106, %v7874
  %v8130 = vmul.f32 %v8106, %v7877
  %v8131 = vmul.f32 %v8106, %v7882
  %v8132 = vmul.f32 %v8106, %v7885
  %v8133 = vmul.f32 %v8106, %v7890
  %v8134 = vmul.f32 %v8106, %v7893
  %v8135 = vmul.f32 %v8106, %v7898
  %v8136 = vmul.f32 %v8106, %v7901
  %v8137 = vmul.f32 %v8106, %v7906
  %v8138 = vmul.f32 %v8106, %v7909
  %v8139 = vmul.f32 %v8106, %v7914
  %v8140 = vmul.f32 %v8106, %v7917
  %v8141 = vmul.f32 %v8106, %v7922
  %v8142 = vmul.f32 %v8106, %v7925
  %v8143 = vmul.f32 %v8106, %v7930
  %v8144 = vmul.f32 %v8106, %v7933
  %v8145 = vmul.f32 %v8106, %v7938
  %v8146 = vmul.f32 %v8106, %v7941
  %v8147 = vmul.f32 %v8106, %v7946
  %v8148 = vmul.f32 %v8106, %v7949
  %v8149 = vmul.f32 %v8106, %v7954
  %v8150 = vmul.f32 %v8106, %v7957
  %v8151 = vmul.f32 %v8106, %v7962
  %v8152 = vmul.f32 %v8106, %v7965
  %v8153 = vmul.f32 %v8106, %v7970
  %v8154 = vmul.f32 %v8106, %v7973
  %v8155 = vmul.f32 %v8106, %v7978
  %v8156 = vmul.f32 %v8106, %v7981
  %v8157 = vmul.f32 %v8106, %v7986
  %v8158 = vmul.f32 %v8106, %v7989
  %v8159 = vmul.f32 %v8106, %v7994
  %v8160 = vmul.f32 %v8106, %v7997
  %v8161 = vmul.f32 %v8106, %v8002
  %v8162 = vmul.f32 %v8106, %v8005
  %v8163 = vmul.f32 %v8106, %v8010
  %v8164 = vmul.f32 %v8106, %v8013
  %v8165 = vmul.f32 %v8106, %v8018
  %v8166 = vmul.f32 %v8106, %v8021
  %v8167 = vmul.f32 %v8106, %v8026
  %v8168 = vmul.f32 %v8106, %v8029
  %v8169 = vmul.f32 %v8106, %v8034
  %v8170 = vmul.f32 %v8106, %v8037
  %v8171 = vsel %vm8042, %v7786, %v8107
  %v8172 = vsel %vm8043, %v7789, %v8108
  %v8173 = vsel %vm8044, %v7794, %v8109
  %v8174 = vsel %vm8045, %v7797, %v8110
  %v8175 = vsel %vm8046, %v7802, %v8111
  %v8176 = vsel %vm8047, %v7805, %v8112
  %v8177 = vsel %vm8048, %v7810, %v8113
  %v8178 = vsel %vm8049, %v7813, %v8114
  %v8179 = vsel %vm8050, %v7818, %v8115
  %v8180 = vsel %vm8051, %v7821, %v8116
  %v8181 = vsel %vm8052, %v7826, %v8117
  %v8182 = vsel %vm8053, %v7829, %v8118
  %v8183 = vsel %vm8054, %v7834, %v8119
  %v8184 = vsel %vm8055, %v7837, %v8120
  %v8185 = vsel %vm8056, %v7842, %v8121
  %v8186 = vsel %vm8057, %v7845, %v8122
  %v8187 = vsel %vm8058, %v7850, %v8123
  %v8188 = vsel %vm8059, %v7853, %v8124
  %v8189 = vsel %vm8060, %v7858, %v8125
  %v8190 = vsel %vm8061, %v7861, %v8126
  %v8191 = vsel %vm8062, %v7866, %v8127
  %v8192 = vsel %vm8063, %v7869, %v8128
  %v8193 = vsel %vm8064, %v7874, %v8129
  %v8194 = vsel %vm8065, %v7877, %v8130
  %v8195 = vsel %vm8066, %v7882, %v8131
  %v8196 = vsel %vm8067, %v7885, %v8132
  %v8197 = vsel %vm8068, %v7890, %v8133
  %v8198 = vsel %vm8069, %v7893, %v8134
  %v8199 = vsel %vm8070, %v7898, %v8135
  %v8200 = vsel %vm8071, %v7901, %v8136
  %v8201 = vsel %vm8072, %v7906, %v8137
  %v8202 = vsel %vm8073, %v7909, %v8138
  %v8203 = vsel %vm8074, %v7914, %v8139
  %v8204 = vsel %vm8075, %v7917, %v8140
  %v8205 = vsel %vm8076, %v7922, %v8141
  %v8206 = vsel %vm8077, %v7925, %v8142
  %v8207 = vsel %vm8078, %v7930, %v8143
  %v8208 = vsel %vm8079, %v7933, %v8144
  %v8209 = vsel %vm8080, %v7938, %v8145
  %v8210 = vsel %vm8081, %v7941, %v8146
  %v8211 = vsel %vm8082, %v7946, %v8147
  %v8212 = vsel %vm8083, %v7949, %v8148
  %v8213 = vsel %vm8084, %v7954, %v8149
  %v8214 = vsel %vm8085, %v7957, %v8150
  %v8215 = vsel %vm8086, %v7962, %v8151
  %v8216 = vsel %vm8087, %v7965, %v8152
  %v8217 = vsel %vm8088, %v7970, %v8153
  %v8218 = vsel %vm8089, %v7973, %v8154
  %v8219 = vsel %vm8090, %v7978, %v8155
  %v8220 = vsel %vm8091, %v7981, %v8156
  %v8221 = vsel %vm8092, %v7986, %v8157
  %v8222 = vsel %vm8093, %v7989, %v8158
  %v8223 = vsel %vm8094, %v7994, %v8159
  %v8224 = vsel %vm8095, %v7997, %v8160
  %v8225 = vsel %vm8096, %v8002, %v8161
  %v8226 = vsel %vm8097, %v8005, %v8162
  %v8227 = vsel %vm8098, %v8010, %v8163
  %v8228 = vsel %vm8099, %v8013, %v8164
  %v8229 = vsel %vm8100, %v8018, %v8165
  %v8230 = vsel %vm8101, %v8021, %v8166
  %v8231 = vsel %vm8102, %v8026, %v8167
  %v8232 = vsel %vm8103, %v8029, %v8168
  %v8233 = vsel %vm8104, %v8034, %v8169
  %v8234 = vsel %vm8105, %v8037, %v8170
  %8235 = vst.msk [vmem:[%s4556 + $0x1] sm:$0xff] %vm665, %v8171
  %8236 = vst.msk [vmem:[%s4556 + $0x9] sm:$0xff] %vm665, %v8172
  %8237 = vst.msk [vmem:[%s4556 + $0x19] sm:$0xff] %vm665, %v8173
  %8238 = vst.msk [vmem:[%s4556 + $0x21] sm:$0xff] %vm665, %v8174
  %8239 = vst.msk [vmem:[%s4556 + $0x31] sm:$0xff] %vm665, %v8175
  %8240 = vst.msk [vmem:[%s4556 + $0x39] sm:$0xff] %vm665, %v8176
  %8241 = vst.msk [vmem:[%s4556 + $0x49] sm:$0xff] %vm665, %v8177
  %8242 = vst.msk [vmem:[%s4556 + $0x51] sm:$0xff] %vm665, %v8178
  %8243 = vst.msk [vmem:[%s4556 + $0x61] sm:$0xff] %vm665, %v8179
  %8244 = vst.msk [vmem:[%s4556 + $0x69] sm:$0xff] %vm665, %v8180
  %8245 = vst.msk [vmem:[%s4556 + $0x79] sm:$0xff] %vm665, %v8181
  %8246 = vst.msk [vmem:[%s4556 + $0x81] sm:$0xff] %vm665, %v8182
  %8247 = vst.msk [vmem:[%s4556 + $0x91] sm:$0xff] %vm665, %v8183
  %8248 = vst.msk [vmem:[%s4556 + $0x99] sm:$0xff] %vm665, %v8184
  %8249 = vst.msk [vmem:[%s4556 + $0xa9] sm:$0xff] %vm665, %v8185
  %8250 = vst.msk [vmem:[%s4556 + $0xb1] sm:$0xff] %vm665, %v8186
  %8251 = vst.msk [vmem:[%s4556 + $0xc1] sm:$0xff] %vm665, %v8187
  %8252 = vst.msk [vmem:[%s4556 + $0xc9] sm:$0xff] %vm665, %v8188
  %8253 = vst.msk [vmem:[%s4556 + $0xd9] sm:$0xff] %vm665, %v8189
  %8254 = vst.msk [vmem:[%s4556 + $0xe1] sm:$0xff] %vm665, %v8190
  %8255 = vst.msk [vmem:[%s4556 + $0xf1] sm:$0xff] %vm665, %v8191
  %8256 = vst.msk [vmem:[%s4556 + $0xf9] sm:$0xff] %vm665, %v8192
  %8257 = vst.msk [vmem:[%s4556 + $0x109] sm:$0xff] %vm665, %v8193
  %8258 = vst.msk [vmem:[%s4556 + $0x111] sm:$0xff] %vm665, %v8194
  %8259 = vst.msk [vmem:[%s4556 + $0x121] sm:$0xff] %vm665, %v8195
  %8260 = vst.msk [vmem:[%s4556 + $0x129] sm:$0xff] %vm665, %v8196
  %8261 = vst.msk [vmem:[%s4556 + $0x139] sm:$0xff] %vm665, %v8197
  %8262 = vst.msk [vmem:[%s4556 + $0x141] sm:$0xff] %vm665, %v8198
  %8263 = vst.msk [vmem:[%s4556 + $0x151] sm:$0xff] %vm665, %v8199
  %8264 = vst.msk [vmem:[%s4556 + $0x159] sm:$0xff] %vm665, %v8200
  %8265 = vst.msk [vmem:[%s4556 + $0x169] sm:$0xff] %vm665, %v8201
  %8266 = vst.msk [vmem:[%s4556 + $0x171] sm:$0xff] %vm665, %v8202
  %8267 = vst.msk [vmem:[%s4556 + $0x1b1] sm:$0xff] %vm665, %v8203
  %8268 = vst.msk [vmem:[%s4556 + $0x1b9] sm:$0xff] %vm665, %v8204
  %8269 = vst.msk [vmem:[%s4556 + $0x1c9] sm:$0xff] %vm665, %v8205
  %8270 = vst.msk [vmem:[%s4556 + $0x1d1] sm:$0xff] %vm665, %v8206
  %8271 = vst.msk [vmem:[%s4556 + $0x1e1] sm:$0xff] %vm665, %v8207
  %8272 = vst.msk [vmem:[%s4556 + $0x1e9] sm:$0xff] %vm665, %v8208
  %8273 = vst.msk [vmem:[%s4556 + $0x1f9] sm:$0xff] %vm665, %v8209
  %8274 = vst.msk [vmem:[%s4556 + $0x201] sm:$0xff] %vm665, %v8210
  %8275 = vst.msk [vmem:[%s4556 + $0x211] sm:$0xff] %vm665, %v8211
  %8276 = vst.msk [vmem:[%s4556 + $0x219] sm:$0xff] %vm665, %v8212
  %8277 = vst.msk [vmem:[%s4556 + $0x229] sm:$0xff] %vm665, %v8213
  %8278 = vst.msk [vmem:[%s4556 + $0x231] sm:$0xff] %vm665, %v8214
  %8279 = vst.msk [vmem:[%s4556 + $0x241] sm:$0xff] %vm665, %v8215
  %8280 = vst.msk [vmem:[%s4556 + $0x249] sm:$0xff] %vm665, %v8216
  %8281 = vst.msk [vmem:[%s4556 + $0x259] sm:$0xff] %vm665, %v8217
  %8282 = vst.msk [vmem:[%s4556 + $0x261] sm:$0xff] %vm665, %v8218
  %8283 = vst.msk [vmem:[%s4556 + $0x271] sm:$0xff] %vm665, %v8219
  %8284 = vst.msk [vmem:[%s4556 + $0x279] sm:$0xff] %vm665, %v8220
  %8285 = vst.msk [vmem:[%s4556 + $0x289] sm:$0xff] %vm665, %v8221
  %8286 = vst.msk [vmem:[%s4556 + $0x291] sm:$0xff] %vm665, %v8222
  %8287 = vst.msk [vmem:[%s4556 + $0x2a1] sm:$0xff] %vm665, %v8223
  %8288 = vst.msk [vmem:[%s4556 + $0x2a9] sm:$0xff] %vm665, %v8224
  %8289 = vst.msk [vmem:[%s4556 + $0x2b9] sm:$0xff] %vm665, %v8225
  %8290 = vst.msk [vmem:[%s4556 + $0x2c1] sm:$0xff] %vm665, %v8226
  %8291 = vst.msk [vmem:[%s4556 + $0x2d1] sm:$0xff] %vm665, %v8227
  %8292 = vst.msk [vmem:[%s4556 + $0x2d9] sm:$0xff] %vm665, %v8228
  %8293 = vst.msk [vmem:[%s4556 + $0x2e9] sm:$0xff] %vm665, %v8229
  %8294 = vst.msk [vmem:[%s4556 + $0x2f1] sm:$0xff] %vm665, %v8230
  %8295 = vst.msk [vmem:[%s4556 + $0x301] sm:$0xff] %vm665, %v8231
  %8296 = vst.msk [vmem:[%s4556 + $0x309] sm:$0xff] %vm665, %v8232
  %8297 = vst.msk [vmem:[%s4556 + $0x319] sm:$0xff] %vm665, %v8233
  %8298 = vst.msk [vmem:[%s4556 + $0x321] sm:$0xff] %vm665, %v8234
  %v8299 = vld [vmem:[#allocation3] sm:$0xff]
  %v8300 = vld [vmem:[#allocation3 + $0x8] sm:$0xff]
  %v8301 = vld [vmem:[#allocation3 + $0x18] sm:$0xff]
  %v8302 = vld [vmem:[#allocation3 + $0x20] sm:$0xff]
  %v8303 = vld [vmem:[#allocation3 + $0x30] sm:$0xff]
  %v8304 = vld [vmem:[#allocation3 + $0x38] sm:$0xff]
  %v8305 = vld [vmem:[#allocation3 + $0x48] sm:$0xff]
  %v8306 = vld [vmem:[#allocation3 + $0x50] sm:$0xff]
  %v8307 = vld [vmem:[#allocation3 + $0x60] sm:$0xff]
  %v8308 = vld [vmem:[#allocation3 + $0x68] sm:$0xff]
  %v8309 = vld [vmem:[#allocation3 + $0x78] sm:$0xff]
  %v8310 = vld [vmem:[#allocation3 + $0x80] sm:$0xff]
  %v8311 = vld [vmem:[#allocation3 + $0x90] sm:$0xff]
  %v8312 = vld [vmem:[#allocation3 + $0x98] sm:$0xff]
  %v8313 = vld [vmem:[#allocation3 + $0xa8] sm:$0xff]
  %v8314 = vld [vmem:[#allocation3 + $0xb0] sm:$0xff]
  %v8315 = vld [vmem:[#allocation3 + $0xc0] sm:$0xff]
  %v8316 = vld [vmem:[#allocation3 + $0xc8] sm:$0xff]
  %v8317 = vld [vmem:[#allocation3 + $0xd8] sm:$0xff]
  %v8318 = vld [vmem:[#allocation3 + $0xe0] sm:$0xff]
  %v8319 = vld [vmem:[#allocation3 + $0xf0] sm:$0xff]
  %v8320 = vld [vmem:[#allocation3 + $0xf8] sm:$0xff]
  %v8321 = vld [vmem:[#allocation3 + $0x108] sm:$0xff]
  %v8322 = vld [vmem:[#allocation3 + $0x110] sm:$0xff]
  %v8323 = vld [vmem:[#allocation3 + $0x120] sm:$0xff]
  %v8324 = vld [vmem:[#allocation3 + $0x128] sm:$0xff]
  %v8325 = vld [vmem:[#allocation3 + $0x138] sm:$0xff]
  %v8326 = vld [vmem:[#allocation3 + $0x140] sm:$0xff]
  %v8327 = vld [vmem:[#allocation3 + $0x150] sm:$0xff]
  %v8328 = vld [vmem:[#allocation3 + $0x158] sm:$0xff]
  %v8329 = vld [vmem:[#allocation3 + $0x168] sm:$0xff]
  %v8330 = vld [vmem:[#allocation3 + $0x170] sm:$0xff]
  %v8331 = vld [vmem:[#allocation3 + $0x1b0] sm:$0xff]
  %v8332 = vld [vmem:[#allocation3 + $0x1b8] sm:$0xff]
  %v8333 = vld [vmem:[#allocation3 + $0x1c8] sm:$0xff]
  %v8334 = vld [vmem:[#allocation3 + $0x1d0] sm:$0xff]
  %v8335 = vld [vmem:[#allocation3 + $0x1e0] sm:$0xff]
  %v8336 = vld [vmem:[#allocation3 + $0x1e8] sm:$0xff]
  %v8337 = vld [vmem:[#allocation3 + $0x1f8] sm:$0xff]
  %v8338 = vld [vmem:[#allocation3 + $0x200] sm:$0xff]
  %v8339 = vld [vmem:[#allocation3 + $0x210] sm:$0xff]
  %v8340 = vld [vmem:[#allocation3 + $0x218] sm:$0xff]
  %v8341 = vld [vmem:[#allocation3 + $0x228] sm:$0xff]
  %v8342 = vld [vmem:[#allocation3 + $0x230] sm:$0xff]
  %v8343 = vld [vmem:[#allocation3 + $0x240] sm:$0xff]
  %v8344 = vld [vmem:[#allocation3 + $0x248] sm:$0xff]
  %v8345 = vld [vmem:[#allocation3 + $0x258] sm:$0xff]
  %v8346 = vld [vmem:[#allocation3 + $0x260] sm:$0xff]
  %v8347 = vld [vmem:[#allocation3 + $0x270] sm:$0xff]
  %v8348 = vld [vmem:[#allocation3 + $0x278] sm:$0xff]
  %v8349 = vld [vmem:[#allocation3 + $0x288] sm:$0xff]
  %v8350 = vld [vmem:[#allocation3 + $0x290] sm:$0xff]
  %v8351 = vld [vmem:[#allocation3 + $0x2a0] sm:$0xff]
  %v8352 = vld [vmem:[#allocation3 + $0x2a8] sm:$0xff]
  %v8353 = vld [vmem:[#allocation3 + $0x2b8] sm:$0xff]
  %v8354 = vld [vmem:[#allocation3 + $0x2c0] sm:$0xff]
  %v8355 = vld [vmem:[#allocation3 + $0x2d0] sm:$0xff]
  %v8356 = vld [vmem:[#allocation3 + $0x2d8] sm:$0xff]
  %v8357 = vld [vmem:[#allocation3 + $0x2e8] sm:$0xff]
  %v8358 = vld [vmem:[#allocation3 + $0x2f0] sm:$0xff]
  %v8359 = vld [vmem:[#allocation3 + $0x300] sm:$0xff]
  %v8360 = vld [vmem:[#allocation3 + $0x308] sm:$0xff]
  %v8361 = vld [vmem:[#allocation3 + $0x318] sm:$0xff]
  %v8362 = vld [vmem:[#allocation3 + $0x320] sm:$0xff]
  %v8363 = vld [vmem:[#allocation3 + $0x1] sm:$0xff]
  %v8364 = vld [vmem:[#allocation3 + $0x9] sm:$0xff]
  %v8365 = vld [vmem:[#allocation3 + $0x19] sm:$0xff]
  %v8366 = vld [vmem:[#allocation3 + $0x21] sm:$0xff]
  %v8367 = vld [vmem:[#allocation3 + $0x31] sm:$0xff]
  %v8368 = vld [vmem:[#allocation3 + $0x39] sm:$0xff]
  %v8369 = vld [vmem:[#allocation3 + $0x49] sm:$0xff]
  %v8370 = vld [vmem:[#allocation3 + $0x51] sm:$0xff]
  %v8371 = vld [vmem:[#allocation3 + $0x61] sm:$0xff]
  %v8372 = vld [vmem:[#allocation3 + $0x69] sm:$0xff]
  %v8373 = vld [vmem:[#allocation3 + $0x79] sm:$0xff]
  %v8374 = vld [vmem:[#allocation3 + $0x81] sm:$0xff]
  %v8375 = vld [vmem:[#allocation3 + $0x91] sm:$0xff]
  %v8376 = vld [vmem:[#allocation3 + $0x99] sm:$0xff]
  %v8377 = vld [vmem:[#allocation3 + $0xa9] sm:$0xff]
  %v8378 = vld [vmem:[#allocation3 + $0xb1] sm:$0xff]
  %v8379 = vld [vmem:[#allocation3 + $0xc1] sm:$0xff]
  %v8380 = vld [vmem:[#allocation3 + $0xc9] sm:$0xff]
  %v8381 = vld [vmem:[#allocation3 + $0xd9] sm:$0xff]
  %v8382 = vld [vmem:[#allocation3 + $0xe1] sm:$0xff]
  %v8383 = vld [vmem:[#allocation3 + $0xf1] sm:$0xff]
  %v8384 = vld [vmem:[#allocation3 + $0xf9] sm:$0xff]
  %v8385 = vld [vmem:[#allocation3 + $0x109] sm:$0xff]
  %v8386 = vld [vmem:[#allocation3 + $0x111] sm:$0xff]
  %v8387 = vld [vmem:[#allocation3 + $0x121] sm:$0xff]
  %v8388 = vld [vmem:[#allocation3 + $0x129] sm:$0xff]
  %v8389 = vld [vmem:[#allocation3 + $0x139] sm:$0xff]
  %v8390 = vld [vmem:[#allocation3 + $0x141] sm:$0xff]
  %v8391 = vld [vmem:[#allocation3 + $0x151] sm:$0xff]
  %v8392 = vld [vmem:[#allocation3 + $0x159] sm:$0xff]
  %v8393 = vld [vmem:[#allocation3 + $0x169] sm:$0xff]
  %v8394 = vld [vmem:[#allocation3 + $0x171] sm:$0xff]
  %v8395 = vld [vmem:[#allocation3 + $0x1b1] sm:$0xff]
  %v8396 = vld [vmem:[#allocation3 + $0x1b9] sm:$0xff]
  %v8397 = vld [vmem:[#allocation3 + $0x1c9] sm:$0xff]
  %v8398 = vld [vmem:[#allocation3 + $0x1d1] sm:$0xff]
  %v8399 = vld [vmem:[#allocation3 + $0x1e1] sm:$0xff]
  %v8400 = vld [vmem:[#allocation3 + $0x1e9] sm:$0xff]
  %v8401 = vld [vmem:[#allocation3 + $0x1f9] sm:$0xff]
  %v8402 = vld [vmem:[#allocation3 + $0x201] sm:$0xff]
  %v8403 = vld [vmem:[#allocation3 + $0x211] sm:$0xff]
  %v8404 = vld [vmem:[#allocation3 + $0x219] sm:$0xff]
  %v8405 = vld [vmem:[#allocation3 + $0x229] sm:$0xff]
  %v8406 = vld [vmem:[#allocation3 + $0x231] sm:$0xff]
  %v8407 = vld [vmem:[#allocation3 + $0x241] sm:$0xff]
  %v8408 = vld [vmem:[#allocation3 + $0x249] sm:$0xff]
  %v8409 = vld [vmem:[#allocation3 + $0x259] sm:$0xff]
  %v8410 = vld [vmem:[#allocation3 + $0x261] sm:$0xff]
  %v8411 = vld [vmem:[#allocation3 + $0x271] sm:$0xff]
  %v8412 = vld [vmem:[#allocation3 + $0x279] sm:$0xff]
  %v8413 = vld [vmem:[#allocation3 + $0x289] sm:$0xff]
  %v8414 = vld [vmem:[#allocation3 + $0x291] sm:$0xff]
  %v8415 = vld [vmem:[#allocation3 + $0x2a1] sm:$0xff]
  %v8416 = vld [vmem:[#allocation3 + $0x2a9] sm:$0xff]
  %v8417 = vld [vmem:[#allocation3 + $0x2b9] sm:$0xff]
  %v8418 = vld [vmem:[#allocation3 + $0x2c1] sm:$0xff]
  %v8419 = vld [vmem:[#allocation3 + $0x2d1] sm:$0xff]
  %v8420 = vld [vmem:[#allocation3 + $0x2d9] sm:$0xff]
  %v8421 = vld [vmem:[#allocation3 + $0x2e9] sm:$0xff]
  %v8422 = vld [vmem:[#allocation3 + $0x2f1] sm:$0xff]
  %v8423 = vld [vmem:[#allocation3 + $0x301] sm:$0xff]
  %v8424 = vld [vmem:[#allocation3 + $0x309] sm:$0xff]
  %v8425 = vld [vmem:[#allocation3 + $0x319] sm:$0xff]
  %v8426 = vld [vmem:[#allocation3 + $0x321] sm:$0xff]
  %v8427 = vld [vmem:[#allocation3 + $0x2] sm:$0xff]
  %v8428 = vld [vmem:[#allocation3 + $0xa] sm:$0xff]
  %v8429 = vld [vmem:[#allocation3 + $0x1a] sm:$0xff]
  %v8430 = vld [vmem:[#allocation3 + $0x22] sm:$0xff]
  %v8431 = vld [vmem:[#allocation3 + $0x32] sm:$0xff]
  %v8432 = vld [vmem:[#allocation3 + $0x3a] sm:$0xff]
  %v8433 = vld [vmem:[#allocation3 + $0x4a] sm:$0xff]
  %v8434 = vld [vmem:[#allocation3 + $0x52] sm:$0xff]
  %v8435 = vld [vmem:[#allocation3 + $0x62] sm:$0xff]
  %v8436 = vld [vmem:[#allocation3 + $0x6a] sm:$0xff]
  %v8437 = vld [vmem:[#allocation3 + $0x7a] sm:$0xff]
  %v8438 = vld [vmem:[#allocation3 + $0x82] sm:$0xff]
  %v8439 = vld [vmem:[#allocation3 + $0x92] sm:$0xff]
  %v8440 = vld [vmem:[#allocation3 + $0x9a] sm:$0xff]
  %v8441 = vld [vmem:[#allocation3 + $0xaa] sm:$0xff]
  %v8442 = vld [vmem:[#allocation3 + $0xb2] sm:$0xff]
  %v8443 = vld [vmem:[#allocation3 + $0xc2] sm:$0xff]
  %v8444 = vld [vmem:[#allocation3 + $0xca] sm:$0xff]
  %v8445 = vld [vmem:[#allocation3 + $0xda] sm:$0xff]
  %v8446 = vld [vmem:[#allocation3 + $0xe2] sm:$0xff]
  %v8447 = vld [vmem:[#allocation3 + $0xf2] sm:$0xff]
  %v8448 = vld [vmem:[#allocation3 + $0xfa] sm:$0xff]
  %v8449 = vld [vmem:[#allocation3 + $0x10a] sm:$0xff]
  %v8450 = vld [vmem:[#allocation3 + $0x112] sm:$0xff]
  %v8451 = vld [vmem:[#allocation3 + $0x122] sm:$0xff]
  %v8452 = vld [vmem:[#allocation3 + $0x12a] sm:$0xff]
  %v8453 = vld [vmem:[#allocation3 + $0x13a] sm:$0xff]
  %v8454 = vld [vmem:[#allocation3 + $0x142] sm:$0xff]
  %v8455 = vld [vmem:[#allocation3 + $0x152] sm:$0xff]
  %v8456 = vld [vmem:[#allocation3 + $0x15a] sm:$0xff]
  %v8457 = vld [vmem:[#allocation3 + $0x16a] sm:$0xff]
  %v8458 = vld [vmem:[#allocation3 + $0x172] sm:$0xff]
  %v8459 = vld [vmem:[#allocation3 + $0x1b2] sm:$0xff]
  %v8460 = vld [vmem:[#allocation3 + $0x1ba] sm:$0xff]
  %v8461 = vld [vmem:[#allocation3 + $0x1ca] sm:$0xff]
  %v8462 = vld [vmem:[#allocation3 + $0x1d2] sm:$0xff]
  %v8463 = vld [vmem:[#allocation3 + $0x1e2] sm:$0xff]
  %v8464 = vld [vmem:[#allocation3 + $0x1ea] sm:$0xff]
  %v8465 = vld [vmem:[#allocation3 + $0x1fa] sm:$0xff]
  %v8466 = vld [vmem:[#allocation3 + $0x202] sm:$0xff]
  %v8467 = vld [vmem:[#allocation3 + $0x212] sm:$0xff]
  %v8468 = vld [vmem:[#allocation3 + $0x21a] sm:$0xff]
  %v8469 = vld [vmem:[#allocation3 + $0x22a] sm:$0xff]
  %v8470 = vld [vmem:[#allocation3 + $0x232] sm:$0xff]
  %v8471 = vld [vmem:[#allocation3 + $0x242] sm:$0xff]
  %v8472 = vld [vmem:[#allocation3 + $0x24a] sm:$0xff]
  %v8473 = vld [vmem:[#allocation3 + $0x25a] sm:$0xff]
  %v8474 = vld [vmem:[#allocation3 + $0x262] sm:$0xff]
  %v8475 = vld [vmem:[#allocation3 + $0x272] sm:$0xff]
  %v8476 = vld [vmem:[#allocation3 + $0x27a] sm:$0xff]
  %v8477 = vld [vmem:[#allocation3 + $0x28a] sm:$0xff]
  %v8478 = vld [vmem:[#allocation3 + $0x292] sm:$0xff]
  %v8479 = vld [vmem:[#allocation3 + $0x2a2] sm:$0xff]
  %v8480 = vld [vmem:[#allocation3 + $0x2aa] sm:$0xff]
  %v8481 = vld [vmem:[#allocation3 + $0x2ba] sm:$0xff]
  %v8482 = vld [vmem:[#allocation3 + $0x2c2] sm:$0xff]
  %v8483 = vld [vmem:[#allocation3 + $0x2d2] sm:$0xff]
  %v8484 = vld [vmem:[#allocation3 + $0x2da] sm:$0xff]
  %v8485 = vld [vmem:[#allocation3 + $0x2ea] sm:$0xff]
  %v8486 = vld [vmem:[#allocation3 + $0x2f2] sm:$0xff]
  %v8487 = vld [vmem:[#allocation3 + $0x302] sm:$0xff]
  %v8488 = vld [vmem:[#allocation3 + $0x30a] sm:$0xff]
  %v8489 = vld [vmem:[#allocation3 + $0x31a] sm:$0xff]
  %v8490 = vld [vmem:[#allocation3 + $0x322] sm:$0xff]
  %v8491 = vld [vmem:[%s4556] sm:$0xff]
  %v8492 = vld [vmem:[%s4556 + $0x8] sm:$0xff]
  %v8493 = vld [vmem:[%s4556 + $0x18] sm:$0xff]
  %v8494 = vld [vmem:[%s4556 + $0x20] sm:$0xff]
  %v8495 = vld [vmem:[%s4556 + $0x30] sm:$0xff]
  %v8496 = vld [vmem:[%s4556 + $0x38] sm:$0xff]
  %v8497 = vld [vmem:[%s4556 + $0x48] sm:$0xff]
  %v8498 = vld [vmem:[%s4556 + $0x50] sm:$0xff]
  %v8499 = vld [vmem:[%s4556 + $0x60] sm:$0xff]
  %v8500 = vld [vmem:[%s4556 + $0x68] sm:$0xff]
  %v8501 = vld [vmem:[%s4556 + $0x78] sm:$0xff]
  %v8502 = vld [vmem:[%s4556 + $0x80] sm:$0xff]
  %v8503 = vld [vmem:[%s4556 + $0x90] sm:$0xff]
  %v8504 = vld [vmem:[%s4556 + $0x98] sm:$0xff]
  %v8505 = vld [vmem:[%s4556 + $0xa8] sm:$0xff]
  %v8506 = vld [vmem:[%s4556 + $0xb0] sm:$0xff]
  %v8507 = vld [vmem:[%s4556 + $0xc0] sm:$0xff]
  %v8508 = vld [vmem:[%s4556 + $0xc8] sm:$0xff]
  %v8509 = vld [vmem:[%s4556 + $0xd8] sm:$0xff]
  %v8510 = vld [vmem:[%s4556 + $0xe0] sm:$0xff]
  %v8511 = vld [vmem:[%s4556 + $0xf0] sm:$0xff]
  %v8512 = vld [vmem:[%s4556 + $0xf8] sm:$0xff]
  %v8513 = vld [vmem:[%s4556 + $0x108] sm:$0xff]
  %v8514 = vld [vmem:[%s4556 + $0x110] sm:$0xff]
  %v8515 = vld [vmem:[%s4556 + $0x120] sm:$0xff]
  %v8516 = vld [vmem:[%s4556 + $0x128] sm:$0xff]
  %v8517 = vld [vmem:[%s4556 + $0x138] sm:$0xff]
  %v8518 = vld [vmem:[%s4556 + $0x140] sm:$0xff]
  %v8519 = vld [vmem:[%s4556 + $0x150] sm:$0xff]
  %v8520 = vld [vmem:[%s4556 + $0x158] sm:$0xff]
  %v8521 = vld [vmem:[%s4556 + $0x168] sm:$0xff]
  %v8522 = vld [vmem:[%s4556 + $0x170] sm:$0xff]
  %v8523 = vld [vmem:[%s4556 + $0x1b0] sm:$0xff]
  %v8524 = vld [vmem:[%s4556 + $0x1b8] sm:$0xff]
  %v8525 = vld [vmem:[%s4556 + $0x1c8] sm:$0xff]
  %v8526 = vld [vmem:[%s4556 + $0x1d0] sm:$0xff]
  %v8527 = vld [vmem:[%s4556 + $0x1e0] sm:$0xff]
  %v8528 = vld [vmem:[%s4556 + $0x1e8] sm:$0xff]
  %v8529 = vld [vmem:[%s4556 + $0x1f8] sm:$0xff]
  %v8530 = vld [vmem:[%s4556 + $0x200] sm:$0xff]
  %v8531 = vld [vmem:[%s4556 + $0x210] sm:$0xff]
  %v8532 = vld [vmem:[%s4556 + $0x218] sm:$0xff]
  %v8533 = vld [vmem:[%s4556 + $0x228] sm:$0xff]
  %v8534 = vld [vmem:[%s4556 + $0x230] sm:$0xff]
  %v8535 = vld [vmem:[%s4556 + $0x240] sm:$0xff]
  %v8536 = vld [vmem:[%s4556 + $0x248] sm:$0xff]
  %v8537 = vld [vmem:[%s4556 + $0x258] sm:$0xff]
  %v8538 = vld [vmem:[%s4556 + $0x260] sm:$0xff]
  %v8539 = vld [vmem:[%s4556 + $0x270] sm:$0xff]
  %v8540 = vld [vmem:[%s4556 + $0x278] sm:$0xff]
  %v8541 = vld [vmem:[%s4556 + $0x288] sm:$0xff]
  %v8542 = vld [vmem:[%s4556 + $0x290] sm:$0xff]
  %v8543 = vld [vmem:[%s4556 + $0x2a0] sm:$0xff]
  %v8544 = vld [vmem:[%s4556 + $0x2a8] sm:$0xff]
  %v8545 = vld [vmem:[%s4556 + $0x2b8] sm:$0xff]
  %v8546 = vld [vmem:[%s4556 + $0x2c0] sm:$0xff]
  %v8547 = vld [vmem:[%s4556 + $0x2d0] sm:$0xff]
  %v8548 = vld [vmem:[%s4556 + $0x2d8] sm:$0xff]
  %v8549 = vld [vmem:[%s4556 + $0x2e8] sm:$0xff]
  %v8550 = vld [vmem:[%s4556 + $0x2f0] sm:$0xff]
  %v8551 = vld [vmem:[%s4556 + $0x300] sm:$0xff]
  %v8552 = vld [vmem:[%s4556 + $0x308] sm:$0xff]
  %v8553 = vld [vmem:[%s4556 + $0x318] sm:$0xff]
  %v8554 = vld [vmem:[%s4556 + $0x320] sm:$0xff]
  %v8555 = vld [vmem:[%s4556 + $0x1] sm:$0xff]
  %v8556 = vld [vmem:[%s4556 + $0x9] sm:$0xff]
  %v8557 = vld [vmem:[%s4556 + $0x19] sm:$0xff]
  %v8558 = vld [vmem:[%s4556 + $0x21] sm:$0xff]
  %v8559 = vld [vmem:[%s4556 + $0x31] sm:$0xff]
  %v8560 = vld [vmem:[%s4556 + $0x39] sm:$0xff]
  %v8561 = vld [vmem:[%s4556 + $0x49] sm:$0xff]
  %v8562 = vld [vmem:[%s4556 + $0x51] sm:$0xff]
  %v8563 = vld [vmem:[%s4556 + $0x61] sm:$0xff]
  %v8564 = vld [vmem:[%s4556 + $0x69] sm:$0xff]
  %v8565 = vld [vmem:[%s4556 + $0x79] sm:$0xff]
  %v8566 = vld [vmem:[%s4556 + $0x81] sm:$0xff]
  %v8567 = vld [vmem:[%s4556 + $0x91] sm:$0xff]
  %v8568 = vld [vmem:[%s4556 + $0x99] sm:$0xff]
  %v8569 = vld [vmem:[%s4556 + $0xa9] sm:$0xff]
  %v8570 = vld [vmem:[%s4556 + $0xb1] sm:$0xff]
  %v8571 = vld [vmem:[%s4556 + $0xc1] sm:$0xff]
  %v8572 = vld [vmem:[%s4556 + $0xc9] sm:$0xff]
  %v8573 = vld [vmem:[%s4556 + $0xd9] sm:$0xff]
  %v8574 = vld [vmem:[%s4556 + $0xe1] sm:$0xff]
  %v8575 = vld [vmem:[%s4556 + $0xf1] sm:$0xff]
  %v8576 = vld [vmem:[%s4556 + $0xf9] sm:$0xff]
  %v8577 = vld [vmem:[%s4556 + $0x109] sm:$0xff]
  %v8578 = vld [vmem:[%s4556 + $0x111] sm:$0xff]
  %v8579 = vld [vmem:[%s4556 + $0x121] sm:$0xff]
  %v8580 = vld [vmem:[%s4556 + $0x129] sm:$0xff]
  %v8581 = vld [vmem:[%s4556 + $0x139] sm:$0xff]
  %v8582 = vld [vmem:[%s4556 + $0x141] sm:$0xff]
  %v8583 = vld [vmem:[%s4556 + $0x151] sm:$0xff]
  %v8584 = vld [vmem:[%s4556 + $0x159] sm:$0xff]
  %v8585 = vld [vmem:[%s4556 + $0x169] sm:$0xff]
  %v8586 = vld [vmem:[%s4556 + $0x171] sm:$0xff]
  %v8587 = vld [vmem:[%s4556 + $0x1b1] sm:$0xff]
  %v8588 = vld [vmem:[%s4556 + $0x1b9] sm:$0xff]
  %v8589 = vld [vmem:[%s4556 + $0x1c9] sm:$0xff]
  %v8590 = vld [vmem:[%s4556 + $0x1d1] sm:$0xff]
  %v8591 = vld [vmem:[%s4556 + $0x1e1] sm:$0xff]
  %v8592 = vld [vmem:[%s4556 + $0x1e9] sm:$0xff]
  %v8593 = vld [vmem:[%s4556 + $0x1f9] sm:$0xff]
  %v8594 = vld [vmem:[%s4556 + $0x201] sm:$0xff]
  %v8595 = vld [vmem:[%s4556 + $0x211] sm:$0xff]
  %v8596 = vld [vmem:[%s4556 + $0x219] sm:$0xff]
  %v8597 = vld [vmem:[%s4556 + $0x229] sm:$0xff]
  %v8598 = vld [vmem:[%s4556 + $0x231] sm:$0xff]
  %v8599 = vld [vmem:[%s4556 + $0x241] sm:$0xff]
  %v8600 = vld [vmem:[%s4556 + $0x249] sm:$0xff]
  %v8601 = vld [vmem:[%s4556 + $0x259] sm:$0xff]
  %v8602 = vld [vmem:[%s4556 + $0x261] sm:$0xff]
  %v8603 = vld [vmem:[%s4556 + $0x271] sm:$0xff]
  %v8604 = vld [vmem:[%s4556 + $0x279] sm:$0xff]
  %v8605 = vld [vmem:[%s4556 + $0x289] sm:$0xff]
  %v8606 = vld [vmem:[%s4556 + $0x291] sm:$0xff]
  %v8607 = vld [vmem:[%s4556 + $0x2a1] sm:$0xff]
  %v8608 = vld [vmem:[%s4556 + $0x2a9] sm:$0xff]
  %v8609 = vld [vmem:[%s4556 + $0x2b9] sm:$0xff]
  %v8610 = vld [vmem:[%s4556 + $0x2c1] sm:$0xff]
  %v8611 = vld [vmem:[%s4556 + $0x2d1] sm:$0xff]
  %v8612 = vld [vmem:[%s4556 + $0x2d9] sm:$0xff]
  %v8613 = vld [vmem:[%s4556 + $0x2e9] sm:$0xff]
  %v8614 = vld [vmem:[%s4556 + $0x2f1] sm:$0xff]
  %v8615 = vld [vmem:[%s4556 + $0x301] sm:$0xff]
  %v8616 = vld [vmem:[%s4556 + $0x309] sm:$0xff]
  %v8617 = vld [vmem:[%s4556 + $0x319] sm:$0xff]
  %v8618 = vld [vmem:[%s4556 + $0x321] sm:$0xff]
  %v8619 = vld [vmem:[%s4556 + $0x2] sm:$0xff]
  %v8620 = vld [vmem:[%s4556 + $0xa] sm:$0xff]
  %v8621 = vld [vmem:[%s4556 + $0x1a] sm:$0xff]
  %v8622 = vld [vmem:[%s4556 + $0x22] sm:$0xff]
  %v8623 = vld [vmem:[%s4556 + $0x32] sm:$0xff]
  %v8624 = vld [vmem:[%s4556 + $0x3a] sm:$0xff]
  %v8625 = vld [vmem:[%s4556 + $0x4a] sm:$0xff]
  %v8626 = vld [vmem:[%s4556 + $0x52] sm:$0xff]
  %v8627 = vld [vmem:[%s4556 + $0x62] sm:$0xff]
  %v8628 = vld [vmem:[%s4556 + $0x6a] sm:$0xff]
  %v8629 = vld [vmem:[%s4556 + $0x7a] sm:$0xff]
  %v8630 = vld [vmem:[%s4556 + $0x82] sm:$0xff]
  %v8631 = vld [vmem:[%s4556 + $0x92] sm:$0xff]
  %v8632 = vld [vmem:[%s4556 + $0x9a] sm:$0xff]
  %v8633 = vld [vmem:[%s4556 + $0xaa] sm:$0xff]
  %v8634 = vld [vmem:[%s4556 + $0xb2] sm:$0xff]
  %v8635 = vld [vmem:[%s4556 + $0xc2] sm:$0xff]
  %v8636 = vld [vmem:[%s4556 + $0xca] sm:$0xff]
  %v8637 = vld [vmem:[%s4556 + $0xda] sm:$0xff]
  %v8638 = vld [vmem:[%s4556 + $0xe2] sm:$0xff]
  %v8639 = vld [vmem:[%s4556 + $0xf2] sm:$0xff]
  %v8640 = vld [vmem:[%s4556 + $0xfa] sm:$0xff]
  %v8641 = vld [vmem:[%s4556 + $0x10a] sm:$0xff]
  %v8642 = vld [vmem:[%s4556 + $0x112] sm:$0xff]
  %v8643 = vld [vmem:[%s4556 + $0x122] sm:$0xff]
  %v8644 = vld [vmem:[%s4556 + $0x12a] sm:$0xff]
  %v8645 = vld [vmem:[%s4556 + $0x13a] sm:$0xff]
  %v8646 = vld [vmem:[%s4556 + $0x142] sm:$0xff]
  %v8647 = vld [vmem:[%s4556 + $0x152] sm:$0xff]
  %v8648 = vld [vmem:[%s4556 + $0x15a] sm:$0xff]
  %v8649 = vld [vmem:[%s4556 + $0x16a] sm:$0xff]
  %v8650 = vld [vmem:[%s4556 + $0x172] sm:$0xff]
  %v8651 = vld [vmem:[%s4556 + $0x1b2] sm:$0xff]
  %v8652 = vld [vmem:[%s4556 + $0x1ba] sm:$0xff]
  %v8653 = vld [vmem:[%s4556 + $0x1ca] sm:$0xff]
  %v8654 = vld [vmem:[%s4556 + $0x1d2] sm:$0xff]
  %v8655 = vld [vmem:[%s4556 + $0x1e2] sm:$0xff]
  %v8656 = vld [vmem:[%s4556 + $0x1ea] sm:$0xff]
  %v8657 = vld [vmem:[%s4556 + $0x1fa] sm:$0xff]
  %v8658 = vld [vmem:[%s4556 + $0x202] sm:$0xff]
  %v8659 = vld [vmem:[%s4556 + $0x212] sm:$0xff]
  %v8660 = vld [vmem:[%s4556 + $0x21a] sm:$0xff]
  %v8661 = vld [vmem:[%s4556 + $0x22a] sm:$0xff]
  %v8662 = vld [vmem:[%s4556 + $0x232] sm:$0xff]
  %v8663 = vld [vmem:[%s4556 + $0x242] sm:$0xff]
  %v8664 = vld [vmem:[%s4556 + $0x24a] sm:$0xff]
  %v8665 = vld [vmem:[%s4556 + $0x25a] sm:$0xff]
  %v8666 = vld [vmem:[%s4556 + $0x262] sm:$0xff]
  %v8667 = vld [vmem:[%s4556 + $0x272] sm:$0xff]
  %v8668 = vld [vmem:[%s4556 + $0x27a] sm:$0xff]
  %v8669 = vld [vmem:[%s4556 + $0x28a] sm:$0xff]
  %v8670 = vld [vmem:[%s4556 + $0x292] sm:$0xff]
  %v8671 = vld [vmem:[%s4556 + $0x2a2] sm:$0xff]
  %v8672 = vld [vmem:[%s4556 + $0x2aa] sm:$0xff]
  %v8673 = vld [vmem:[%s4556 + $0x2ba] sm:$0xff]
  %v8674 = vld [vmem:[%s4556 + $0x2c2] sm:$0xff]
  %v8675 = vld [vmem:[%s4556 + $0x2d2] sm:$0xff]
  %v8676 = vld [vmem:[%s4556 + $0x2da] sm:$0xff]
  %v8677 = vld [vmem:[%s4556 + $0x2ea] sm:$0xff]
  %v8678 = vld [vmem:[%s4556 + $0x2f2] sm:$0xff]
  %v8679 = vld [vmem:[%s4556 + $0x302] sm:$0xff]
  %v8680 = vld [vmem:[%s4556 + $0x30a] sm:$0xff]
  %v8681 = vld [vmem:[%s4556 + $0x31a] sm:$0xff]
  %v8682 = vld [vmem:[%s4556 + $0x322] sm:$0xff]
  %v8683 = vld [vmem:[%s5005] sm:$0xff]
  %v8684 = vld [vmem:[%s5005 + $0x8] sm:$0xff]
  %v8685 = vld [vmem:[%s5005 + $0x18] sm:$0xff]
  %v8686 = vld [vmem:[%s5005 + $0x20] sm:$0xff]
  %v8687 = vld [vmem:[%s5005 + $0x30] sm:$0xff]
  %v8688 = vld [vmem:[%s5005 + $0x38] sm:$0xff]
  %v8689 = vld [vmem:[%s5005 + $0x48] sm:$0xff]
  %v8690 = vld [vmem:[%s5005 + $0x50] sm:$0xff]
  %v8691 = vld [vmem:[%s5005 + $0x60] sm:$0xff]
  %v8692 = vld [vmem:[%s5005 + $0x68] sm:$0xff]
  %v8693 = vld [vmem:[%s5005 + $0x78] sm:$0xff]
  %v8694 = vld [vmem:[%s5005 + $0x80] sm:$0xff]
  %v8695 = vld [vmem:[%s5005 + $0x90] sm:$0xff]
  %v8696 = vld [vmem:[%s5005 + $0x98] sm:$0xff]
  %v8697 = vld [vmem:[%s5005 + $0xa8] sm:$0xff]
  %v8698 = vld [vmem:[%s5005 + $0xb0] sm:$0xff]
  %v8699 = vld [vmem:[%s5005 + $0xc0] sm:$0xff]
  %v8700 = vld [vmem:[%s5005 + $0xc8] sm:$0xff]
  %v8701 = vld [vmem:[%s5005 + $0xd8] sm:$0xff]
  %v8702 = vld [vmem:[%s5005 + $0xe0] sm:$0xff]
  %v8703 = vld [vmem:[%s5005 + $0xf0] sm:$0xff]
  %v8704 = vld [vmem:[%s5005 + $0xf8] sm:$0xff]
  %v8705 = vld [vmem:[%s5005 + $0x108] sm:$0xff]
  %v8706 = vld [vmem:[%s5005 + $0x110] sm:$0xff]
  %v8707 = vld [vmem:[%s5005 + $0x120] sm:$0xff]
  %v8708 = vld [vmem:[%s5005 + $0x128] sm:$0xff]
  %v8709 = vld [vmem:[%s5005 + $0x138] sm:$0xff]
  %v8710 = vld [vmem:[%s5005 + $0x140] sm:$0xff]
  %v8711 = vld [vmem:[%s5005 + $0x150] sm:$0xff]
  %v8712 = vld [vmem:[%s5005 + $0x158] sm:$0xff]
  %v8713 = vld [vmem:[%s5005 + $0x168] sm:$0xff]
  %v8714 = vld [vmem:[%s5005 + $0x170] sm:$0xff]
  %v8715 = vld [vmem:[%s5005 + $0x1b0] sm:$0xff]
  %v8716 = vld [vmem:[%s5005 + $0x1b8] sm:$0xff]
  %v8717 = vld [vmem:[%s5005 + $0x1c8] sm:$0xff]
  %v8718 = vld [vmem:[%s5005 + $0x1d0] sm:$0xff]
  %v8719 = vld [vmem:[%s5005 + $0x1e0] sm:$0xff]
  %v8720 = vld [vmem:[%s5005 + $0x1e8] sm:$0xff]
  %v8721 = vld [vmem:[%s5005 + $0x1f8] sm:$0xff]
  %v8722 = vld [vmem:[%s5005 + $0x200] sm:$0xff]
  %v8723 = vld [vmem:[%s5005 + $0x210] sm:$0xff]
  %v8724 = vld [vmem:[%s5005 + $0x218] sm:$0xff]
  %v8725 = vld [vmem:[%s5005 + $0x228] sm:$0xff]
  %v8726 = vld [vmem:[%s5005 + $0x230] sm:$0xff]
  %v8727 = vld [vmem:[%s5005 + $0x240] sm:$0xff]
  %v8728 = vld [vmem:[%s5005 + $0x248] sm:$0xff]
  %v8729 = vld [vmem:[%s5005 + $0x258] sm:$0xff]
  %v8730 = vld [vmem:[%s5005 + $0x260] sm:$0xff]
  %v8731 = vld [vmem:[%s5005 + $0x270] sm:$0xff]
  %v8732 = vld [vmem:[%s5005 + $0x278] sm:$0xff]
  %v8733 = vld [vmem:[%s5005 + $0x288] sm:$0xff]
  %v8734 = vld [vmem:[%s5005 + $0x290] sm:$0xff]
  %v8735 = vld [vmem:[%s5005 + $0x2a0] sm:$0xff]
  %v8736 = vld [vmem:[%s5005 + $0x2a8] sm:$0xff]
  %v8737 = vld [vmem:[%s5005 + $0x2b8] sm:$0xff]
  %v8738 = vld [vmem:[%s5005 + $0x2c0] sm:$0xff]
  %v8739 = vld [vmem:[%s5005 + $0x2d0] sm:$0xff]
  %v8740 = vld [vmem:[%s5005 + $0x2d8] sm:$0xff]
  %v8741 = vld [vmem:[%s5005 + $0x2e8] sm:$0xff]
  %v8742 = vld [vmem:[%s5005 + $0x2f0] sm:$0xff]
  %v8743 = vld [vmem:[%s5005 + $0x300] sm:$0xff]
  %v8744 = vld [vmem:[%s5005 + $0x308] sm:$0xff]
  %v8745 = vld [vmem:[%s5005 + $0x318] sm:$0xff]
  %v8746 = vld [vmem:[%s5005 + $0x320] sm:$0xff]
  %v8747 = vld [vmem:[%s5005 + $0x1] sm:$0xff]
  %v8748 = vld [vmem:[%s5005 + $0x9] sm:$0xff]
  %v8749 = vld [vmem:[%s5005 + $0x19] sm:$0xff]
  %v8750 = vld [vmem:[%s5005 + $0x21] sm:$0xff]
  %v8751 = vld [vmem:[%s5005 + $0x31] sm:$0xff]
  %v8752 = vld [vmem:[%s5005 + $0x39] sm:$0xff]
  %v8753 = vld [vmem:[%s5005 + $0x49] sm:$0xff]
  %v8754 = vld [vmem:[%s5005 + $0x51] sm:$0xff]
  %v8755 = vld [vmem:[%s5005 + $0x61] sm:$0xff]
  %v8756 = vld [vmem:[%s5005 + $0x69] sm:$0xff]
  %v8757 = vld [vmem:[%s5005 + $0x79] sm:$0xff]
  %v8758 = vld [vmem:[%s5005 + $0x81] sm:$0xff]
  %v8759 = vld [vmem:[%s5005 + $0x91] sm:$0xff]
  %v8760 = vld [vmem:[%s5005 + $0x99] sm:$0xff]
  %v8761 = vld [vmem:[%s5005 + $0xa9] sm:$0xff]
  %v8762 = vld [vmem:[%s5005 + $0xb1] sm:$0xff]
  %v8763 = vld [vmem:[%s5005 + $0xc1] sm:$0xff]
  %v8764 = vld [vmem:[%s5005 + $0xc9] sm:$0xff]
  %v8765 = vld [vmem:[%s5005 + $0xd9] sm:$0xff]
  %v8766 = vld [vmem:[%s5005 + $0xe1] sm:$0xff]
  %v8767 = vld [vmem:[%s5005 + $0xf1] sm:$0xff]
  %v8768 = vld [vmem:[%s5005 + $0xf9] sm:$0xff]
  %v8769 = vld [vmem:[%s5005 + $0x109] sm:$0xff]
  %v8770 = vld [vmem:[%s5005 + $0x111] sm:$0xff]
  %v8771 = vld [vmem:[%s5005 + $0x121] sm:$0xff]
  %v8772 = vld [vmem:[%s5005 + $0x129] sm:$0xff]
  %v8773 = vld [vmem:[%s5005 + $0x139] sm:$0xff]
  %v8774 = vld [vmem:[%s5005 + $0x141] sm:$0xff]
  %v8775 = vld [vmem:[%s5005 + $0x151] sm:$0xff]
  %v8776 = vld [vmem:[%s5005 + $0x159] sm:$0xff]
  %v8777 = vld [vmem:[%s5005 + $0x169] sm:$0xff]
  %v8778 = vld [vmem:[%s5005 + $0x171] sm:$0xff]
  %v8779 = vld [vmem:[%s5005 + $0x1b1] sm:$0xff]
  %v8780 = vld [vmem:[%s5005 + $0x1b9] sm:$0xff]
  %v8781 = vld [vmem:[%s5005 + $0x1c9] sm:$0xff]
  %v8782 = vld [vmem:[%s5005 + $0x1d1] sm:$0xff]
  %v8783 = vld [vmem:[%s5005 + $0x1e1] sm:$0xff]
  %v8784 = vld [vmem:[%s5005 + $0x1e9] sm:$0xff]
  %v8785 = vld [vmem:[%s5005 + $0x1f9] sm:$0xff]
  %v8786 = vld [vmem:[%s5005 + $0x201] sm:$0xff]
  %v8787 = vld [vmem:[%s5005 + $0x211] sm:$0xff]
  %v8788 = vld [vmem:[%s5005 + $0x219] sm:$0xff]
  %v8789 = vld [vmem:[%s5005 + $0x229] sm:$0xff]
  %v8790 = vld [vmem:[%s5005 + $0x231] sm:$0xff]
  %v8791 = vld [vmem:[%s5005 + $0x241] sm:$0xff]
  %v8792 = vld [vmem:[%s5005 + $0x249] sm:$0xff]
  %v8793 = vld [vmem:[%s5005 + $0x259] sm:$0xff]
  %v8794 = vld [vmem:[%s5005 + $0x261] sm:$0xff]
  %v8795 = vld [vmem:[%s5005 + $0x271] sm:$0xff]
  %v8796 = vld [vmem:[%s5005 + $0x279] sm:$0xff]
  %v8797 = vld [vmem:[%s5005 + $0x289] sm:$0xff]
  %v8798 = vld [vmem:[%s5005 + $0x291] sm:$0xff]
  %v8799 = vld [vmem:[%s5005 + $0x2a1] sm:$0xff]
  %v8800 = vld [vmem:[%s5005 + $0x2a9] sm:$0xff]
  %v8801 = vld [vmem:[%s5005 + $0x2b9] sm:$0xff]
  %v8802 = vld [vmem:[%s5005 + $0x2c1] sm:$0xff]
  %v8803 = vld [vmem:[%s5005 + $0x2d1] sm:$0xff]
  %v8804 = vld [vmem:[%s5005 + $0x2d9] sm:$0xff]
  %v8805 = vld [vmem:[%s5005 + $0x2e9] sm:$0xff]
  %v8806 = vld [vmem:[%s5005 + $0x2f1] sm:$0xff]
  %v8807 = vld [vmem:[%s5005 + $0x301] sm:$0xff]
  %v8808 = vld [vmem:[%s5005 + $0x309] sm:$0xff]
  %v8809 = vld [vmem:[%s5005 + $0x319] sm:$0xff]
  %v8810 = vld [vmem:[%s5005 + $0x321] sm:$0xff]
  %v8811 = vld [vmem:[%s5005 + $0x2] sm:$0xff]
  %v8812 = vld [vmem:[%s5005 + $0xa] sm:$0xff]
  %v8813 = vld [vmem:[%s5005 + $0x1a] sm:$0xff]
  %v8814 = vld [vmem:[%s5005 + $0x22] sm:$0xff]
  %v8815 = vld [vmem:[%s5005 + $0x32] sm:$0xff]
  %v8816 = vld [vmem:[%s5005 + $0x3a] sm:$0xff]
  %v8817 = vld [vmem:[%s5005 + $0x4a] sm:$0xff]
  %v8818 = vld [vmem:[%s5005 + $0x52] sm:$0xff]
  %v8819 = vld [vmem:[%s5005 + $0x62] sm:$0xff]
  %v8820 = vld [vmem:[%s5005 + $0x6a] sm:$0xff]
  %v8821 = vld [vmem:[%s5005 + $0x7a] sm:$0xff]
  %v8822 = vld [vmem:[%s5005 + $0x82] sm:$0xff]
  %v8823 = vld [vmem:[%s5005 + $0x92] sm:$0xff]
  %v8824 = vld [vmem:[%s5005 + $0x9a] sm:$0xff]
  %v8825 = vld [vmem:[%s5005 + $0xaa] sm:$0xff]
  %v8826 = vld [vmem:[%s5005 + $0xb2] sm:$0xff]
  %v8827 = vld [vmem:[%s5005 + $0xc2] sm:$0xff]
  %v8828 = vld [vmem:[%s5005 + $0xca] sm:$0xff]
  %v8829 = vld [vmem:[%s5005 + $0xda] sm:$0xff]
  %v8830 = vld [vmem:[%s5005 + $0xe2] sm:$0xff]
  %v8831 = vld [vmem:[%s5005 + $0xf2] sm:$0xff]
  %v8832 = vld [vmem:[%s5005 + $0xfa] sm:$0xff]
  %v8833 = vld [vmem:[%s5005 + $0x10a] sm:$0xff]
  %v8834 = vld [vmem:[%s5005 + $0x112] sm:$0xff]
  %v8835 = vld [vmem:[%s5005 + $0x122] sm:$0xff]
  %v8836 = vld [vmem:[%s5005 + $0x12a] sm:$0xff]
  %v8837 = vld [vmem:[%s5005 + $0x13a] sm:$0xff]
  %v8838 = vld [vmem:[%s5005 + $0x142] sm:$0xff]
  %v8839 = vld [vmem:[%s5005 + $0x152] sm:$0xff]
  %v8840 = vld [vmem:[%s5005 + $0x15a] sm:$0xff]
  %v8841 = vld [vmem:[%s5005 + $0x16a] sm:$0xff]
  %v8842 = vld [vmem:[%s5005 + $0x172] sm:$0xff]
  %v8843 = vld [vmem:[%s5005 + $0x1b2] sm:$0xff]
  %v8844 = vld [vmem:[%s5005 + $0x1ba] sm:$0xff]
  %v8845 = vld [vmem:[%s5005 + $0x1ca] sm:$0xff]
  %v8846 = vld [vmem:[%s5005 + $0x1d2] sm:$0xff]
  %v8847 = vld [vmem:[%s5005 + $0x1e2] sm:$0xff]
  %v8848 = vld [vmem:[%s5005 + $0x1ea] sm:$0xff]
  %v8849 = vld [vmem:[%s5005 + $0x1fa] sm:$0xff]
  %v8850 = vld [vmem:[%s5005 + $0x202] sm:$0xff]
  %v8851 = vld [vmem:[%s5005 + $0x212] sm:$0xff]
  %v8852 = vld [vmem:[%s5005 + $0x21a] sm:$0xff]
  %v8853 = vld [vmem:[%s5005 + $0x22a] sm:$0xff]
  %v8854 = vld [vmem:[%s5005 + $0x232] sm:$0xff]
  %v8855 = vld [vmem:[%s5005 + $0x242] sm:$0xff]
  %v8856 = vld [vmem:[%s5005 + $0x24a] sm:$0xff]
  %v8857 = vld [vmem:[%s5005 + $0x25a] sm:$0xff]
  %v8858 = vld [vmem:[%s5005 + $0x262] sm:$0xff]
  %v8859 = vld [vmem:[%s5005 + $0x272] sm:$0xff]
  %v8860 = vld [vmem:[%s5005 + $0x27a] sm:$0xff]
  %v8861 = vld [vmem:[%s5005 + $0x28a] sm:$0xff]
  %v8862 = vld [vmem:[%s5005 + $0x292] sm:$0xff]
  %v8863 = vld [vmem:[%s5005 + $0x2a2] sm:$0xff]
  %v8864 = vld [vmem:[%s5005 + $0x2aa] sm:$0xff]
  %v8865 = vld [vmem:[%s5005 + $0x2ba] sm:$0xff]
  %v8866 = vld [vmem:[%s5005 + $0x2c2] sm:$0xff]
  %v8867 = vld [vmem:[%s5005 + $0x2d2] sm:$0xff]
  %v8868 = vld [vmem:[%s5005 + $0x2da] sm:$0xff]
  %v8869 = vld [vmem:[%s5005 + $0x2ea] sm:$0xff]
  %v8870 = vld [vmem:[%s5005 + $0x2f2] sm:$0xff]
  %v8871 = vld [vmem:[%s5005 + $0x302] sm:$0xff]
  %v8872 = vld [vmem:[%s5005 + $0x30a] sm:$0xff]
  %v8873 = vld [vmem:[%s5005 + $0x31a] sm:$0xff]
  %v8874 = vld [vmem:[%s5005 + $0x322] sm:$0xff]
  %8939 = vrot.lane.b32.xlu0 %v8363, 32
  %v8940 = vpop.permute.xlu0 %8939
  %8941 = vrot.lane.b32.xlu0 %v8364, 32
  %v8942 = vpop.permute.xlu0 %8941
  %8943 = vrot.lane.b32.xlu0 %v8365, 32
  %v8944 = vpop.permute.xlu0 %8943
  %8945 = vrot.lane.b32.xlu0 %v8366, 32
  %v8946 = vpop.permute.xlu0 %8945
  %8947 = vrot.lane.b32.xlu0 %v8367, 32
  %v8948 = vpop.permute.xlu0 %8947
  %8949 = vrot.lane.b32.xlu0 %v8368, 32
  %v8950 = vpop.permute.xlu0 %8949
  %8951 = vrot.lane.b32.xlu0 %v8369, 32
  %v8952 = vpop.permute.xlu0 %8951
  %8953 = vrot.lane.b32.xlu0 %v8370, 32
  %v8954 = vpop.permute.xlu0 %8953
  %8955 = vrot.lane.b32.xlu0 %v8371, 32
  %v8956 = vpop.permute.xlu0 %8955
  %8957 = vrot.lane.b32.xlu0 %v8372, 32
  %v8958 = vpop.permute.xlu0 %8957
  %8959 = vrot.lane.b32.xlu0 %v8373, 32
  %v8960 = vpop.permute.xlu0 %8959
  %8961 = vrot.lane.b32.xlu0 %v8374, 32
  %v8962 = vpop.permute.xlu0 %8961
  %8963 = vrot.lane.b32.xlu0 %v8375, 32
  %v8964 = vpop.permute.xlu0 %8963
  %8965 = vrot.lane.b32.xlu0 %v8376, 32
  %v8966 = vpop.permute.xlu0 %8965
  %8967 = vrot.lane.b32.xlu0 %v8377, 32
  %v8968 = vpop.permute.xlu0 %8967
  %8969 = vrot.lane.b32.xlu0 %v8378, 32
  %v8970 = vpop.permute.xlu0 %8969
  %8971 = vrot.lane.b32.xlu0 %v8379, 32
  %v8972 = vpop.permute.xlu0 %8971
  %8973 = vrot.lane.b32.xlu0 %v8380, 32
  %v8974 = vpop.permute.xlu0 %8973
  %8975 = vrot.lane.b32.xlu0 %v8381, 32
  %v8976 = vpop.permute.xlu0 %8975
  %8977 = vrot.lane.b32.xlu0 %v8382, 32
  %v8978 = vpop.permute.xlu0 %8977
  %8979 = vrot.lane.b32.xlu0 %v8383, 32
  %v8980 = vpop.permute.xlu0 %8979
  %8981 = vrot.lane.b32.xlu0 %v8384, 32
  %v8982 = vpop.permute.xlu0 %8981
  %8983 = vrot.lane.b32.xlu0 %v8385, 32
  %v8984 = vpop.permute.xlu0 %8983
  %8985 = vrot.lane.b32.xlu0 %v8386, 32
  %v8986 = vpop.permute.xlu0 %8985
  %8987 = vrot.lane.b32.xlu0 %v8387, 32
  %v8988 = vpop.permute.xlu0 %8987
  %8989 = vrot.lane.b32.xlu0 %v8388, 32
  %v8990 = vpop.permute.xlu0 %8989
  %8991 = vrot.lane.b32.xlu0 %v8389, 32
  %v8992 = vpop.permute.xlu0 %8991
  %8993 = vrot.lane.b32.xlu0 %v8390, 32
  %v8994 = vpop.permute.xlu0 %8993
  %8995 = vrot.lane.b32.xlu0 %v8391, 32
  %v8996 = vpop.permute.xlu0 %8995
  %8997 = vrot.lane.b32.xlu0 %v8392, 32
  %v8998 = vpop.permute.xlu0 %8997
  %8999 = vrot.lane.b32.xlu0 %v8393, 32
  %v9000 = vpop.permute.xlu0 %8999
  %9001 = vrot.lane.b32.xlu0 %v8394, 32
  %v9002 = vpop.permute.xlu0 %9001
  %9003 = vrot.lane.b32.xlu0 %v8395, 32
  %v9004 = vpop.permute.xlu0 %9003
  %9005 = vrot.lane.b32.xlu0 %v8396, 32
  %v9006 = vpop.permute.xlu0 %9005
  %9007 = vrot.lane.b32.xlu0 %v8397, 32
  %v9008 = vpop.permute.xlu0 %9007
  %9009 = vrot.lane.b32.xlu0 %v8398, 32
  %v9010 = vpop.permute.xlu0 %9009
  %9011 = vrot.lane.b32.xlu0 %v8399, 32
  %v9012 = vpop.permute.xlu0 %9011
  %9013 = vrot.lane.b32.xlu0 %v8400, 32
  %v9014 = vpop.permute.xlu0 %9013
  %9015 = vrot.lane.b32.xlu0 %v8401, 32
  %v9016 = vpop.permute.xlu0 %9015
  %9017 = vrot.lane.b32.xlu0 %v8402, 32
  %v9018 = vpop.permute.xlu0 %9017
  %9019 = vrot.lane.b32.xlu0 %v8403, 32
  %v9020 = vpop.permute.xlu0 %9019
  %9021 = vrot.lane.b32.xlu0 %v8404, 32
  %v9022 = vpop.permute.xlu0 %9021
  %9023 = vrot.lane.b32.xlu0 %v8405, 32
  %v9024 = vpop.permute.xlu0 %9023
  %9025 = vrot.lane.b32.xlu0 %v8406, 32
  %v9026 = vpop.permute.xlu0 %9025
  %9027 = vrot.lane.b32.xlu0 %v8407, 32
  %v9028 = vpop.permute.xlu0 %9027
  %9029 = vrot.lane.b32.xlu0 %v8408, 32
  %v9030 = vpop.permute.xlu0 %9029
  %9031 = vrot.lane.b32.xlu0 %v8409, 32
  %v9032 = vpop.permute.xlu0 %9031
  %9033 = vrot.lane.b32.xlu0 %v8410, 32
  %v9034 = vpop.permute.xlu0 %9033
  %9035 = vrot.lane.b32.xlu0 %v8411, 32
  %v9036 = vpop.permute.xlu0 %9035
  %9037 = vrot.lane.b32.xlu0 %v8412, 32
  %v9038 = vpop.permute.xlu0 %9037
  %9039 = vrot.lane.b32.xlu0 %v8413, 32
  %v9040 = vpop.permute.xlu0 %9039
  %9041 = vrot.lane.b32.xlu0 %v8414, 32
  %v9042 = vpop.permute.xlu0 %9041
  %9043 = vrot.lane.b32.xlu0 %v8415, 32
  %v9044 = vpop.permute.xlu0 %9043
  %9045 = vrot.lane.b32.xlu0 %v8416, 32
  %v9046 = vpop.permute.xlu0 %9045
  %9047 = vrot.lane.b32.xlu0 %v8417, 32
  %v9048 = vpop.permute.xlu0 %9047
  %9049 = vrot.lane.b32.xlu0 %v8418, 32
  %v9050 = vpop.permute.xlu0 %9049
  %9051 = vrot.lane.b32.xlu0 %v8419, 32
  %v9052 = vpop.permute.xlu0 %9051
  %9053 = vrot.lane.b32.xlu0 %v8420, 32
  %v9054 = vpop.permute.xlu0 %9053
  %9055 = vrot.lane.b32.xlu0 %v8421, 32
  %v9056 = vpop.permute.xlu0 %9055
  %9057 = vrot.lane.b32.xlu0 %v8422, 32
  %v9058 = vpop.permute.xlu0 %9057
  %9059 = vrot.lane.b32.xlu0 %v8423, 32
  %v9060 = vpop.permute.xlu0 %9059
  %9061 = vrot.lane.b32.xlu0 %v8424, 32
  %v9062 = vpop.permute.xlu0 %9061
  %9063 = vrot.lane.b32.xlu0 %v8425, 32
  %v9064 = vpop.permute.xlu0 %9063
  %9065 = vrot.lane.b32.xlu0 %v8426, 32
  %v9066 = vpop.permute.xlu0 %9065
  %9195 = vrot.lane.b32.xlu0 %v8427, 64
  %v9196 = vpop.permute.xlu0 %9195
  %9197 = vrot.lane.b32.xlu0 %v8428, 64
  %v9198 = vpop.permute.xlu0 %9197
  %9199 = vrot.lane.b32.xlu0 %v8429, 64
  %v9200 = vpop.permute.xlu0 %9199
  %9201 = vrot.lane.b32.xlu0 %v8430, 64
  %v9202 = vpop.permute.xlu0 %9201
  %9203 = vrot.lane.b32.xlu0 %v8431, 64
  %v9204 = vpop.permute.xlu0 %9203
  %9205 = vrot.lane.b32.xlu0 %v8432, 64
  %v9206 = vpop.permute.xlu0 %9205
  %9207 = vrot.lane.b32.xlu0 %v8433, 64
  %v9208 = vpop.permute.xlu0 %9207
  %9209 = vrot.lane.b32.xlu0 %v8434, 64
  %v9210 = vpop.permute.xlu0 %9209
  %9211 = vrot.lane.b32.xlu0 %v8435, 64
  %v9212 = vpop.permute.xlu0 %9211
  %9213 = vrot.lane.b32.xlu0 %v8436, 64
  %v9214 = vpop.permute.xlu0 %9213
  %9215 = vrot.lane.b32.xlu0 %v8437, 64
  %v9216 = vpop.permute.xlu0 %9215
  %9217 = vrot.lane.b32.xlu0 %v8438, 64
  %v9218 = vpop.permute.xlu0 %9217
  %9219 = vrot.lane.b32.xlu0 %v8439, 64
  %v9220 = vpop.permute.xlu0 %9219
  %9221 = vrot.lane.b32.xlu0 %v8440, 64
  %v9222 = vpop.permute.xlu0 %9221
  %9223 = vrot.lane.b32.xlu0 %v8441, 64
  %v9224 = vpop.permute.xlu0 %9223
  %9225 = vrot.lane.b32.xlu0 %v8442, 64
  %v9226 = vpop.permute.xlu0 %9225
  %9227 = vrot.lane.b32.xlu0 %v8443, 64
  %v9228 = vpop.permute.xlu0 %9227
  %9229 = vrot.lane.b32.xlu0 %v8444, 64
  %v9230 = vpop.permute.xlu0 %9229
  %9231 = vrot.lane.b32.xlu0 %v8445, 64
  %v9232 = vpop.permute.xlu0 %9231
  %9233 = vrot.lane.b32.xlu0 %v8446, 64
  %v9234 = vpop.permute.xlu0 %9233
  %9235 = vrot.lane.b32.xlu0 %v8447, 64
  %v9236 = vpop.permute.xlu0 %9235
  %9237 = vrot.lane.b32.xlu0 %v8448, 64
  %v9238 = vpop.permute.xlu0 %9237
  %9239 = vrot.lane.b32.xlu0 %v8449, 64
  %v9240 = vpop.permute.xlu0 %9239
  %9241 = vrot.lane.b32.xlu0 %v8450, 64
  %v9242 = vpop.permute.xlu0 %9241
  %9243 = vrot.lane.b32.xlu0 %v8451, 64
  %v9244 = vpop.permute.xlu0 %9243
  %9245 = vrot.lane.b32.xlu0 %v8452, 64
  %v9246 = vpop.permute.xlu0 %9245
  %9247 = vrot.lane.b32.xlu0 %v8453, 64
  %v9248 = vpop.permute.xlu0 %9247
  %9249 = vrot.lane.b32.xlu0 %v8454, 64
  %v9250 = vpop.permute.xlu0 %9249
  %9251 = vrot.lane.b32.xlu0 %v8455, 64
  %v9252 = vpop.permute.xlu0 %9251
  %9253 = vrot.lane.b32.xlu0 %v8456, 64
  %v9254 = vpop.permute.xlu0 %9253
  %9255 = vrot.lane.b32.xlu0 %v8457, 64
  %v9256 = vpop.permute.xlu0 %9255
  %9257 = vrot.lane.b32.xlu0 %v8458, 64
  %v9258 = vpop.permute.xlu0 %9257
  %9259 = vrot.lane.b32.xlu0 %v8459, 64
  %v9260 = vpop.permute.xlu0 %9259
  %9261 = vrot.lane.b32.xlu0 %v8460, 64
  %v9262 = vpop.permute.xlu0 %9261
  %9263 = vrot.lane.b32.xlu0 %v8461, 64
  %v9264 = vpop.permute.xlu0 %9263
  %9265 = vrot.lane.b32.xlu0 %v8462, 64
  %v9266 = vpop.permute.xlu0 %9265
  %9267 = vrot.lane.b32.xlu0 %v8463, 64
  %v9268 = vpop.permute.xlu0 %9267
  %9269 = vrot.lane.b32.xlu0 %v8464, 64
  %v9270 = vpop.permute.xlu0 %9269
  %9271 = vrot.lane.b32.xlu0 %v8465, 64
  %v9272 = vpop.permute.xlu0 %9271
  %9273 = vrot.lane.b32.xlu0 %v8466, 64
  %v9274 = vpop.permute.xlu0 %9273
  %9275 = vrot.lane.b32.xlu0 %v8467, 64
  %v9276 = vpop.permute.xlu0 %9275
  %9277 = vrot.lane.b32.xlu0 %v8468, 64
  %v9278 = vpop.permute.xlu0 %9277
  %9279 = vrot.lane.b32.xlu0 %v8469, 64
  %v9280 = vpop.permute.xlu0 %9279
  %9281 = vrot.lane.b32.xlu0 %v8470, 64
  %v9282 = vpop.permute.xlu0 %9281
  %9283 = vrot.lane.b32.xlu0 %v8471, 64
  %v9284 = vpop.permute.xlu0 %9283
  %9285 = vrot.lane.b32.xlu0 %v8472, 64
  %v9286 = vpop.permute.xlu0 %9285
  %9287 = vrot.lane.b32.xlu0 %v8473, 64
  %v9288 = vpop.permute.xlu0 %9287
  %9289 = vrot.lane.b32.xlu0 %v8474, 64
  %v9290 = vpop.permute.xlu0 %9289
  %9291 = vrot.lane.b32.xlu0 %v8475, 64
  %v9292 = vpop.permute.xlu0 %9291
  %9293 = vrot.lane.b32.xlu0 %v8476, 64
  %v9294 = vpop.permute.xlu0 %9293
  %9295 = vrot.lane.b32.xlu0 %v8477, 64
  %v9296 = vpop.permute.xlu0 %9295
  %9297 = vrot.lane.b32.xlu0 %v8478, 64
  %v9298 = vpop.permute.xlu0 %9297
  %9299 = vrot.lane.b32.xlu0 %v8479, 64
  %v9300 = vpop.permute.xlu0 %9299
  %9301 = vrot.lane.b32.xlu0 %v8480, 64
  %v9302 = vpop.permute.xlu0 %9301
  %9303 = vrot.lane.b32.xlu0 %v8481, 64
  %v9304 = vpop.permute.xlu0 %9303
  %9305 = vrot.lane.b32.xlu0 %v8482, 64
  %v9306 = vpop.permute.xlu0 %9305
  %9307 = vrot.lane.b32.xlu0 %v8483, 64
  %v9308 = vpop.permute.xlu0 %9307
  %9309 = vrot.lane.b32.xlu0 %v8484, 64
  %v9310 = vpop.permute.xlu0 %9309
  %9311 = vrot.lane.b32.xlu0 %v8485, 64
  %v9312 = vpop.permute.xlu0 %9311
  %9313 = vrot.lane.b32.xlu0 %v8486, 64
  %v9314 = vpop.permute.xlu0 %9313
  %9315 = vrot.lane.b32.xlu0 %v8487, 64
  %v9316 = vpop.permute.xlu0 %9315
  %9317 = vrot.lane.b32.xlu0 %v8488, 64
  %v9318 = vpop.permute.xlu0 %9317
  %9319 = vrot.lane.b32.xlu0 %v8489, 64
  %v9320 = vpop.permute.xlu0 %9319
  %9321 = vrot.lane.b32.xlu0 %v8490, 64
  %v9322 = vpop.permute.xlu0 %9321
  %9451 = vrot.lane.b32.xlu0 %v8491, 96
  %v9452 = vpop.permute.xlu0 %9451
  %9453 = vrot.lane.b32.xlu0 %v8492, 96
  %v9454 = vpop.permute.xlu0 %9453
  %9455 = vrot.lane.b32.xlu0 %v8493, 96
  %v9456 = vpop.permute.xlu0 %9455
  %9457 = vrot.lane.b32.xlu0 %v8494, 96
  %v9458 = vpop.permute.xlu0 %9457
  %9459 = vrot.lane.b32.xlu0 %v8495, 96
  %v9460 = vpop.permute.xlu0 %9459
  %9461 = vrot.lane.b32.xlu0 %v8496, 96
  %v9462 = vpop.permute.xlu0 %9461
  %9463 = vrot.lane.b32.xlu0 %v8497, 96
  %v9464 = vpop.permute.xlu0 %9463
  %9465 = vrot.lane.b32.xlu0 %v8498, 96
  %v9466 = vpop.permute.xlu0 %9465
  %9467 = vrot.lane.b32.xlu0 %v8499, 96
  %v9468 = vpop.permute.xlu0 %9467
  %9469 = vrot.lane.b32.xlu0 %v8500, 96
  %v9470 = vpop.permute.xlu0 %9469
  %9471 = vrot.lane.b32.xlu0 %v8501, 96
  %v9472 = vpop.permute.xlu0 %9471
  %9473 = vrot.lane.b32.xlu0 %v8502, 96
  %v9474 = vpop.permute.xlu0 %9473
  %9475 = vrot.lane.b32.xlu0 %v8503, 96
  %v9476 = vpop.permute.xlu0 %9475
  %9477 = vrot.lane.b32.xlu0 %v8504, 96
  %v9478 = vpop.permute.xlu0 %9477
  %9479 = vrot.lane.b32.xlu0 %v8505, 96
  %v9480 = vpop.permute.xlu0 %9479
  %9481 = vrot.lane.b32.xlu0 %v8506, 96
  %v9482 = vpop.permute.xlu0 %9481
  %9483 = vrot.lane.b32.xlu0 %v8507, 96
  %v9484 = vpop.permute.xlu0 %9483
  %9485 = vrot.lane.b32.xlu0 %v8508, 96
  %v9486 = vpop.permute.xlu0 %9485
  %9487 = vrot.lane.b32.xlu0 %v8509, 96
  %v9488 = vpop.permute.xlu0 %9487
  %9489 = vrot.lane.b32.xlu0 %v8510, 96
  %v9490 = vpop.permute.xlu0 %9489
  %9491 = vrot.lane.b32.xlu0 %v8511, 96
  %v9492 = vpop.permute.xlu0 %9491
  %9493 = vrot.lane.b32.xlu0 %v8512, 96
  %v9494 = vpop.permute.xlu0 %9493
  %9495 = vrot.lane.b32.xlu0 %v8513, 96
  %v9496 = vpop.permute.xlu0 %9495
  %9497 = vrot.lane.b32.xlu0 %v8514, 96
  %v9498 = vpop.permute.xlu0 %9497
  %9499 = vrot.lane.b32.xlu0 %v8515, 96
  %v9500 = vpop.permute.xlu0 %9499
  %9501 = vrot.lane.b32.xlu0 %v8516, 96
  %v9502 = vpop.permute.xlu0 %9501
  %9503 = vrot.lane.b32.xlu0 %v8517, 96
  %v9504 = vpop.permute.xlu0 %9503
  %9505 = vrot.lane.b32.xlu0 %v8518, 96
  %v9506 = vpop.permute.xlu0 %9505
  %9507 = vrot.lane.b32.xlu0 %v8519, 96
  %v9508 = vpop.permute.xlu0 %9507
  %9509 = vrot.lane.b32.xlu0 %v8520, 96
  %v9510 = vpop.permute.xlu0 %9509
  %9511 = vrot.lane.b32.xlu0 %v8521, 96
  %v9512 = vpop.permute.xlu0 %9511
  %9513 = vrot.lane.b32.xlu0 %v8522, 96
  %v9514 = vpop.permute.xlu0 %9513
  %9515 = vrot.lane.b32.xlu0 %v8523, 96
  %v9516 = vpop.permute.xlu0 %9515
  %9517 = vrot.lane.b32.xlu0 %v8524, 96
  %v9518 = vpop.permute.xlu0 %9517
  %9519 = vrot.lane.b32.xlu0 %v8525, 96
  %v9520 = vpop.permute.xlu0 %9519
  %9521 = vrot.lane.b32.xlu0 %v8526, 96
  %v9522 = vpop.permute.xlu0 %9521
  %9523 = vrot.lane.b32.xlu0 %v8527, 96
  %v9524 = vpop.permute.xlu0 %9523
  %9525 = vrot.lane.b32.xlu0 %v8528, 96
  %v9526 = vpop.permute.xlu0 %9525
  %9527 = vrot.lane.b32.xlu0 %v8529, 96
  %v9528 = vpop.permute.xlu0 %9527
  %9529 = vrot.lane.b32.xlu0 %v8530, 96
  %v9530 = vpop.permute.xlu0 %9529
  %9531 = vrot.lane.b32.xlu0 %v8531, 96
  %v9532 = vpop.permute.xlu0 %9531
  %9533 = vrot.lane.b32.xlu0 %v8532, 96
  %v9534 = vpop.permute.xlu0 %9533
  %9535 = vrot.lane.b32.xlu0 %v8533, 96
  %v9536 = vpop.permute.xlu0 %9535
  %9537 = vrot.lane.b32.xlu0 %v8534, 96
  %v9538 = vpop.permute.xlu0 %9537
  %9539 = vrot.lane.b32.xlu0 %v8535, 96
  %v9540 = vpop.permute.xlu0 %9539
  %9541 = vrot.lane.b32.xlu0 %v8536, 96
  %v9542 = vpop.permute.xlu0 %9541
  %9543 = vrot.lane.b32.xlu0 %v8537, 96
  %v9544 = vpop.permute.xlu0 %9543
  %9545 = vrot.lane.b32.xlu0 %v8538, 96
  %v9546 = vpop.permute.xlu0 %9545
  %9547 = vrot.lane.b32.xlu0 %v8539, 96
  %v9548 = vpop.permute.xlu0 %9547
  %9549 = vrot.lane.b32.xlu0 %v8540, 96
  %v9550 = vpop.permute.xlu0 %9549
  %9551 = vrot.lane.b32.xlu0 %v8541, 96
  %v9552 = vpop.permute.xlu0 %9551
  %9553 = vrot.lane.b32.xlu0 %v8542, 96
  %v9554 = vpop.permute.xlu0 %9553
  %9555 = vrot.lane.b32.xlu0 %v8543, 96
  %v9556 = vpop.permute.xlu0 %9555
  %9557 = vrot.lane.b32.xlu0 %v8544, 96
  %v9558 = vpop.permute.xlu0 %9557
  %9559 = vrot.lane.b32.xlu0 %v8545, 96
  %v9560 = vpop.permute.xlu0 %9559
  %9561 = vrot.lane.b32.xlu0 %v8546, 96
  %v9562 = vpop.permute.xlu0 %9561
  %9563 = vrot.lane.b32.xlu0 %v8547, 96
  %v9564 = vpop.permute.xlu0 %9563
  %9565 = vrot.lane.b32.xlu0 %v8548, 96
  %v9566 = vpop.permute.xlu0 %9565
  %9567 = vrot.lane.b32.xlu0 %v8549, 96
  %v9568 = vpop.permute.xlu0 %9567
  %9569 = vrot.lane.b32.xlu0 %v8550, 96
  %v9570 = vpop.permute.xlu0 %9569
  %9571 = vrot.lane.b32.xlu0 %v8551, 96
  %v9572 = vpop.permute.xlu0 %9571
  %9573 = vrot.lane.b32.xlu0 %v8552, 96
  %v9574 = vpop.permute.xlu0 %9573
  %9575 = vrot.lane.b32.xlu0 %v8553, 96
  %v9576 = vpop.permute.xlu0 %9575
  %9577 = vrot.lane.b32.xlu0 %v8554, 96
  %v9578 = vpop.permute.xlu0 %9577
  %9707 = vrot.lane.b32.xlu0 %v8619, 32
  %v9708 = vpop.permute.xlu0 %9707
  %9709 = vrot.lane.b32.xlu0 %v8620, 32
  %v9710 = vpop.permute.xlu0 %9709
  %9711 = vrot.lane.b32.xlu0 %v8621, 32
  %v9712 = vpop.permute.xlu0 %9711
  %9713 = vrot.lane.b32.xlu0 %v8622, 32
  %v9714 = vpop.permute.xlu0 %9713
  %9715 = vrot.lane.b32.xlu0 %v8623, 32
  %v9716 = vpop.permute.xlu0 %9715
  %9717 = vrot.lane.b32.xlu0 %v8624, 32
  %v9718 = vpop.permute.xlu0 %9717
  %9719 = vrot.lane.b32.xlu0 %v8625, 32
  %v9720 = vpop.permute.xlu0 %9719
  %9721 = vrot.lane.b32.xlu0 %v8626, 32
  %v9722 = vpop.permute.xlu0 %9721
  %9723 = vrot.lane.b32.xlu0 %v8627, 32
  %v9724 = vpop.permute.xlu0 %9723
  %9725 = vrot.lane.b32.xlu0 %v8628, 32
  %v9726 = vpop.permute.xlu0 %9725
  %9727 = vrot.lane.b32.xlu0 %v8629, 32
  %v9728 = vpop.permute.xlu0 %9727
  %9729 = vrot.lane.b32.xlu0 %v8630, 32
  %v9730 = vpop.permute.xlu0 %9729
  %9731 = vrot.lane.b32.xlu0 %v8631, 32
  %v9732 = vpop.permute.xlu0 %9731
  %9733 = vrot.lane.b32.xlu0 %v8632, 32
  %v9734 = vpop.permute.xlu0 %9733
  %9735 = vrot.lane.b32.xlu0 %v8633, 32
  %v9736 = vpop.permute.xlu0 %9735
  %9737 = vrot.lane.b32.xlu0 %v8634, 32
  %v9738 = vpop.permute.xlu0 %9737
  %9739 = vrot.lane.b32.xlu0 %v8635, 32
  %v9740 = vpop.permute.xlu0 %9739
  %9741 = vrot.lane.b32.xlu0 %v8636, 32
  %v9742 = vpop.permute.xlu0 %9741
  %9743 = vrot.lane.b32.xlu0 %v8637, 32
  %v9744 = vpop.permute.xlu0 %9743
  %9745 = vrot.lane.b32.xlu0 %v8638, 32
  %v9746 = vpop.permute.xlu0 %9745
  %9747 = vrot.lane.b32.xlu0 %v8639, 32
  %v9748 = vpop.permute.xlu0 %9747
  %9749 = vrot.lane.b32.xlu0 %v8640, 32
  %v9750 = vpop.permute.xlu0 %9749
  %9751 = vrot.lane.b32.xlu0 %v8641, 32
  %v9752 = vpop.permute.xlu0 %9751
  %9753 = vrot.lane.b32.xlu0 %v8642, 32
  %v9754 = vpop.permute.xlu0 %9753
  %9755 = vrot.lane.b32.xlu0 %v8643, 32
  %v9756 = vpop.permute.xlu0 %9755
  %9757 = vrot.lane.b32.xlu0 %v8644, 32
  %v9758 = vpop.permute.xlu0 %9757
  %9759 = vrot.lane.b32.xlu0 %v8645, 32
  %v9760 = vpop.permute.xlu0 %9759
  %9761 = vrot.lane.b32.xlu0 %v8646, 32
  %v9762 = vpop.permute.xlu0 %9761
  %9763 = vrot.lane.b32.xlu0 %v8647, 32
  %v9764 = vpop.permute.xlu0 %9763
  %9765 = vrot.lane.b32.xlu0 %v8648, 32
  %v9766 = vpop.permute.xlu0 %9765
  %9767 = vrot.lane.b32.xlu0 %v8649, 32
  %v9768 = vpop.permute.xlu0 %9767
  %9769 = vrot.lane.b32.xlu0 %v8650, 32
  %v9770 = vpop.permute.xlu0 %9769
  %9771 = vrot.lane.b32.xlu0 %v8651, 32
  %v9772 = vpop.permute.xlu0 %9771
  %9773 = vrot.lane.b32.xlu0 %v8652, 32
  %v9774 = vpop.permute.xlu0 %9773
  %9775 = vrot.lane.b32.xlu0 %v8653, 32
  %v9776 = vpop.permute.xlu0 %9775
  %9777 = vrot.lane.b32.xlu0 %v8654, 32
  %v9778 = vpop.permute.xlu0 %9777
  %9779 = vrot.lane.b32.xlu0 %v8655, 32
  %v9780 = vpop.permute.xlu0 %9779
  %9781 = vrot.lane.b32.xlu0 %v8656, 32
  %v9782 = vpop.permute.xlu0 %9781
  %9783 = vrot.lane.b32.xlu0 %v8657, 32
  %v9784 = vpop.permute.xlu0 %9783
  %9785 = vrot.lane.b32.xlu0 %v8658, 32
  %v9786 = vpop.permute.xlu0 %9785
  %9787 = vrot.lane.b32.xlu0 %v8659, 32
  %v9788 = vpop.permute.xlu0 %9787
  %9789 = vrot.lane.b32.xlu0 %v8660, 32
  %v9790 = vpop.permute.xlu0 %9789
  %9791 = vrot.lane.b32.xlu0 %v8661, 32
  %v9792 = vpop.permute.xlu0 %9791
  %9793 = vrot.lane.b32.xlu0 %v8662, 32
  %v9794 = vpop.permute.xlu0 %9793
  %9795 = vrot.lane.b32.xlu0 %v8663, 32
  %v9796 = vpop.permute.xlu0 %9795
  %9797 = vrot.lane.b32.xlu0 %v8664, 32
  %v9798 = vpop.permute.xlu0 %9797
  %9799 = vrot.lane.b32.xlu0 %v8665, 32
  %v9800 = vpop.permute.xlu0 %9799
  %9801 = vrot.lane.b32.xlu0 %v8666, 32
  %v9802 = vpop.permute.xlu0 %9801
  %9803 = vrot.lane.b32.xlu0 %v8667, 32
  %v9804 = vpop.permute.xlu0 %9803
  %9805 = vrot.lane.b32.xlu0 %v8668, 32
  %v9806 = vpop.permute.xlu0 %9805
  %9807 = vrot.lane.b32.xlu0 %v8669, 32
  %v9808 = vpop.permute.xlu0 %9807
  %9809 = vrot.lane.b32.xlu0 %v8670, 32
  %v9810 = vpop.permute.xlu0 %9809
  %9811 = vrot.lane.b32.xlu0 %v8671, 32
  %v9812 = vpop.permute.xlu0 %9811
  %9813 = vrot.lane.b32.xlu0 %v8672, 32
  %v9814 = vpop.permute.xlu0 %9813
  %9815 = vrot.lane.b32.xlu0 %v8673, 32
  %v9816 = vpop.permute.xlu0 %9815
  %9817 = vrot.lane.b32.xlu0 %v8674, 32
  %v9818 = vpop.permute.xlu0 %9817
  %9819 = vrot.lane.b32.xlu0 %v8675, 32
  %v9820 = vpop.permute.xlu0 %9819
  %9821 = vrot.lane.b32.xlu0 %v8676, 32
  %v9822 = vpop.permute.xlu0 %9821
  %9823 = vrot.lane.b32.xlu0 %v8677, 32
  %v9824 = vpop.permute.xlu0 %9823
  %9825 = vrot.lane.b32.xlu0 %v8678, 32
  %v9826 = vpop.permute.xlu0 %9825
  %9827 = vrot.lane.b32.xlu0 %v8679, 32
  %v9828 = vpop.permute.xlu0 %9827
  %9829 = vrot.lane.b32.xlu0 %v8680, 32
  %v9830 = vpop.permute.xlu0 %9829
  %9831 = vrot.lane.b32.xlu0 %v8681, 32
  %v9832 = vpop.permute.xlu0 %9831
  %9833 = vrot.lane.b32.xlu0 %v8682, 32
  %v9834 = vpop.permute.xlu0 %9833
  %9963 = vrot.lane.b32.xlu0 %v8683, 64
  %v9964 = vpop.permute.xlu0 %9963
  %9965 = vrot.lane.b32.xlu0 %v8684, 64
  %v9966 = vpop.permute.xlu0 %9965
  %9967 = vrot.lane.b32.xlu0 %v8685, 64
  %v9968 = vpop.permute.xlu0 %9967
  %9969 = vrot.lane.b32.xlu0 %v8686, 64
  %v9970 = vpop.permute.xlu0 %9969
  %9971 = vrot.lane.b32.xlu0 %v8687, 64
  %v9972 = vpop.permute.xlu0 %9971
  %9973 = vrot.lane.b32.xlu0 %v8688, 64
  %v9974 = vpop.permute.xlu0 %9973
  %9975 = vrot.lane.b32.xlu0 %v8689, 64
  %v9976 = vpop.permute.xlu0 %9975
  %9977 = vrot.lane.b32.xlu0 %v8690, 64
  %v9978 = vpop.permute.xlu0 %9977
  %9979 = vrot.lane.b32.xlu0 %v8691, 64
  %v9980 = vpop.permute.xlu0 %9979
  %9981 = vrot.lane.b32.xlu0 %v8692, 64
  %v9982 = vpop.permute.xlu0 %9981
  %9983 = vrot.lane.b32.xlu0 %v8693, 64
  %v9984 = vpop.permute.xlu0 %9983
  %9985 = vrot.lane.b32.xlu0 %v8694, 64
  %v9986 = vpop.permute.xlu0 %9985
  %9987 = vrot.lane.b32.xlu0 %v8695, 64
  %v9988 = vpop.permute.xlu0 %9987
  %9989 = vrot.lane.b32.xlu0 %v8696, 64
  %v9990 = vpop.permute.xlu0 %9989
  %9991 = vrot.lane.b32.xlu0 %v8697, 64
  %v9992 = vpop.permute.xlu0 %9991
  %9993 = vrot.lane.b32.xlu0 %v8698, 64
  %v9994 = vpop.permute.xlu0 %9993
  %9995 = vrot.lane.b32.xlu0 %v8699, 64
  %v9996 = vpop.permute.xlu0 %9995
  %9997 = vrot.lane.b32.xlu0 %v8700, 64
  %v9998 = vpop.permute.xlu0 %9997
  %9999 = vrot.lane.b32.xlu0 %v8701, 64
  %v10000 = vpop.permute.xlu0 %9999
  %10001 = vrot.lane.b32.xlu0 %v8702, 64
  %v10002 = vpop.permute.xlu0 %10001
  %10003 = vrot.lane.b32.xlu0 %v8703, 64
  %v10004 = vpop.permute.xlu0 %10003
  %10005 = vrot.lane.b32.xlu0 %v8704, 64
  %v10006 = vpop.permute.xlu0 %10005
  %10007 = vrot.lane.b32.xlu0 %v8705, 64
  %v10008 = vpop.permute.xlu0 %10007
  %10009 = vrot.lane.b32.xlu0 %v8706, 64
  %v10010 = vpop.permute.xlu0 %10009
  %10011 = vrot.lane.b32.xlu0 %v8707, 64
  %v10012 = vpop.permute.xlu0 %10011
  %10013 = vrot.lane.b32.xlu0 %v8708, 64
  %v10014 = vpop.permute.xlu0 %10013
  %10015 = vrot.lane.b32.xlu0 %v8709, 64
  %v10016 = vpop.permute.xlu0 %10015
  %10017 = vrot.lane.b32.xlu0 %v8710, 64
  %v10018 = vpop.permute.xlu0 %10017
  %10019 = vrot.lane.b32.xlu0 %v8711, 64
  %v10020 = vpop.permute.xlu0 %10019
  %10021 = vrot.lane.b32.xlu0 %v8712, 64
  %v10022 = vpop.permute.xlu0 %10021
  %10023 = vrot.lane.b32.xlu0 %v8713, 64
  %v10024 = vpop.permute.xlu0 %10023
  %10025 = vrot.lane.b32.xlu0 %v8714, 64
  %v10026 = vpop.permute.xlu0 %10025
  %10027 = vrot.lane.b32.xlu0 %v8715, 64
  %v10028 = vpop.permute.xlu0 %10027
  %10029 = vrot.lane.b32.xlu0 %v8716, 64
  %v10030 = vpop.permute.xlu0 %10029
  %10031 = vrot.lane.b32.xlu0 %v8717, 64
  %v10032 = vpop.permute.xlu0 %10031
  %10033 = vrot.lane.b32.xlu0 %v8718, 64
  %v10034 = vpop.permute.xlu0 %10033
  %10035 = vrot.lane.b32.xlu0 %v8719, 64
  %v10036 = vpop.permute.xlu0 %10035
  %10037 = vrot.lane.b32.xlu0 %v8720, 64
  %v10038 = vpop.permute.xlu0 %10037
  %10039 = vrot.lane.b32.xlu0 %v8721, 64
  %v10040 = vpop.permute.xlu0 %10039
  %10041 = vrot.lane.b32.xlu0 %v8722, 64
  %v10042 = vpop.permute.xlu0 %10041
  %10043 = vrot.lane.b32.xlu0 %v8723, 64
  %v10044 = vpop.permute.xlu0 %10043
  %10045 = vrot.lane.b32.xlu0 %v8724, 64
  %v10046 = vpop.permute.xlu0 %10045
  %10047 = vrot.lane.b32.xlu0 %v8725, 64
  %v10048 = vpop.permute.xlu0 %10047
  %10049 = vrot.lane.b32.xlu0 %v8726, 64
  %v10050 = vpop.permute.xlu0 %10049
  %10051 = vrot.lane.b32.xlu0 %v8727, 64
  %v10052 = vpop.permute.xlu0 %10051
  %10053 = vrot.lane.b32.xlu0 %v8728, 64
  %v10054 = vpop.permute.xlu0 %10053
  %10055 = vrot.lane.b32.xlu0 %v8729, 64
  %v10056 = vpop.permute.xlu0 %10055
  %10057 = vrot.lane.b32.xlu0 %v8730, 64
  %v10058 = vpop.permute.xlu0 %10057
  %10059 = vrot.lane.b32.xlu0 %v8731, 64
  %v10060 = vpop.permute.xlu0 %10059
  %10061 = vrot.lane.b32.xlu0 %v8732, 64
  %v10062 = vpop.permute.xlu0 %10061
  %10063 = vrot.lane.b32.xlu0 %v8733, 64
  %v10064 = vpop.permute.xlu0 %10063
  %10065 = vrot.lane.b32.xlu0 %v8734, 64
  %v10066 = vpop.permute.xlu0 %10065
  %10067 = vrot.lane.b32.xlu0 %v8735, 64
  %v10068 = vpop.permute.xlu0 %10067
  %10069 = vrot.lane.b32.xlu0 %v8736, 64
  %v10070 = vpop.permute.xlu0 %10069
  %10071 = vrot.lane.b32.xlu0 %v8737, 64
  %v10072 = vpop.permute.xlu0 %10071
  %10073 = vrot.lane.b32.xlu0 %v8738, 64
  %v10074 = vpop.permute.xlu0 %10073
  %10075 = vrot.lane.b32.xlu0 %v8739, 64
  %v10076 = vpop.permute.xlu0 %10075
  %10077 = vrot.lane.b32.xlu0 %v8740, 64
  %v10078 = vpop.permute.xlu0 %10077
  %10079 = vrot.lane.b32.xlu0 %v8741, 64
  %v10080 = vpop.permute.xlu0 %10079
  %10081 = vrot.lane.b32.xlu0 %v8742, 64
  %v10082 = vpop.permute.xlu0 %10081
  %10083 = vrot.lane.b32.xlu0 %v8743, 64
  %v10084 = vpop.permute.xlu0 %10083
  %10085 = vrot.lane.b32.xlu0 %v8744, 64
  %v10086 = vpop.permute.xlu0 %10085
  %10087 = vrot.lane.b32.xlu0 %v8745, 64
  %v10088 = vpop.permute.xlu0 %10087
  %10089 = vrot.lane.b32.xlu0 %v8746, 64
  %v10090 = vpop.permute.xlu0 %10089
  %10219 = vrot.lane.b32.xlu0 %v8747, 96
  %v10220 = vpop.permute.xlu0 %10219
  %10221 = vrot.lane.b32.xlu0 %v8748, 96
  %v10222 = vpop.permute.xlu0 %10221
  %10223 = vrot.lane.b32.xlu0 %v8749, 96
  %v10224 = vpop.permute.xlu0 %10223
  %10225 = vrot.lane.b32.xlu0 %v8750, 96
  %v10226 = vpop.permute.xlu0 %10225
  %10227 = vrot.lane.b32.xlu0 %v8751, 96
  %v10228 = vpop.permute.xlu0 %10227
  %10229 = vrot.lane.b32.xlu0 %v8752, 96
  %v10230 = vpop.permute.xlu0 %10229
  %10231 = vrot.lane.b32.xlu0 %v8753, 96
  %v10232 = vpop.permute.xlu0 %10231
  %10233 = vrot.lane.b32.xlu0 %v8754, 96
  %v10234 = vpop.permute.xlu0 %10233
  %10235 = vrot.lane.b32.xlu0 %v8755, 96
  %v10236 = vpop.permute.xlu0 %10235
  %10237 = vrot.lane.b32.xlu0 %v8756, 96
  %v10238 = vpop.permute.xlu0 %10237
  %10239 = vrot.lane.b32.xlu0 %v8757, 96
  %v10240 = vpop.permute.xlu0 %10239
  %10241 = vrot.lane.b32.xlu0 %v8758, 96
  %v10242 = vpop.permute.xlu0 %10241
  %10243 = vrot.lane.b32.xlu0 %v8759, 96
  %v10244 = vpop.permute.xlu0 %10243
  %10245 = vrot.lane.b32.xlu0 %v8760, 96
  %v10246 = vpop.permute.xlu0 %10245
  %10247 = vrot.lane.b32.xlu0 %v8761, 96
  %v10248 = vpop.permute.xlu0 %10247
  %10249 = vrot.lane.b32.xlu0 %v8762, 96
  %v10250 = vpop.permute.xlu0 %10249
  %10251 = vrot.lane.b32.xlu0 %v8763, 96
  %v10252 = vpop.permute.xlu0 %10251
  %10253 = vrot.lane.b32.xlu0 %v8764, 96
  %v10254 = vpop.permute.xlu0 %10253
  %10255 = vrot.lane.b32.xlu0 %v8765, 96
  %v10256 = vpop.permute.xlu0 %10255
  %10257 = vrot.lane.b32.xlu0 %v8766, 96
  %v10258 = vpop.permute.xlu0 %10257
  %10259 = vrot.lane.b32.xlu0 %v8767, 96
  %v10260 = vpop.permute.xlu0 %10259
  %10261 = vrot.lane.b32.xlu0 %v8768, 96
  %v10262 = vpop.permute.xlu0 %10261
  %10263 = vrot.lane.b32.xlu0 %v8769, 96
  %v10264 = vpop.permute.xlu0 %10263
  %10265 = vrot.lane.b32.xlu0 %v8770, 96
  %v10266 = vpop.permute.xlu0 %10265
  %10267 = vrot.lane.b32.xlu0 %v8771, 96
  %v10268 = vpop.permute.xlu0 %10267
  %10269 = vrot.lane.b32.xlu0 %v8772, 96
  %v10270 = vpop.permute.xlu0 %10269
  %10271 = vrot.lane.b32.xlu0 %v8773, 96
  %v10272 = vpop.permute.xlu0 %10271
  %10273 = vrot.lane.b32.xlu0 %v8774, 96
  %v10274 = vpop.permute.xlu0 %10273
  %10275 = vrot.lane.b32.xlu0 %v8775, 96
  %v10276 = vpop.permute.xlu0 %10275
  %10277 = vrot.lane.b32.xlu0 %v8776, 96
  %v10278 = vpop.permute.xlu0 %10277
  %10279 = vrot.lane.b32.xlu0 %v8777, 96
  %v10280 = vpop.permute.xlu0 %10279
  %10281 = vrot.lane.b32.xlu0 %v8778, 96
  %v10282 = vpop.permute.xlu0 %10281
  %10283 = vrot.lane.b32.xlu0 %v8779, 96
  %v10284 = vpop.permute.xlu0 %10283
  %10285 = vrot.lane.b32.xlu0 %v8780, 96
  %v10286 = vpop.permute.xlu0 %10285
  %10287 = vrot.lane.b32.xlu0 %v8781, 96
  %v10288 = vpop.permute.xlu0 %10287
  %10289 = vrot.lane.b32.xlu0 %v8782, 96
  %v10290 = vpop.permute.xlu0 %10289
  %10291 = vrot.lane.b32.xlu0 %v8783, 96
  %v10292 = vpop.permute.xlu0 %10291
  %10293 = vrot.lane.b32.xlu0 %v8784, 96
  %v10294 = vpop.permute.xlu0 %10293
  %10295 = vrot.lane.b32.xlu0 %v8785, 96
  %v10296 = vpop.permute.xlu0 %10295
  %10297 = vrot.lane.b32.xlu0 %v8786, 96
  %v10298 = vpop.permute.xlu0 %10297
  %10299 = vrot.lane.b32.xlu0 %v8787, 96
  %v10300 = vpop.permute.xlu0 %10299
  %10301 = vrot.lane.b32.xlu0 %v8788, 96
  %v10302 = vpop.permute.xlu0 %10301
  %10303 = vrot.lane.b32.xlu0 %v8789, 96
  %v10304 = vpop.permute.xlu0 %10303
  %10305 = vrot.lane.b32.xlu0 %v8790, 96
  %v10306 = vpop.permute.xlu0 %10305
  %10307 = vrot.lane.b32.xlu0 %v8791, 96
  %v10308 = vpop.permute.xlu0 %10307
  %10309 = vrot.lane.b32.xlu0 %v8792, 96
  %v10310 = vpop.permute.xlu0 %10309
  %10311 = vrot.lane.b32.xlu0 %v8793, 96
  %v10312 = vpop.permute.xlu0 %10311
  %10313 = vrot.lane.b32.xlu0 %v8794, 96
  %v10314 = vpop.permute.xlu0 %10313
  %10315 = vrot.lane.b32.xlu0 %v8795, 96
  %v10316 = vpop.permute.xlu0 %10315
  %10317 = vrot.lane.b32.xlu0 %v8796, 96
  %v10318 = vpop.permute.xlu0 %10317
  %10319 = vrot.lane.b32.xlu0 %v8797, 96
  %v10320 = vpop.permute.xlu0 %10319
  %10321 = vrot.lane.b32.xlu0 %v8798, 96
  %v10322 = vpop.permute.xlu0 %10321
  %10323 = vrot.lane.b32.xlu0 %v8799, 96
  %v10324 = vpop.permute.xlu0 %10323
  %10325 = vrot.lane.b32.xlu0 %v8800, 96
  %v10326 = vpop.permute.xlu0 %10325
  %10327 = vrot.lane.b32.xlu0 %v8801, 96
  %v10328 = vpop.permute.xlu0 %10327
  %10329 = vrot.lane.b32.xlu0 %v8802, 96
  %v10330 = vpop.permute.xlu0 %10329
  %10331 = vrot.lane.b32.xlu0 %v8803, 96
  %v10332 = vpop.permute.xlu0 %10331
  %10333 = vrot.lane.b32.xlu0 %v8804, 96
  %v10334 = vpop.permute.xlu0 %10333
  %10335 = vrot.lane.b32.xlu0 %v8805, 96
  %v10336 = vpop.permute.xlu0 %10335
  %10337 = vrot.lane.b32.xlu0 %v8806, 96
  %v10338 = vpop.permute.xlu0 %10337
  %10339 = vrot.lane.b32.xlu0 %v8807, 96
  %v10340 = vpop.permute.xlu0 %10339
  %10341 = vrot.lane.b32.xlu0 %v8808, 96
  %v10342 = vpop.permute.xlu0 %10341
  %10343 = vrot.lane.b32.xlu0 %v8809, 96
  %v10344 = vpop.permute.xlu0 %10343
  %10345 = vrot.lane.b32.xlu0 %v8810, 96
  %v10346 = vpop.permute.xlu0 %10345
  %v10411 = vsel %vm665, %v8299, %v8940
  %v10412 = vsel %vm665, %v8300, %v8942
  %v10413 = vsel %vm665, %v8301, %v8944
  %v10414 = vsel %vm665, %v8302, %v8946
  %v10415 = vsel %vm665, %v8303, %v8948
  %v10416 = vsel %vm665, %v8304, %v8950
  %v10417 = vsel %vm665, %v8305, %v8952
  %v10418 = vsel %vm665, %v8306, %v8954
  %v10419 = vsel %vm665, %v8307, %v8956
  %v10420 = vsel %vm665, %v8308, %v8958
  %v10421 = vsel %vm665, %v8309, %v8960
  %v10422 = vsel %vm665, %v8310, %v8962
  %v10423 = vsel %vm665, %v8311, %v8964
  %v10424 = vsel %vm665, %v8312, %v8966
  %v10425 = vsel %vm665, %v8313, %v8968
  %v10426 = vsel %vm665, %v8314, %v8970
  %v10427 = vsel %vm665, %v8315, %v8972
  %v10428 = vsel %vm665, %v8316, %v8974
  %v10429 = vsel %vm665, %v8317, %v8976
  %v10430 = vsel %vm665, %v8318, %v8978
  %v10431 = vsel %vm665, %v8319, %v8980
  %v10432 = vsel %vm665, %v8320, %v8982
  %v10433 = vsel %vm665, %v8321, %v8984
  %v10434 = vsel %vm665, %v8322, %v8986
  %v10435 = vsel %vm665, %v8323, %v8988
  %v10436 = vsel %vm665, %v8324, %v8990
  %v10437 = vsel %vm665, %v8325, %v8992
  %v10438 = vsel %vm665, %v8326, %v8994
  %v10439 = vsel %vm665, %v8327, %v8996
  %v10440 = vsel %vm665, %v8328, %v8998
  %v10441 = vsel %vm665, %v8329, %v9000
  %v10442 = vsel %vm665, %v8330, %v9002
  %v10443 = vsel %vm665, %v8331, %v9004
  %v10444 = vsel %vm665, %v8332, %v9006
  %v10445 = vsel %vm665, %v8333, %v9008
  %v10446 = vsel %vm665, %v8334, %v9010
  %v10447 = vsel %vm665, %v8335, %v9012
  %v10448 = vsel %vm665, %v8336, %v9014
  %v10449 = vsel %vm665, %v8337, %v9016
  %v10450 = vsel %vm665, %v8338, %v9018
  %v10451 = vsel %vm665, %v8339, %v9020
  %v10452 = vsel %vm665, %v8340, %v9022
  %v10453 = vsel %vm665, %v8341, %v9024
  %v10454 = vsel %vm665, %v8342, %v9026
  %v10455 = vsel %vm665, %v8343, %v9028
  %v10456 = vsel %vm665, %v8344, %v9030
  %v10457 = vsel %vm665, %v8345, %v9032
  %v10458 = vsel %vm665, %v8346, %v9034
  %v10459 = vsel %vm665, %v8347, %v9036
  %v10460 = vsel %vm665, %v8348, %v9038
  %v10461 = vsel %vm665, %v8349, %v9040
  %v10462 = vsel %vm665, %v8350, %v9042
  %v10463 = vsel %vm665, %v8351, %v9044
  %v10464 = vsel %vm665, %v8352, %v9046
  %v10465 = vsel %vm665, %v8353, %v9048
  %v10466 = vsel %vm665, %v8354, %v9050
  %v10467 = vsel %vm665, %v8355, %v9052
  %v10468 = vsel %vm665, %v8356, %v9054
  %v10469 = vsel %vm665, %v8357, %v9056
  %v10470 = vsel %vm665, %v8358, %v9058
  %v10471 = vsel %vm665, %v8359, %v9060
  %v10472 = vsel %vm665, %v8360, %v9062
  %v10473 = vsel %vm665, %v8361, %v9064
  %v10474 = vsel %vm665, %v8362, %v9066
  %v10475 = vsel %vm3831, %v10411, %v9196
  %v10476 = vsel %vm3831, %v10412, %v9198
  %v10477 = vsel %vm3831, %v10413, %v9200
  %v10478 = vsel %vm3831, %v10414, %v9202
  %v10479 = vsel %vm3831, %v10415, %v9204
  %v10480 = vsel %vm3831, %v10416, %v9206
  %v10481 = vsel %vm3831, %v10417, %v9208
  %v10482 = vsel %vm3831, %v10418, %v9210
  %v10483 = vsel %vm3831, %v10419, %v9212
  %v10484 = vsel %vm3831, %v10420, %v9214
  %v10485 = vsel %vm3831, %v10421, %v9216
  %v10486 = vsel %vm3831, %v10422, %v9218
  %v10487 = vsel %vm3831, %v10423, %v9220
  %v10488 = vsel %vm3831, %v10424, %v9222
  %v10489 = vsel %vm3831, %v10425, %v9224
  %v10490 = vsel %vm3831, %v10426, %v9226
  %v10491 = vsel %vm3831, %v10427, %v9228
  %v10492 = vsel %vm3831, %v10428, %v9230
  %v10493 = vsel %vm3831, %v10429, %v9232
  %v10494 = vsel %vm3831, %v10430, %v9234
  %v10495 = vsel %vm3831, %v10431, %v9236
  %v10496 = vsel %vm3831, %v10432, %v9238
  %v10497 = vsel %vm3831, %v10433, %v9240
  %v10498 = vsel %vm3831, %v10434, %v9242
  %v10499 = vsel %vm3831, %v10435, %v9244
  %v10500 = vsel %vm3831, %v10436, %v9246
  %v10501 = vsel %vm3831, %v10437, %v9248
  %v10502 = vsel %vm3831, %v10438, %v9250
  %v10503 = vsel %vm3831, %v10439, %v9252
  %v10504 = vsel %vm3831, %v10440, %v9254
  %v10505 = vsel %vm3831, %v10441, %v9256
  %v10506 = vsel %vm3831, %v10442, %v9258
  %v10507 = vsel %vm3831, %v10443, %v9260
  %v10508 = vsel %vm3831, %v10444, %v9262
  %v10509 = vsel %vm3831, %v10445, %v9264
  %v10510 = vsel %vm3831, %v10446, %v9266
  %v10511 = vsel %vm3831, %v10447, %v9268
  %v10512 = vsel %vm3831, %v10448, %v9270
  %v10513 = vsel %vm3831, %v10449, %v9272
  %v10514 = vsel %vm3831, %v10450, %v9274
  %v10515 = vsel %vm3831, %v10451, %v9276
  %v10516 = vsel %vm3831, %v10452, %v9278
  %v10517 = vsel %vm3831, %v10453, %v9280
  %v10518 = vsel %vm3831, %v10454, %v9282
  %v10519 = vsel %vm3831, %v10455, %v9284
  %v10520 = vsel %vm3831, %v10456, %v9286
  %v10521 = vsel %vm3831, %v10457, %v9288
  %v10522 = vsel %vm3831, %v10458, %v9290
  %v10523 = vsel %vm3831, %v10459, %v9292
  %v10524 = vsel %vm3831, %v10460, %v9294
  %v10525 = vsel %vm3831, %v10461, %v9296
  %v10526 = vsel %vm3831, %v10462, %v9298
  %v10527 = vsel %vm3831, %v10463, %v9300
  %v10528 = vsel %vm3831, %v10464, %v9302
  %v10529 = vsel %vm3831, %v10465, %v9304
  %v10530 = vsel %vm3831, %v10466, %v9306
  %v10531 = vsel %vm3831, %v10467, %v9308
  %v10532 = vsel %vm3831, %v10468, %v9310
  %v10533 = vsel %vm3831, %v10469, %v9312
  %v10534 = vsel %vm3831, %v10470, %v9314
  %v10535 = vsel %vm3831, %v10471, %v9316
  %v10536 = vsel %vm3831, %v10472, %v9318
  %v10537 = vsel %vm3831, %v10473, %v9320
  %v10538 = vsel %vm3831, %v10474, %v9322
  %v10539 = vsel %vm6862, %v10475, %v9452
  %v10540 = vsel %vm6862, %v10476, %v9454
  %v10541 = vsel %vm6862, %v10477, %v9456
  %v10542 = vsel %vm6862, %v10478, %v9458
  %v10543 = vsel %vm6862, %v10479, %v9460
  %v10544 = vsel %vm6862, %v10480, %v9462
  %v10545 = vsel %vm6862, %v10481, %v9464
  %v10546 = vsel %vm6862, %v10482, %v9466
  %v10547 = vsel %vm6862, %v10483, %v9468
  %v10548 = vsel %vm6862, %v10484, %v9470
  %v10549 = vsel %vm6862, %v10485, %v9472
  %v10550 = vsel %vm6862, %v10486, %v9474
  %v10551 = vsel %vm6862, %v10487, %v9476
  %v10552 = vsel %vm6862, %v10488, %v9478
  %v10553 = vsel %vm6862, %v10489, %v9480
  %v10554 = vsel %vm6862, %v10490, %v9482
  %v10555 = vsel %vm6862, %v10491, %v9484
  %v10556 = vsel %vm6862, %v10492, %v9486
  %v10557 = vsel %vm6862, %v10493, %v9488
  %v10558 = vsel %vm6862, %v10494, %v9490
  %v10559 = vsel %vm6862, %v10495, %v9492
  %v10560 = vsel %vm6862, %v10496, %v9494
  %v10561 = vsel %vm6862, %v10497, %v9496
  %v10562 = vsel %vm6862, %v10498, %v9498
  %v10563 = vsel %vm6862, %v10499, %v9500
  %v10564 = vsel %vm6862, %v10500, %v9502
  %v10565 = vsel %vm6862, %v10501, %v9504
  %v10566 = vsel %vm6862, %v10502, %v9506
  %v10567 = vsel %vm6862, %v10503, %v9508
  %v10568 = vsel %vm6862, %v10504, %v9510
  %v10569 = vsel %vm6862, %v10505, %v9512
  %v10570 = vsel %vm6862, %v10506, %v9514
  %v10571 = vsel %vm6862, %v10507, %v9516
  %v10572 = vsel %vm6862, %v10508, %v9518
  %v10573 = vsel %vm6862, %v10509, %v9520
  %v10574 = vsel %vm6862, %v10510, %v9522
  %v10575 = vsel %vm6862, %v10511, %v9524
  %v10576 = vsel %vm6862, %v10512, %v9526
  %v10577 = vsel %vm6862, %v10513, %v9528
  %v10578 = vsel %vm6862, %v10514, %v9530
  %v10579 = vsel %vm6862, %v10515, %v9532
  %v10580 = vsel %vm6862, %v10516, %v9534
  %v10581 = vsel %vm6862, %v10517, %v9536
  %v10582 = vsel %vm6862, %v10518, %v9538
  %v10583 = vsel %vm6862, %v10519, %v9540
  %v10584 = vsel %vm6862, %v10520, %v9542
  %v10585 = vsel %vm6862, %v10521, %v9544
  %v10586 = vsel %vm6862, %v10522, %v9546
  %v10587 = vsel %vm6862, %v10523, %v9548
  %v10588 = vsel %vm6862, %v10524, %v9550
  %v10589 = vsel %vm6862, %v10525, %v9552
  %v10590 = vsel %vm6862, %v10526, %v9554
  %v10591 = vsel %vm6862, %v10527, %v9556
  %v10592 = vsel %vm6862, %v10528, %v9558
  %v10593 = vsel %vm6862, %v10529, %v9560
  %v10594 = vsel %vm6862, %v10530, %v9562
  %v10595 = vsel %vm6862, %v10531, %v9564
  %v10596 = vsel %vm6862, %v10532, %v9566
  %v10597 = vsel %vm6862, %v10533, %v9568
  %v10598 = vsel %vm6862, %v10534, %v9570
  %v10599 = vsel %vm6862, %v10535, %v9572
  %v10600 = vsel %vm6862, %v10536, %v9574
  %v10601 = vsel %vm6862, %v10537, %v9576
  %v10602 = vsel %vm6862, %v10538, %v9578
  %v10603 = vsel %vm665, %v8555, %v9708
  %v10604 = vsel %vm665, %v8556, %v9710
  %v10605 = vsel %vm665, %v8557, %v9712
  %v10606 = vsel %vm665, %v8558, %v9714
  %v10607 = vsel %vm665, %v8559, %v9716
  %v10608 = vsel %vm665, %v8560, %v9718
  %v10609 = vsel %vm665, %v8561, %v9720
  %v10610 = vsel %vm665, %v8562, %v9722
  %v10611 = vsel %vm665, %v8563, %v9724
  %v10612 = vsel %vm665, %v8564, %v9726
  %v10613 = vsel %vm665, %v8565, %v9728
  %v10614 = vsel %vm665, %v8566, %v9730
  %v10615 = vsel %vm665, %v8567, %v9732
  %v10616 = vsel %vm665, %v8568, %v9734
  %v10617 = vsel %vm665, %v8569, %v9736
  %v10618 = vsel %vm665, %v8570, %v9738
  %v10619 = vsel %vm665, %v8571, %v9740
  %v10620 = vsel %vm665, %v8572, %v9742
  %v10621 = vsel %vm665, %v8573, %v9744
  %v10622 = vsel %vm665, %v8574, %v9746
  %v10623 = vsel %vm665, %v8575, %v9748
  %v10624 = vsel %vm665, %v8576, %v9750
  %v10625 = vsel %vm665, %v8577, %v9752
  %v10626 = vsel %vm665, %v8578, %v9754
  %v10627 = vsel %vm665, %v8579, %v9756
  %v10628 = vsel %vm665, %v8580, %v9758
  %v10629 = vsel %vm665, %v8581, %v9760
  %v10630 = vsel %vm665, %v8582, %v9762
  %v10631 = vsel %vm665, %v8583, %v9764
  %v10632 = vsel %vm665, %v8584, %v9766
  %v10633 = vsel %vm665, %v8585, %v9768
  %v10634 = vsel %vm665, %v8586, %v9770
  %v10635 = vsel %vm665, %v8587, %v9772
  %v10636 = vsel %vm665, %v8588, %v9774
  %v10637 = vsel %vm665, %v8589, %v9776
  %v10638 = vsel %vm665, %v8590, %v9778
  %v10639 = vsel %vm665, %v8591, %v9780
  %v10640 = vsel %vm665, %v8592, %v9782
  %v10641 = vsel %vm665, %v8593, %v9784
  %v10642 = vsel %vm665, %v8594, %v9786
  %v10643 = vsel %vm665, %v8595, %v9788
  %v10644 = vsel %vm665, %v8596, %v9790
  %v10645 = vsel %vm665, %v8597, %v9792
  %v10646 = vsel %vm665, %v8598, %v9794
  %v10647 = vsel %vm665, %v8599, %v9796
  %v10648 = vsel %vm665, %v8600, %v9798
  %v10649 = vsel %vm665, %v8601, %v9800
  %v10650 = vsel %vm665, %v8602, %v9802
  %v10651 = vsel %vm665, %v8603, %v9804
  %v10652 = vsel %vm665, %v8604, %v9806
  %v10653 = vsel %vm665, %v8605, %v9808
  %v10654 = vsel %vm665, %v8606, %v9810
  %v10655 = vsel %vm665, %v8607, %v9812
  %v10656 = vsel %vm665, %v8608, %v9814
  %v10657 = vsel %vm665, %v8609, %v9816
  %v10658 = vsel %vm665, %v8610, %v9818
  %v10659 = vsel %vm665, %v8611, %v9820
  %v10660 = vsel %vm665, %v8612, %v9822
  %v10661 = vsel %vm665, %v8613, %v9824
  %v10662 = vsel %vm665, %v8614, %v9826
  %v10663 = vsel %vm665, %v8615, %v9828
  %v10664 = vsel %vm665, %v8616, %v9830
  %v10665 = vsel %vm665, %v8617, %v9832
  %v10666 = vsel %vm665, %v8618, %v9834
  %v10667 = vsel %vm3831, %v10603, %v9964
  %v10668 = vsel %vm3831, %v10604, %v9966
  %v10669 = vsel %vm3831, %v10605, %v9968
  %v10670 = vsel %vm3831, %v10606, %v9970
  %v10671 = vsel %vm3831, %v10607, %v9972
  %v10672 = vsel %vm3831, %v10608, %v9974
  %v10673 = vsel %vm3831, %v10609, %v9976
  %v10674 = vsel %vm3831, %v10610, %v9978
  %v10675 = vsel %vm3831, %v10611, %v9980
  %v10676 = vsel %vm3831, %v10612, %v9982
  %v10677 = vsel %vm3831, %v10613, %v9984
  %v10678 = vsel %vm3831, %v10614, %v9986
  %v10679 = vsel %vm3831, %v10615, %v9988
  %v10680 = vsel %vm3831, %v10616, %v9990
  %v10681 = vsel %vm3831, %v10617, %v9992
  %v10682 = vsel %vm3831, %v10618, %v9994
  %v10683 = vsel %vm3831, %v10619, %v9996
  %v10684 = vsel %vm3831, %v10620, %v9998
  %v10685 = vsel %vm3831, %v10621, %v10000
  %v10686 = vsel %vm3831, %v10622, %v10002
  %v10687 = vsel %vm3831, %v10623, %v10004
  %v10688 = vsel %vm3831, %v10624, %v10006
  %v10689 = vsel %vm3831, %v10625, %v10008
  %v10690 = vsel %vm3831, %v10626, %v10010
  %v10691 = vsel %vm3831, %v10627, %v10012
  %v10692 = vsel %vm3831, %v10628, %v10014
  %v10693 = vsel %vm3831, %v10629, %v10016
  %v10694 = vsel %vm3831, %v10630, %v10018
  %v10695 = vsel %vm3831, %v10631, %v10020
  %v10696 = vsel %vm3831, %v10632, %v10022
  %v10697 = vsel %vm3831, %v10633, %v10024
  %v10698 = vsel %vm3831, %v10634, %v10026
  %v10699 = vsel %vm3831, %v10635, %v10028
  %v10700 = vsel %vm3831, %v10636, %v10030
  %v10701 = vsel %vm3831, %v10637, %v10032
  %v10702 = vsel %vm3831, %v10638, %v10034
  %v10703 = vsel %vm3831, %v10639, %v10036
  %v10704 = vsel %vm3831, %v10640, %v10038
  %v10705 = vsel %vm3831, %v10641, %v10040
  %v10706 = vsel %vm3831, %v10642, %v10042
  %v10707 = vsel %vm3831, %v10643, %v10044
  %v10708 = vsel %vm3831, %v10644, %v10046
  %v10709 = vsel %vm3831, %v10645, %v10048
  %v10710 = vsel %vm3831, %v10646, %v10050
  %v10711 = vsel %vm3831, %v10647, %v10052
  %v10712 = vsel %vm3831, %v10648, %v10054
  %v10713 = vsel %vm3831, %v10649, %v10056
  %v10714 = vsel %vm3831, %v10650, %v10058
  %v10715 = vsel %vm3831, %v10651, %v10060
  %v10716 = vsel %vm3831, %v10652, %v10062
  %v10717 = vsel %vm3831, %v10653, %v10064
  %v10718 = vsel %vm3831, %v10654, %v10066
  %v10719 = vsel %vm3831, %v10655, %v10068
  %v10720 = vsel %vm3831, %v10656, %v10070
  %v10721 = vsel %vm3831, %v10657, %v10072
  %v10722 = vsel %vm3831, %v10658, %v10074
  %v10723 = vsel %vm3831, %v10659, %v10076
  %v10724 = vsel %vm3831, %v10660, %v10078
  %v10725 = vsel %vm3831, %v10661, %v10080
  %v10726 = vsel %vm3831, %v10662, %v10082
  %v10727 = vsel %vm3831, %v10663, %v10084
  %v10728 = vsel %vm3831, %v10664, %v10086
  %v10729 = vsel %vm3831, %v10665, %v10088
  %v10730 = vsel %vm3831, %v10666, %v10090
  %v10731 = vsel %vm6862, %v10667, %v10220
  %v10732 = vsel %vm6862, %v10668, %v10222
  %v10733 = vsel %vm6862, %v10669, %v10224
  %v10734 = vsel %vm6862, %v10670, %v10226
  %v10735 = vsel %vm6862, %v10671, %v10228
  %v10736 = vsel %vm6862, %v10672, %v10230
  %v10737 = vsel %vm6862, %v10673, %v10232
  %v10738 = vsel %vm6862, %v10674, %v10234
  %v10739 = vsel %vm6862, %v10675, %v10236
  %v10740 = vsel %vm6862, %v10676, %v10238
  %v10741 = vsel %vm6862, %v10677, %v10240
  %v10742 = vsel %vm6862, %v10678, %v10242
  %v10743 = vsel %vm6862, %v10679, %v10244
  %v10744 = vsel %vm6862, %v10680, %v10246
  %v10745 = vsel %vm6862, %v10681, %v10248
  %v10746 = vsel %vm6862, %v10682, %v10250
  %v10747 = vsel %vm6862, %v10683, %v10252
  %v10748 = vsel %vm6862, %v10684, %v10254
  %v10749 = vsel %vm6862, %v10685, %v10256
  %v10750 = vsel %vm6862, %v10686, %v10258
  %v10751 = vsel %vm6862, %v10687, %v10260
  %v10752 = vsel %vm6862, %v10688, %v10262
  %v10753 = vsel %vm6862, %v10689, %v10264
  %v10754 = vsel %vm6862, %v10690, %v10266
  %v10755 = vsel %vm6862, %v10691, %v10268
  %v10756 = vsel %vm6862, %v10692, %v10270
  %v10757 = vsel %vm6862, %v10693, %v10272
  %v10758 = vsel %vm6862, %v10694, %v10274
  %v10759 = vsel %vm6862, %v10695, %v10276
  %v10760 = vsel %vm6862, %v10696, %v10278
  %v10761 = vsel %vm6862, %v10697, %v10280
  %v10762 = vsel %vm6862, %v10698, %v10282
  %v10763 = vsel %vm6862, %v10699, %v10284
  %v10764 = vsel %vm6862, %v10700, %v10286
  %v10765 = vsel %vm6862, %v10701, %v10288
  %v10766 = vsel %vm6862, %v10702, %v10290
  %v10767 = vsel %vm6862, %v10703, %v10292
  %v10768 = vsel %vm6862, %v10704, %v10294
  %v10769 = vsel %vm6862, %v10705, %v10296
  %v10770 = vsel %vm6862, %v10706, %v10298
  %v10771 = vsel %vm6862, %v10707, %v10300
  %v10772 = vsel %vm6862, %v10708, %v10302
  %v10773 = vsel %vm6862, %v10709, %v10304
  %v10774 = vsel %vm6862, %v10710, %v10306
  %v10775 = vsel %vm6862, %v10711, %v10308
  %v10776 = vsel %vm6862, %v10712, %v10310
  %v10777 = vsel %vm6862, %v10713, %v10312
  %v10778 = vsel %vm6862, %v10714, %v10314
  %v10779 = vsel %vm6862, %v10715, %v10316
  %v10780 = vsel %vm6862, %v10716, %v10318
  %v10781 = vsel %vm6862, %v10717, %v10320
  %v10782 = vsel %vm6862, %v10718, %v10322
  %v10783 = vsel %vm6862, %v10719, %v10324
  %v10784 = vsel %vm6862, %v10720, %v10326
  %v10785 = vsel %vm6862, %v10721, %v10328
  %v10786 = vsel %vm6862, %v10722, %v10330
  %v10787 = vsel %vm6862, %v10723, %v10332
  %v10788 = vsel %vm6862, %v10724, %v10334
  %v10789 = vsel %vm6862, %v10725, %v10336
  %v10790 = vsel %vm6862, %v10726, %v10338
  %v10791 = vsel %vm6862, %v10727, %v10340
  %v10792 = vsel %vm6862, %v10728, %v10342
  %v10793 = vsel %vm6862, %v10729, %v10344
  %v10794 = vsel %vm6862, %v10730, %v10346
  %v10795 = vpack.c.bf16 %v10540, %v10539
  %v10796 = vpack.c.bf16 %v10732, %v10731
  %v10797 = vpack.c.bf16 %v8812, %v8811
  %v10798 = vpack.c.bf16 %v10542, %v10541
  %v10799 = vpack.c.bf16 %v10734, %v10733
  %v10800 = vpack.c.bf16 %v8814, %v8813
  %v10801 = vpack.c.bf16 %v10544, %v10543
  %v10802 = vpack.c.bf16 %v10736, %v10735
  %v10803 = vpack.c.bf16 %v8816, %v8815
  %v10804 = vpack.c.bf16 %v10546, %v10545
  %v10805 = vpack.c.bf16 %v10738, %v10737
  %v10806 = vpack.c.bf16 %v8818, %v8817
  %v10807 = vpack.c.bf16 %v10548, %v10547
  %v10808 = vpack.c.bf16 %v10740, %v10739
  %v10809 = vpack.c.bf16 %v8820, %v8819
  %v10810 = vpack.c.bf16 %v10550, %v10549
  %v10811 = vpack.c.bf16 %v10742, %v10741
  %v10812 = vpack.c.bf16 %v8822, %v8821
  %v10813 = vpack.c.bf16 %v10552, %v10551
  %v10814 = vpack.c.bf16 %v10744, %v10743
  %v10815 = vpack.c.bf16 %v8824, %v8823
  %v10816 = vpack.c.bf16 %v10554, %v10553
  %v10817 = vpack.c.bf16 %v10746, %v10745
  %v10818 = vpack.c.bf16 %v8826, %v8825
  %v10819 = vpack.c.bf16 %v10556, %v10555
  %v10820 = vpack.c.bf16 %v10748, %v10747
  %v10821 = vpack.c.bf16 %v8828, %v8827
  %v10822 = vpack.c.bf16 %v10558, %v10557
  %v10823 = vpack.c.bf16 %v10750, %v10749
  %v10824 = vpack.c.bf16 %v8830, %v8829
  %v10825 = vpack.c.bf16 %v10560, %v10559
  %v10826 = vpack.c.bf16 %v10752, %v10751
  %v10827 = vpack.c.bf16 %v8832, %v8831
  %v10828 = vpack.c.bf16 %v10562, %v10561
  %v10829 = vpack.c.bf16 %v10754, %v10753
  %v10830 = vpack.c.bf16 %v8834, %v8833
  %v10831 = vpack.c.bf16 %v10564, %v10563
  %v10832 = vpack.c.bf16 %v10756, %v10755
  %v10833 = vpack.c.bf16 %v8836, %v8835
  %v10834 = vpack.c.bf16 %v10566, %v10565
  %v10835 = vpack.c.bf16 %v10758, %v10757
  %v10836 = vpack.c.bf16 %v8838, %v8837
  %v10837 = vpack.c.bf16 %v10568, %v10567
  %v10838 = vpack.c.bf16 %v10760, %v10759
  %v10839 = vpack.c.bf16 %v8840, %v8839
  %v10840 = vpack.c.bf16 %v10570, %v10569
  %v10841 = vpack.c.bf16 %v10762, %v10761
  %v10842 = vpack.c.bf16 %v8842, %v8841
  %v10843 = vpack.c.bf16 %v10572, %v10571
  %v10844 = vpack.c.bf16 %v10764, %v10763
  %v10845 = vpack.c.bf16 %v8844, %v8843
  %v10846 = vpack.c.bf16 %v10574, %v10573
  %v10847 = vpack.c.bf16 %v10766, %v10765
  %v10848 = vpack.c.bf16 %v8846, %v8845
  %v10849 = vpack.c.bf16 %v10576, %v10575
  %v10850 = vpack.c.bf16 %v10768, %v10767
  %v10851 = vpack.c.bf16 %v8848, %v8847
  %v10852 = vpack.c.bf16 %v10578, %v10577
  %v10853 = vpack.c.bf16 %v10770, %v10769
  %v10854 = vpack.c.bf16 %v8850, %v8849
  %v10855 = vpack.c.bf16 %v10580, %v10579
  %v10856 = vpack.c.bf16 %v10772, %v10771
  %v10857 = vpack.c.bf16 %v8852, %v8851
  %v10858 = vpack.c.bf16 %v10582, %v10581
  %v10859 = vpack.c.bf16 %v10774, %v10773
  %v10860 = vpack.c.bf16 %v8854, %v8853
  %v10861 = vpack.c.bf16 %v10584, %v10583
  %v10862 = vpack.c.bf16 %v10776, %v10775
  %v10863 = vpack.c.bf16 %v8856, %v8855
  %v10864 = vpack.c.bf16 %v10586, %v10585
  %v10865 = vpack.c.bf16 %v10778, %v10777
  %v10866 = vpack.c.bf16 %v8858, %v8857
  %v10867 = vpack.c.bf16 %v10588, %v10587
  %v10868 = vpack.c.bf16 %v10780, %v10779
  %v10869 = vpack.c.bf16 %v8860, %v8859
  %v10870 = vpack.c.bf16 %v10590, %v10589
  %v10871 = vpack.c.bf16 %v10782, %v10781
  %v10872 = vpack.c.bf16 %v8862, %v8861
  %v10873 = vpack.c.bf16 %v10592, %v10591
  %v10874 = vpack.c.bf16 %v10784, %v10783
  %v10875 = vpack.c.bf16 %v8864, %v8863
  %v10876 = vpack.c.bf16 %v10594, %v10593
  %v10877 = vpack.c.bf16 %v10786, %v10785
  %v10878 = vpack.c.bf16 %v8866, %v8865
  %v10879 = vpack.c.bf16 %v10596, %v10595
  %v10880 = vpack.c.bf16 %v10788, %v10787
  %v10881 = vpack.c.bf16 %v8868, %v8867
  %v10882 = vpack.c.bf16 %v10598, %v10597
  %v10883 = vpack.c.bf16 %v10790, %v10789
  %v10884 = vpack.c.bf16 %v8870, %v8869
  %v10885 = vpack.c.bf16 %v10600, %v10599
  %v10886 = vpack.c.bf16 %v10792, %v10791
  %v10887 = vpack.c.bf16 %v8872, %v8871
  %v10888 = vpack.c.bf16 %v10602, %v10601
  %v10889 = vpack.c.bf16 %v10794, %v10793
  %v10890 = vpack.c.bf16 %v8874, %v8873
  %v10891 = vld [vmem:[%s8] sm:$0xf]
  %v10892 = vld [vmem:[%s8 + $0x4] sm:$0xf]
  %v10893 = vld [vmem:[%s8 + $0x8] sm:$0xf]
  %v10894 = vld [vmem:[%s8 + $0xc] sm:$0xf]
  %v10895 = vld [vmem:[%s8 + $0x10] sm:$0xf]
  %v10896 = vld [vmem:[%s8 + $0x14] sm:$0xf]
  %v10897 = vld [vmem:[%s8 + $0x18] sm:$0xf]
  %v10898 = vld [vmem:[%s8 + $0x1c] sm:$0xf]
  %v10899 = vld [vmem:[%s8 + $0x20] sm:$0xf]
  %v10900 = vld [vmem:[%s8 + $0x24] sm:$0xf]
  %v10901 = vld [vmem:[%s8 + $0x28] sm:$0xf]
  %v10902 = vld [vmem:[%s8 + $0x2c] sm:$0xf]
  %v10903 = vld [vmem:[%s8 + $0x30] sm:$0xf]
  %v10904 = vld [vmem:[%s8 + $0x34] sm:$0xf]
  %v10905 = vld [vmem:[%s8 + $0x38] sm:$0xf]
  %v10906 = vld [vmem:[%s8 + $0x3c] sm:$0xf]
  %v10907 = vld [vmem:[%s8 + $0x40] sm:$0xf]
  %v10908 = vld [vmem:[%s8 + $0x44] sm:$0xf]
  %v10909 = vld [vmem:[%s8 + $0x48] sm:$0xf]
  %v10910 = vld [vmem:[%s8 + $0x4c] sm:$0xf]
  %v10911 = vld [vmem:[%s8 + $0x50] sm:$0xf]
  %v10912 = vld [vmem:[%s8 + $0x54] sm:$0xf]
  %v10913 = vld [vmem:[%s8 + $0x58] sm:$0xf]
  %v10914 = vld [vmem:[%s8 + $0x5c] sm:$0xf]
  %v10915 = vld [vmem:[%s8 + $0x60] sm:$0xf]
  %v10916 = vld [vmem:[%s8 + $0x64] sm:$0xf]
  %v10917 = vld [vmem:[%s8 + $0x68] sm:$0xf]
  %v10918 = vld [vmem:[%s8 + $0x6c] sm:$0xf]
  %v10919 = vld [vmem:[%s8 + $0x70] sm:$0xf]
  %v10920 = vld [vmem:[%s8 + $0x74] sm:$0xf]
  %v10921 = vld [vmem:[%s8 + $0x78] sm:$0xf]
  %v10922 = vld [vmem:[%s8 + $0x7c] sm:$0xf]
  %v10923 = vld [vmem:[%s8 + $0x80] sm:$0xf]
  %v10924 = vld [vmem:[%s8 + $0x84] sm:$0xf]
  %v10925 = vld [vmem:[%s8 + $0x88] sm:$0xf]
  %v10926 = vld [vmem:[%s8 + $0x8c] sm:$0xf]
  %v10927 = vld [vmem:[%s9] sm:$0x1]
  %v10929 = vlaneseq
  %v10930 = vshrl.u32 %v10929, 7
  %v10931 = vsub.s32 0, %v10930
  %v10932 = vrot.slane %v10927, %v10931
  %v10970 = vunpack.c.l.b16 %v10891
  %v10971 = vunpack.c.l.b16 %v10892
  %v10972 = vunpack.c.l.b16 %v10893
  %v10973 = vunpack.c.l.b16 %v10894
  %v10974 = vunpack.c.l.b16 %v10895
  %v10975 = vunpack.c.l.b16 %v10896
  %v10976 = vunpack.c.l.b16 %v10897
  %v10977 = vunpack.c.l.b16 %v10898
  %v10978 = vunpack.c.l.b16 %v10899
  %v10979 = vunpack.c.l.b16 %v10900
  %v10980 = vunpack.c.l.b16 %v10901
  %v10981 = vunpack.c.l.b16 %v10902
  %v10982 = vunpack.c.l.b16 %v10903
  %v10983 = vunpack.c.l.b16 %v10904
  %v10984 = vunpack.c.l.b16 %v10905
  %v10985 = vunpack.c.l.b16 %v10906
  %v10986 = vunpack.c.l.b16 %v10907
  %v10987 = vunpack.c.l.b16 %v10908
  %v10988 = vunpack.c.l.b16 %v10909
  %v10989 = vunpack.c.l.b16 %v10910
  %v10990 = vunpack.c.l.b16 %v10911
  %v10991 = vunpack.c.l.b16 %v10912
  %v10992 = vunpack.c.l.b16 %v10913
  %v10993 = vunpack.c.l.b16 %v10914
  %v10994 = vunpack.c.l.b16 %v10915
  %v10995 = vunpack.c.l.b16 %v10916
  %v10996 = vunpack.c.l.b16 %v10917
  %v10997 = vunpack.c.l.b16 %v10918
  %v10998 = vunpack.c.l.b16 %v10919
  %v10999 = vunpack.c.l.b16 %v10920
  %v11000 = vunpack.c.l.b16 %v10921
  %v11001 = vunpack.c.l.b16 %v10922
  %v11002 = vunpack.c.l.b16 %v10923
  %v11003 = vunpack.c.l.b16 %v10924
  %v11004 = vunpack.c.l.b16 %v10925
  %v11005 = vunpack.c.l.b16 %v10926
  %v11006 = vpack.c.b16 %v10971, %v10970
  %v11007 = vpack.c.b16 %v10973, %v10972
  %v11008 = vpack.c.b16 %v10975, %v10974
  %v11009 = vpack.c.b16 %v10977, %v10976
  %v11010 = vpack.c.b16 %v10979, %v10978
  %v11011 = vpack.c.b16 %v10981, %v10980
  %v11012 = vpack.c.b16 %v10983, %v10982
  %v11013 = vpack.c.b16 %v10985, %v10984
  %v11014 = vpack.c.b16 %v10987, %v10986
  %v11015 = vpack.c.b16 %v10989, %v10988
  %v11016 = vpack.c.b16 %v10991, %v10990
  %v11017 = vpack.c.b16 %v10993, %v10992
  %v11018 = vpack.c.b16 %v10995, %v10994
  %v11019 = vpack.c.b16 %v10997, %v10996
  %v11020 = vpack.c.b16 %v10999, %v10998
  %v11021 = vpack.c.b16 %v11001, %v11000
  %v11022 = vpack.c.b16 %v11003, %v11002
  %v11023 = vpack.c.b16 %v11005, %v11004
  %v11043 = vsel %vm665, %v10797, 0
  %v11046 = vsel %vm665, %v10800, 0
  %v11049 = vsel %vm665, %v10803, 0
  %v11052 = vsel %vm665, %v10806, 0
  %v11055 = vsel %vm665, %v10809, 0
  %v11058 = vsel %vm665, %v10812, 0
  %v11061 = vsel %vm665, %v10815, 0
  %v11064 = vsel %vm665, %v10818, 0
  %v11067 = vsel %vm665, %v10821, 0
  %v11070 = vsel %vm665, %v10824, 0
  %v11073 = vsel %vm665, %v10827, 0
  %v11076 = vsel %vm665, %v10830, 0
  %v11079 = vsel %vm665, %v10833, 0
  %v11082 = vsel %vm665, %v10836, 0
  %v11085 = vsel %vm665, %v10839, 0
  %v11088 = vsel %vm665, %v10842, 0
  %v11091 = vsel %vm665, %v10845, 0
  %v11094 = vsel %vm665, %v10848, 0
  %v11097 = vsel %vm665, %v10851, 0
  %v11100 = vsel %vm665, %v10854, 0
  %v11103 = vsel %vm665, %v10857, 0
  %v11106 = vsel %vm665, %v10860, 0
  %v11109 = vsel %vm665, %v10863, 0
  %v11112 = vsel %vm665, %v10866, 0
  %v11115 = vsel %vm665, %v10869, 0
  %v11118 = vsel %vm665, %v10872, 0
  %v11121 = vsel %vm665, %v10875, 0
  %v11124 = vsel %vm665, %v10878, 0
  %v11127 = vsel %vm665, %v10881, 0
  %v11130 = vsel %vm665, %v10884, 0
  %v11133 = vsel %vm665, %v10887, 0
  %v11136 = vsel %vm665, %v10890, 0
  %11138 = vmatprep.subr.bf16.mxu0 0
  %11139 = vmatpush1.bf16.msra.mxu0 %v11013
  %11140 = vmatprep.subr.bf16.mxu0 0
  %11141 = vmatpush1.bf16.msra.mxu0 %v11012
  %11142 = vmatprep.subr.bf16.mxu0 0
  %11143 = vmatpush1.bf16.msra.mxu0 %v11011
  %11144 = vmatprep.subr.bf16.mxu0 0
  %11145 = vmatpush1.bf16.msra.mxu0 %v11010
  %11146 = vmatprep.subr.bf16.mxu0 0
  %11147 = vmatpush1.bf16.msra.mxu0 %v11009
  %11148 = vmatprep.subr.bf16.mxu0 0
  %11149 = vmatpush1.bf16.msra.mxu0 %v11008
  %11150 = vmatprep.subr.bf16.mxu0 0
  %11151 = vmatpush1.bf16.msra.mxu0 %v11007
  %11152 = vmatprep.subr.bf16.mxu0 0
  %11153 = vmatpush1.bf16.msra.mxu0 %v11006
  %11154 = vmatprep.subr.bf16.mxu0 0
  %11155 = vmatpush2.bf16.msra.mxu0 %v11021
  %11156 = vmatprep.subr.bf16.mxu0 0
  %11157 = vmatpush2.bf16.msra.mxu0 %v11020
  %11158 = vmatprep.subr.bf16.mxu0 0
  %11159 = vmatpush2.bf16.msra.mxu0 %v11019
  %11160 = vmatprep.subr.bf16.mxu0 0
  %11161 = vmatpush2.bf16.msra.mxu0 %v11018
  %11162 = vmatprep.subr.bf16.mxu0 0
  %11163 = vmatpush2.bf16.msra.mxu0 %v11017
  %11164 = vmatprep.subr.bf16.mxu0 0
  %11165 = vmatpush2.bf16.msra.mxu0 %v11016
  %11166 = vmatprep.subr.bf16.mxu0 0
  %11167 = vmatpush2.bf16.msra.mxu0 %v11015
  %11168 = vmatprep.subr.bf16.mxu0 0
  %11169 = vmatpush2.bf16.msra.mxu0 %v11014
  %11170 = vmatprep.mubr.bf16.mxu0 %v10796
  %11171 = vmatmul.mubr.bf16.gmra.mxu0 %v10795
  %v11172 = vpop.f32.mrf.mxu0
  %v11173 = vadd.f32 %v10932, %v11172
  %v11174 = vpop.f32.mrf.mxu0
  %v11175 = vpop.f32.mrf.mxu0
  %v11176 = vadd.f32 %v10932, %v11175
  %v11177 = vpop.f32.mrf.mxu0
  %11178 = vmatprep.mubr.bf16.mxu0 %v10799
  %11179 = vmatmul.mubr.bf16.gmra.mxu0 %v10798
  %v11180 = vpop.f32.mrf.mxu0
  %v11181 = vadd.f32 %v10932, %v11180
  %v11182 = vpop.f32.mrf.mxu0
  %v11183 = vpop.f32.mrf.mxu0
  %v11184 = vadd.f32 %v10932, %v11183
  %v11185 = vpop.f32.mrf.mxu0
  %11186 = vmatprep.mubr.bf16.mxu0 %v10802
  %11187 = vmatmul.mubr.bf16.gmra.mxu0 %v10801
  %v11188 = vpop.f32.mrf.mxu0
  %v11189 = vadd.f32 %v10932, %v11188
  %v11190 = vpop.f32.mrf.mxu0
  %v11191 = vpop.f32.mrf.mxu0
  %v11192 = vadd.f32 %v10932, %v11191
  %v11193 = vpop.f32.mrf.mxu0
  %11194 = vmatprep.mubr.bf16.mxu0 %v10805
  %11195 = vmatmul.mubr.bf16.gmra.mxu0 %v10804
  %v11196 = vpop.f32.mrf.mxu0
  %v11197 = vadd.f32 %v10932, %v11196
  %v11198 = vpop.f32.mrf.mxu0
  %v11199 = vpop.f32.mrf.mxu0
  %v11200 = vadd.f32 %v10932, %v11199
  %v11201 = vpop.f32.mrf.mxu0
  %11202 = vmatprep.mubr.bf16.mxu0 %v10808
  %11203 = vmatmul.mubr.bf16.gmra.mxu0 %v10807
  %v11204 = vpop.f32.mrf.mxu0
  %v11205 = vadd.f32 %v10932, %v11204
  %v11206 = vpop.f32.mrf.mxu0
  %v11207 = vpop.f32.mrf.mxu0
  %v11208 = vadd.f32 %v10932, %v11207
  %v11209 = vpop.f32.mrf.mxu0
  %11210 = vmatprep.mubr.bf16.mxu0 %v10811
  %11211 = vmatmul.mubr.bf16.gmra.mxu0 %v10810
  %v11212 = vpop.f32.mrf.mxu0
  %v11213 = vadd.f32 %v10932, %v11212
  %v11214 = vpop.f32.mrf.mxu0
  %v11215 = vpop.f32.mrf.mxu0
  %v11216 = vadd.f32 %v10932, %v11215
  %v11217 = vpop.f32.mrf.mxu0
  %11218 = vmatprep.mubr.bf16.mxu0 %v10814
  %11219 = vmatmul.mubr.bf16.gmra.mxu0 %v10813
  %v11220 = vpop.f32.mrf.mxu0
  %v11221 = vadd.f32 %v10932, %v11220
  %v11222 = vpop.f32.mrf.mxu0
  %v11223 = vpop.f32.mrf.mxu0
  %v11224 = vadd.f32 %v10932, %v11223
  %v11225 = vpop.f32.mrf.mxu0
  %11226 = vmatprep.mubr.bf16.mxu0 %v10817
  %11227 = vmatmul.mubr.bf16.gmra.mxu0 %v10816
  %v11228 = vpop.f32.mrf.mxu0
  %v11229 = vadd.f32 %v10932, %v11228
  %v11230 = vpop.f32.mrf.mxu0
  %v11231 = vpop.f32.mrf.mxu0
  %v11232 = vadd.f32 %v10932, %v11231
  %v11233 = vpop.f32.mrf.mxu0
  %11234 = vmatprep.mubr.bf16.mxu0 %v10820
  %11235 = vmatmul.mubr.bf16.gmra.mxu0 %v10819
  %v11236 = vpop.f32.mrf.mxu0
  %v11237 = vadd.f32 %v10932, %v11236
  %v11238 = vpop.f32.mrf.mxu0
  %v11239 = vpop.f32.mrf.mxu0
  %v11240 = vadd.f32 %v10932, %v11239
  %v11241 = vpop.f32.mrf.mxu0
  %11242 = vmatprep.mubr.bf16.mxu0 %v10823
  %11243 = vmatmul.mubr.bf16.gmra.mxu0 %v10822
  %v11244 = vpop.f32.mrf.mxu0
  %v11245 = vadd.f32 %v10932, %v11244
  %v11246 = vpop.f32.mrf.mxu0
  %v11247 = vpop.f32.mrf.mxu0
  %v11248 = vadd.f32 %v10932, %v11247
  %v11249 = vpop.f32.mrf.mxu0
  %11250 = vmatprep.mubr.bf16.mxu0 %v10826
  %11251 = vmatmul.mubr.bf16.gmra.mxu0 %v10825
  %v11252 = vpop.f32.mrf.mxu0
  %v11253 = vadd.f32 %v10932, %v11252
  %v11254 = vpop.f32.mrf.mxu0
  %v11255 = vpop.f32.mrf.mxu0
  %v11256 = vadd.f32 %v10932, %v11255
  %v11257 = vpop.f32.mrf.mxu0
  %11258 = vmatprep.mubr.bf16.mxu0 %v10829
  %11259 = vmatmul.mubr.bf16.gmra.mxu0 %v10828
  %v11260 = vpop.f32.mrf.mxu0
  %v11261 = vadd.f32 %v10932, %v11260
  %v11262 = vpop.f32.mrf.mxu0
  %v11263 = vpop.f32.mrf.mxu0
  %v11264 = vadd.f32 %v10932, %v11263
  %v11265 = vpop.f32.mrf.mxu0
  %11266 = vmatprep.mubr.bf16.mxu0 %v10832
  %11267 = vmatmul.mubr.bf16.gmra.mxu0 %v10831
  %v11268 = vpop.f32.mrf.mxu0
  %v11269 = vadd.f32 %v10932, %v11268
  %v11270 = vpop.f32.mrf.mxu0
  %v11271 = vpop.f32.mrf.mxu0
  %v11272 = vadd.f32 %v10932, %v11271
  %v11273 = vpop.f32.mrf.mxu0
  %11274 = vmatprep.mubr.bf16.mxu0 %v10835
  %11275 = vmatmul.mubr.bf16.gmra.mxu0 %v10834
  %v11276 = vpop.f32.mrf.mxu0
  %v11277 = vadd.f32 %v10932, %v11276
  %v11278 = vpop.f32.mrf.mxu0
  %v11279 = vpop.f32.mrf.mxu0
  %v11280 = vadd.f32 %v10932, %v11279
  %v11281 = vpop.f32.mrf.mxu0
  %11282 = vmatprep.mubr.bf16.mxu0 %v10838
  %11283 = vmatmul.mubr.bf16.gmra.mxu0 %v10837
  %v11284 = vpop.f32.mrf.mxu0
  %v11285 = vadd.f32 %v10932, %v11284
  %v11286 = vpop.f32.mrf.mxu0
  %v11287 = vpop.f32.mrf.mxu0
  %v11288 = vadd.f32 %v10932, %v11287
  %v11289 = vpop.f32.mrf.mxu0
  %11290 = vmatprep.mubr.bf16.mxu0 %v10841
  %11291 = vmatmul.mubr.bf16.gmra.mxu0 %v10840
  %v11292 = vpop.f32.mrf.mxu0
  %v11293 = vadd.f32 %v10932, %v11292
  %v11294 = vpop.f32.mrf.mxu0
  %v11295 = vpop.f32.mrf.mxu0
  %v11296 = vadd.f32 %v10932, %v11295
  %v11297 = vpop.f32.mrf.mxu0
  %11298 = vmatprep.mubr.bf16.mxu0 %v10844
  %11299 = vmatmul.mubr.bf16.gmra.mxu0 %v10843
  %v11300 = vpop.f32.mrf.mxu0
  %v11301 = vadd.f32 %v10932, %v11300
  %v11302 = vpop.f32.mrf.mxu0
  %v11303 = vpop.f32.mrf.mxu0
  %v11304 = vadd.f32 %v10932, %v11303
  %v11305 = vpop.f32.mrf.mxu0
  %11306 = vmatprep.mubr.bf16.mxu0 %v10847
  %11307 = vmatmul.mubr.bf16.gmra.mxu0 %v10846
  %v11308 = vpop.f32.mrf.mxu0
  %v11309 = vadd.f32 %v10932, %v11308
  %v11310 = vpop.f32.mrf.mxu0
  %v11311 = vpop.f32.mrf.mxu0
  %v11312 = vadd.f32 %v10932, %v11311
  %v11313 = vpop.f32.mrf.mxu0
  %11314 = vmatprep.mubr.bf16.mxu0 %v10850
  %11315 = vmatmul.mubr.bf16.gmra.mxu0 %v10849
  %v11316 = vpop.f32.mrf.mxu0
  %v11317 = vadd.f32 %v10932, %v11316
  %v11318 = vpop.f32.mrf.mxu0
  %v11319 = vpop.f32.mrf.mxu0
  %v11320 = vadd.f32 %v10932, %v11319
  %v11321 = vpop.f32.mrf.mxu0
  %11322 = vmatprep.mubr.bf16.mxu0 %v10853
  %11323 = vmatmul.mubr.bf16.gmra.mxu0 %v10852
  %v11324 = vpop.f32.mrf.mxu0
  %v11325 = vadd.f32 %v10932, %v11324
  %v11326 = vpop.f32.mrf.mxu0
  %v11327 = vpop.f32.mrf.mxu0
  %v11328 = vadd.f32 %v10932, %v11327
  %v11329 = vpop.f32.mrf.mxu0
  %11330 = vmatprep.mubr.bf16.mxu0 %v10856
  %11331 = vmatmul.mubr.bf16.gmra.mxu0 %v10855
  %v11332 = vpop.f32.mrf.mxu0
  %v11333 = vadd.f32 %v10932, %v11332
  %v11334 = vpop.f32.mrf.mxu0
  %v11335 = vpop.f32.mrf.mxu0
  %v11336 = vadd.f32 %v10932, %v11335
  %v11337 = vpop.f32.mrf.mxu0
  %11338 = vmatprep.mubr.bf16.mxu0 %v10859
  %11339 = vmatmul.mubr.bf16.gmra.mxu0 %v10858
  %v11340 = vpop.f32.mrf.mxu0
  %v11341 = vadd.f32 %v10932, %v11340
  %v11342 = vpop.f32.mrf.mxu0
  %v11343 = vpop.f32.mrf.mxu0
  %v11344 = vadd.f32 %v10932, %v11343
  %v11345 = vpop.f32.mrf.mxu0
  %11346 = vmatprep.mubr.bf16.mxu0 %v10862
  %11347 = vmatmul.mubr.bf16.gmra.mxu0 %v10861
  %v11348 = vpop.f32.mrf.mxu0
  %v11349 = vadd.f32 %v10932, %v11348
  %v11350 = vpop.f32.mrf.mxu0
  %v11351 = vpop.f32.mrf.mxu0
  %v11352 = vadd.f32 %v10932, %v11351
  %v11353 = vpop.f32.mrf.mxu0
  %11354 = vmatprep.mubr.bf16.mxu0 %v10865
  %11355 = vmatmul.mubr.bf16.gmra.mxu0 %v10864
  %v11356 = vpop.f32.mrf.mxu0
  %v11357 = vadd.f32 %v10932, %v11356
  %v11358 = vpop.f32.mrf.mxu0
  %v11359 = vpop.f32.mrf.mxu0
  %v11360 = vadd.f32 %v10932, %v11359
  %v11361 = vpop.f32.mrf.mxu0
  %11362 = vmatprep.mubr.bf16.mxu0 %v10868
  %11363 = vmatmul.mubr.bf16.gmra.mxu0 %v10867
  %v11364 = vpop.f32.mrf.mxu0
  %v11365 = vadd.f32 %v10932, %v11364
  %v11366 = vpop.f32.mrf.mxu0
  %v11367 = vpop.f32.mrf.mxu0
  %v11368 = vadd.f32 %v10932, %v11367
  %v11369 = vpop.f32.mrf.mxu0
  %11370 = vmatprep.mubr.bf16.mxu0 %v10871
  %11371 = vmatmul.mubr.bf16.gmra.mxu0 %v10870
  %v11372 = vpop.f32.mrf.mxu0
  %v11373 = vadd.f32 %v10932, %v11372
  %v11374 = vpop.f32.mrf.mxu0
  %v11375 = vpop.f32.mrf.mxu0
  %v11376 = vadd.f32 %v10932, %v11375
  %v11377 = vpop.f32.mrf.mxu0
  %11378 = vmatprep.mubr.bf16.mxu0 %v10874
  %11379 = vmatmul.mubr.bf16.gmra.mxu0 %v10873
  %v11380 = vpop.f32.mrf.mxu0
  %v11381 = vadd.f32 %v10932, %v11380
  %v11382 = vpop.f32.mrf.mxu0
  %v11383 = vpop.f32.mrf.mxu0
  %v11384 = vadd.f32 %v10932, %v11383
  %v11385 = vpop.f32.mrf.mxu0
  %11386 = vmatprep.mubr.bf16.mxu0 %v10877
  %11387 = vmatmul.mubr.bf16.gmra.mxu0 %v10876
  %v11388 = vpop.f32.mrf.mxu0
  %v11389 = vadd.f32 %v10932, %v11388
  %v11390 = vpop.f32.mrf.mxu0
  %v11391 = vpop.f32.mrf.mxu0
  %v11392 = vadd.f32 %v10932, %v11391
  %v11393 = vpop.f32.mrf.mxu0
  %11394 = vmatprep.mubr.bf16.mxu0 %v10880
  %11395 = vmatmul.mubr.bf16.gmra.mxu0 %v10879
  %v11396 = vpop.f32.mrf.mxu0
  %v11397 = vadd.f32 %v10932, %v11396
  %v11398 = vpop.f32.mrf.mxu0
  %v11399 = vpop.f32.mrf.mxu0
  %v11400 = vadd.f32 %v10932, %v11399
  %v11401 = vpop.f32.mrf.mxu0
  %11402 = vmatprep.mubr.bf16.mxu0 %v10883
  %11403 = vmatmul.mubr.bf16.gmra.mxu0 %v10882
  %v11404 = vpop.f32.mrf.mxu0
  %v11405 = vadd.f32 %v10932, %v11404
  %v11406 = vpop.f32.mrf.mxu0
  %v11407 = vpop.f32.mrf.mxu0
  %v11408 = vadd.f32 %v10932, %v11407
  %v11409 = vpop.f32.mrf.mxu0
  %11410 = vmatprep.mubr.bf16.mxu0 %v10886
  %11411 = vmatmul.mubr.bf16.gmra.mxu0 %v10885
  %v11412 = vpop.f32.mrf.mxu0
  %v11413 = vadd.f32 %v10932, %v11412
  %v11414 = vpop.f32.mrf.mxu0
  %v11415 = vpop.f32.mrf.mxu0
  %v11416 = vadd.f32 %v10932, %v11415
  %v11417 = vpop.f32.mrf.mxu0
  %11418 = vmatprep.mubr.bf16.mxu0 %v10889
  %11419 = vmatmul.mubr.bf16.gmra.mxu0 %v10888
  %v11420 = vpop.f32.mrf.mxu0
  %v11421 = vadd.f32 %v10932, %v11420
  %v11422 = vpop.f32.mrf.mxu0
  %v11423 = vpop.f32.mrf.mxu0
  %v11424 = vadd.f32 %v10932, %v11423
  %v11425 = vpop.f32.mrf.mxu0
  %11426 = vdwg.mxu0
  %11427 = vmatprep.subr.bf16.mxu0 0
  %11428 = vmatpush1.bf16.msra.mxu0 0
  %11429 = vmatprep.subr.bf16.mxu0 0
  %11430 = vmatpush1.bf16.msra.mxu0 0
  %11431 = vmatprep.subr.bf16.mxu0 0
  %11432 = vmatpush1.bf16.msra.mxu0 0
  %11433 = vmatprep.subr.bf16.mxu0 0
  %11434 = vmatpush1.bf16.msra.mxu0 0
  %11435 = vmatprep.subr.bf16.mxu0 0
  %11436 = vmatpush1.bf16.msra.mxu0 0
  %11437 = vmatprep.subr.bf16.mxu0 0
  %11438 = vmatpush1.bf16.msra.mxu0 0
  %11439 = vmatprep.subr.bf16.mxu0 0
  %11440 = vmatpush1.bf16.msra.mxu0 %v11023
  %11441 = vmatprep.subr.bf16.mxu0 0
  %11442 = vmatpush1.bf16.msra.mxu0 %v11022
  %11443 = vmatprep.subr.bf16.mxu0 0
  %11444 = vmatpush2.bf16.msra.mxu0 0
  %11445 = vmatprep.subr.bf16.mxu0 0
  %11446 = vmatpush2.bf16.msra.mxu0 0
  %11447 = vmatprep.subr.bf16.mxu0 0
  %11448 = vmatpush2.bf16.msra.mxu0 0
  %11449 = vmatprep.subr.bf16.mxu0 0
  %11450 = vmatpush2.bf16.msra.mxu0 0
  %11451 = vmatprep.subr.bf16.mxu0 0
  %11452 = vmatpush2.bf16.msra.mxu0 0
  %11453 = vmatprep.subr.bf16.mxu0 0
  %11454 = vmatpush2.bf16.msra.mxu0 0
  %11455 = vmatprep.subr.bf16.mxu0 0
  %11456 = vmatpush2.bf16.msra.mxu0 0
  %11457 = vmatprep.subr.bf16.mxu0 0
  %11458 = vmatpush2.bf16.msra.mxu0 0
  %11459 = vmatprep.mubr.bf16.mxu0 0
  %11460 = vmatmul.mubr.bf16.gmra.mxu0 %v11043
  %v11461 = vpop.f32.mrf.mxu0
  %v11462 = vadd.f32 %v11173, %v11461
  %v11463 = vpop.f32.mrf.mxu0
  %v11464 = vpop.f32.mrf.mxu0
  %v11465 = vadd.f32 %v11176, %v11464
  %v11466 = vpop.f32.mrf.mxu0
  %11467 = vmatprep.mubr.bf16.mxu0 0
  %11468 = vmatmul.mubr.bf16.gmra.mxu0 %v11046
  %v11469 = vpop.f32.mrf.mxu0
  %v11470 = vadd.f32 %v11181, %v11469
  %v11471 = vpop.f32.mrf.mxu0
  %v11472 = vpop.f32.mrf.mxu0
  %v11473 = vadd.f32 %v11184, %v11472
  %v11474 = vpop.f32.mrf.mxu0
  %11475 = vmatprep.mubr.bf16.mxu0 0
  %11476 = vmatmul.mubr.bf16.gmra.mxu0 %v11049
  %v11477 = vpop.f32.mrf.mxu0
  %v11478 = vadd.f32 %v11189, %v11477
  %v11479 = vpop.f32.mrf.mxu0
  %v11480 = vpop.f32.mrf.mxu0
  %v11481 = vadd.f32 %v11192, %v11480
  %v11482 = vpop.f32.mrf.mxu0
  %11483 = vmatprep.mubr.bf16.mxu0 0
  %11484 = vmatmul.mubr.bf16.gmra.mxu0 %v11052
  %v11485 = vpop.f32.mrf.mxu0
  %v11486 = vadd.f32 %v11197, %v11485
  %v11487 = vpop.f32.mrf.mxu0
  %v11488 = vpop.f32.mrf.mxu0
  %v11489 = vadd.f32 %v11200, %v11488
  %v11490 = vpop.f32.mrf.mxu0
  %11491 = vmatprep.mubr.bf16.mxu0 0
  %11492 = vmatmul.mubr.bf16.gmra.mxu0 %v11055
  %v11493 = vpop.f32.mrf.mxu0
  %v11494 = vadd.f32 %v11205, %v11493
  %v11495 = vpop.f32.mrf.mxu0
  %v11496 = vpop.f32.mrf.mxu0
  %v11497 = vadd.f32 %v11208, %v11496
  %v11498 = vpop.f32.mrf.mxu0
  %11499 = vmatprep.mubr.bf16.mxu0 0
  %11500 = vmatmul.mubr.bf16.gmra.mxu0 %v11058
  %v11501 = vpop.f32.mrf.mxu0
  %v11502 = vadd.f32 %v11213, %v11501
  %v11503 = vpop.f32.mrf.mxu0
  %v11504 = vpop.f32.mrf.mxu0
  %v11505 = vadd.f32 %v11216, %v11504
  %v11506 = vpop.f32.mrf.mxu0
  %11507 = vmatprep.mubr.bf16.mxu0 0
  %11508 = vmatmul.mubr.bf16.gmra.mxu0 %v11061
  %v11509 = vpop.f32.mrf.mxu0
  %v11510 = vadd.f32 %v11221, %v11509
  %v11511 = vpop.f32.mrf.mxu0
  %v11512 = vpop.f32.mrf.mxu0
  %v11513 = vadd.f32 %v11224, %v11512
  %v11514 = vpop.f32.mrf.mxu0
  %11515 = vmatprep.mubr.bf16.mxu0 0
  %11516 = vmatmul.mubr.bf16.gmra.mxu0 %v11064
  %v11517 = vpop.f32.mrf.mxu0
  %v11518 = vadd.f32 %v11229, %v11517
  %v11519 = vpop.f32.mrf.mxu0
  %v11520 = vpop.f32.mrf.mxu0
  %v11521 = vadd.f32 %v11232, %v11520
  %v11522 = vpop.f32.mrf.mxu0
  %11523 = vmatprep.mubr.bf16.mxu0 0
  %11524 = vmatmul.mubr.bf16.gmra.mxu0 %v11067
  %v11525 = vpop.f32.mrf.mxu0
  %v11526 = vadd.f32 %v11237, %v11525
  %v11527 = vpop.f32.mrf.mxu0
  %v11528 = vpop.f32.mrf.mxu0
  %v11529 = vadd.f32 %v11240, %v11528
  %v11530 = vpop.f32.mrf.mxu0
  %11531 = vmatprep.mubr.bf16.mxu0 0
  %11532 = vmatmul.mubr.bf16.gmra.mxu0 %v11070
  %v11533 = vpop.f32.mrf.mxu0
  %v11534 = vadd.f32 %v11245, %v11533
  %v11535 = vpop.f32.mrf.mxu0
  %v11536 = vpop.f32.mrf.mxu0
  %v11537 = vadd.f32 %v11248, %v11536
  %v11538 = vpop.f32.mrf.mxu0
  %11539 = vmatprep.mubr.bf16.mxu0 0
  %11540 = vmatmul.mubr.bf16.gmra.mxu0 %v11073
  %v11541 = vpop.f32.mrf.mxu0
  %v11542 = vadd.f32 %v11253, %v11541
  %v11543 = vpop.f32.mrf.mxu0
  %v11544 = vpop.f32.mrf.mxu0
  %v11545 = vadd.f32 %v11256, %v11544
  %v11546 = vpop.f32.mrf.mxu0
  %11547 = vmatprep.mubr.bf16.mxu0 0
  %11548 = vmatmul.mubr.bf16.gmra.mxu0 %v11076
  %v11549 = vpop.f32.mrf.mxu0
  %v11550 = vadd.f32 %v11261, %v11549
  %v11551 = vpop.f32.mrf.mxu0
  %v11552 = vpop.f32.mrf.mxu0
  %v11553 = vadd.f32 %v11264, %v11552
  %v11554 = vpop.f32.mrf.mxu0
  %11555 = vmatprep.mubr.bf16.mxu0 0
  %11556 = vmatmul.mubr.bf16.gmra.mxu0 %v11079
  %v11557 = vpop.f32.mrf.mxu0
  %v11558 = vadd.f32 %v11269, %v11557
  %v11559 = vpop.f32.mrf.mxu0
  %v11560 = vpop.f32.mrf.mxu0
  %v11561 = vadd.f32 %v11272, %v11560
  %v11562 = vpop.f32.mrf.mxu0
  %11563 = vmatprep.mubr.bf16.mxu0 0
  %11564 = vmatmul.mubr.bf16.gmra.mxu0 %v11082
  %v11565 = vpop.f32.mrf.mxu0
  %v11566 = vadd.f32 %v11277, %v11565
  %v11567 = vpop.f32.mrf.mxu0
  %v11568 = vpop.f32.mrf.mxu0
  %v11569 = vadd.f32 %v11280, %v11568
  %v11570 = vpop.f32.mrf.mxu0
  %11571 = vmatprep.mubr.bf16.mxu0 0
  %11572 = vmatmul.mubr.bf16.gmra.mxu0 %v11085
  %v11573 = vpop.f32.mrf.mxu0
  %v11574 = vadd.f32 %v11285, %v11573
  %v11575 = vpop.f32.mrf.mxu0
  %v11576 = vpop.f32.mrf.mxu0
  %v11577 = vadd.f32 %v11288, %v11576
  %v11578 = vpop.f32.mrf.mxu0
  %11579 = vmatprep.mubr.bf16.mxu0 0
  %11580 = vmatmul.mubr.bf16.gmra.mxu0 %v11088
  %v11581 = vpop.f32.mrf.mxu0
  %v11582 = vadd.f32 %v11293, %v11581
  %v11583 = vpop.f32.mrf.mxu0
  %v11584 = vpop.f32.mrf.mxu0
  %v11585 = vadd.f32 %v11296, %v11584
  %v11586 = vpop.f32.mrf.mxu0
  %11587 = vmatprep.mubr.bf16.mxu0 0
  %11588 = vmatmul.mubr.bf16.gmra.mxu0 %v11091
  %v11589 = vpop.f32.mrf.mxu0
  %v11590 = vadd.f32 %v11301, %v11589
  %v11591 = vpop.f32.mrf.mxu0
  %v11592 = vpop.f32.mrf.mxu0
  %v11593 = vadd.f32 %v11304, %v11592
  %v11594 = vpop.f32.mrf.mxu0
  %11595 = vmatprep.mubr.bf16.mxu0 0
  %11596 = vmatmul.mubr.bf16.gmra.mxu0 %v11094
  %v11597 = vpop.f32.mrf.mxu0
  %v11598 = vadd.f32 %v11309, %v11597
  %v11599 = vpop.f32.mrf.mxu0
  %v11600 = vpop.f32.mrf.mxu0
  %v11601 = vadd.f32 %v11312, %v11600
  %v11602 = vpop.f32.mrf.mxu0
  %11603 = vmatprep.mubr.bf16.mxu0 0
  %11604 = vmatmul.mubr.bf16.gmra.mxu0 %v11097
  %v11605 = vpop.f32.mrf.mxu0
  %v11606 = vadd.f32 %v11317, %v11605
  %v11607 = vpop.f32.mrf.mxu0
  %v11608 = vpop.f32.mrf.mxu0
  %v11609 = vadd.f32 %v11320, %v11608
  %v11610 = vpop.f32.mrf.mxu0
  %11611 = vmatprep.mubr.bf16.mxu0 0
  %11612 = vmatmul.mubr.bf16.gmra.mxu0 %v11100
  %v11613 = vpop.f32.mrf.mxu0
  %v11614 = vadd.f32 %v11325, %v11613
  %v11615 = vpop.f32.mrf.mxu0
  %v11616 = vpop.f32.mrf.mxu0
  %v11617 = vadd.f32 %v11328, %v11616
  %v11618 = vpop.f32.mrf.mxu0
  %11619 = vmatprep.mubr.bf16.mxu0 0
  %11620 = vmatmul.mubr.bf16.gmra.mxu0 %v11103
  %v11621 = vpop.f32.mrf.mxu0
  %v11622 = vadd.f32 %v11333, %v11621
  %v11623 = vpop.f32.mrf.mxu0
  %v11624 = vpop.f32.mrf.mxu0
  %v11625 = vadd.f32 %v11336, %v11624
  %v11626 = vpop.f32.mrf.mxu0
  %11627 = vmatprep.mubr.bf16.mxu0 0
  %11628 = vmatmul.mubr.bf16.gmra.mxu0 %v11106
  %v11629 = vpop.f32.mrf.mxu0
  %v11630 = vadd.f32 %v11341, %v11629
  %v11631 = vpop.f32.mrf.mxu0
  %v11632 = vpop.f32.mrf.mxu0
  %v11633 = vadd.f32 %v11344, %v11632
  %v11634 = vpop.f32.mrf.mxu0
  %11635 = vmatprep.mubr.bf16.mxu0 0
  %11636 = vmatmul.mubr.bf16.gmra.mxu0 %v11109
  %v11637 = vpop.f32.mrf.mxu0
  %v11638 = vadd.f32 %v11349, %v11637
  %v11639 = vpop.f32.mrf.mxu0
  %v11640 = vpop.f32.mrf.mxu0
  %v11641 = vadd.f32 %v11352, %v11640
  %v11642 = vpop.f32.mrf.mxu0
  %11643 = vmatprep.mubr.bf16.mxu0 0
  %11644 = vmatmul.mubr.bf16.gmra.mxu0 %v11112
  %v11645 = vpop.f32.mrf.mxu0
  %v11646 = vadd.f32 %v11357, %v11645
  %v11647 = vpop.f32.mrf.mxu0
  %v11648 = vpop.f32.mrf.mxu0
  %v11649 = vadd.f32 %v11360, %v11648
  %v11650 = vpop.f32.mrf.mxu0
  %11651 = vmatprep.mubr.bf16.mxu0 0
  %11652 = vmatmul.mubr.bf16.gmra.mxu0 %v11115
  %v11653 = vpop.f32.mrf.mxu0
  %v11654 = vadd.f32 %v11365, %v11653
  %v11655 = vpop.f32.mrf.mxu0
  %v11656 = vpop.f32.mrf.mxu0
  %v11657 = vadd.f32 %v11368, %v11656
  %v11658 = vpop.f32.mrf.mxu0
  %11659 = vmatprep.mubr.bf16.mxu0 0
  %11660 = vmatmul.mubr.bf16.gmra.mxu0 %v11118
  %v11661 = vpop.f32.mrf.mxu0
  %v11662 = vadd.f32 %v11373, %v11661
  %v11663 = vpop.f32.mrf.mxu0
  %v11664 = vpop.f32.mrf.mxu0
  %v11665 = vadd.f32 %v11376, %v11664
  %v11666 = vpop.f32.mrf.mxu0
  %11667 = vmatprep.mubr.bf16.mxu0 0
  %11668 = vmatmul.mubr.bf16.gmra.mxu0 %v11121
  %v11669 = vpop.f32.mrf.mxu0
  %v11670 = vadd.f32 %v11381, %v11669
  %v11671 = vpop.f32.mrf.mxu0
  %v11672 = vpop.f32.mrf.mxu0
  %v11673 = vadd.f32 %v11384, %v11672
  %v11674 = vpop.f32.mrf.mxu0
  %11675 = vmatprep.mubr.bf16.mxu0 0
  %11676 = vmatmul.mubr.bf16.gmra.mxu0 %v11124
  %v11677 = vpop.f32.mrf.mxu0
  %v11678 = vadd.f32 %v11389, %v11677
  %v11679 = vpop.f32.mrf.mxu0
  %v11680 = vpop.f32.mrf.mxu0
  %v11681 = vadd.f32 %v11392, %v11680
  %v11682 = vpop.f32.mrf.mxu0
  %11683 = vmatprep.mubr.bf16.mxu0 0
  %11684 = vmatmul.mubr.bf16.gmra.mxu0 %v11127
  %v11685 = vpop.f32.mrf.mxu0
  %v11686 = vadd.f32 %v11397, %v11685
  %v11687 = vpop.f32.mrf.mxu0
  %v11688 = vpop.f32.mrf.mxu0
  %v11689 = vadd.f32 %v11400, %v11688
  %v11690 = vpop.f32.mrf.mxu0
  %11691 = vmatprep.mubr.bf16.mxu0 0
  %11692 = vmatmul.mubr.bf16.gmra.mxu0 %v11130
  %v11693 = vpop.f32.mrf.mxu0
  %v11694 = vadd.f32 %v11405, %v11693
  %v11695 = vpop.f32.mrf.mxu0
  %v11696 = vpop.f32.mrf.mxu0
  %v11697 = vadd.f32 %v11408, %v11696
  %v11698 = vpop.f32.mrf.mxu0
  %11699 = vmatprep.mubr.bf16.mxu0 0
  %11700 = vmatmul.mubr.bf16.gmra.mxu0 %v11133
  %v11701 = vpop.f32.mrf.mxu0
  %v11702 = vadd.f32 %v11413, %v11701
  %v11703 = vpop.f32.mrf.mxu0
  %v11704 = vpop.f32.mrf.mxu0
  %v11705 = vadd.f32 %v11416, %v11704
  %v11706 = vpop.f32.mrf.mxu0
  %11707 = vmatprep.mubr.bf16.mxu0 0
  %11708 = vmatmul.mubr.bf16.gmra.mxu0 %v11136
  %v11709 = vpop.f32.mrf.mxu0
  %v11710 = vadd.f32 %v11421, %v11709
  %v11711 = vpop.f32.mrf.mxu0
  %v11712 = vpop.f32.mrf.mxu0
  %v11713 = vadd.f32 %v11424, %v11712
  %v11714 = vpop.f32.mrf.mxu0
  %11715 = vdwg.mxu0
  %v11716 = vld [vmem:[%s0] sm:$0xff]
  %v11717 = vld [vmem:[%s0 + $0x8] sm:$0xff]
  %v11718 = vld [vmem:[%s0 + $0x10] sm:$0xff]
  %v11719 = vld [vmem:[%s0 + $0x18] sm:$0xff]
  %v11720 = vld [vmem:[%s0 + $0x20] sm:$0xff]
  %v11721 = vld [vmem:[%s0 + $0x28] sm:$0xff]
  %v11722 = vld [vmem:[%s0 + $0x30] sm:$0xff]
  %v11723 = vld [vmem:[%s0 + $0x38] sm:$0xff]
  %v11724 = vld [vmem:[%s0 + $0x40] sm:$0xff]
  %v11725 = vld [vmem:[%s0 + $0x48] sm:$0xff]
  %v11726 = vld [vmem:[%s0 + $0x50] sm:$0xff]
  %v11727 = vld [vmem:[%s0 + $0x58] sm:$0xff]
  %v11728 = vld [vmem:[%s0 + $0x60] sm:$0xff]
  %v11729 = vld [vmem:[%s0 + $0x68] sm:$0xff]
  %v11730 = vld [vmem:[%s0 + $0x70] sm:$0xff]
  %v11731 = vld [vmem:[%s0 + $0x78] sm:$0xff]
  %v11732 = vld [vmem:[%s0 + $0x80] sm:$0xff]
  %v11733 = vld [vmem:[%s0 + $0x88] sm:$0xff]
  %v11734 = vld [vmem:[%s0 + $0x90] sm:$0xff]
  %v11735 = vld [vmem:[%s0 + $0x98] sm:$0xff]
  %v11736 = vld [vmem:[%s0 + $0xa0] sm:$0xff]
  %v11737 = vld [vmem:[%s0 + $0xa8] sm:$0xff]
  %v11738 = vld [vmem:[%s0 + $0xb0] sm:$0xff]
  %v11739 = vld [vmem:[%s0 + $0xb8] sm:$0xff]
  %v11740 = vld [vmem:[%s0 + $0xc0] sm:$0xff]
  %v11741 = vld [vmem:[%s0 + $0xc8] sm:$0xff]
  %v11742 = vld [vmem:[%s0 + $0xd0] sm:$0xff]
  %v11743 = vld [vmem:[%s0 + $0xd8] sm:$0xff]
  %v11744 = vld [vmem:[%s0 + $0xe0] sm:$0xff]
  %v11745 = vld [vmem:[%s0 + $0xe8] sm:$0xff]
  %v11746 = vld [vmem:[%s0 + $0xf0] sm:$0xff]
  %v11747 = vld [vmem:[%s0 + $0xf8] sm:$0xff]
  %v11748 = vld [vmem:[%s0 + $0x100] sm:$0xff]
  %v11749 = vld [vmem:[%s0 + $0x108] sm:$0xff]
  %v11750 = vld [vmem:[%s0 + $0x110] sm:$0xff]
  %v11751 = vld [vmem:[%s0 + $0x118] sm:$0xff]
  %v11752 = vld [vmem:[%s0 + $0x120] sm:$0xff]
  %v11753 = vld [vmem:[%s0 + $0x128] sm:$0xff]
  %v11754 = vld [vmem:[%s0 + $0x130] sm:$0xff]
  %v11755 = vld [vmem:[%s0 + $0x138] sm:$0xff]
  %v11756 = vld [vmem:[%s0 + $0x140] sm:$0xff]
  %v11757 = vld [vmem:[%s0 + $0x148] sm:$0xff]
  %v11758 = vld [vmem:[%s0 + $0x150] sm:$0xff]
  %v11759 = vld [vmem:[%s0 + $0x158] sm:$0xff]
  %v11760 = vld [vmem:[%s0 + $0x160] sm:$0xff]
  %v11761 = vld [vmem:[%s0 + $0x168] sm:$0xff]
  %v11762 = vld [vmem:[%s0 + $0x170] sm:$0xff]
  %v11763 = vld [vmem:[%s0 + $0x178] sm:$0xff]
  %v11764 = vld [vmem:[%s0 + $0x180] sm:$0xff]
  %v11765 = vld [vmem:[%s0 + $0x188] sm:$0xff]
  %v11766 = vld [vmem:[%s0 + $0x190] sm:$0xff]
  %v11767 = vld [vmem:[%s0 + $0x198] sm:$0xff]
  %v11768 = vld [vmem:[%s0 + $0x1a0] sm:$0xff]
  %v11769 = vld [vmem:[%s0 + $0x1a8] sm:$0xff]
  %v11770 = vld [vmem:[%s0 + $0x1b0] sm:$0xff]
  %v11771 = vld [vmem:[%s0 + $0x1b8] sm:$0xff]
  %v11772 = vld [vmem:[%s0 + $0x1c0] sm:$0xff]
  %v11773 = vld [vmem:[%s0 + $0x1c8] sm:$0xff]
  %v11774 = vld [vmem:[%s0 + $0x1d0] sm:$0xff]
  %v11775 = vld [vmem:[%s0 + $0x1d8] sm:$0xff]
  %v11776 = vld [vmem:[%s0 + $0x1e0] sm:$0xff]
  %v11777 = vld [vmem:[%s0 + $0x1e8] sm:$0xff]
  %v11778 = vld [vmem:[%s0 + $0x1f0] sm:$0xff]
  %v11779 = vld [vmem:[%s0 + $0x1f8] sm:$0xff]
  %v11780 = vadd.f32 %v11716, %v11462
  %v11781 = vadd.f32 %v11717, %v11465
  %v11782 = vadd.f32 %v11718, %v11470
  %v11783 = vadd.f32 %v11719, %v11473
  %v11784 = vadd.f32 %v11720, %v11478
  %v11785 = vadd.f32 %v11721, %v11481
  %v11786 = vadd.f32 %v11722, %v11486
  %v11787 = vadd.f32 %v11723, %v11489
  %v11788 = vadd.f32 %v11724, %v11494
  %v11789 = vadd.f32 %v11725, %v11497
  %v11790 = vadd.f32 %v11726, %v11502
  %v11791 = vadd.f32 %v11727, %v11505
  %v11792 = vadd.f32 %v11728, %v11510
  %v11793 = vadd.f32 %v11729, %v11513
  %v11794 = vadd.f32 %v11730, %v11518
  %v11795 = vadd.f32 %v11731, %v11521
  %v11796 = vadd.f32 %v11732, %v11526
  %v11797 = vadd.f32 %v11733, %v11529
  %v11798 = vadd.f32 %v11734, %v11534
  %v11799 = vadd.f32 %v11735, %v11537
  %v11800 = vadd.f32 %v11736, %v11542
  %v11801 = vadd.f32 %v11737, %v11545
  %v11802 = vadd.f32 %v11738, %v11550
  %v11803 = vadd.f32 %v11739, %v11553
  %v11804 = vadd.f32 %v11740, %v11558
  %v11805 = vadd.f32 %v11741, %v11561
  %v11806 = vadd.f32 %v11742, %v11566
  %v11807 = vadd.f32 %v11743, %v11569
  %v11808 = vadd.f32 %v11744, %v11574
  %v11809 = vadd.f32 %v11745, %v11577
  %v11810 = vadd.f32 %v11746, %v11582
  %v11811 = vadd.f32 %v11747, %v11585
  %v11812 = vadd.f32 %v11748, %v11590
  %v11813 = vadd.f32 %v11749, %v11593
  %v11814 = vadd.f32 %v11750, %v11598
  %v11815 = vadd.f32 %v11751, %v11601
  %v11816 = vadd.f32 %v11752, %v11606
  %v11817 = vadd.f32 %v11753, %v11609
  %v11818 = vadd.f32 %v11754, %v11614
  %v11819 = vadd.f32 %v11755, %v11617
  %v11820 = vadd.f32 %v11756, %v11622
  %v11821 = vadd.f32 %v11757, %v11625
  %v11822 = vadd.f32 %v11758, %v11630
  %v11823 = vadd.f32 %v11759, %v11633
  %v11824 = vadd.f32 %v11760, %v11638
  %v11825 = vadd.f32 %v11761, %v11641
  %v11826 = vadd.f32 %v11762, %v11646
  %v11827 = vadd.f32 %v11763, %v11649
  %v11828 = vadd.f32 %v11764, %v11654
  %v11829 = vadd.f32 %v11765, %v11657
  %v11830 = vadd.f32 %v11766, %v11662
  %v11831 = vadd.f32 %v11767, %v11665
  %v11832 = vadd.f32 %v11768, %v11670
  %v11833 = vadd.f32 %v11769, %v11673
  %v11834 = vadd.f32 %v11770, %v11678
  %v11835 = vadd.f32 %v11771, %v11681
  %v11836 = vadd.f32 %v11772, %v11686
  %v11837 = vadd.f32 %v11773, %v11689
  %v11838 = vadd.f32 %v11774, %v11694
  %v11839 = vadd.f32 %v11775, %v11697
  %v11840 = vadd.f32 %v11776, %v11702
  %v11841 = vadd.f32 %v11777, %v11705
  %v11842 = vadd.f32 %v11778, %v11710
  %v11843 = vadd.f32 %v11779, %v11713
  %11844 = vst.msk [vmem:[%s10] sm:$0xff] %vm215, %v11780
  %11845 = vst.msk [vmem:[%s10 + $0x8] sm:$0xff] %vm215, %v11781
  %11846 = vst.msk [vmem:[%s10 + $0x10] sm:$0xff] %vm215, %v11782
  %11847 = vst.msk [vmem:[%s10 + $0x18] sm:$0xff] %vm215, %v11783
  %11848 = vst.msk [vmem:[%s10 + $0x20] sm:$0xff] %vm215, %v11784
  %11849 = vst.msk [vmem:[%s10 + $0x28] sm:$0xff] %vm215, %v11785
  %11850 = vst.msk [vmem:[%s10 + $0x30] sm:$0xff] %vm215, %v11786
  %11851 = vst.msk [vmem:[%s10 + $0x38] sm:$0xff] %vm215, %v11787
  %11852 = vst.msk [vmem:[%s10 + $0x40] sm:$0xff] %vm215, %v11788
  %11853 = vst.msk [vmem:[%s10 + $0x48] sm:$0xff] %vm215, %v11789
  %11854 = vst.msk [vmem:[%s10 + $0x50] sm:$0xff] %vm215, %v11790
  %11855 = vst.msk [vmem:[%s10 + $0x58] sm:$0xff] %vm215, %v11791
  %11856 = vst.msk [vmem:[%s10 + $0x60] sm:$0xff] %vm215, %v11792
  %11857 = vst.msk [vmem:[%s10 + $0x68] sm:$0xff] %vm215, %v11793
  %11858 = vst.msk [vmem:[%s10 + $0x70] sm:$0xff] %vm215, %v11794
  %11859 = vst.msk [vmem:[%s10 + $0x78] sm:$0xff] %vm215, %v11795
  %11860 = vst.msk [vmem:[%s10 + $0x80] sm:$0xff] %vm215, %v11796
  %11861 = vst.msk [vmem:[%s10 + $0x88] sm:$0xff] %vm215, %v11797
  %11862 = vst.msk [vmem:[%s10 + $0x90] sm:$0xff] %vm215, %v11798
  %11863 = vst.msk [vmem:[%s10 + $0x98] sm:$0xff] %vm215, %v11799
  %11864 = vst.msk [vmem:[%s10 + $0xa0] sm:$0xff] %vm215, %v11800
  %11865 = vst.msk [vmem:[%s10 + $0xa8] sm:$0xff] %vm215, %v11801
  %11866 = vst.msk [vmem:[%s10 + $0xb0] sm:$0xff] %vm215, %v11802
  %11867 = vst.msk [vmem:[%s10 + $0xb8] sm:$0xff] %vm215, %v11803
  %11868 = vst.msk [vmem:[%s10 + $0xc0] sm:$0xff] %vm215, %v11804
  %11869 = vst.msk [vmem:[%s10 + $0xc8] sm:$0xff] %vm215, %v11805
  %11870 = vst.msk [vmem:[%s10 + $0xd0] sm:$0xff] %vm215, %v11806
  %11871 = vst.msk [vmem:[%s10 + $0xd8] sm:$0xff] %vm215, %v11807
  %11872 = vst.msk [vmem:[%s10 + $0xe0] sm:$0xff] %vm215, %v11808
  %11873 = vst.msk [vmem:[%s10 + $0xe8] sm:$0xff] %vm215, %v11809
  %11874 = vst.msk [vmem:[%s10 + $0xf0] sm:$0xff] %vm215, %v11810
  %11875 = vst.msk [vmem:[%s10 + $0xf8] sm:$0xff] %vm215, %v11811
  %11876 = vst.msk [vmem:[%s10 + $0x100] sm:$0xff] %vm215, %v11812
  %11877 = vst.msk [vmem:[%s10 + $0x108] sm:$0xff] %vm215, %v11813
  %11878 = vst.msk [vmem:[%s10 + $0x110] sm:$0xff] %vm215, %v11814
  %11879 = vst.msk [vmem:[%s10 + $0x118] sm:$0xff] %vm215, %v11815
  %11880 = vst.msk [vmem:[%s10 + $0x120] sm:$0xff] %vm215, %v11816
  %11881 = vst.msk [vmem:[%s10 + $0x128] sm:$0xff] %vm215, %v11817
  %11882 = vst.msk [vmem:[%s10 + $0x130] sm:$0xff] %vm215, %v11818
  %11883 = vst.msk [vmem:[%s10 + $0x138] sm:$0xff] %vm215, %v11819
  %11884 = vst.msk [vmem:[%s10 + $0x140] sm:$0xff] %vm215, %v11820
  %11885 = vst.msk [vmem:[%s10 + $0x148] sm:$0xff] %vm215, %v11821
  %11886 = vst.msk [vmem:[%s10 + $0x150] sm:$0xff] %vm215, %v11822
  %11887 = vst.msk [vmem:[%s10 + $0x158] sm:$0xff] %vm215, %v11823
  %11888 = vst.msk [vmem:[%s10 + $0x160] sm:$0xff] %vm215, %v11824
  %11889 = vst.msk [vmem:[%s10 + $0x168] sm:$0xff] %vm215, %v11825
  %11890 = vst.msk [vmem:[%s10 + $0x170] sm:$0xff] %vm215, %v11826
  %11891 = vst.msk [vmem:[%s10 + $0x178] sm:$0xff] %vm215, %v11827
  %11892 = vst.msk [vmem:[%s10 + $0x180] sm:$0xff] %vm215, %v11828
  %11893 = vst.msk [vmem:[%s10 + $0x188] sm:$0xff] %vm215, %v11829
  %11894 = vst.msk [vmem:[%s10 + $0x190] sm:$0xff] %vm215, %v11830
  %11895 = vst.msk [vmem:[%s10 + $0x198] sm:$0xff] %vm215, %v11831
  %11896 = vst.msk [vmem:[%s10 + $0x1a0] sm:$0xff] %vm215, %v11832
  %11897 = vst.msk [vmem:[%s10 + $0x1a8] sm:$0xff] %vm215, %v11833
  %11898 = vst.msk [vmem:[%s10 + $0x1b0] sm:$0xff] %vm215, %v11834
  %11899 = vst.msk [vmem:[%s10 + $0x1b8] sm:$0xff] %vm215, %v11835
  %11900 = vst.msk [vmem:[%s10 + $0x1c0] sm:$0xff] %vm215, %v11836
  %11901 = vst.msk [vmem:[%s10 + $0x1c8] sm:$0xff] %vm215, %v11837
  %11902 = vst.msk [vmem:[%s10 + $0x1d0] sm:$0xff] %vm215, %v11838
  %11903 = vst.msk [vmem:[%s10 + $0x1d8] sm:$0xff] %vm215, %v11839
  %11904 = vst.msk [vmem:[%s10 + $0x1e0] sm:$0xff] %vm215, %v11840
  %11905 = vst.msk [vmem:[%s10 + $0x1e8] sm:$0xff] %vm215, %v11841
  %11906 = vst.msk [vmem:[%s10 + $0x1f0] sm:$0xff] %vm215, %v11842
  %11907 = vst.msk [vmem:[%s10 + $0x1f8] sm:$0xff] %vm215, %v11843
  // Predicated region
  $region42: #{tpu_custom_call.1} parent=0 // pred_check
    _
  $region43: #{tpu_custom_call.1} parent=0 // pred_check_branch
    %11909 = sbr.rel (0) target = $region45
  $region44: #{tpu_custom_call.1} parent=0 // pred_region
    _
  $region45: #{tpu_custom_call.1} parent=0 // pred_fallthru
    _
  // Predicated region
  $region46: #{tpu_custom_call.1} parent=0 // pred_check
    _
  $region47: #{tpu_custom_call.1} parent=0 // pred_check_branch
    %11911 = sbr.rel (0) target = $region49
  $region48: #{tpu_custom_call.1} parent=0 // pred_region
    _
  $region49: #{tpu_custom_call.1} parent=0 // pred_fallthru
    _

</llo_original>
